<compile_context>
chip_gen: v7x
topology: tpu7x:2x2x1
jax: 0.10.0
libtpu: 0.0.40
codegen_flags: <defaults>
</compile_context>

<pallas_src>
import functools

import jax
import jax.numpy as jnp
from jax import lax
from jax.experimental import pallas as pl
from jax.experimental.pallas import tpu as pltpu


def _row_blocks(total, rb):
    """Static (start, size) row blocks covering [0, total) with size <= rb."""
    blocks, s = [], 0
    while s < total:
        sz = min(rb, total - s)
        blocks.append((s, sz))
        s += sz
    return blocks


def _choose_tile_h(H, max_th):
    th = max(1, min(H, max_th))
    while H % th != 0:
        th -= 1
    return th


# -----------------------------------------------------------------------------
# Fused kernel: one (batch, h-tile) grid cell computes TH output rows.
# -----------------------------------------------------------------------------
def _fft_conv_block_kernel(x_ref, halo_ref, w1_ref, b1_ref, w2_ref, b2_ref,
                           wid_ref, bid_ref, o_ref,
                           xpad_ref, o1pad_ref, acc_ref, *, TH, W, RB, slope):
    Cin = x_ref.shape[-1]
    Cout = o_ref.shape[-1]
    t = pl.program_id(1)
    nH = pl.num_programs(1)

    # ---- stage 0: build the zero-padded input tile in VMEM (no HBM pad) ------
    # xpad rows: [0,2) top halo, [2,TH+2) tile rows, [TH+2,TH+4) bottom halo;
    # columns 0 and W+1 are the conv 'same' zero padding.
    xpad_ref[:, 0:1, :] = jnp.zeros((TH + 4, 1, Cin), jnp.float32)
    xpad_ref[:, W + 1:W + 2, :] = jnp.zeros((TH + 4, 1, Cin), jnp.float32)
    xpad_ref[0:2, 1:W + 1, :] = halo_ref[0, 0:2]
    xpad_ref[2:TH + 2, 1:W + 1, :] = x_ref[0]
    xpad_ref[TH + 2:TH + 4, 1:W + 1, :] = halo_ref[0, 2:4]

    # out1 scratch: rows [0, TH+2) = out1 global rows [t*TH-1, t*TH+TH+1),
    # with zero side columns for conv_2's horizontal padding.
    o1pad_ref[:, 0:1, :] = jnp.zeros((TH + 2, 1, Cout), jnp.float32)
    o1pad_ref[:, W + 1:W + 2, :] = jnp.zeros((TH + 2, 1, Cout), jnp.float32)

    def conv3x3(src_ref, w_ref, r0, rows):
        """3x3 conv of `rows` output rows starting at r0 (padded row coords)."""
        acc_ref[0:rows * W, :] = jnp.zeros((rows * W, Cout), jnp.float32)
        for dy in range(3):
            band = src_ref[r0 + dy:r0 + dy + rows]          # (rows, W+2, Csrc)
            for dx in range(3):
                lhs = band[:, dx:dx + W, :].reshape(rows * W, band.shape[-1])
                acc_ref[0:rows * W, :] += jnp.dot(
                    lhs, w_ref[dy, dx], preferred_element_type=jnp.float32)
        return acc_ref[0:rows * W, :]

    # ---- stage 1: conv_1 + LeakyReLU -> o1pad rows [0, TH+2) -----------------
    for r0, rows in _row_blocks(TH + 2, RB):
        o1 = conv3x3(xpad_ref, w1_ref, r0, rows) + b1_ref[...]
        o1 = jnp.where(o1 >= 0.0, o1, o1 * slope)
        o1pad_ref[r0:r0 + rows, 1:W + 1, :] = o1.reshape(rows, W, Cout)

    # conv_2's 'same' padding rows at the global image top / bottom are zeros,
    # not conv_1 applied to padding -- overwrite them on boundary tiles.
    @pl.when(t == 0)
    def _():
        o1pad_ref[0:1, :, :] = jnp.zeros((1, W + 2, Cout), jnp.float32)

    @pl.when(t == nH - 1)
    def _():
        o1pad_ref[TH + 1:TH + 2, :, :] = jnp.zeros((1, W + 2, Cout), jnp.float32)

    # ---- stage 2: conv_2 + LeakyReLU + identity 1x1 + residual add -----------
    for r0, rows in _row_blocks(TH, RB):
        o2 = conv3x3(o1pad_ref, w2_ref, r0, rows) + b2_ref[...]
        o2 = jnp.where(o2 >= 0.0, o2, o2 * slope)
        lhs_id = xpad_ref[r0 + 2:r0 + 2 + rows, 1:W + 1, :].reshape(rows * W, Cin)
        ident = jnp.dot(lhs_id, wid_ref[...],
                        preferred_element_type=jnp.float32) + bid_ref[...]
        o_ref[0, r0:r0 + rows, :, :] = (o2 + ident).reshape(rows, W, Cout)


# -----------------------------------------------------------------------------
# Wrapper: NCHW in / NCHW out, PyTorch weight layouts.
# -----------------------------------------------------------------------------
def fft_conv_block_forward(x_nchw, params, relu_slope, *,
                           max_tile_h=32, row_block=8):
    x = jnp.transpose(x_nchw, (0, 2, 3, 1)).astype(jnp.float32)   # NCHW -> NHWC
    N, H, W, Cin = x.shape

    # PyTorch layouts -> kernel layouts (channels on lanes).
    w1 = jnp.transpose(params["conv1_w"], (2, 3, 1, 0)).astype(jnp.float32)  # HWIO
    b1 = params["conv1_b"].reshape(1, -1).astype(jnp.float32)
    w2 = jnp.transpose(params["conv2_w"], (2, 3, 1, 0)).astype(jnp.float32)
    b2 = params["conv2_b"].reshape(1, -1).astype(jnp.float32)
    wid = jnp.transpose(params["id_w"][:, :, 0, 0], (1, 0)).astype(jnp.float32)  # (Cin,Cout)
    bid = params["id_b"].reshape(1, -1).astype(jnp.float32)
    Cout = w1.shape[-1]

    TH = _choose_tile_h(H, max_tile_h)
    nH = H // TH
    RB = max(1, min(row_block, TH))

    # 2-row halos above / below each H-tile (zeros at the image boundary).
    xp = jnp.pad(x, ((0, 0), (2, 2), (0, 0), (0, 0)))
    top = jnp.stack([xp[:, t * TH:t * TH + 2] for t in range(nH)], axis=1)
    bot = jnp.stack([xp[:, (t + 1) * TH + 2:(t + 1) * TH + 4] for t in range(nH)],
                    axis=1)
    halo = jnp.concatenate([top, bot], axis=2).reshape(N, nH * 4, W, Cin)

    kern = functools.partial(_fft_conv_block_kernel,
                             TH=TH, W=W, RB=RB, slope=float(relu_slope))

    out = pl.pallas_call(
        kern,
        out_shape=jax.ShapeDtypeStruct((N, H, W, Cout), jnp.float32),
        grid=(N, nH),
        in_specs=[
            pl.BlockSpec((1, TH, W, Cin), lambda n, t: (n, t, 0, 0)),
            pl.BlockSpec((1, 4, W, Cin), lambda n, t: (n, t, 0, 0)),
            pl.BlockSpec((3, 3, Cin, Cout), lambda n, t: (0, 0, 0, 0)),
            pl.BlockSpec((1, Cout), lambda n, t: (0, 0)),
            pl.BlockSpec((3, 3, Cout, Cout), lambda n, t: (0, 0, 0, 0)),
            pl.BlockSpec((1, Cout), lambda n, t: (0, 0)),
            pl.BlockSpec((Cin, Cout), lambda n, t: (0, 0)),
            pl.BlockSpec((1, Cout), lambda n, t: (0, 0)),
        ],
        out_specs=pl.BlockSpec((1, TH, W, Cout), lambda n, t: (n, t, 0, 0)),
        scratch_shapes=[
            pltpu.VMEM((TH + 4, W + 2, Cin), jnp.float32),   # padded x tile
            pltpu.VMEM((TH + 2, W + 2, Cout), jnp.float32),  # padded out1 tile
            pltpu.VMEM((RB * W, Cout), jnp.float32),         # matmul accumulator
        ],
        compiler_params=pltpu.CompilerParams(
            dimension_semantics=("parallel", "parallel"),
            vmem_limit_bytes=64 * 1024 * 1024,
        ),
    )(x, halo, w1, b1, w2, b2, wid, bid)

    return jnp.transpose(out, (0, 3, 1, 2))                  # NHWC -> NCHW


# -----------------------------------------------------------------------------
# Pure-JAX reference (verification only), operating on PyTorch-layout weights.
# -----------------------------------------------------------------------------
def reference_forward(x_nchw, p, slope):
    def conv(z, w, b, pad):
        y = lax.conv_general_dilated(
            z, w, (1, 1), [(pad, pad), (pad, pad)],
            dimension_numbers=("NCHW", "OIHW", "NCHW"))
        return y + b.reshape(1, -1, 1, 1)

    def lrelu(z):
        return jnp.where(z >= 0, z, z * slope)

    o = lrelu(conv(x_nchw, p["conv1_w"], p["conv1_b"], 1))
    o = lrelu(conv(o, p["conv2_w"], p["conv2_b"], 1))
    return o + conv(x_nchw, p["id_w"], p["id_b"], 0)


if __name__ == "__main__":
    key = jax.random.PRNGKey(0)
    N, in_size, out_size = 2, 8, 16
    H = W = 16
    relu_slope = 0.2

    ks = jax.random.split(key, 7)
    x = jax.random.normal(ks[0], (N, in_size, H, W), jnp.float32)
    params = {
        # PyTorch layouts: Conv2d weight (O, I, kH, kW), bias (O,)
        "conv1_w": 0.1 * jax.random.normal(ks[1], (out_size, in_size, 3, 3), jnp.float32),
        "conv1_b": 0.1 * jax.random.normal(ks[2], (out_size,), jnp.float32),
        "conv2_w": 0.1 * jax.random.normal(ks[3], (out_size, out_size, 3, 3), jnp.float32),
        "conv2_b": 0.1 * jax.random.normal(ks[4], (out_size,), jnp.float32),
        "id_w": 0.1 * jax.random.normal(ks[5], (out_size, in_size, 1, 1), jnp.float32),
        "id_b": 0.1 * jax.random.normal(ks[6], (out_size,), jnp.float32),
    }

    # max_tile_h=8 -> 2 H-tiles per image, exercising the halo / boundary logic.
    out = fft_conv_block_forward(x, params, relu_slope, max_tile_h=8, row_block=8)
    out = jax.block_until_ready(out)
    assert out.shape == (N, out_size, H, W)

    ref = reference_forward(x, params, relu_slope)
    max_err = float(jnp.max(jnp.abs(out - ref)))
    assert max_err < 1e-3, f"mismatch vs reference: {max_err}"

    print("KERNEL_OK")
</pallas_src>

<mosaic_0001>
module attributes {stable_mosaic.version = 11 : i64} {
  func.func @_fft_conv_block_kernel(%arg0: i32, %arg1: i32, %arg2: memref<1x8x16x8xf32, #tpu.memory_space<vmem>>, %arg3: memref<1x4x16x8xf32, #tpu.memory_space<vmem>>, %arg4: memref<3x3x8x16xf32, #tpu.memory_space<vmem>>, %arg5: memref<1x16xf32, #tpu.memory_space<vmem>>, %arg6: memref<3x3x16x16xf32, #tpu.memory_space<vmem>>, %arg7: memref<1x16xf32, #tpu.memory_space<vmem>>, %arg8: memref<8x16xf32, #tpu.memory_space<vmem>>, %arg9: memref<1x16xf32, #tpu.memory_space<vmem>>, %arg10: memref<1x8x16x16xf32, #tpu.memory_space<vmem>>, %arg11: memref<12x18x8xf32, #tpu.memory_space<vmem>>, %arg12: memref<10x18x16xf32, #tpu.memory_space<vmem>>, %arg13: memref<128x16xf32, #tpu.memory_space<vmem>>) attributes {dimension_semantics = [#tpu.dimension_semantics<parallel>, #tpu.dimension_semantics<parallel>], iteration_bounds = array<i64: 2, 2>, scalar_prefetch = 0 : i64, scratch_operands = 3 : i64, tpu.core_type = #tpu.core_type<tc>, window_params = [{transform_indices = @transform_0, window_bounds = array<i64: 1, 8, 16, 8>}, {transform_indices = @transform_1, window_bounds = array<i64: 1, 4, 16, 8>}, {pipeline_mode = #tpu.pipeline_mode<synchronous>, transform_indices = @transform_2, window_bounds = array<i64: 3, 3, 8, 16>}, {pipeline_mode = #tpu.pipeline_mode<synchronous>, transform_indices = @transform_3, window_bounds = array<i64: 1, 16>}, {pipeline_mode = #tpu.pipeline_mode<synchronous>, transform_indices = @transform_4, window_bounds = array<i64: 3, 3, 16, 16>}, {pipeline_mode = #tpu.pipeline_mode<synchronous>, transform_indices = @transform_5, window_bounds = array<i64: 1, 16>}, {pipeline_mode = #tpu.pipeline_mode<synchronous>, transform_indices = @transform_6, window_bounds = array<i64: 8, 16>}, {pipeline_mode = #tpu.pipeline_mode<synchronous>, transform_indices = @transform_7, window_bounds = array<i64: 1, 16>}, {transform_indices = @transform_8, window_bounds = array<i64: 1, 8, 16, 16>}]} {
    %cst = arith.constant 0.000000e+00 : f32
    %0 = vector.broadcast %cst : f32 to vector<12x1x8xf32>
    %c0 = arith.constant 0 : index
    %c0_0 = arith.constant 0 : index
    %c0_1 = arith.constant 0 : index
    %1 = vector.load %arg11[%c0, %c0_0, %c0_1] : memref<12x18x8xf32, #tpu.memory_space<vmem>>, vector<12x1x8xf32>
    tpu.vector_store %arg11[%c0, %c0_0, %c0_1], %0 {strides = array<i32>} : memref<12x18x8xf32, #tpu.memory_space<vmem>>, vector<12x1x8xf32>,
    %cst_2 = arith.constant 0.000000e+00 : f32
    %2 = vector.broadcast %cst_2 : f32 to vector<12x1x8xf32>
    %c0_3 = arith.constant 0 : index
    %c17 = arith.constant 17 : index
    %c0_4 = arith.constant 0 : index
    %3 = vector.load %arg11[%c0_3, %c17, %c0_4] : memref<12x18x8xf32, #tpu.memory_space<vmem>>, vector<12x1x8xf32>
    tpu.vector_store %arg11[%c0_3, %c17, %c0_4], %2 {strides = array<i32>} : memref<12x18x8xf32, #tpu.memory_space<vmem>>, vector<12x1x8xf32>,
    %c0_5 = arith.constant 0 : index
    %c0_6 = arith.constant 0 : index
    %c0_7 = arith.constant 0 : index
    %c0_8 = arith.constant 0 : index
    %4 = vector.load %arg3[%c0_5, %c0_6, %c0_7, %c0_8] : memref<1x4x16x8xf32, #tpu.memory_space<vmem>>, vector<1x2x16x8xf32>
    %5 = vector.shape_cast %4 : vector<1x2x16x8xf32> to vector<2x16x8xf32>
    %c0_9 = arith.constant 0 : index
    %c1 = arith.constant 1 : index
    %c0_10 = arith.constant 0 : index
    %6 = vector.load %arg11[%c0_9, %c1, %c0_10] : memref<12x18x8xf32, #tpu.memory_space<vmem>>, vector<2x16x8xf32>
    tpu.vector_store %arg11[%c0_9, %c1, %c0_10], %5 {strides = array<i32>} : memref<12x18x8xf32, #tpu.memory_space<vmem>>, vector<2x16x8xf32>,
    %c0_11 = arith.constant 0 : index
    %c0_12 = arith.constant 0 : index
    %c0_13 = arith.constant 0 : index
    %c0_14 = arith.constant 0 : index
    %7 = vector.load %arg2[%c0_11, %c0_12, %c0_13, %c0_14] : memref<1x8x16x8xf32, #tpu.memory_space<vmem>>, vector<1x8x16x8xf32>
    %8 = vector.shape_cast %7 : vector<1x8x16x8xf32> to vector<8x16x8xf32>
    %c2 = arith.constant 2 : index
    %c1_15 = arith.constant 1 : index
    %c0_16 = arith.constant 0 : index
    %9 = vector.load %arg11[%c2, %c1_15, %c0_16] : memref<12x18x8xf32, #tpu.memory_space<vmem>>, vector<8x16x8xf32>
    tpu.vector_store %arg11[%c2, %c1_15, %c0_16], %8 {strides = array<i32>} : memref<12x18x8xf32, #tpu.memory_space<vmem>>, vector<8x16x8xf32>,
    %c0_17 = arith.constant 0 : index
    %c2_18 = arith.constant 2 : index
    %c0_19 = arith.constant 0 : index
    %c0_20 = arith.constant 0 : index
    %10 = vector.load %arg3[%c0_17, %c2_18, %c0_19, %c0_20] : memref<1x4x16x8xf32, #tpu.memory_space<vmem>>, vector<1x2x16x8xf32>
    %11 = vector.shape_cast %10 : vector<1x2x16x8xf32> to vector<2x16x8xf32>
    %c10 = arith.constant 10 : index
    %c1_21 = arith.constant 1 : index
    %c0_22 = arith.constant 0 : index
    %12 = vector.load %arg11[%c10, %c1_21, %c0_22] : memref<12x18x8xf32, #tpu.memory_space<vmem>>, vector<2x16x8xf32>
    tpu.vector_store %arg11[%c10, %c1_21, %c0_22], %11 {strides = array<i32>} : memref<12x18x8xf32, #tpu.memory_space<vmem>>, vector<2x16x8xf32>,
    %cst_23 = arith.constant 0.000000e+00 : f32
    %13 = vector.broadcast %cst_23 : f32 to vector<10x1x16xf32>
    %c0_24 = arith.constant 0 : index
    %c0_25 = arith.constant 0 : index
    %c0_26 = arith.constant 0 : index
    %14 = vector.load %arg12[%c0_24, %c0_25, %c0_26] : memref<10x18x16xf32, #tpu.memory_space<vmem>>, vector<10x1x16xf32>
    tpu.vector_store %arg12[%c0_24, %c0_25, %c0_26], %13 {strides = array<i32>} : memref<10x18x16xf32, #tpu.memory_space<vmem>>, vector<10x1x16xf32>,
    %cst_27 = arith.constant 0.000000e+00 : f32
    %15 = vector.broadcast %cst_27 : f32 to vector<10x1x16xf32>
    %c0_28 = arith.constant 0 : index
    %c17_29 = arith.constant 17 : index
    %c0_30 = arith.constant 0 : index
    %16 = vector.load %arg12[%c0_28, %c17_29, %c0_30] : memref<10x18x16xf32, #tpu.memory_space<vmem>>, vector<10x1x16xf32>
    tpu.vector_store %arg12[%c0_28, %c17_29, %c0_30], %15 {strides = array<i32>} : memref<10x18x16xf32, #tpu.memory_space<vmem>>, vector<10x1x16xf32>,
    %cst_31 = arith.constant 0.000000e+00 : f32
    %17 = vector.broadcast %cst_31 : f32 to vector<128x16xf32>
    %c0_32 = arith.constant 0 : index
    %c0_33 = arith.constant 0 : index
    %18 = vector.load %arg13[%c0_32, %c0_33] : memref<128x16xf32, #tpu.memory_space<vmem>>, vector<128x16xf32>
    tpu.vector_store %arg13[%c0_32, %c0_33], %17 {strides = array<i32>} : memref<128x16xf32, #tpu.memory_space<vmem>>, vector<128x16xf32>,
    %c0_34 = arith.constant 0 : index
    %c0_35 = arith.constant 0 : index
    %c0_36 = arith.constant 0 : index
    %19 = vector.load %arg11[%c0_34, %c0_35, %c0_36] : memref<12x18x8xf32, #tpu.memory_space<vmem>>, vector<8x18x8xf32>
    %20 = vector.extract_strided_slice %19 {offsets = [0, 0, 0], sizes = [8, 16, 8], strides = [1, 1, 1]} : vector<8x18x8xf32> to vector<8x16x8xf32>
    %21 = vector.shape_cast %20 : vector<8x16x8xf32> to vector<128x8xf32>
    %c0_37 = arith.constant 0 : index
    %c0_38 = arith.constant 0 : index
    %22 = vector.load %arg13[%c0_37, %c0_38] : memref<128x16xf32, #tpu.memory_space<vmem>>, vector<128x16xf32>
    %c0_39 = arith.constant 0 : index
    %c0_40 = arith.constant 0 : index
    %c0_41 = arith.constant 0 : index
    %c0_42 = arith.constant 0 : index
    %23 = vector.load %arg4[%c0_39, %c0_40, %c0_41, %c0_42] : memref<3x3x8x16xf32, #tpu.memory_space<vmem>>, vector<1x1x8x16xf32>
    %24 = vector.shape_cast %23 : vector<1x1x8x16xf32> to vector<8x16xf32>
    %cst_43 = arith.constant dense<0.000000e+00> : vector<128x16xf32>
    %25 = tpu.matmul %21, %24, %cst_43 {dimension_numbers = #tpu.dot_dimension_numbers<[1], [0], [0], [1], [0, 0, 1, 1], [], []>} : vector<128x8xf32>, vector<8x16xf32>, vector<128x16xf32> -> vector<128x16xf32>
    %26 = arith.addf %22, %25 : vector<128x16xf32>
    %c0_44 = arith.constant 0 : index
    %c0_45 = arith.constant 0 : index
    %27 = vector.load %arg13[%c0_44, %c0_45] : memref<128x16xf32, #tpu.memory_space<vmem>>, vector<128x16xf32>
    tpu.vector_store %arg13[%c0_44, %c0_45], %26 {strides = array<i32>} : memref<128x16xf32, #tpu.memory_space<vmem>>, vector<128x16xf32>,
    %28 = vector.extract_strided_slice %19 {offsets = [0, 1, 0], sizes = [8, 16, 8], strides = [1, 1, 1]} : vector<8x18x8xf32> to vector<8x16x8xf32>
    %29 = vector.shape_cast %28 : vector<8x16x8xf32> to vector<128x8xf32>
    %c0_46 = arith.constant 0 : index
    %c0_47 = arith.constant 0 : index
    %30 = vector.load %arg13[%c0_46, %c0_47] : memref<128x16xf32, #tpu.memory_space<vmem>>, vector<128x16xf32>
    %c0_48 = arith.constant 0 : index
    %c1_49 = arith.constant 1 : index
    %c0_50 = arith.constant 0 : index
    %c0_51 = arith.constant 0 : index
    %31 = vector.load %arg4[%c0_48, %c1_49, %c0_50, %c0_51] : memref<3x3x8x16xf32, #tpu.memory_space<vmem>>, vector<1x1x8x16xf32>
    %32 = vector.shape_cast %31 : vector<1x1x8x16xf32> to vector<8x16xf32>
    %cst_52 = arith.constant dense<0.000000e+00> : vector<128x16xf32>
    %33 = tpu.matmul %29, %32, %cst_52 {dimension_numbers = #tpu.dot_dimension_numbers<[1], [0], [0], [1], [0, 0, 1, 1], [], []>} : vector<128x8xf32>, vector<8x16xf32>, vector<128x16xf32> -> vector<128x16xf32>
    %34 = arith.addf %30, %33 : vector<128x16xf32>
    %c0_53 = arith.constant 0 : index
    %c0_54 = arith.constant 0 : index
    %35 = vector.load %arg13[%c0_53, %c0_54] : memref<128x16xf32, #tpu.memory_space<vmem>>, vector<128x16xf32>
    tpu.vector_store %arg13[%c0_53, %c0_54], %34 {strides = array<i32>} : memref<128x16xf32, #tpu.memory_space<vmem>>, vector<128x16xf32>,
    %36 = vector.extract_strided_slice %19 {offsets = [0, 2, 0], sizes = [8, 16, 8], strides = [1, 1, 1]} : vector<8x18x8xf32> to vector<8x16x8xf32>
    %37 = vector.shape_cast %36 : vector<8x16x8xf32> to vector<128x8xf32>
    %c0_55 = arith.constant 0 : index
    %c0_56 = arith.constant 0 : index
    %38 = vector.load %arg13[%c0_55, %c0_56] : memref<128x16xf32, #tpu.memory_space<vmem>>, vector<128x16xf32>
    %c0_57 = arith.constant 0 : index
    %c2_58 = arith.constant 2 : index
    %c0_59 = arith.constant 0 : index
    %c0_60 = arith.constant 0 : index
    %39 = vector.load %arg4[%c0_57, %c2_58, %c0_59, %c0_60] : memref<3x3x8x16xf32, #tpu.memory_space<vmem>>, vector<1x1x8x16xf32>
    %40 = vector.shape_cast %39 : vector<1x1x8x16xf32> to vector<8x16xf32>
    %cst_61 = arith.constant dense<0.000000e+00> : vector<128x16xf32>
    %41 = tpu.matmul %37, %40, %cst_61 {dimension_numbers = #tpu.dot_dimension_numbers<[1], [0], [0], [1], [0, 0, 1, 1], [], []>} : vector<128x8xf32>, vector<8x16xf32>, vector<128x16xf32> -> vector<128x16xf32>
    %42 = arith.addf %38, %41 : vector<128x16xf32>
    %c0_62 = arith.constant 0 : index
    %c0_63 = arith.constant 0 : index
    %43 = vector.load %arg13[%c0_62, %c0_63] : memref<128x16xf32, #tpu.memory_space<vmem>>, vector<128x16xf32>
    tpu.vector_store %arg13[%c0_62, %c0_63], %42 {strides = array<i32>} : memref<128x16xf32, #tpu.memory_space<vmem>>, vector<128x16xf32>,
    %c1_64 = arith.constant 1 : index
    %c0_65 = arith.constant 0 : index
    %c0_66 = arith.constant 0 : index
    %44 = vector.load %arg11[%c1_64, %c0_65, %c0_66] : memref<12x18x8xf32, #tpu.memory_space<vmem>>, vector<8x18x8xf32>
    %45 = vector.extract_strided_slice %44 {offsets = [0, 0, 0], sizes = [8, 16, 8], strides = [1, 1, 1]} : vector<8x18x8xf32> to vector<8x16x8xf32>
    %46 = vector.shape_cast %45 : vector<8x16x8xf32> to vector<128x8xf32>
    %c0_67 = arith.constant 0 : index
    %c0_68 = arith.constant 0 : index
    %47 = vector.load %arg13[%c0_67, %c0_68] : memref<128x16xf32, #tpu.memory_space<vmem>>, vector<128x16xf32>
    %c1_69 = arith.constant 1 : index
    %c0_70 = arith.constant 0 : index
    %c0_71 = arith.constant 0 : index
    %c0_72 = arith.constant 0 : index
    %48 = vector.load %arg4[%c1_69, %c0_70, %c0_71, %c0_72] : memref<3x3x8x16xf32, #tpu.memory_space<vmem>>, vector<1x1x8x16xf32>
    %49 = vector.shape_cast %48 : vector<1x1x8x16xf32> to vector<8x16xf32>
    %cst_73 = arith.constant dense<0.000000e+00> : vector<128x16xf32>
    %50 = tpu.matmul %46, %49, %cst_73 {dimension_numbers = #tpu.dot_dimension_numbers<[1], [0], [0], [1], [0, 0, 1, 1], [], []>} : vector<128x8xf32>, vector<8x16xf32>, vector<128x16xf32> -> vector<128x16xf32>
    %51 = arith.addf %47, %50 : vector<128x16xf32>
    %c0_74 = arith.constant 0 : index
    %c0_75 = arith.constant 0 : index
    %52 = vector.load %arg13[%c0_74, %c0_75] : memref<128x16xf32, #tpu.memory_space<vmem>>, vector<128x16xf32>
    tpu.vector_store %arg13[%c0_74, %c0_75], %51 {strides = array<i32>} : memref<128x16xf32, #tpu.memory_space<vmem>>, vector<128x16xf32>,
    %53 = vector.extract_strided_slice %44 {offsets = [0, 1, 0], sizes = [8, 16, 8], strides = [1, 1, 1]} : vector<8x18x8xf32> to vector<8x16x8xf32>
    %54 = vector.shape_cast %53 : vector<8x16x8xf32> to vector<128x8xf32>
    %c0_76 = arith.constant 0 : index
    %c0_77 = arith.constant 0 : index
    %55 = vector.load %arg13[%c0_76, %c0_77] : memref<128x16xf32, #tpu.memory_space<vmem>>, vector<128x16xf32>
    %c1_78 = arith.constant 1 : index
    %c1_79 = arith.constant 1 : index
    %c0_80 = arith.constant 0 : index
    %c0_81 = arith.constant 0 : index
    %56 = vector.load %arg4[%c1_78, %c1_79, %c0_80, %c0_81] : memref<3x3x8x16xf32, #tpu.memory_space<vmem>>, vector<1x1x8x16xf32>
    %57 = vector.shape_cast %56 : vector<1x1x8x16xf32> to vector<8x16xf32>
    %cst_82 = arith.constant dense<0.000000e+00> : vector<128x16xf32>
    %58 = tpu.matmul %54, %57, %cst_82 {dimension_numbers = #tpu.dot_dimension_numbers<[1], [0], [0], [1], [0, 0, 1, 1], [], []>} : vector<128x8xf32>, vector<8x16xf32>, vector<128x16xf32> -> vector<128x16xf32>
    %59 = arith.addf %55, %58 : vector<128x16xf32>
    %c0_83 = arith.constant 0 : index
    %c0_84 = arith.constant 0 : index
    %60 = vector.load %arg13[%c0_83, %c0_84] : memref<128x16xf32, #tpu.memory_space<vmem>>, vector<128x16xf32>
    tpu.vector_store %arg13[%c0_83, %c0_84], %59 {strides = array<i32>} : memref<128x16xf32, #tpu.memory_space<vmem>>, vector<128x16xf32>,
    %61 = vector.extract_strided_slice %44 {offsets = [0, 2, 0], sizes = [8, 16, 8], strides = [1, 1, 1]} : vector<8x18x8xf32> to vector<8x16x8xf32>
    %62 = vector.shape_cast %61 : vector<8x16x8xf32> to vector<128x8xf32>
    %c0_85 = arith.constant 0 : index
    %c0_86 = arith.constant 0 : index
    %63 = vector.load %arg13[%c0_85, %c0_86] : memref<128x16xf32, #tpu.memory_space<vmem>>, vector<128x16xf32>
    %c1_87 = arith.constant 1 : index
    %c2_88 = arith.constant 2 : index
    %c0_89 = arith.constant 0 : index
    %c0_90 = arith.constant 0 : index
    %64 = vector.load %arg4[%c1_87, %c2_88, %c0_89, %c0_90] : memref<3x3x8x16xf32, #tpu.memory_space<vmem>>, vector<1x1x8x16xf32>
    %65 = vector.shape_cast %64 : vector<1x1x8x16xf32> to vector<8x16xf32>
    %cst_91 = arith.constant dense<0.000000e+00> : vector<128x16xf32>
    %66 = tpu.matmul %62, %65, %cst_91 {dimension_numbers = #tpu.dot_dimension_numbers<[1], [0], [0], [1], [0, 0, 1, 1], [], []>} : vector<128x8xf32>, vector<8x16xf32>, vector<128x16xf32> -> vector<128x16xf32>
    %67 = arith.addf %63, %66 : vector<128x16xf32>
    %c0_92 = arith.constant 0 : index
    %c0_93 = arith.constant 0 : index
    %68 = vector.load %arg13[%c0_92, %c0_93] : memref<128x16xf32, #tpu.memory_space<vmem>>, vector<128x16xf32>
    tpu.vector_store %arg13[%c0_92, %c0_93], %67 {strides = array<i32>} : memref<128x16xf32, #tpu.memory_space<vmem>>, vector<128x16xf32>,
    %c2_94 = arith.constant 2 : index
    %c0_95 = arith.constant 0 : index
    %c0_96 = arith.constant 0 : index
    %69 = vector.load %arg11[%c2_94, %c0_95, %c0_96] : memref<12x18x8xf32, #tpu.memory_space<vmem>>, vector<8x18x8xf32>
    %70 = vector.extract_strided_slice %69 {offsets = [0, 0, 0], sizes = [8, 16, 8], strides = [1, 1, 1]} : vector<8x18x8xf32> to vector<8x16x8xf32>
    %71 = vector.shape_cast %70 : vector<8x16x8xf32> to vector<128x8xf32>
    %c0_97 = arith.constant 0 : index
    %c0_98 = arith.constant 0 : index
    %72 = vector.load %arg13[%c0_97, %c0_98] : memref<128x16xf32, #tpu.memory_space<vmem>>, vector<128x16xf32>
    %c2_99 = arith.constant 2 : index
    %c0_100 = arith.constant 0 : index
    %c0_101 = arith.constant 0 : index
    %c0_102 = arith.constant 0 : index
    %73 = vector.load %arg4[%c2_99, %c0_100, %c0_101, %c0_102] : memref<3x3x8x16xf32, #tpu.memory_space<vmem>>, vector<1x1x8x16xf32>
    %74 = vector.shape_cast %73 : vector<1x1x8x16xf32> to vector<8x16xf32>
    %cst_103 = arith.constant dense<0.000000e+00> : vector<128x16xf32>
    %75 = tpu.matmul %71, %74, %cst_103 {dimension_numbers = #tpu.dot_dimension_numbers<[1], [0], [0], [1], [0, 0, 1, 1], [], []>} : vector<128x8xf32>, vector<8x16xf32>, vector<128x16xf32> -> vector<128x16xf32>
    %76 = arith.addf %72, %75 : vector<128x16xf32>
    %c0_104 = arith.constant 0 : index
    %c0_105 = arith.constant 0 : index
    %77 = vector.load %arg13[%c0_104, %c0_105] : memref<128x16xf32, #tpu.memory_space<vmem>>, vector<128x16xf32>
    tpu.vector_store %arg13[%c0_104, %c0_105], %76 {strides = array<i32>} : memref<128x16xf32, #tpu.memory_space<vmem>>, vector<128x16xf32>,
    %78 = vector.extract_strided_slice %69 {offsets = [0, 1, 0], sizes = [8, 16, 8], strides = [1, 1, 1]} : vector<8x18x8xf32> to vector<8x16x8xf32>
    %79 = vector.shape_cast %78 : vector<8x16x8xf32> to vector<128x8xf32>
    %c0_106 = arith.constant 0 : index
    %c0_107 = arith.constant 0 : index
    %80 = vector.load %arg13[%c0_106, %c0_107] : memref<128x16xf32, #tpu.memory_space<vmem>>, vector<128x16xf32>
    %c2_108 = arith.constant 2 : index
    %c1_109 = arith.constant 1 : index
    %c0_110 = arith.constant 0 : index
    %c0_111 = arith.constant 0 : index
    %81 = vector.load %arg4[%c2_108, %c1_109, %c0_110, %c0_111] : memref<3x3x8x16xf32, #tpu.memory_space<vmem>>, vector<1x1x8x16xf32>
    %82 = vector.shape_cast %81 : vector<1x1x8x16xf32> to vector<8x16xf32>
    %cst_112 = arith.constant dense<0.000000e+00> : vector<128x16xf32>
    %83 = tpu.matmul %79, %82, %cst_112 {dimension_numbers = #tpu.dot_dimension_numbers<[1], [0], [0], [1], [0, 0, 1, 1], [], []>} : vector<128x8xf32>, vector<8x16xf32>, vector<128x16xf32> -> vector<128x16xf32>
    %84 = arith.addf %80, %83 : vector<128x16xf32>
    %c0_113 = arith.constant 0 : index
    %c0_114 = arith.constant 0 : index
    %85 = vector.load %arg13[%c0_113, %c0_114] : memref<128x16xf32, #tpu.memory_space<vmem>>, vector<128x16xf32>
    tpu.vector_store %arg13[%c0_113, %c0_114], %84 {strides = array<i32>} : memref<128x16xf32, #tpu.memory_space<vmem>>, vector<128x16xf32>,
    %86 = vector.extract_strided_slice %69 {offsets = [0, 2, 0], sizes = [8, 16, 8], strides = [1, 1, 1]} : vector<8x18x8xf32> to vector<8x16x8xf32>
    %87 = vector.shape_cast %86 : vector<8x16x8xf32> to vector<128x8xf32>
    %c0_115 = arith.constant 0 : index
    %c0_116 = arith.constant 0 : index
    %88 = vector.load %arg13[%c0_115, %c0_116] : memref<128x16xf32, #tpu.memory_space<vmem>>, vector<128x16xf32>
    %c2_117 = arith.constant 2 : index
    %c2_118 = arith.constant 2 : index
    %c0_119 = arith.constant 0 : index
    %c0_120 = arith.constant 0 : index
    %89 = vector.load %arg4[%c2_117, %c2_118, %c0_119, %c0_120] : memref<3x3x8x16xf32, #tpu.memory_space<vmem>>, vector<1x1x8x16xf32>
    %90 = vector.shape_cast %89 : vector<1x1x8x16xf32> to vector<8x16xf32>
    %cst_121 = arith.constant dense<0.000000e+00> : vector<128x16xf32>
    %91 = tpu.matmul %87, %90, %cst_121 {dimension_numbers = #tpu.dot_dimension_numbers<[1], [0], [0], [1], [0, 0, 1, 1], [], []>} : vector<128x8xf32>, vector<8x16xf32>, vector<128x16xf32> -> vector<128x16xf32>
    %92 = arith.addf %88, %91 : vector<128x16xf32>
    %c0_122 = arith.constant 0 : index
    %c0_123 = arith.constant 0 : index
    %93 = vector.load %arg13[%c0_122, %c0_123] : memref<128x16xf32, #tpu.memory_space<vmem>>, vector<128x16xf32>
    tpu.vector_store %arg13[%c0_122, %c0_123], %92 {strides = array<i32>} : memref<128x16xf32, #tpu.memory_space<vmem>>, vector<128x16xf32>,
    %c0_124 = arith.constant 0 : index
    %c0_125 = arith.constant 0 : index
    %94 = vector.load %arg13[%c0_124, %c0_125] : memref<128x16xf32, #tpu.memory_space<vmem>>, vector<128x16xf32>
    %c0_126 = arith.constant 0 : index
    %c0_127 = arith.constant 0 : index
    %95 = vector.load %arg5[%c0_126, %c0_127] : memref<1x16xf32, #tpu.memory_space<vmem>>, vector<1x16xf32>
    %96 = vector.broadcast %95 : vector<1x16xf32> to vector<128x16xf32>
    %97 = arith.addf %94, %96 : vector<128x16xf32>
    %cst_128 = arith.constant 0.000000e+00 : f32
    %98 = vector.broadcast %cst_128 : f32 to vector<128x16xf32>
    %99 = arith.cmpf oge, %97, %98 : vector<128x16xf32>
    %cst_129 = arith.constant 2.000000e-01 : f32
    %100 = vector.broadcast %cst_129 : f32 to vector<128x16xf32>
    %101 = arith.mulf %97, %100 : vector<128x16xf32>
    %102 = arith.select %99, %97, %101 : vector<128x16xi1>, vector<128x16xf32>
    %103 = vector.shape_cast %102 : vector<128x16xf32> to vector<8x16x16xf32>
    %c0_130 = arith.constant 0 : index
    %c1_131 = arith.constant 1 : index
    %c0_132 = arith.constant 0 : index
    %104 = vector.load %arg12[%c0_130, %c1_131, %c0_132] : memref<10x18x16xf32, #tpu.memory_space<vmem>>, vector<8x16x16xf32>
    tpu.vector_store %arg12[%c0_130, %c1_131, %c0_132], %103 {strides = array<i32>} : memref<10x18x16xf32, #tpu.memory_space<vmem>>, vector<8x16x16xf32>,
    %cst_133 = arith.constant 0.000000e+00 : f32
    %105 = vector.broadcast %cst_133 : f32 to vector<32x16xf32>
    %c0_134 = arith.constant 0 : index
    %c0_135 = arith.constant 0 : index
    %106 = vector.load %arg13[%c0_134, %c0_135] : memref<128x16xf32, #tpu.memory_space<vmem>>, vector<32x16xf32>
    tpu.vector_store %arg13[%c0_134, %c0_135], %105 {strides = array<i32>} : memref<128x16xf32, #tpu.memory_space<vmem>>, vector<32x16xf32>,
    %c8 = arith.constant 8 : index
    %c0_136 = arith.constant 0 : index
    %c0_137 = arith.constant 0 : index
    %107 = vector.load %arg11[%c8, %c0_136, %c0_137] : memref<12x18x8xf32, #tpu.memory_space<vmem>>, vector<2x18x8xf32>
    %108 = vector.extract_strided_slice %107 {offsets = [0, 0, 0], sizes = [2, 16, 8], strides = [1, 1, 1]} : vector<2x18x8xf32> to vector<2x16x8xf32>
    %109 = vector.shape_cast %108 : vector<2x16x8xf32> to vector<32x8xf32>
    %c0_138 = arith.constant 0 : index
    %c0_139 = arith.constant 0 : index
    %110 = vector.load %arg13[%c0_138, %c0_139] : memref<128x16xf32, #tpu.memory_space<vmem>>, vector<32x16xf32>
    %c0_140 = arith.constant 0 : index
    %c0_141 = arith.constant 0 : index
    %c0_142 = arith.constant 0 : index
    %c0_143 = arith.constant 0 : index
    %111 = vector.load %arg4[%c0_140, %c0_141, %c0_142, %c0_143] : memref<3x3x8x16xf32, #tpu.memory_space<vmem>>, vector<1x1x8x16xf32>
    %112 = vector.shape_cast %111 : vector<1x1x8x16xf32> to vector<8x16xf32>
    %cst_144 = arith.constant dense<0.000000e+00> : vector<32x16xf32>
    %113 = tpu.matmul %109, %112, %cst_144 {dimension_numbers = #tpu.dot_dimension_numbers<[1], [0], [0], [1], [0, 0, 1, 1], [], []>} : vector<32x8xf32>, vector<8x16xf32>, vector<32x16xf32> -> vector<32x16xf32>
    %114 = arith.addf %110, %113 : vector<32x16xf32>
    %c0_145 = arith.constant 0 : index
    %c0_146 = arith.constant 0 : index
    %115 = vector.load %arg13[%c0_145, %c0_146] : memref<128x16xf32, #tpu.memory_space<vmem>>, vector<32x16xf32>
    tpu.vector_store %arg13[%c0_145, %c0_146], %114 {strides = array<i32>} : memref<128x16xf32, #tpu.memory_space<vmem>>, vector<32x16xf32>,
    %116 = vector.extract_strided_slice %107 {offsets = [0, 1, 0], sizes = [2, 16, 8], strides = [1, 1, 1]} : vector<2x18x8xf32> to vector<2x16x8xf32>
    %117 = vector.shape_cast %116 : vector<2x16x8xf32> to vector<32x8xf32>
    %c0_147 = arith.constant 0 : index
    %c0_148 = arith.constant 0 : index
    %118 = vector.load %arg13[%c0_147, %c0_148] : memref<128x16xf32, #tpu.memory_space<vmem>>, vector<32x16xf32>
    %c0_149 = arith.constant 0 : index
    %c1_150 = arith.constant 1 : index
    %c0_151 = arith.constant 0 : index
    %c0_152 = arith.constant 0 : index
    %119 = vector.load %arg4[%c0_149, %c1_150, %c0_151, %c0_152] : memref<3x3x8x16xf32, #tpu.memory_space<vmem>>, vector<1x1x8x16xf32>
    %120 = vector.shape_cast %119 : vector<1x1x8x16xf32> to vector<8x16xf32>
    %cst_153 = arith.constant dense<0.000000e+00> : vector<32x16xf32>
    %121 = tpu.matmul %117, %120, %cst_153 {dimension_numbers = #tpu.dot_dimension_numbers<[1], [0], [0], [1], [0, 0, 1, 1], [], []>} : vector<32x8xf32>, vector<8x16xf32>, vector<32x16xf32> -> vector<32x16xf32>
    %122 = arith.addf %118, %121 : vector<32x16xf32>
    %c0_154 = arith.constant 0 : index
    %c0_155 = arith.constant 0 : index
    %123 = vector.load %arg13[%c0_154, %c0_155] : memref<128x16xf32, #tpu.memory_space<vmem>>, vector<32x16xf32>
    tpu.vector_store %arg13[%c0_154, %c0_155], %122 {strides = array<i32>} : memref<128x16xf32, #tpu.memory_space<vmem>>, vector<32x16xf32>,
    %124 = vector.extract_strided_slice %107 {offsets = [0, 2, 0], sizes = [2, 16, 8], strides = [1, 1, 1]} : vector<2x18x8xf32> to vector<2x16x8xf32>
    %125 = vector.shape_cast %124 : vector<2x16x8xf32> to vector<32x8xf32>
    %c0_156 = arith.constant 0 : index
    %c0_157 = arith.constant 0 : index
    %126 = vector.load %arg13[%c0_156, %c0_157] : memref<128x16xf32, #tpu.memory_space<vmem>>, vector<32x16xf32>
    %c0_158 = arith.constant 0 : index
    %c2_159 = arith.constant 2 : index
    %c0_160 = arith.constant 0 : index
    %c0_161 = arith.constant 0 : index
    %127 = vector.load %arg4[%c0_158, %c2_159, %c0_160, %c0_161] : memref<3x3x8x16xf32, #tpu.memory_space<vmem>>, vector<1x1x8x16xf32>
    %128 = vector.shape_cast %127 : vector<1x1x8x16xf32> to vector<8x16xf32>
    %cst_162 = arith.constant dense<0.000000e+00> : vector<32x16xf32>
    %129 = tpu.matmul %125, %128, %cst_162 {dimension_numbers = #tpu.dot_dimension_numbers<[1], [0], [0], [1], [0, 0, 1, 1], [], []>} : vector<32x8xf32>, vector<8x16xf32>, vector<32x16xf32> -> vector<32x16xf32>
    %130 = arith.addf %126, %129 : vector<32x16xf32>
    %c0_163 = arith.constant 0 : index
    %c0_164 = arith.constant 0 : index
    %131 = vector.load %arg13[%c0_163, %c0_164] : memref<128x16xf32, #tpu.memory_space<vmem>>, vector<32x16xf32>
    tpu.vector_store %arg13[%c0_163, %c0_164], %130 {strides = array<i32>} : memref<128x16xf32, #tpu.memory_space<vmem>>, vector<32x16xf32>,
    %c9 = arith.constant 9 : index
    %c0_165 = arith.constant 0 : index
    %c0_166 = arith.constant 0 : index
    %132 = vector.load %arg11[%c9, %c0_165, %c0_166] : memref<12x18x8xf32, #tpu.memory_space<vmem>>, vector<2x18x8xf32>
    %133 = vector.extract_strided_slice %132 {offsets = [0, 0, 0], sizes = [2, 16, 8], strides = [1, 1, 1]} : vector<2x18x8xf32> to vector<2x16x8xf32>
    %134 = vector.shape_cast %133 : vector<2x16x8xf32> to vector<32x8xf32>
    %c0_167 = arith.constant 0 : index
    %c0_168 = arith.constant 0 : index
    %135 = vector.load %arg13[%c0_167, %c0_168] : memref<128x16xf32, #tpu.memory_space<vmem>>, vector<32x16xf32>
    %c1_169 = arith.constant 1 : index
    %c0_170 = arith.constant 0 : index
    %c0_171 = arith.constant 0 : index
    %c0_172 = arith.constant 0 : index
    %136 = vector.load %arg4[%c1_169, %c0_170, %c0_171, %c0_172] : memref<3x3x8x16xf32, #tpu.memory_space<vmem>>, vector<1x1x8x16xf32>
    %137 = vector.shape_cast %136 : vector<1x1x8x16xf32> to vector<8x16xf32>
    %cst_173 = arith.constant dense<0.000000e+00> : vector<32x16xf32>
    %138 = tpu.matmul %134, %137, %cst_173 {dimension_numbers = #tpu.dot_dimension_numbers<[1], [0], [0], [1], [0, 0, 1, 1], [], []>} : vector<32x8xf32>, vector<8x16xf32>, vector<32x16xf32> -> vector<32x16xf32>
    %139 = arith.addf %135, %138 : vector<32x16xf32>
    %c0_174 = arith.constant 0 : index
    %c0_175 = arith.constant 0 : index
    %140 = vector.load %arg13[%c0_174, %c0_175] : memref<128x16xf32, #tpu.memory_space<vmem>>, vector<32x16xf32>
    tpu.vector_store %arg13[%c0_174, %c0_175], %139 {strides = array<i32>} : memref<128x16xf32, #tpu.memory_space<vmem>>, vector<32x16xf32>,
    %141 = vector.extract_strided_slice %132 {offsets = [0, 1, 0], sizes = [2, 16, 8], strides = [1, 1, 1]} : vector<2x18x8xf32> to vector<2x16x8xf32>
    %142 = vector.shape_cast %141 : vector<2x16x8xf32> to vector<32x8xf32>
    %c0_176 = arith.constant 0 : index
    %c0_177 = arith.constant 0 : index
    %143 = vector.load %arg13[%c0_176, %c0_177] : memref<128x16xf32, #tpu.memory_space<vmem>>, vector<32x16xf32>
    %c1_178 = arith.constant 1 : index
    %c1_179 = arith.constant 1 : index
    %c0_180 = arith.constant 0 : index
    %c0_181 = arith.constant 0 : index
    %144 = vector.load %arg4[%c1_178, %c1_179, %c0_180, %c0_181] : memref<3x3x8x16xf32, #tpu.memory_space<vmem>>, vector<1x1x8x16xf32>
    %145 = vector.shape_cast %144 : vector<1x1x8x16xf32> to vector<8x16xf32>
    %cst_182 = arith.constant dense<0.000000e+00> : vector<32x16xf32>
    %146 = tpu.matmul %142, %145, %cst_182 {dimension_numbers = #tpu.dot_dimension_numbers<[1], [0], [0], [1], [0, 0, 1, 1], [], []>} : vector<32x8xf32>, vector<8x16xf32>, vector<32x16xf32> -> vector<32x16xf32>
    %147 = arith.addf %143, %146 : vector<32x16xf32>
    %c0_183 = arith.constant 0 : index
    %c0_184 = arith.constant 0 : index
    %148 = vector.load %arg13[%c0_183, %c0_184] : memref<128x16xf32, #tpu.memory_space<vmem>>, vector<32x16xf32>
    tpu.vector_store %arg13[%c0_183, %c0_184], %147 {strides = array<i32>} : memref<128x16xf32, #tpu.memory_space<vmem>>, vector<32x16xf32>,
    %149 = vector.extract_strided_slice %132 {offsets = [0, 2, 0], sizes = [2, 16, 8], strides = [1, 1, 1]} : vector<2x18x8xf32> to vector<2x16x8xf32>
    %150 = vector.shape_cast %149 : vector<2x16x8xf32> to vector<32x8xf32>
    %c0_185 = arith.constant 0 : index
    %c0_186 = arith.constant 0 : index
    %151 = vector.load %arg13[%c0_185, %c0_186] : memref<128x16xf32, #tpu.memory_space<vmem>>, vector<32x16xf32>
    %c1_187 = arith.constant 1 : index
    %c2_188 = arith.constant 2 : index
    %c0_189 = arith.constant 0 : index
    %c0_190 = arith.constant 0 : index
    %152 = vector.load %arg4[%c1_187, %c2_188, %c0_189, %c0_190] : memref<3x3x8x16xf32, #tpu.memory_space<vmem>>, vector<1x1x8x16xf32>
    %153 = vector.shape_cast %152 : vector<1x1x8x16xf32> to vector<8x16xf32>
    %cst_191 = arith.constant dense<0.000000e+00> : vector<32x16xf32>
    %154 = tpu.matmul %150, %153, %cst_191 {dimension_numbers = #tpu.dot_dimension_numbers<[1], [0], [0], [1], [0, 0, 1, 1], [], []>} : vector<32x8xf32>, vector<8x16xf32>, vector<32x16xf32> -> vector<32x16xf32>
    %155 = arith.addf %151, %154 : vector<32x16xf32>
    %c0_192 = arith.constant 0 : index
    %c0_193 = arith.constant 0 : index
    %156 = vector.load %arg13[%c0_192, %c0_193] : memref<128x16xf32, #tpu.memory_space<vmem>>, vector<32x16xf32>
    tpu.vector_store %arg13[%c0_192, %c0_193], %155 {strides = array<i32>} : memref<128x16xf32, #tpu.memory_space<vmem>>, vector<32x16xf32>,
    %c10_194 = arith.constant 10 : index
    %c0_195 = arith.constant 0 : index
    %c0_196 = arith.constant 0 : index
    %157 = vector.load %arg11[%c10_194, %c0_195, %c0_196] : memref<12x18x8xf32, #tpu.memory_space<vmem>>, vector<2x18x8xf32>
    %158 = vector.extract_strided_slice %157 {offsets = [0, 0, 0], sizes = [2, 16, 8], strides = [1, 1, 1]} : vector<2x18x8xf32> to vector<2x16x8xf32>
    %159 = vector.shape_cast %158 : vector<2x16x8xf32> to vector<32x8xf32>
    %c0_197 = arith.constant 0 : index
    %c0_198 = arith.constant 0 : index
    %160 = vector.load %arg13[%c0_197, %c0_198] : memref<128x16xf32, #tpu.memory_space<vmem>>, vector<32x16xf32>
    %c2_199 = arith.constant 2 : index
    %c0_200 = arith.constant 0 : index
    %c0_201 = arith.constant 0 : index
    %c0_202 = arith.constant 0 : index
    %161 = vector.load %arg4[%c2_199, %c0_200, %c0_201, %c0_202] : memref<3x3x8x16xf32, #tpu.memory_space<vmem>>, vector<1x1x8x16xf32>
    %162 = vector.shape_cast %161 : vector<1x1x8x16xf32> to vector<8x16xf32>
    %cst_203 = arith.constant dense<0.000000e+00> : vector<32x16xf32>
    %163 = tpu.matmul %159, %162, %cst_203 {dimension_numbers = #tpu.dot_dimension_numbers<[1], [0], [0], [1], [0, 0, 1, 1], [], []>} : vector<32x8xf32>, vector<8x16xf32>, vector<32x16xf32> -> vector<32x16xf32>
    %164 = arith.addf %160, %163 : vector<32x16xf32>
    %c0_204 = arith.constant 0 : index
    %c0_205 = arith.constant 0 : index
    %165 = vector.load %arg13[%c0_204, %c0_205] : memref<128x16xf32, #tpu.memory_space<vmem>>, vector<32x16xf32>
    tpu.vector_store %arg13[%c0_204, %c0_205], %164 {strides = array<i32>} : memref<128x16xf32, #tpu.memory_space<vmem>>, vector<32x16xf32>,
    %166 = vector.extract_strided_slice %157 {offsets = [0, 1, 0], sizes = [2, 16, 8], strides = [1, 1, 1]} : vector<2x18x8xf32> to vector<2x16x8xf32>
    %167 = vector.shape_cast %166 : vector<2x16x8xf32> to vector<32x8xf32>
    %c0_206 = arith.constant 0 : index
    %c0_207 = arith.constant 0 : index
    %168 = vector.load %arg13[%c0_206, %c0_207] : memref<128x16xf32, #tpu.memory_space<vmem>>, vector<32x16xf32>
    %c2_208 = arith.constant 2 : index
    %c1_209 = arith.constant 1 : index
    %c0_210 = arith.constant 0 : index
    %c0_211 = arith.constant 0 : index
    %169 = vector.load %arg4[%c2_208, %c1_209, %c0_210, %c0_211] : memref<3x3x8x16xf32, #tpu.memory_space<vmem>>, vector<1x1x8x16xf32>
    %170 = vector.shape_cast %169 : vector<1x1x8x16xf32> to vector<8x16xf32>
    %cst_212 = arith.constant dense<0.000000e+00> : vector<32x16xf32>
    %171 = tpu.matmul %167, %170, %cst_212 {dimension_numbers = #tpu.dot_dimension_numbers<[1], [0], [0], [1], [0, 0, 1, 1], [], []>} : vector<32x8xf32>, vector<8x16xf32>, vector<32x16xf32> -> vector<32x16xf32>
    %172 = arith.addf %168, %171 : vector<32x16xf32>
    %c0_213 = arith.constant 0 : index
    %c0_214 = arith.constant 0 : index
    %173 = vector.load %arg13[%c0_213, %c0_214] : memref<128x16xf32, #tpu.memory_space<vmem>>, vector<32x16xf32>
    tpu.vector_store %arg13[%c0_213, %c0_214], %172 {strides = array<i32>} : memref<128x16xf32, #tpu.memory_space<vmem>>, vector<32x16xf32>,
    %174 = vector.extract_strided_slice %157 {offsets = [0, 2, 0], sizes = [2, 16, 8], strides = [1, 1, 1]} : vector<2x18x8xf32> to vector<2x16x8xf32>
    %175 = vector.shape_cast %174 : vector<2x16x8xf32> to vector<32x8xf32>
    %c0_215 = arith.constant 0 : index
    %c0_216 = arith.constant 0 : index
    %176 = vector.load %arg13[%c0_215, %c0_216] : memref<128x16xf32, #tpu.memory_space<vmem>>, vector<32x16xf32>
    %c2_217 = arith.constant 2 : index
    %c2_218 = arith.constant 2 : index
    %c0_219 = arith.constant 0 : index
    %c0_220 = arith.constant 0 : index
    %177 = vector.load %arg4[%c2_217, %c2_218, %c0_219, %c0_220] : memref<3x3x8x16xf32, #tpu.memory_space<vmem>>, vector<1x1x8x16xf32>
    %178 = vector.shape_cast %177 : vector<1x1x8x16xf32> to vector<8x16xf32>
    %cst_221 = arith.constant dense<0.000000e+00> : vector<32x16xf32>
    %179 = tpu.matmul %175, %178, %cst_221 {dimension_numbers = #tpu.dot_dimension_numbers<[1], [0], [0], [1], [0, 0, 1, 1], [], []>} : vector<32x8xf32>, vector<8x16xf32>, vector<32x16xf32> -> vector<32x16xf32>
    %180 = arith.addf %176, %179 : vector<32x16xf32>
    %c0_222 = arith.constant 0 : index
    %c0_223 = arith.constant 0 : index
    %181 = vector.load %arg13[%c0_222, %c0_223] : memref<128x16xf32, #tpu.memory_space<vmem>>, vector<32x16xf32>
    tpu.vector_store %arg13[%c0_222, %c0_223], %180 {strides = array<i32>} : memref<128x16xf32, #tpu.memory_space<vmem>>, vector<32x16xf32>,
    %c0_224 = arith.constant 0 : index
    %c0_225 = arith.constant 0 : index
    %182 = vector.load %arg13[%c0_224, %c0_225] : memref<128x16xf32, #tpu.memory_space<vmem>>, vector<32x16xf32>
    %c0_226 = arith.constant 0 : index
    %c0_227 = arith.constant 0 : index
    %183 = vector.load %arg5[%c0_226, %c0_227] : memref<1x16xf32, #tpu.memory_space<vmem>>, vector<1x16xf32>
    %184 = vector.broadcast %183 : vector<1x16xf32> to vector<32x16xf32>
    %185 = arith.addf %182, %184 : vector<32x16xf32>
    %cst_228 = arith.constant 0.000000e+00 : f32
    %186 = vector.broadcast %cst_228 : f32 to vector<32x16xf32>
    %187 = arith.cmpf oge, %185, %186 : vector<32x16xf32>
    %cst_229 = arith.constant 2.000000e-01 : f32
    %188 = vector.broadcast %cst_229 : f32 to vector<32x16xf32>
    %189 = arith.mulf %185, %188 : vector<32x16xf32>
    %190 = arith.select %187, %185, %189 : vector<32x16xi1>, vector<32x16xf32>
    %191 = vector.shape_cast %190 : vector<32x16xf32> to vector<2x16x16xf32>
    %c8_230 = arith.constant 8 : index
    %c1_231 = arith.constant 1 : index
    %c0_232 = arith.constant 0 : index
    %192 = vector.load %arg12[%c8_230, %c1_231, %c0_232] : memref<10x18x16xf32, #tpu.memory_space<vmem>>, vector<2x16x16xf32>
    tpu.vector_store %arg12[%c8_230, %c1_231, %c0_232], %191 {strides = array<i32>} : memref<10x18x16xf32, #tpu.memory_space<vmem>>, vector<2x16x16xf32>,
    %c0_i32 = arith.constant 0 : i32
    %193 = arith.cmpi eq, %arg1, %c0_i32 : i32
    %194 = arith.extui %193 : i1 to i32
    %c0_i32_233 = arith.constant 0 : i32
    %195 = arith.cmpi ne, %194, %c0_i32_233 : i32
    scf.if %195 {
      %cst_346 = arith.constant 0.000000e+00 : f32
      %297 = vector.broadcast %cst_346 : f32 to vector<1x18x16xf32>
      %c0_347 = arith.constant 0 : index
      %c0_348 = arith.constant 0 : index
      %c0_349 = arith.constant 0 : index
      %298 = vector.load %arg12[%c0_347, %c0_348, %c0_349] : memref<10x18x16xf32, #tpu.memory_space<vmem>>, vector<1x18x16xf32>
      tpu.vector_store %arg12[%c0_347, %c0_348, %c0_349], %297 {strides = array<i32>} : memref<10x18x16xf32, #tpu.memory_space<vmem>>, vector<1x18x16xf32>,
    } else {
    }
    %c1_i32 = arith.constant 1 : i32
    %196 = arith.cmpi eq, %arg1, %c1_i32 : i32
    %197 = arith.extui %196 : i1 to i32
    %c0_i32_234 = arith.constant 0 : i32
    %198 = arith.cmpi ne, %197, %c0_i32_234 : i32
    scf.if %198 {
      %cst_346 = arith.constant 0.000000e+00 : f32
      %297 = vector.broadcast %cst_346 : f32 to vector<1x18x16xf32>
      %c9_347 = arith.constant 9 : index
      %c0_348 = arith.constant 0 : index
      %c0_349 = arith.constant 0 : index
      %298 = vector.load %arg12[%c9_347, %c0_348, %c0_349] : memref<10x18x16xf32, #tpu.memory_space<vmem>>, vector<1x18x16xf32>
      tpu.vector_store %arg12[%c9_347, %c0_348, %c0_349], %297 {strides = array<i32>} : memref<10x18x16xf32, #tpu.memory_space<vmem>>, vector<1x18x16xf32>,
    } else {
    }
    %cst_235 = arith.constant 0.000000e+00 : f32
    %199 = vector.broadcast %cst_235 : f32 to vector<128x16xf32>
    %c0_236 = arith.constant 0 : index
    %c0_237 = arith.constant 0 : index
    %200 = vector.load %arg13[%c0_236, %c0_237] : memref<128x16xf32, #tpu.memory_space<vmem>>, vector<128x16xf32>
    tpu.vector_store %arg13[%c0_236, %c0_237], %199 {strides = array<i32>} : memref<128x16xf32, #tpu.memory_space<vmem>>, vector<128x16xf32>,
    %c0_238 = arith.constant 0 : index
    %c0_239 = arith.constant 0 : index
    %c0_240 = arith.constant 0 : index
    %201 = vector.load %arg12[%c0_238, %c0_239, %c0_240] : memref<10x18x16xf32, #tpu.memory_space<vmem>>, vector<8x18x16xf32>
    %202 = vector.extract_strided_slice %201 {offsets = [0, 0, 0], sizes = [8, 16, 16], strides = [1, 1, 1]} : vector<8x18x16xf32> to vector<8x16x16xf32>
    %203 = vector.shape_cast %202 : vector<8x16x16xf32> to vector<128x16xf32>
    %c0_241 = arith.constant 0 : index
    %c0_242 = arith.constant 0 : index
    %204 = vector.load %arg13[%c0_241, %c0_242] : memref<128x16xf32, #tpu.memory_space<vmem>>, vector<128x16xf32>
    %c0_243 = arith.constant 0 : index
    %c0_244 = arith.constant 0 : index
    %c0_245 = arith.constant 0 : index
    %c0_246 = arith.constant 0 : index
    %205 = vector.load %arg6[%c0_243, %c0_244, %c0_245, %c0_246] : memref<3x3x16x16xf32, #tpu.memory_space<vmem>>, vector<1x1x16x16xf32>
    %206 = vector.shape_cast %205 : vector<1x1x16x16xf32> to vector<16x16xf32>
    %cst_247 = arith.constant dense<0.000000e+00> : vector<128x16xf32>
    %207 = tpu.matmul %203, %206, %cst_247 {dimension_numbers = #tpu.dot_dimension_numbers<[1], [0], [0], [1], [0, 0, 1, 1], [], []>} : vector<128x16xf32>, vector<16x16xf32>, vector<128x16xf32> -> vector<128x16xf32>
    %208 = arith.addf %204, %207 : vector<128x16xf32>
    %c0_248 = arith.constant 0 : index
    %c0_249 = arith.constant 0 : index
    %209 = vector.load %arg13[%c0_248, %c0_249] : memref<128x16xf32, #tpu.memory_space<vmem>>, vector<128x16xf32>
    tpu.vector_store %arg13[%c0_248, %c0_249], %208 {strides = array<i32>} : memref<128x16xf32, #tpu.memory_space<vmem>>, vector<128x16xf32>,
    %210 = vector.extract_strided_slice %201 {offsets = [0, 1, 0], sizes = [8, 16, 16], strides = [1, 1, 1]} : vector<8x18x16xf32> to vector<8x16x16xf32>
    %211 = vector.shape_cast %210 : vector<8x16x16xf32> to vector<128x16xf32>
    %c0_250 = arith.constant 0 : index
    %c0_251 = arith.constant 0 : index
    %212 = vector.load %arg13[%c0_250, %c0_251] : memref<128x16xf32, #tpu.memory_space<vmem>>, vector<128x16xf32>
    %c0_252 = arith.constant 0 : index
    %c1_253 = arith.constant 1 : index
    %c0_254 = arith.constant 0 : index
    %c0_255 = arith.constant 0 : index
    %213 = vector.load %arg6[%c0_252, %c1_253, %c0_254, %c0_255] : memref<3x3x16x16xf32, #tpu.memory_space<vmem>>, vector<1x1x16x16xf32>
    %214 = vector.shape_cast %213 : vector<1x1x16x16xf32> to vector<16x16xf32>
    %cst_256 = arith.constant dense<0.000000e+00> : vector<128x16xf32>
    %215 = tpu.matmul %211, %214, %cst_256 {dimension_numbers = #tpu.dot_dimension_numbers<[1], [0], [0], [1], [0, 0, 1, 1], [], []>} : vector<128x16xf32>, vector<16x16xf32>, vector<128x16xf32> -> vector<128x16xf32>
    %216 = arith.addf %212, %215 : vector<128x16xf32>
    %c0_257 = arith.constant 0 : index
    %c0_258 = arith.constant 0 : index
    %217 = vector.load %arg13[%c0_257, %c0_258] : memref<128x16xf32, #tpu.memory_space<vmem>>, vector<128x16xf32>
    tpu.vector_store %arg13[%c0_257, %c0_258], %216 {strides = array<i32>} : memref<128x16xf32, #tpu.memory_space<vmem>>, vector<128x16xf32>,
    %218 = vector.extract_strided_slice %201 {offsets = [0, 2, 0], sizes = [8, 16, 16], strides = [1, 1, 1]} : vector<8x18x16xf32> to vector<8x16x16xf32>
    %219 = vector.shape_cast %218 : vector<8x16x16xf32> to vector<128x16xf32>
    %c0_259 = arith.constant 0 : index
    %c0_260 = arith.constant 0 : index
    %220 = vector.load %arg13[%c0_259, %c0_260] : memref<128x16xf32, #tpu.memory_space<vmem>>, vector<128x16xf32>
    %c0_261 = arith.constant 0 : index
    %c2_262 = arith.constant 2 : index
    %c0_263 = arith.constant 0 : index
    %c0_264 = arith.constant 0 : index
    %221 = vector.load %arg6[%c0_261, %c2_262, %c0_263, %c0_264] : memref<3x3x16x16xf32, #tpu.memory_space<vmem>>, vector<1x1x16x16xf32>
    %222 = vector.shape_cast %221 : vector<1x1x16x16xf32> to vector<16x16xf32>
    %cst_265 = arith.constant dense<0.000000e+00> : vector<128x16xf32>
    %223 = tpu.matmul %219, %222, %cst_265 {dimension_numbers = #tpu.dot_dimension_numbers<[1], [0], [0], [1], [0, 0, 1, 1], [], []>} : vector<128x16xf32>, vector<16x16xf32>, vector<128x16xf32> -> vector<128x16xf32>
    %224 = arith.addf %220, %223 : vector<128x16xf32>
    %c0_266 = arith.constant 0 : index
    %c0_267 = arith.constant 0 : index
    %225 = vector.load %arg13[%c0_266, %c0_267] : memref<128x16xf32, #tpu.memory_space<vmem>>, vector<128x16xf32>
    tpu.vector_store %arg13[%c0_266, %c0_267], %224 {strides = array<i32>} : memref<128x16xf32, #tpu.memory_space<vmem>>, vector<128x16xf32>,
    %c1_268 = arith.constant 1 : index
    %c0_269 = arith.constant 0 : index
    %c0_270 = arith.constant 0 : index
    %226 = vector.load %arg12[%c1_268, %c0_269, %c0_270] : memref<10x18x16xf32, #tpu.memory_space<vmem>>, vector<8x18x16xf32>
    %227 = vector.extract_strided_slice %226 {offsets = [0, 0, 0], sizes = [8, 16, 16], strides = [1, 1, 1]} : vector<8x18x16xf32> to vector<8x16x16xf32>
    %228 = vector.shape_cast %227 : vector<8x16x16xf32> to vector<128x16xf32>
    %c0_271 = arith.constant 0 : index
    %c0_272 = arith.constant 0 : index
    %229 = vector.load %arg13[%c0_271, %c0_272] : memref<128x16xf32, #tpu.memory_space<vmem>>, vector<128x16xf32>
    %c1_273 = arith.constant 1 : index
    %c0_274 = arith.constant 0 : index
    %c0_275 = arith.constant 0 : index
    %c0_276 = arith.constant 0 : index
    %230 = vector.load %arg6[%c1_273, %c0_274, %c0_275, %c0_276] : memref<3x3x16x16xf32, #tpu.memory_space<vmem>>, vector<1x1x16x16xf32>
    %231 = vector.shape_cast %230 : vector<1x1x16x16xf32> to vector<16x16xf32>
    %cst_277 = arith.constant dense<0.000000e+00> : vector<128x16xf32>
    %232 = tpu.matmul %228, %231, %cst_277 {dimension_numbers = #tpu.dot_dimension_numbers<[1], [0], [0], [1], [0, 0, 1, 1], [], []>} : vector<128x16xf32>, vector<16x16xf32>, vector<128x16xf32> -> vector<128x16xf32>
    %233 = arith.addf %229, %232 : vector<128x16xf32>
    %c0_278 = arith.constant 0 : index
    %c0_279 = arith.constant 0 : index
    %234 = vector.load %arg13[%c0_278, %c0_279] : memref<128x16xf32, #tpu.memory_space<vmem>>, vector<128x16xf32>
    tpu.vector_store %arg13[%c0_278, %c0_279], %233 {strides = array<i32>} : memref<128x16xf32, #tpu.memory_space<vmem>>, vector<128x16xf32>,
    %235 = vector.extract_strided_slice %226 {offsets = [0, 1, 0], sizes = [8, 16, 16], strides = [1, 1, 1]} : vector<8x18x16xf32> to vector<8x16x16xf32>
    %236 = vector.shape_cast %235 : vector<8x16x16xf32> to vector<128x16xf32>
    %c0_280 = arith.constant 0 : index
    %c0_281 = arith.constant 0 : index
    %237 = vector.load %arg13[%c0_280, %c0_281] : memref<128x16xf32, #tpu.memory_space<vmem>>, vector<128x16xf32>
    %c1_282 = arith.constant 1 : index
    %c1_283 = arith.constant 1 : index
    %c0_284 = arith.constant 0 : index
    %c0_285 = arith.constant 0 : index
    %238 = vector.load %arg6[%c1_282, %c1_283, %c0_284, %c0_285] : memref<3x3x16x16xf32, #tpu.memory_space<vmem>>, vector<1x1x16x16xf32>
    %239 = vector.shape_cast %238 : vector<1x1x16x16xf32> to vector<16x16xf32>
    %cst_286 = arith.constant dense<0.000000e+00> : vector<128x16xf32>
    %240 = tpu.matmul %236, %239, %cst_286 {dimension_numbers = #tpu.dot_dimension_numbers<[1], [0], [0], [1], [0, 0, 1, 1], [], []>} : vector<128x16xf32>, vector<16x16xf32>, vector<128x16xf32> -> vector<128x16xf32>
    %241 = arith.addf %237, %240 : vector<128x16xf32>
    %c0_287 = arith.constant 0 : index
    %c0_288 = arith.constant 0 : index
    %242 = vector.load %arg13[%c0_287, %c0_288] : memref<128x16xf32, #tpu.memory_space<vmem>>, vector<128x16xf32>
    tpu.vector_store %arg13[%c0_287, %c0_288], %241 {strides = array<i32>} : memref<128x16xf32, #tpu.memory_space<vmem>>, vector<128x16xf32>,
    %243 = vector.extract_strided_slice %226 {offsets = [0, 2, 0], sizes = [8, 16, 16], strides = [1, 1, 1]} : vector<8x18x16xf32> to vector<8x16x16xf32>
    %244 = vector.shape_cast %243 : vector<8x16x16xf32> to vector<128x16xf32>
    %c0_289 = arith.constant 0 : index
    %c0_290 = arith.constant 0 : index
    %245 = vector.load %arg13[%c0_289, %c0_290] : memref<128x16xf32, #tpu.memory_space<vmem>>, vector<128x16xf32>
    %c1_291 = arith.constant 1 : index
    %c2_292 = arith.constant 2 : index
    %c0_293 = arith.constant 0 : index
    %c0_294 = arith.constant 0 : index
    %246 = vector.load %arg6[%c1_291, %c2_292, %c0_293, %c0_294] : memref<3x3x16x16xf32, #tpu.memory_space<vmem>>, vector<1x1x16x16xf32>
    %247 = vector.shape_cast %246 : vector<1x1x16x16xf32> to vector<16x16xf32>
    %cst_295 = arith.constant dense<0.000000e+00> : vector<128x16xf32>
    %248 = tpu.matmul %244, %247, %cst_295 {dimension_numbers = #tpu.dot_dimension_numbers<[1], [0], [0], [1], [0, 0, 1, 1], [], []>} : vector<128x16xf32>, vector<16x16xf32>, vector<128x16xf32> -> vector<128x16xf32>
    %249 = arith.addf %245, %248 : vector<128x16xf32>
    %c0_296 = arith.constant 0 : index
    %c0_297 = arith.constant 0 : index
    %250 = vector.load %arg13[%c0_296, %c0_297] : memref<128x16xf32, #tpu.memory_space<vmem>>, vector<128x16xf32>
    tpu.vector_store %arg13[%c0_296, %c0_297], %249 {strides = array<i32>} : memref<128x16xf32, #tpu.memory_space<vmem>>, vector<128x16xf32>,
    %c2_298 = arith.constant 2 : index
    %c0_299 = arith.constant 0 : index
    %c0_300 = arith.constant 0 : index
    %251 = vector.load %arg12[%c2_298, %c0_299, %c0_300] : memref<10x18x16xf32, #tpu.memory_space<vmem>>, vector<8x18x16xf32>
    %252 = vector.extract_strided_slice %251 {offsets = [0, 0, 0], sizes = [8, 16, 16], strides = [1, 1, 1]} : vector<8x18x16xf32> to vector<8x16x16xf32>
    %253 = vector.shape_cast %252 : vector<8x16x16xf32> to vector<128x16xf32>
    %c0_301 = arith.constant 0 : index
    %c0_302 = arith.constant 0 : index
    %254 = vector.load %arg13[%c0_301, %c0_302] : memref<128x16xf32, #tpu.memory_space<vmem>>, vector<128x16xf32>
    %c2_303 = arith.constant 2 : index
    %c0_304 = arith.constant 0 : index
    %c0_305 = arith.constant 0 : index
    %c0_306 = arith.constant 0 : index
    %255 = vector.load %arg6[%c2_303, %c0_304, %c0_305, %c0_306] : memref<3x3x16x16xf32, #tpu.memory_space<vmem>>, vector<1x1x16x16xf32>
    %256 = vector.shape_cast %255 : vector<1x1x16x16xf32> to vector<16x16xf32>
    %cst_307 = arith.constant dense<0.000000e+00> : vector<128x16xf32>
    %257 = tpu.matmul %253, %256, %cst_307 {dimension_numbers = #tpu.dot_dimension_numbers<[1], [0], [0], [1], [0, 0, 1, 1], [], []>} : vector<128x16xf32>, vector<16x16xf32>, vector<128x16xf32> -> vector<128x16xf32>
    %258 = arith.addf %254, %257 : vector<128x16xf32>
    %c0_308 = arith.constant 0 : index
    %c0_309 = arith.constant 0 : index
    %259 = vector.load %arg13[%c0_308, %c0_309] : memref<128x16xf32, #tpu.memory_space<vmem>>, vector<128x16xf32>
    tpu.vector_store %arg13[%c0_308, %c0_309], %258 {strides = array<i32>} : memref<128x16xf32, #tpu.memory_space<vmem>>, vector<128x16xf32>,
    %260 = vector.extract_strided_slice %251 {offsets = [0, 1, 0], sizes = [8, 16, 16], strides = [1, 1, 1]} : vector<8x18x16xf32> to vector<8x16x16xf32>
    %261 = vector.shape_cast %260 : vector<8x16x16xf32> to vector<128x16xf32>
    %c0_310 = arith.constant 0 : index
    %c0_311 = arith.constant 0 : index
    %262 = vector.load %arg13[%c0_310, %c0_311] : memref<128x16xf32, #tpu.memory_space<vmem>>, vector<128x16xf32>
    %c2_312 = arith.constant 2 : index
    %c1_313 = arith.constant 1 : index
    %c0_314 = arith.constant 0 : index
    %c0_315 = arith.constant 0 : index
    %263 = vector.load %arg6[%c2_312, %c1_313, %c0_314, %c0_315] : memref<3x3x16x16xf32, #tpu.memory_space<vmem>>, vector<1x1x16x16xf32>
    %264 = vector.shape_cast %263 : vector<1x1x16x16xf32> to vector<16x16xf32>
    %cst_316 = arith.constant dense<0.000000e+00> : vector<128x16xf32>
    %265 = tpu.matmul %261, %264, %cst_316 {dimension_numbers = #tpu.dot_dimension_numbers<[1], [0], [0], [1], [0, 0, 1, 1], [], []>} : vector<128x16xf32>, vector<16x16xf32>, vector<128x16xf32> -> vector<128x16xf32>
    %266 = arith.addf %262, %265 : vector<128x16xf32>
    %c0_317 = arith.constant 0 : index
    %c0_318 = arith.constant 0 : index
    %267 = vector.load %arg13[%c0_317, %c0_318] : memref<128x16xf32, #tpu.memory_space<vmem>>, vector<128x16xf32>
    tpu.vector_store %arg13[%c0_317, %c0_318], %266 {strides = array<i32>} : memref<128x16xf32, #tpu.memory_space<vmem>>, vector<128x16xf32>,
    %268 = vector.extract_strided_slice %251 {offsets = [0, 2, 0], sizes = [8, 16, 16], strides = [1, 1, 1]} : vector<8x18x16xf32> to vector<8x16x16xf32>
    %269 = vector.shape_cast %268 : vector<8x16x16xf32> to vector<128x16xf32>
    %c0_319 = arith.constant 0 : index
    %c0_320 = arith.constant 0 : index
    %270 = vector.load %arg13[%c0_319, %c0_320] : memref<128x16xf32, #tpu.memory_space<vmem>>, vector<128x16xf32>
    %c2_321 = arith.constant 2 : index
    %c2_322 = arith.constant 2 : index
    %c0_323 = arith.constant 0 : index
    %c0_324 = arith.constant 0 : index
    %271 = vector.load %arg6[%c2_321, %c2_322, %c0_323, %c0_324] : memref<3x3x16x16xf32, #tpu.memory_space<vmem>>, vector<1x1x16x16xf32>
    %272 = vector.shape_cast %271 : vector<1x1x16x16xf32> to vector<16x16xf32>
    %cst_325 = arith.constant dense<0.000000e+00> : vector<128x16xf32>
    %273 = tpu.matmul %269, %272, %cst_325 {dimension_numbers = #tpu.dot_dimension_numbers<[1], [0], [0], [1], [0, 0, 1, 1], [], []>} : vector<128x16xf32>, vector<16x16xf32>, vector<128x16xf32> -> vector<128x16xf32>
    %274 = arith.addf %270, %273 : vector<128x16xf32>
    %c0_326 = arith.constant 0 : index
    %c0_327 = arith.constant 0 : index
    %275 = vector.load %arg13[%c0_326, %c0_327] : memref<128x16xf32, #tpu.memory_space<vmem>>, vector<128x16xf32>
    tpu.vector_store %arg13[%c0_326, %c0_327], %274 {strides = array<i32>} : memref<128x16xf32, #tpu.memory_space<vmem>>, vector<128x16xf32>,
    %c0_328 = arith.constant 0 : index
    %c0_329 = arith.constant 0 : index
    %276 = vector.load %arg13[%c0_328, %c0_329] : memref<128x16xf32, #tpu.memory_space<vmem>>, vector<128x16xf32>
    %c0_330 = arith.constant 0 : index
    %c0_331 = arith.constant 0 : index
    %277 = vector.load %arg7[%c0_330, %c0_331] : memref<1x16xf32, #tpu.memory_space<vmem>>, vector<1x16xf32>
    %278 = vector.broadcast %277 : vector<1x16xf32> to vector<128x16xf32>
    %279 = arith.addf %276, %278 : vector<128x16xf32>
    %cst_332 = arith.constant 0.000000e+00 : f32
    %280 = vector.broadcast %cst_332 : f32 to vector<128x16xf32>
    %281 = arith.cmpf oge, %279, %280 : vector<128x16xf32>
    %cst_333 = arith.constant 2.000000e-01 : f32
    %282 = vector.broadcast %cst_333 : f32 to vector<128x16xf32>
    %283 = arith.mulf %279, %282 : vector<128x16xf32>
    %284 = arith.select %281, %279, %283 : vector<128x16xi1>, vector<128x16xf32>
    %c2_334 = arith.constant 2 : index
    %c1_335 = arith.constant 1 : index
    %c0_336 = arith.constant 0 : index
    %285 = vector.load %arg11[%c2_334, %c1_335, %c0_336] : memref<12x18x8xf32, #tpu.memory_space<vmem>>, vector<8x16x8xf32>
    %286 = vector.shape_cast %285 : vector<8x16x8xf32> to vector<128x8xf32>
    %c0_337 = arith.constant 0 : index
    %c0_338 = arith.constant 0 : index
    %287 = vector.load %arg8[%c0_337, %c0_338] : memref<8x16xf32, #tpu.memory_space<vmem>>, vector<8x16xf32>
    %cst_339 = arith.constant dense<0.000000e+00> : vector<128x16xf32>
    %288 = tpu.matmul %286, %287, %cst_339 {dimension_numbers = #tpu.dot_dimension_numbers<[1], [0], [0], [1], [0, 0, 1, 1], [], []>} : vector<128x8xf32>, vector<8x16xf32>, vector<128x16xf32> -> vector<128x16xf32>
    %c0_340 = arith.constant 0 : index
    %c0_341 = arith.constant 0 : index
    %289 = vector.load %arg9[%c0_340, %c0_341] : memref<1x16xf32, #tpu.memory_space<vmem>>, vector<1x16xf32>
    %290 = vector.broadcast %289 : vector<1x16xf32> to vector<128x16xf32>
    %291 = arith.addf %288, %290 : vector<128x16xf32>
    %292 = arith.addf %284, %291 : vector<128x16xf32>
    %293 = vector.shape_cast %292 : vector<128x16xf32> to vector<8x16x16xf32>
    %c0_342 = arith.constant 0 : index
    %c0_343 = arith.constant 0 : index
    %c0_344 = arith.constant 0 : index
    %c0_345 = arith.constant 0 : index
    %294 = vector.load %arg10[%c0_342, %c0_343, %c0_344, %c0_345] : memref<1x8x16x16xf32, #tpu.memory_space<vmem>>, vector<1x8x16x16xf32>
    %295 = vector.shape_cast %294 : vector<1x8x16x16xf32> to vector<8x16x16xf32>
    %296 = vector.shape_cast %293 : vector<8x16x16xf32> to vector<1x8x16x16xf32>
    tpu.vector_store %arg10[%c0_342, %c0_343, %c0_344, %c0_345], %296 {strides = array<i32>} : memref<1x8x16x16xf32, #tpu.memory_space<vmem>>, vector<1x8x16x16xf32>,
    return
  }
  func.func @transform_0(%arg0: i32, %arg1: i32) -> (i32, i32, i32, i32) {
    %c0_i32 = arith.constant 0 : i32
    %c0_i32_0 = arith.constant 0 : i32
    %c0_i32_1 = arith.constant 0 : i32
    return %arg0, %arg1, %c0_i32, %c0_i32_0 : i32, i32, i32, i32
  }
  func.func @transform_1(%arg0: i32, %arg1: i32) -> (i32, i32, i32, i32) {
    %c0_i32 = arith.constant 0 : i32
    %c0_i32_0 = arith.constant 0 : i32
    %c0_i32_1 = arith.constant 0 : i32
    return %arg0, %arg1, %c0_i32, %c0_i32_0 : i32, i32, i32, i32
  }
  func.func @transform_2(%arg0: i32, %arg1: i32) -> (i32, i32, i32, i32) {
    %c0_i32 = arith.constant 0 : i32
    %c0_i32_0 = arith.constant 0 : i32
    %c0_i32_1 = arith.constant 0 : i32
    %c0_i32_2 = arith.constant 0 : i32
    %c0_i32_3 = arith.constant 0 : i32
    return %c0_i32, %c0_i32_0, %c0_i32_1, %c0_i32_2 : i32, i32, i32, i32
  }
  func.func @transform_3(%arg0: i32, %arg1: i32) -> (i32, i32) {
    %c0_i32 = arith.constant 0 : i32
    %c0_i32_0 = arith.constant 0 : i32
    %c0_i32_1 = arith.constant 0 : i32
    return %c0_i32, %c0_i32_0 : i32, i32
  }
  func.func @transform_4(%arg0: i32, %arg1: i32) -> (i32, i32, i32, i32) {
    %c0_i32 = arith.constant 0 : i32
    %c0_i32_0 = arith.constant 0 : i32
    %c0_i32_1 = arith.constant 0 : i32
    %c0_i32_2 = arith.constant 0 : i32
    %c0_i32_3 = arith.constant 0 : i32
    return %c0_i32, %c0_i32_0, %c0_i32_1, %c0_i32_2 : i32, i32, i32, i32
  }
  func.func @transform_5(%arg0: i32, %arg1: i32) -> (i32, i32) {
    %c0_i32 = arith.constant 0 : i32
    %c0_i32_0 = arith.constant 0 : i32
    %c0_i32_1 = arith.constant 0 : i32
    return %c0_i32, %c0_i32_0 : i32, i32
  }
  func.func @transform_6(%arg0: i32, %arg1: i32) -> (i32, i32) {
    %c0_i32 = arith.constant 0 : i32
    %c0_i32_0 = arith.constant 0 : i32
    %c0_i32_1 = arith.constant 0 : i32
    return %c0_i32, %c0_i32_0 : i32, i32
  }
  func.func @transform_7(%arg0: i32, %arg1: i32) -> (i32, i32) {
    %c0_i32 = arith.constant 0 : i32
    %c0_i32_0 = arith.constant 0 : i32
    %c0_i32_1 = arith.constant 0 : i32
    return %c0_i32, %c0_i32_0 : i32, i32
  }
  func.func @transform_8(%arg0: i32, %arg1: i32) -> (i32, i32, i32, i32) {
    %c0_i32 = arith.constant 0 : i32
    %c0_i32_0 = arith.constant 0 : i32
    %c0_i32_1 = arith.constant 0 : i32
    return %arg0, %arg1, %c0_i32, %c0_i32_0 : i32, i32, i32, i32
  }
}

</mosaic_0001>

<llo_original>
// kernel: tpu_custom_call.1
$region0: #{tpu_custom_call.1}
  #allocation0 [shape = 'u32[]', space=smem, size = 0x4, offset = 0x4, fixed_abs, tag = 'smem constant byte address 0x4 - core index']
  #allocation1 [shape = 'u32[144,128]{1,0:T(1,128)}', space=vmem, size = 0x12000, scoped, tag = 'internal scratch']
  #allocation2 [shape = 'f32[12,18,8]{2,1,0:T(8,128)}', space=vmem, size = 0x24000, scoped, tag = 'scratch operand']
  #allocation3 [shape = 'f32[10,18,16]{2,1,0:T(8,128)}', space=vmem, size = 0x1e000, scoped, tag = 'scratch operand']
  #allocation4 [shape = 'f32[128,16]{1,0:T(8,128)}', space=vmem, size = 0x10000, scoped, tag = 'scratch operand']
  %s0 = inlined_call_operand.hbm [shape: f32[2,16,16,8], index: 0, kind: input, shape index: {}]
  %s1 = inlined_call_operand.hbm [shape: f32[2,8,16,8], index: 1, kind: input, shape index: {}]
  %s2 = inlined_call_operand.hbm [shape: f32[3,3,8,16], index: 2, kind: input, shape index: {}]
  %s3 = inlined_call_operand.hbm [shape: f32[1,16], index: 3, kind: input, shape index: {}]
  %s4 = inlined_call_operand.hbm [shape: f32[3,3,16,16], index: 4, kind: input, shape index: {}]
  %s5 = inlined_call_operand.hbm [shape: f32[1,16], index: 5, kind: input, shape index: {}]
  %s6 = inlined_call_operand.hbm [shape: f32[8,16], index: 6, kind: input, shape index: {}]
  %s7 = inlined_call_operand.hbm [shape: f32[1,16], index: 7, kind: input, shape index: {}]
  %s8 = inlined_call_operand.hbm [shape: f32[2,16,16,16], index: 8, kind: output, shape index: {}]
  %s9 = sld [smem:[#allocation0]]
  $region105: #{tpu_custom_call.1} parent=0
    _
  %s11 = ssub.s32 1, %s9
  %s12 = scalar_select 0, %s11, %s9
  $region1: #{tpu_custom_call.1} parent=0
    #allocation5 [shape = 'u8[131072]{0}', space=vmem, size = 0x20000, scoped, tag = 'input window, operand 0']
    #allocation6 [shape = 's32[2]{0}', space=sflag, size = 0x8, scoped, tag = 'scoped memory for tpu_custom_call.1']
    #allocation7 [shape = 's32[2]{0}', space=sflag, size = 0x8, scoped, tag = 'scoped memory for tpu_custom_call.1']
    #allocation8 [shape = 'u8[65536]{0}', space=vmem, size = 0x10000, scoped, tag = 'input window, operand 1']
    #allocation9 [shape = 's32[2]{0}', space=sflag, size = 0x8, scoped, tag = 'scoped memory for tpu_custom_call.1']
    #allocation10 [shape = 'u8[36864]{0}', space=vmem, size = 0x9000, scoped, tag = 'input window, operand 2, single buffered']
    #allocation11 [shape = 'u8[512]{0}', space=vmem, size = 0x400, scoped, tag = 'input window, operand 3, single buffered']
    #allocation12 [shape = 's32[1]{0}', space=sflag, size = 0x4, scoped, tag = 'scoped memory for tpu_custom_call.1']
    #allocation13 [shape = 'u8[73728]{0}', space=vmem, size = 0x12000, scoped, tag = 'input window, operand 4, single buffered']
    #allocation14 [shape = 'u8[512]{0}', space=vmem, size = 0x400, scoped, tag = 'input window, operand 5, single buffered']
    #allocation15 [shape = 's32[1]{0}', space=sflag, size = 0x4, scoped, tag = 'scoped memory for tpu_custom_call.1']
    #allocation16 [shape = 'u8[4096]{0}', space=vmem, size = 0x1000, scoped, tag = 'input window, operand 6, single buffered']
    #allocation17 [shape = 'u8[512]{0}', space=vmem, size = 0x400, scoped, tag = 'input window, operand 7, single buffered']
    #allocation18 [shape = 's32[1]{0}', space=sflag, size = 0x4, scoped, tag = 'scoped memory for tpu_custom_call.1']
    #allocation19 [shape = 'u8[131072]{0}', space=vmem, size = 0x20000, scoped, tag = 'output window, operand 0']
    %13 = vsyncpa [#allocation6], 0
    %s14 = scalar_lea.sflag [#allocation6], 1
    %15 = vsyncpa %s14, 0
    %16 = vsyncpa [#allocation9], 0
    %s17 = scalar_lea.sflag [#allocation9], 1
    %18 = vsyncpa %s17, 0
    %19 = vsyncpa [#allocation12], 0
    %20 = vsyncpa [#allocation15], 0
    %21 = vsyncpa [#allocation18], 0
    %22 = vsyncpa [#allocation7], 0
    %s23 = scalar_lea.sflag [#allocation7], 1
    %24 = vsyncpa %s23, 0
    loop: start=0, step=1, limit=6
    $region2: #{tpu_custom_call.1} parent=1 // loop_pre_header
      _
    $region3: #{tpu_custom_call.1} parent=1 // loop_header
      %s26 = sphi 0, %s30
      %p27 = scmp.ge.s32.totalorder %s26, 6
      %s33 = sphi 0, %s45
      %s34 = sphi 0, %s41
      %s35 = sphi 0, %s33
      %s36 = sphi 0, %s34
      %s37 = sphi 0, %s35
      %s38 = sphi 0, %s36
      %s50 = sphi 0, %s52
      %s53 = sphi 0, %s50
      %s54 = sphi 0, %s53
      %s70 = sphi 0, %s54
      %s78 = sphi 0, %s80
      %s81 = sphi 0, %s78
      %s82 = sphi 0, %s81
      %s98 = sphi 0, %s82
      %s102 = sphi 0, %s102
      %s104 = sphi 0, %s102
      %s105 = sphi 0, %s104
      %s119 = sphi 0, %s105
      %s123 = sphi 0, %s123
      %s125 = sphi 0, %s123
      %s126 = sphi 0, %s125
      %s140 = sphi 0, %s126
      %s144 = sphi 0, %s144
      %s146 = sphi 0, %s144
      %s147 = sphi 0, %s146
      %s161 = sphi 0, %s147
      %s165 = sphi 0, %s165
      %s167 = sphi 0, %s165
      %s168 = sphi 0, %s167
      %s182 = sphi 0, %s168
      %s186 = sphi 0, %s186
      %s188 = sphi 0, %s186
      %s189 = sphi 0, %s188
      %s203 = sphi 0, %s189
      %s207 = sphi 0, %s207
      %s209 = sphi 0, %s207
      %s210 = sphi 0, %s209
      %s224 = sphi 0, %s210
      %s232 = sphi 0, %s234
      %s235 = sphi 0, %s232
      %s236 = sphi 0, %s235
      %s252 = sphi 0, %s236
    $region4: #{tpu_custom_call.1} parent=1 // loop_header_branch
      %29 = sbr.rel (%p27) target = $region8
    $region5: #{tpu_custom_call.1} parent=1 // loop_body
      %s31 = ssub.s32 %s26, 1
      %s32 = ssub.s32 %s26, 2
      %s39 = sadd.s32 1, %s34
      %p40 = scmp.ge.s32.totalorder %s39, 2
      %s41 = scalar_select %p40, 0, %s39
      %s42 = sadd.s32 1, %s33
      %s43 = scalar_select %p40, %s42, %s33
      %p44 = scmp.ge.s32.totalorder %s43, 2
      %s45 = scalar_select %p44, 0, %s43
      %s46 = ssub.s32 %s33, %s45
      %s47 = ssub.s32 %s34, %s41
      %s48 = sor.u32 %s46, %s47
      %p49 = scmp.eq.s32.totalorder %s48, 0
      %s51 = sadd.s32 %s50, 1
      %s52 = scalar_select %p49, %s50, %s51
      %p55 = pneg %p49
      %p56 = scmp.eq.s32.totalorder %s26, 3
      %p57 = por %p55, %p56
      %p58 = scmp.ne.s32.totalorder %s50, %s53
      %p59 = scmp.eq.s32.totalorder %s26, 0
      %p60 = por %p58, %p59
      %p61 = scmp.ne.s32.totalorder %s50, %s53
      %p62 = scmp.eq.s32.totalorder %s31, 3
      %p63 = por %p61, %p62
      %p64 = scmp.ne.s32.totalorder %s53, %s54
      %p65 = scmp.eq.s32.totalorder %s31, 0
      %p66 = por %p64, %p65
      %p67 = scmp.ne.s32.totalorder %s53, %s54
      %p68 = scmp.eq.s32.totalorder %s32, 3
      %p69 = por %p67, %p68
      %p71 = scmp.ne.s32.totalorder %s54, %s70
      %p72 = scmp.eq.s32.totalorder %s32, 0
      %p73 = por %p71, %p72
      %s74 = ssub.s32 %s33, %s45
      %s75 = ssub.s32 %s34, %s41
      %s76 = sor.u32 %s74, %s75
      %p77 = scmp.eq.s32.totalorder %s76, 0
      %s79 = sadd.s32 %s78, 1
      %s80 = scalar_select %p77, %s78, %s79
      %p83 = pneg %p77
      %p84 = scmp.eq.s32.totalorder %s26, 3
      %p85 = por %p83, %p84
      %p86 = scmp.ne.s32.totalorder %s78, %s81
      %p87 = scmp.eq.s32.totalorder %s26, 0
      %p88 = por %p86, %p87
      %p89 = scmp.ne.s32.totalorder %s78, %s81
      %p90 = scmp.eq.s32.totalorder %s31, 3
      %p91 = por %p89, %p90
      %p92 = scmp.ne.s32.totalorder %s81, %s82
      %p93 = scmp.eq.s32.totalorder %s31, 0
      %p94 = por %p92, %p93
      %p95 = scmp.ne.s32.totalorder %s81, %s82
      %p96 = scmp.eq.s32.totalorder %s32, 3
      %p97 = por %p95, %p96
      %p99 = scmp.ne.s32.totalorder %s82, %s98
      %p100 = scmp.eq.s32.totalorder %s32, 0
      %p101 = por %p99, %p100
      %s103 = sadd.s32 %s102, 1
      %p106 = scmp.eq.s32.totalorder %s26, 3
      %p107 = scmp.ne.s32.totalorder %s102, %s104
      %p108 = scmp.eq.s32.totalorder %s26, 0
      %p109 = por %p107, %p108
      %p110 = scmp.ne.s32.totalorder %s102, %s104
      %p111 = scmp.eq.s32.totalorder %s31, 3
      %p112 = por %p110, %p111
      %p113 = scmp.ne.s32.totalorder %s104, %s105
      %p114 = scmp.eq.s32.totalorder %s31, 0
      %p115 = por %p113, %p114
      %p116 = scmp.ne.s32.totalorder %s104, %s105
      %p117 = scmp.eq.s32.totalorder %s32, 3
      %p118 = por %p116, %p117
      %p120 = scmp.ne.s32.totalorder %s105, %s119
      %p121 = scmp.eq.s32.totalorder %s32, 0
      %p122 = por %p120, %p121
      %s124 = sadd.s32 %s123, 1
      %p127 = scmp.eq.s32.totalorder %s26, 3
      %p128 = scmp.ne.s32.totalorder %s123, %s125
      %p129 = scmp.eq.s32.totalorder %s26, 0
      %p130 = por %p128, %p129
      %p131 = scmp.ne.s32.totalorder %s123, %s125
      %p132 = scmp.eq.s32.totalorder %s31, 3
      %p133 = por %p131, %p132
      %p134 = scmp.ne.s32.totalorder %s125, %s126
      %p135 = scmp.eq.s32.totalorder %s31, 0
      %p136 = por %p134, %p135
      %p137 = scmp.ne.s32.totalorder %s125, %s126
      %p138 = scmp.eq.s32.totalorder %s32, 3
      %p139 = por %p137, %p138
      %p141 = scmp.ne.s32.totalorder %s126, %s140
      %p142 = scmp.eq.s32.totalorder %s32, 0
      %p143 = por %p141, %p142
      %s145 = sadd.s32 %s144, 1
      %p148 = scmp.eq.s32.totalorder %s26, 3
      %p149 = scmp.ne.s32.totalorder %s144, %s146
      %p150 = scmp.eq.s32.totalorder %s26, 0
      %p151 = por %p149, %p150
      %p152 = scmp.ne.s32.totalorder %s144, %s146
      %p153 = scmp.eq.s32.totalorder %s31, 3
      %p154 = por %p152, %p153
      %p155 = scmp.ne.s32.totalorder %s146, %s147
      %p156 = scmp.eq.s32.totalorder %s31, 0
      %p157 = por %p155, %p156
      %p158 = scmp.ne.s32.totalorder %s146, %s147
      %p159 = scmp.eq.s32.totalorder %s32, 3
      %p160 = por %p158, %p159
      %p162 = scmp.ne.s32.totalorder %s147, %s161
      %p163 = scmp.eq.s32.totalorder %s32, 0
      %p164 = por %p162, %p163
      %s166 = sadd.s32 %s165, 1
      %p169 = scmp.eq.s32.totalorder %s26, 3
      %p170 = scmp.ne.s32.totalorder %s165, %s167
      %p171 = scmp.eq.s32.totalorder %s26, 0
      %p172 = por %p170, %p171
      %p173 = scmp.ne.s32.totalorder %s165, %s167
      %p174 = scmp.eq.s32.totalorder %s31, 3
      %p175 = por %p173, %p174
      %p176 = scmp.ne.s32.totalorder %s167, %s168
      %p177 = scmp.eq.s32.totalorder %s31, 0
      %p178 = por %p176, %p177
      %p179 = scmp.ne.s32.totalorder %s167, %s168
      %p180 = scmp.eq.s32.totalorder %s32, 3
      %p181 = por %p179, %p180
      %p183 = scmp.ne.s32.totalorder %s168, %s182
      %p184 = scmp.eq.s32.totalorder %s32, 0
      %p185 = por %p183, %p184
      %s187 = sadd.s32 %s186, 1
      %p190 = scmp.eq.s32.totalorder %s26, 3
      %p191 = scmp.ne.s32.totalorder %s186, %s188
      %p192 = scmp.eq.s32.totalorder %s26, 0
      %p193 = por %p191, %p192
      %p194 = scmp.ne.s32.totalorder %s186, %s188
      %p195 = scmp.eq.s32.totalorder %s31, 3
      %p196 = por %p194, %p195
      %p197 = scmp.ne.s32.totalorder %s188, %s189
      %p198 = scmp.eq.s32.totalorder %s31, 0
      %p199 = por %p197, %p198
      %p200 = scmp.ne.s32.totalorder %s188, %s189
      %p201 = scmp.eq.s32.totalorder %s32, 3
      %p202 = por %p200, %p201
      %p204 = scmp.ne.s32.totalorder %s189, %s203
      %p205 = scmp.eq.s32.totalorder %s32, 0
      %p206 = por %p204, %p205
      %s208 = sadd.s32 %s207, 1
      %p211 = scmp.eq.s32.totalorder %s26, 3
      %p212 = scmp.ne.s32.totalorder %s207, %s209
      %p213 = scmp.eq.s32.totalorder %s26, 0
      %p214 = por %p212, %p213
      %p215 = scmp.ne.s32.totalorder %s207, %s209
      %p216 = scmp.eq.s32.totalorder %s31, 3
      %p217 = por %p215, %p216
      %p218 = scmp.ne.s32.totalorder %s209, %s210
      %p219 = scmp.eq.s32.totalorder %s31, 0
      %p220 = por %p218, %p219
      %p221 = scmp.ne.s32.totalorder %s209, %s210
      %p222 = scmp.eq.s32.totalorder %s32, 3
      %p223 = por %p221, %p222
      %p225 = scmp.ne.s32.totalorder %s210, %s224
      %p226 = scmp.eq.s32.totalorder %s32, 0
      %p227 = por %p225, %p226
      %s228 = ssub.s32 %s33, %s45
      %s229 = ssub.s32 %s34, %s41
      %s230 = sor.u32 %s228, %s229
      %p231 = scmp.eq.s32.totalorder %s230, 0
      %s233 = sadd.s32 %s232, 1
      %s234 = scalar_select %p231, %s232, %s233
      %p237 = pneg %p231
      %p238 = scmp.eq.s32.totalorder %s26, 3
      %p239 = por %p237, %p238
      %p240 = scmp.ne.s32.totalorder %s232, %s235
      %p241 = scmp.eq.s32.totalorder %s26, 0
      %p242 = por %p240, %p241
      %p243 = scmp.ne.s32.totalorder %s232, %s235
      %p244 = scmp.eq.s32.totalorder %s31, 3
      %p245 = por %p243, %p244
      %p246 = scmp.ne.s32.totalorder %s235, %s236
      %p247 = scmp.eq.s32.totalorder %s31, 0
      %p248 = por %p246, %p247
      %p249 = scmp.ne.s32.totalorder %s235, %s236
      %p250 = scmp.eq.s32.totalorder %s32, 3
      %p251 = por %p249, %p250
      %p253 = scmp.ne.s32.totalorder %s236, %s252
      %p254 = scmp.eq.s32.totalorder %s32, 0
      %p255 = por %p253, %p254
      %p256 = scmp.le.s32.totalorder 1, %s26
      %p257 = scmp.lt.s32.totalorder %s26, 5
      %p258 = pnand %p256, %p257
      %p259 = pneg %p258
      // Predicated region
      $region9: #{tpu_custom_call.1} parent=5 // pred_check
        _
      $region10: #{tpu_custom_call.1} parent=5 // pred_check_branch
        %261 = sbr.rel (%p258) target = $region12
      $region11: #{tpu_custom_call.1} parent=5 // pred_region
        %s262 = ssub.s32 %s26, 1
        // Predicated region
        $region13: #{tpu_custom_call.1} parent=11 // pred_check
          %p263 = pneg %p115
        $region14: #{tpu_custom_call.1} parent=11 // pred_check_branch
          %265 = sbr.rel (%p263) target = $region16
        $region15: #{tpu_custom_call.1} parent=11 // pred_region
          %s267 = ssub.s32 1152, 1152
          %268 = vsyncadd [#allocation9], %s267
          %s269 = sshll.u32 [#allocation10], 4
          %s270 = int_to_ptr.vmem [resolvable:$true] %s269
          %275 = dma.hbm_to_vmem [thread:$0]  %s2, 1152, %s270, [#allocation9], 128, 128, 8
        $region16: #{tpu_custom_call.1} parent=11 // pred_fallthru
          _
        // Predicated region
        $region17: #{tpu_custom_call.1} parent=11 // pred_check
          %p276 = pneg %p136
        $region18: #{tpu_custom_call.1} parent=11 // pred_check_branch
          %278 = sbr.rel (%p276) target = $region20
        $region19: #{tpu_custom_call.1} parent=11 // pred_region
          %s280 = ssub.s32 16, 16
          %281 = vsyncadd [#allocation12], %s280
          %s283 = sshll.u32 [#allocation11], 4
          %s284 = int_to_ptr.vmem [resolvable:$true] %s283
          %286 = dma.hbm_to_vmem [thread:$0]  %s3, 16, %s284, [#allocation12]
        $region20: #{tpu_custom_call.1} parent=11 // pred_fallthru
          _
        // Predicated region
        $region21: #{tpu_custom_call.1} parent=11 // pred_check
          %p287 = pneg %p157
        $region22: #{tpu_custom_call.1} parent=11 // pred_check_branch
          %289 = sbr.rel (%p287) target = $region24
        $region23: #{tpu_custom_call.1} parent=11 // pred_region
          %s291 = ssub.s32 2304, 2304
          %292 = vsyncadd [#allocation12], %s291
          %s293 = sshll.u32 [#allocation13], 4
          %s294 = int_to_ptr.vmem [resolvable:$true] %s293
          %299 = dma.hbm_to_vmem [thread:$0]  %s4, 2304, %s294, [#allocation12], 128, 128, 8
        $region24: #{tpu_custom_call.1} parent=11 // pred_fallthru
          _
        // Predicated region
        $region25: #{tpu_custom_call.1} parent=11 // pred_check
          %p300 = pneg %p178
        $region26: #{tpu_custom_call.1} parent=11 // pred_check_branch
          %302 = sbr.rel (%p300) target = $region28
        $region27: #{tpu_custom_call.1} parent=11 // pred_region
          %s304 = ssub.s32 16, 16
          %305 = vsyncadd [#allocation15], %s304
          %s307 = sshll.u32 [#allocation14], 4
          %s308 = int_to_ptr.vmem [resolvable:$true] %s307
          %310 = dma.hbm_to_vmem [thread:$0]  %s5, 16, %s308, [#allocation15]
        $region28: #{tpu_custom_call.1} parent=11 // pred_fallthru
          _
        // Predicated region
        $region29: #{tpu_custom_call.1} parent=11 // pred_check
          %p311 = pneg %p199
        $region30: #{tpu_custom_call.1} parent=11 // pred_check_branch
          %313 = sbr.rel (%p311) target = $region32
        $region31: #{tpu_custom_call.1} parent=11 // pred_region
          %s315 = ssub.s32 128, 128
          %316 = vsyncadd [#allocation15], %s315
          %s318 = sshll.u32 [#allocation16], 4
          %s319 = int_to_ptr.vmem [resolvable:$true] %s318
          %321 = dma.hbm_to_vmem [thread:$0]  %s6, 128, %s319, [#allocation15]
        $region32: #{tpu_custom_call.1} parent=11 // pred_fallthru
          _
        // Predicated region
        $region33: #{tpu_custom_call.1} parent=11 // pred_check
          %p322 = pneg %p220
        $region34: #{tpu_custom_call.1} parent=11 // pred_check_branch
          %324 = sbr.rel (%p322) target = $region36
        $region35: #{tpu_custom_call.1} parent=11 // pred_region
          %s326 = ssub.s32 16, 16
          %327 = vsyncadd [#allocation18], %s326
          %s329 = sshll.u32 [#allocation17], 4
          %s330 = int_to_ptr.vmem [resolvable:$true] %s329
          %332 = dma.hbm_to_vmem [thread:$0]  %s7, 16, %s330, [#allocation18]
        $region36: #{tpu_custom_call.1} parent=11 // pred_fallthru
          _
      $region12: #{tpu_custom_call.1} parent=5 // pred_fallthru
        _
      %p333 = scmp.lt.s32.totalorder %s26, 4
      // Predicated region
      $region37: #{tpu_custom_call.1} parent=5 // pred_check
        %p334 = pneg %p333
      $region38: #{tpu_custom_call.1} parent=5 // pred_check_branch
        %336 = sbr.rel (%p334) target = $region40
      $region39: #{tpu_custom_call.1} parent=5 // pred_region
        // Predicated region
        $region41: #{tpu_custom_call.1} parent=39 // pred_check
          %p337 = pneg %p60
        $region42: #{tpu_custom_call.1} parent=39 // pred_check_branch
          %339 = sbr.rel (%p337) target = $region44
        $region43: #{tpu_custom_call.1} parent=39 // pred_region
          %s340 = sand.u32 %s50, 1
          %s341 = scalar_lea.sflag [#allocation6], %s340
          %s342 = sand.u32 %s50, 1
          %s343 = smul.addr %s342, 128
          %s344 = scalar_lea.vmem [#allocation5], %s343
          %s345 = smul.u32 8, %s34
          %s347 = ssub.s32 2048, 2048
          %348 = vsyncadd %s341, %s347
          %s349 = smul.addr %s345, 2
          %s350 = smul.addr %s33, 32
          %s351 = sadd.s32 %s349, %s350
          %s352 = smul.addr %s351, 128
          %s353 = scalar_lea.hbm %s0, %s352
          %s354 = sshll.u32 %s344, 4
          %s355 = int_to_ptr.vmem [resolvable:$true] %s354
          %360 = dma.hbm_to_vmem [thread:$0]  %s353, 2048, %s355, %s341, 128, 128, 8
        $region44: #{tpu_custom_call.1} parent=39 // pred_fallthru
          _
        // Predicated region
        $region45: #{tpu_custom_call.1} parent=39 // pred_check
          %p361 = pneg %p88
        $region46: #{tpu_custom_call.1} parent=39 // pred_check_branch
          %363 = sbr.rel (%p361) target = $region48
        $region47: #{tpu_custom_call.1} parent=39 // pred_region
          %s364 = sand.u32 %s26, 1
          %s365 = scalar_lea.sflag [#allocation9], %s364
          %s366 = sand.u32 %s78, 1
          %s367 = smul.addr %s366, 64
          %s368 = scalar_lea.vmem [#allocation8], %s367
          %s369 = smul.u32 4, %s34
          %s371 = ssub.s32 1024, 1024
          %372 = vsyncadd %s365, %s371
          %s373 = smul.addr %s369, 2
          %s374 = smul.addr %s33, 16
          %s375 = sadd.s32 %s373, %s374
          %s376 = smul.addr %s375, 128
          %s377 = scalar_lea.hbm %s1, %s376
          %s378 = sshll.u32 %s368, 4
          %s379 = int_to_ptr.vmem [resolvable:$true] %s378
          %384 = dma.hbm_to_vmem [thread:$0]  %s377, 1024, %s379, %s365, 128, 128, 8
        $region48: #{tpu_custom_call.1} parent=39 // pred_fallthru
          _
      $region40: #{tpu_custom_call.1} parent=5 // pred_fallthru
        _
      %p385 = scmp.le.s32.totalorder 1, %s26
      %p386 = scmp.lt.s32.totalorder %s26, 5
      %p387 = pnand %p385, %p386
      %p388 = pneg %p387
      // Predicated region
      $region49: #{tpu_custom_call.1} parent=5 // pred_check
        _
      $region50: #{tpu_custom_call.1} parent=5 // pred_check_branch
        %390 = sbr.rel (%p387) target = $region52
      $region51: #{tpu_custom_call.1} parent=5 // pred_region
        %s391 = ssub.s32 %s26, 1
        %s392 = sand.u32 %s53, 1
        %s393 = scalar_lea.sflag [#allocation6], %s392
        %s394 = sand.u32 %s53, 1
        %s395 = smul.addr %s394, 128
        %s396 = scalar_lea.vmem [#allocation5], %s395
        // Predicated region
        $region53: #{tpu_custom_call.1} parent=51 // pred_check
          %p397 = pneg %p66
        $region54: #{tpu_custom_call.1} parent=51 // pred_check_branch
          %399 = sbr.rel (%p397) target = $region56
        $region55: #{tpu_custom_call.1} parent=51 // pred_region
          %400 = dma.done %s393, 2048
        $region56: #{tpu_custom_call.1} parent=51 // pred_fallthru
          _
        %s401 = sand.u32 %s31, 1
        %s402 = scalar_lea.sflag [#allocation9], %s401
        %s403 = sand.u32 %s81, 1
        %s404 = smul.addr %s403, 64
        %s405 = scalar_lea.vmem [#allocation8], %s404
        // Predicated region
        $region57: #{tpu_custom_call.1} parent=51 // pred_check
          %p406 = pneg %p94
        $region58: #{tpu_custom_call.1} parent=51 // pred_check_branch
          %408 = sbr.rel (%p406) target = $region60
        $region59: #{tpu_custom_call.1} parent=51 // pred_region
          %409 = dma.done %s402, 1024
        $region60: #{tpu_custom_call.1} parent=51 // pred_fallthru
          _
        // Predicated region
        $region61: #{tpu_custom_call.1} parent=51 // pred_check
          %p410 = pneg %p115
        $region62: #{tpu_custom_call.1} parent=51 // pred_check_branch
          %412 = sbr.rel (%p410) target = $region64
        $region63: #{tpu_custom_call.1} parent=51 // pred_region
          %413 = dma.done [#allocation9], 1152
        $region64: #{tpu_custom_call.1} parent=51 // pred_fallthru
          _
        // Predicated region
        $region65: #{tpu_custom_call.1} parent=51 // pred_check
          %p414 = pneg %p136
        $region66: #{tpu_custom_call.1} parent=51 // pred_check_branch
          %416 = sbr.rel (%p414) target = $region68
        $region67: #{tpu_custom_call.1} parent=51 // pred_region
          %417 = dma.done [#allocation12], 16
        $region68: #{tpu_custom_call.1} parent=51 // pred_fallthru
          _
        // Predicated region
        $region69: #{tpu_custom_call.1} parent=51 // pred_check
          %p418 = pneg %p157
        $region70: #{tpu_custom_call.1} parent=51 // pred_check_branch
          %420 = sbr.rel (%p418) target = $region72
        $region71: #{tpu_custom_call.1} parent=51 // pred_region
          %421 = dma.done [#allocation12], 2304
        $region72: #{tpu_custom_call.1} parent=51 // pred_fallthru
          _
        // Predicated region
        $region73: #{tpu_custom_call.1} parent=51 // pred_check
          %p422 = pneg %p178
        $region74: #{tpu_custom_call.1} parent=51 // pred_check_branch
          %424 = sbr.rel (%p422) target = $region76
        $region75: #{tpu_custom_call.1} parent=51 // pred_region
          %425 = dma.done [#allocation15], 16
        $region76: #{tpu_custom_call.1} parent=51 // pred_fallthru
          _
        // Predicated region
        $region77: #{tpu_custom_call.1} parent=51 // pred_check
          %p426 = pneg %p199
        $region78: #{tpu_custom_call.1} parent=51 // pred_check_branch
          %428 = sbr.rel (%p426) target = $region80
        $region79: #{tpu_custom_call.1} parent=51 // pred_region
          %429 = dma.done [#allocation15], 128
        $region80: #{tpu_custom_call.1} parent=51 // pred_fallthru
          _
        // Predicated region
        $region81: #{tpu_custom_call.1} parent=51 // pred_check
          %p430 = pneg %p220
        $region82: #{tpu_custom_call.1} parent=51 // pred_check_branch
          %432 = sbr.rel (%p430) target = $region84
        $region83: #{tpu_custom_call.1} parent=51 // pred_region
          %433 = dma.done [#allocation18], 16
        $region84: #{tpu_custom_call.1} parent=51 // pred_fallthru
          _
        %s434 = sand.u32 %s53, 1
        %s435 = scalar_lea.sflag [#allocation6], %s434
        %s436 = sand.u32 %s53, 1
        %s437 = smul.addr %s436, 128
        %s438 = scalar_lea.vmem [#allocation5], %s437
        %p439 = pneg %p66
        %p440 = pneg %p63
        %s441 = sand.u32 %s31, 1
        %s442 = scalar_lea.sflag [#allocation9], %s441
        %s443 = sand.u32 %s81, 1
        %s444 = smul.addr %s443, 64
        %s445 = scalar_lea.vmem [#allocation8], %s444
        %p446 = pneg %p94
        %p447 = pneg %p91
        %p448 = pneg %p115
        %p449 = pneg %p112
        %p450 = pneg %p136
        %p451 = pneg %p133
        %p452 = pneg %p157
        %p453 = pneg %p154
        %p454 = pneg %p178
        %p455 = pneg %p175
        %p456 = pneg %p199
        %p457 = pneg %p196
        %p458 = pneg %p220
        %p459 = pneg %p217
        %p460 = pneg %p248
        %p461 = pneg %p245
        %s462 = sand.u32 %s235, 1
        %s463 = scalar_lea.sflag [#allocation7], %s462
        %s464 = sand.u32 %s235, 1
        %s465 = smul.addr %s464, 128
        %s466 = scalar_lea.vmem [#allocation19], %s465
        %s467 = smul.u32 8, %s36
        %s468 = smul.u32 4, %s36
        %s469 = smul.u32 8, %s36
        %vm470 = vcmask 57344
        %471 = vst.msk [vmem:[#allocation2] sm:$0x1] %vm470, 0.0
        %472 = vst.msk [vmem:[#allocation2 + $0x18] sm:$0x1] %vm470, 0.0
        %473 = vst.msk [vmem:[#allocation2 + $0x30] sm:$0x1] %vm470, 0.0
        %474 = vst.msk [vmem:[#allocation2 + $0x48] sm:$0x1] %vm470, 0.0
        %475 = vst.msk [vmem:[#allocation2 + $0x60] sm:$0x1] %vm470, 0.0
        %476 = vst.msk [vmem:[#allocation2 + $0x78] sm:$0x1] %vm470, 0.0
        %477 = vst.msk [vmem:[#allocation2 + $0x90] sm:$0x1] %vm470, 0.0
        %478 = vst.msk [vmem:[#allocation2 + $0xa8] sm:$0x1] %vm470, 0.0
        %479 = vst.msk [vmem:[#allocation2 + $0xc0] sm:$0x1] %vm470, 0.0
        %480 = vst.msk [vmem:[#allocation2 + $0xd8] sm:$0x1] %vm470, 0.0
        %481 = vst.msk [vmem:[#allocation2 + $0xf0] sm:$0x1] %vm470, 0.0
        %482 = vst.msk [vmem:[#allocation2 + $0x108] sm:$0x1] %vm470, 0.0
        %483 = vst.msk [vmem:[#allocation2 + $0x11] sm:$0x1] %vm470, 0.0
        %484 = vst.msk [vmem:[#allocation2 + $0x29] sm:$0x1] %vm470, 0.0
        %485 = vst.msk [vmem:[#allocation2 + $0x41] sm:$0x1] %vm470, 0.0
        %486 = vst.msk [vmem:[#allocation2 + $0x59] sm:$0x1] %vm470, 0.0
        %487 = vst.msk [vmem:[#allocation2 + $0x71] sm:$0x1] %vm470, 0.0
        %488 = vst.msk [vmem:[#allocation2 + $0x89] sm:$0x1] %vm470, 0.0
        %489 = vst.msk [vmem:[#allocation2 + $0xa1] sm:$0x1] %vm470, 0.0
        %490 = vst.msk [vmem:[#allocation2 + $0xb9] sm:$0x1] %vm470, 0.0
        %491 = vst.msk [vmem:[#allocation2 + $0xd1] sm:$0x1] %vm470, 0.0
        %492 = vst.msk [vmem:[#allocation2 + $0xe9] sm:$0x1] %vm470, 0.0
        %493 = vst.msk [vmem:[#allocation2 + $0x101] sm:$0x1] %vm470, 0.0
        %494 = vst.msk [vmem:[#allocation2 + $0x119] sm:$0x1] %vm470, 0.0
        %v495 = vld [vmem:[%s405] sm:$0xff]
        %v496 = vld [vmem:[%s405 + $0x8] sm:$0xff]
        %v497 = vld [vmem:[%s405 + $0x10] sm:$0xff]
        %v498 = vld [vmem:[%s405 + $0x18] sm:$0xff]
        %vm499 = vcmask 64512
        %500 = vst.msk [vmem:[#allocation2 + $0x1] sm:$0xff] %vm499, %v495
        %501 = vst.msk [vmem:[#allocation2 + $0x9] sm:$0xff] %vm499, %v496
        %502 = vst.msk [vmem:[#allocation2 + $0x19] sm:$0xff] %vm499, %v497
        %503 = vst.msk [vmem:[#allocation2 + $0x21] sm:$0xff] %vm499, %v498
        %v504 = vld [vmem:[%s396] sm:$0xff]
        %v505 = vld [vmem:[%s396 + $0x8] sm:$0xff]
        %v506 = vld [vmem:[%s396 + $0x10] sm:$0xff]
        %v507 = vld [vmem:[%s396 + $0x18] sm:$0xff]
        %v508 = vld [vmem:[%s396 + $0x20] sm:$0xff]
        %v509 = vld [vmem:[%s396 + $0x28] sm:$0xff]
        %v510 = vld [vmem:[%s396 + $0x30] sm:$0xff]
        %v511 = vld [vmem:[%s396 + $0x38] sm:$0xff]
        %v512 = vld [vmem:[%s396 + $0x40] sm:$0xff]
        %v513 = vld [vmem:[%s396 + $0x48] sm:$0xff]
        %v514 = vld [vmem:[%s396 + $0x50] sm:$0xff]
        %v515 = vld [vmem:[%s396 + $0x58] sm:$0xff]
        %v516 = vld [vmem:[%s396 + $0x60] sm:$0xff]
        %v517 = vld [vmem:[%s396 + $0x68] sm:$0xff]
        %v518 = vld [vmem:[%s396 + $0x70] sm:$0xff]
        %v519 = vld [vmem:[%s396 + $0x78] sm:$0xff]
        %s520 = scalar_lea.vmem [#allocation2], 48
        %521 = vst.msk [vmem:[%s520 + $0x1] sm:$0xff] %vm499, %v504
        %522 = vst.msk [vmem:[%s520 + $0x9] sm:$0xff] %vm499, %v505
        %523 = vst.msk [vmem:[%s520 + $0x19] sm:$0xff] %vm499, %v506
        %524 = vst.msk [vmem:[%s520 + $0x21] sm:$0xff] %vm499, %v507
        %525 = vst.msk [vmem:[%s520 + $0x31] sm:$0xff] %vm499, %v508
        %526 = vst.msk [vmem:[%s520 + $0x39] sm:$0xff] %vm499, %v509
        %527 = vst.msk [vmem:[%s520 + $0x49] sm:$0xff] %vm499, %v510
        %528 = vst.msk [vmem:[%s520 + $0x51] sm:$0xff] %vm499, %v511
        %529 = vst.msk [vmem:[%s520 + $0x61] sm:$0xff] %vm499, %v512
        %530 = vst.msk [vmem:[%s520 + $0x69] sm:$0xff] %vm499, %v513
        %531 = vst.msk [vmem:[%s520 + $0x79] sm:$0xff] %vm499, %v514
        %532 = vst.msk [vmem:[%s520 + $0x81] sm:$0xff] %vm499, %v515
        %533 = vst.msk [vmem:[%s520 + $0x91] sm:$0xff] %vm499, %v516
        %534 = vst.msk [vmem:[%s520 + $0x99] sm:$0xff] %vm499, %v517
        %535 = vst.msk [vmem:[%s520 + $0xa9] sm:$0xff] %vm499, %v518
        %536 = vst.msk [vmem:[%s520 + $0xb1] sm:$0xff] %vm499, %v519
        %s537 = scalar_lea.vmem %s405, 32 [#allocation8]
        %v538 = vld [vmem:[%s537] sm:$0xff]
        %v539 = vld [vmem:[%s537 + $0x8] sm:$0xff]
        %v540 = vld [vmem:[%s537 + $0x10] sm:$0xff]
        %v541 = vld [vmem:[%s537 + $0x18] sm:$0xff]
        %s542 = scalar_lea.vmem [#allocation2], 240
        %543 = vst.msk [vmem:[%s542 + $0x1] sm:$0xff] %vm499, %v538
        %544 = vst.msk [vmem:[%s542 + $0x9] sm:$0xff] %vm499, %v539
        %545 = vst.msk [vmem:[%s542 + $0x19] sm:$0xff] %vm499, %v540
        %546 = vst.msk [vmem:[%s542 + $0x21] sm:$0xff] %vm499, %v541
        %vm547 = vcmask 122880
        %548 = vst.msk [vmem:[#allocation3] sm:$0x1] %vm547, 0.0
        %549 = vst.msk [vmem:[#allocation3 + $0x18] sm:$0x1] %vm547, 0.0
        %550 = vst.msk [vmem:[#allocation3 + $0x30] sm:$0x1] %vm547, 0.0
        %551 = vst.msk [vmem:[#allocation3 + $0x48] sm:$0x1] %vm547, 0.0
        %552 = vst.msk [vmem:[#allocation3 + $0x60] sm:$0x1] %vm547, 0.0
        %553 = vst.msk [vmem:[#allocation3 + $0x78] sm:$0x1] %vm547, 0.0
        %554 = vst.msk [vmem:[#allocation3 + $0x90] sm:$0x1] %vm547, 0.0
        %555 = vst.msk [vmem:[#allocation3 + $0xa8] sm:$0x1] %vm547, 0.0
        %556 = vst.msk [vmem:[#allocation3 + $0xc0] sm:$0x1] %vm547, 0.0
        %557 = vst.msk [vmem:[#allocation3 + $0xd8] sm:$0x1] %vm547, 0.0
        %558 = vst.msk [vmem:[#allocation3 + $0x11] sm:$0x1] %vm547, 0.0
        %559 = vst.msk [vmem:[#allocation3 + $0x29] sm:$0x1] %vm547, 0.0
        %560 = vst.msk [vmem:[#allocation3 + $0x41] sm:$0x1] %vm547, 0.0
        %561 = vst.msk [vmem:[#allocation3 + $0x59] sm:$0x1] %vm547, 0.0
        %562 = vst.msk [vmem:[#allocation3 + $0x71] sm:$0x1] %vm547, 0.0
        %563 = vst.msk [vmem:[#allocation3 + $0x89] sm:$0x1] %vm547, 0.0
        %564 = vst.msk [vmem:[#allocation3 + $0xa1] sm:$0x1] %vm547, 0.0
        %565 = vst.msk [vmem:[#allocation3 + $0xb9] sm:$0x1] %vm547, 0.0
        %566 = vst.msk [vmem:[#allocation3 + $0xd1] sm:$0x1] %vm547, 0.0
        %567 = vst.msk [vmem:[#allocation3 + $0xe9] sm:$0x1] %vm547, 0.0
        %vm568 = vcmask 130048
        %569 = vst.msk [vmem:[#allocation4] sm:$0xff] %vm568, 0.0
        %570 = vst.msk [vmem:[#allocation4 + $0x8] sm:$0xff] %vm568, 0.0
        %571 = vst.msk [vmem:[#allocation4 + $0x10] sm:$0xff] %vm568, 0.0
        %572 = vst.msk [vmem:[#allocation4 + $0x18] sm:$0xff] %vm568, 0.0
        %573 = vst.msk [vmem:[#allocation4 + $0x20] sm:$0xff] %vm568, 0.0
        %574 = vst.msk [vmem:[#allocation4 + $0x28] sm:$0xff] %vm568, 0.0
        %575 = vst.msk [vmem:[#allocation4 + $0x30] sm:$0xff] %vm568, 0.0
        %576 = vst.msk [vmem:[#allocation4 + $0x38] sm:$0xff] %vm568, 0.0
        %577 = vst.msk [vmem:[#allocation4 + $0x40] sm:$0xff] %vm568, 0.0
        %578 = vst.msk [vmem:[#allocation4 + $0x48] sm:$0xff] %vm568, 0.0
        %579 = vst.msk [vmem:[#allocation4 + $0x50] sm:$0xff] %vm568, 0.0
        %580 = vst.msk [vmem:[#allocation4 + $0x58] sm:$0xff] %vm568, 0.0
        %581 = vst.msk [vmem:[#allocation4 + $0x60] sm:$0xff] %vm568, 0.0
        %582 = vst.msk [vmem:[#allocation4 + $0x68] sm:$0xff] %vm568, 0.0
        %583 = vst.msk [vmem:[#allocation4 + $0x70] sm:$0xff] %vm568, 0.0
        %584 = vst.msk [vmem:[#allocation4 + $0x78] sm:$0xff] %vm568, 0.0
        %v585 = vld [vmem:[#allocation2] sm:$0xff]
        %v586 = vld [vmem:[#allocation2 + $0x8] sm:$0xff]
        %v587 = vld [vmem:[#allocation2 + $0x10] sm:$0x3]
        %v588 = vld [vmem:[#allocation2 + $0x18] sm:$0xff]
        %v589 = vld [vmem:[#allocation2 + $0x20] sm:$0xff]
        %v590 = vld [vmem:[#allocation2 + $0x28] sm:$0x3]
        %v591 = vld [vmem:[#allocation2 + $0x30] sm:$0xff]
        %v592 = vld [vmem:[#allocation2 + $0x38] sm:$0xff]
        %v593 = vld [vmem:[#allocation2 + $0x40] sm:$0x3]
        %v594 = vld [vmem:[#allocation2 + $0x48] sm:$0xff]
        %v595 = vld [vmem:[#allocation2 + $0x50] sm:$0xff]
        %v596 = vld [vmem:[#allocation2 + $0x58] sm:$0x3]
        %v597 = vld [vmem:[#allocation2 + $0x60] sm:$0xff]
        %v598 = vld [vmem:[#allocation2 + $0x68] sm:$0xff]
        %v599 = vld [vmem:[#allocation2 + $0x70] sm:$0x3]
        %v600 = vld [vmem:[#allocation2 + $0x78] sm:$0xff]
        %v601 = vld [vmem:[#allocation2 + $0x80] sm:$0xff]
        %v602 = vld [vmem:[#allocation2 + $0x88] sm:$0x3]
        %v603 = vld [vmem:[#allocation2 + $0x90] sm:$0xff]
        %v604 = vld [vmem:[#allocation2 + $0x98] sm:$0xff]
        %v605 = vld [vmem:[#allocation2 + $0xa0] sm:$0x3]
        %v606 = vld [vmem:[#allocation2 + $0xa8] sm:$0xff]
        %v607 = vld [vmem:[#allocation2 + $0xb0] sm:$0xff]
        %v608 = vld [vmem:[#allocation2 + $0xb8] sm:$0x3]
        %v609 = vld [vmem:[#allocation4] sm:$0xff]
        %v610 = vld [vmem:[#allocation4 + $0x8] sm:$0xff]
        %v611 = vld [vmem:[#allocation4 + $0x10] sm:$0xff]
        %v612 = vld [vmem:[#allocation4 + $0x18] sm:$0xff]
        %v613 = vld [vmem:[#allocation4 + $0x20] sm:$0xff]
        %v614 = vld [vmem:[#allocation4 + $0x28] sm:$0xff]
        %v615 = vld [vmem:[#allocation4 + $0x30] sm:$0xff]
        %v616 = vld [vmem:[#allocation4 + $0x38] sm:$0xff]
        %v617 = vld [vmem:[#allocation4 + $0x40] sm:$0xff]
        %v618 = vld [vmem:[#allocation4 + $0x48] sm:$0xff]
        %v619 = vld [vmem:[#allocation4 + $0x50] sm:$0xff]
        %v620 = vld [vmem:[#allocation4 + $0x58] sm:$0xff]
        %v621 = vld [vmem:[#allocation4 + $0x60] sm:$0xff]
        %v622 = vld [vmem:[#allocation4 + $0x68] sm:$0xff]
        %v623 = vld [vmem:[#allocation4 + $0x70] sm:$0xff]
        %v624 = vld [vmem:[#allocation4 + $0x78] sm:$0xff]
        %v625 = vld [vmem:[#allocation10] sm:$0xff]
        %v627 = vsel %vm499, %v585, 0
        %v630 = vsel %vm499, %v586, 0
        %v633 = vsel %vm499, %v588, 0
        %v636 = vsel %vm499, %v589, 0
        %v639 = vsel %vm499, %v591, 0
        %v642 = vsel %vm499, %v592, 0
        %v645 = vsel %vm499, %v594, 0
        %v648 = vsel %vm499, %v595, 0
        %v651 = vsel %vm499, %v597, 0
        %v654 = vsel %vm499, %v598, 0
        %v657 = vsel %vm499, %v600, 0
        %v660 = vsel %vm499, %v601, 0
        %v663 = vsel %vm499, %v603, 0
        %v666 = vsel %vm499, %v604, 0
        %v669 = vsel %vm499, %v606, 0
        %v672 = vsel %vm499, %v607, 0
        %674 = vmatprep.subr.mxu0 0.0
        %675 = vmatpush1.msra.mxu0 %v625
        %676 = vmatprep.subr.mxu0 0.0
        %677 = vmatpush1.msra.mxu0 0.0
        %678 = vmatprep.subr.mxu0 0.0
        %679 = vmatpush1.msra.mxu0 0.0
        %680 = vmatprep.subr.mxu0 0.0
        %681 = vmatpush1.msra.mxu0 0.0
        %682 = vmatprep.subr.mxu0 0.0
        %683 = vmatpush1.msra.mxu0 0.0
        %684 = vmatprep.subr.mxu0 0.0
        %685 = vmatpush1.msra.mxu0 0.0
        %686 = vmatprep.subr.mxu0 0.0
        %687 = vmatpush1.msra.mxu0 0.0
        %688 = vmatprep.subr.mxu0 0.0
        %689 = vmatpush1.msra.mxu0 0.0
        %690 = vmatprep.subr.mxu0 0.0
        %691 = vmatpush1.msra.mxu0 0.0
        %692 = vmatprep.subr.mxu0 0.0
        %693 = vmatpush1.msra.mxu0 0.0
        %694 = vmatprep.subr.mxu0 0.0
        %695 = vmatpush1.msra.mxu0 0.0
        %696 = vmatprep.subr.mxu0 0.0
        %697 = vmatpush1.msra.mxu0 0.0
        %698 = vmatprep.subr.mxu0 0.0
        %699 = vmatpush1.msra.mxu0 0.0
        %700 = vmatprep.subr.mxu0 0.0
        %701 = vmatpush1.msra.mxu0 0.0
        %702 = vmatprep.subr.mxu0 0.0
        %703 = vmatpush1.msra.mxu0 0.0
        %704 = vmatprep.subr.mxu0 0.0
        %705 = vmatpush1.msra.mxu0 0.0
        %706 = vmatprep.subr.mxu0 0.0
        %707 = vmatpush1.msra.mxu0 0.0
        %708 = vmatprep.subr.mxu0 0.0
        %709 = vmatpush1.msra.mxu0 0.0
        %710 = vmatprep.subr.mxu0 0.0
        %711 = vmatpush1.msra.mxu0 0.0
        %712 = vmatprep.subr.mxu0 0.0
        %713 = vmatpush1.msra.mxu0 0.0
        %714 = vmatprep.subr.mxu0 0.0
        %715 = vmatpush1.msra.mxu0 0.0
        %716 = vmatprep.subr.mxu0 0.0
        %717 = vmatpush1.msra.mxu0 0.0
        %718 = vmatprep.subr.mxu0 0.0
        %719 = vmatpush1.msra.mxu0 0.0
        %720 = vmatprep.subr.mxu0 0.0
        %721 = vmatpush1.msra.mxu0 0.0
        %722 = vmatprep.subr.mxu0 0.0
        %723 = vmatpush1.msra.mxu0 0.0
        %724 = vmatprep.subr.mxu0 0.0
        %725 = vmatpush1.msra.mxu0 0.0
        %726 = vmatprep.subr.mxu0 0.0
        %727 = vmatpush1.msra.mxu0 0.0
        %728 = vmatprep.subr.mxu0 0.0
        %729 = vmatpush1.msra.mxu0 0.0
        %730 = vmatprep.subr.mxu0 0.0
        %731 = vmatpush1.msra.mxu0 0.0
        %732 = vmatprep.subr.mxu0 0.0
        %733 = vmatpush1.msra.mxu0 0.0
        %734 = vmatprep.subr.mxu0 0.0
        %735 = vmatpush1.msra.mxu0 0.0
        %736 = vmatprep.subr.mxu0 0.0
        %737 = vmatpush1.msra.mxu0 0.0
        %738 = vmatprep.mubr.f32.mxu0 0.0
        %739 = vmatmul.mubr.f32.gmra.mrb[0].mxu0 %v627
        %v740 = vpop.f32.mrb[0].mxu0
        %v741 = vadd.f32 0.0, %v740
        %v742 = vpop.f32.mrb[0].mxu0
        %743 = vmatprep.mubr.f32.mxu0 0.0
        %744 = vmatmul.mubr.f32.gmra.mrb[0].mxu0 %v630
        %v745 = vpop.f32.mrb[0].mxu0
        %v746 = vadd.f32 0.0, %v745
        %v747 = vpop.f32.mrb[0].mxu0
        %748 = vmatprep.mubr.f32.mxu0 0.0
        %749 = vmatmul.mubr.f32.gmra.mrb[0].mxu0 %v633
        %v750 = vpop.f32.mrb[0].mxu0
        %v751 = vadd.f32 0.0, %v750
        %v752 = vpop.f32.mrb[0].mxu0
        %753 = vmatprep.mubr.f32.mxu0 0.0
        %754 = vmatmul.mubr.f32.gmra.mrb[0].mxu0 %v636
        %v755 = vpop.f32.mrb[0].mxu0
        %v756 = vadd.f32 0.0, %v755
        %v757 = vpop.f32.mrb[0].mxu0
        %758 = vmatprep.mubr.f32.mxu0 0.0
        %759 = vmatmul.mubr.f32.gmra.mrb[0].mxu0 %v639
        %v760 = vpop.f32.mrb[0].mxu0
        %v761 = vadd.f32 0.0, %v760
        %v762 = vpop.f32.mrb[0].mxu0
        %763 = vmatprep.mubr.f32.mxu0 0.0
        %764 = vmatmul.mubr.f32.gmra.mrb[0].mxu0 %v642
        %v765 = vpop.f32.mrb[0].mxu0
        %v766 = vadd.f32 0.0, %v765
        %v767 = vpop.f32.mrb[0].mxu0
        %768 = vmatprep.mubr.f32.mxu0 0.0
        %769 = vmatmul.mubr.f32.gmra.mrb[0].mxu0 %v645
        %v770 = vpop.f32.mrb[0].mxu0
        %v771 = vadd.f32 0.0, %v770
        %v772 = vpop.f32.mrb[0].mxu0
        %773 = vmatprep.mubr.f32.mxu0 0.0
        %774 = vmatmul.mubr.f32.gmra.mrb[0].mxu0 %v648
        %v775 = vpop.f32.mrb[0].mxu0
        %v776 = vadd.f32 0.0, %v775
        %v777 = vpop.f32.mrb[0].mxu0
        %778 = vmatprep.mubr.f32.mxu0 0.0
        %779 = vmatmul.mubr.f32.gmra.mrb[0].mxu0 %v651
        %v780 = vpop.f32.mrb[0].mxu0
        %v781 = vadd.f32 0.0, %v780
        %v782 = vpop.f32.mrb[0].mxu0
        %783 = vmatprep.mubr.f32.mxu0 0.0
        %784 = vmatmul.mubr.f32.gmra.mrb[0].mxu0 %v654
        %v785 = vpop.f32.mrb[0].mxu0
        %v786 = vadd.f32 0.0, %v785
        %v787 = vpop.f32.mrb[0].mxu0
        %788 = vmatprep.mubr.f32.mxu0 0.0
        %789 = vmatmul.mubr.f32.gmra.mrb[0].mxu0 %v657
        %v790 = vpop.f32.mrb[0].mxu0
        %v791 = vadd.f32 0.0, %v790
        %v792 = vpop.f32.mrb[0].mxu0
        %793 = vmatprep.mubr.f32.mxu0 0.0
        %794 = vmatmul.mubr.f32.gmra.mrb[0].mxu0 %v660
        %v795 = vpop.f32.mrb[0].mxu0
        %v796 = vadd.f32 0.0, %v795
        %v797 = vpop.f32.mrb[0].mxu0
        %798 = vmatprep.mubr.f32.mxu0 0.0
        %799 = vmatmul.mubr.f32.gmra.mrb[0].mxu0 %v663
        %v800 = vpop.f32.mrb[0].mxu0
        %v801 = vadd.f32 0.0, %v800
        %v802 = vpop.f32.mrb[0].mxu0
        %803 = vmatprep.mubr.f32.mxu0 0.0
        %804 = vmatmul.mubr.f32.gmra.mrb[0].mxu0 %v666
        %v805 = vpop.f32.mrb[0].mxu0
        %v806 = vadd.f32 0.0, %v805
        %v807 = vpop.f32.mrb[0].mxu0
        %808 = vmatprep.mubr.f32.mxu0 0.0
        %809 = vmatmul.mubr.f32.gmra.mrb[0].mxu0 %v669
        %v810 = vpop.f32.mrb[0].mxu0
        %v811 = vadd.f32 0.0, %v810
        %v812 = vpop.f32.mrb[0].mxu0
        %813 = vmatprep.mubr.f32.mxu0 0.0
        %814 = vmatmul.mubr.f32.gmra.mrb[0].mxu0 %v672
        %v815 = vpop.f32.mrb[0].mxu0
        %v816 = vadd.f32 0.0, %v815
        %v817 = vpop.f32.mrb[0].mxu0
        %818 = vdwg.mxu0
        %v819 = vadd.f32 %v609, %v741
        %v820 = vadd.f32 %v610, %v746
        %v821 = vadd.f32 %v611, %v751
        %v822 = vadd.f32 %v612, %v756
        %v823 = vadd.f32 %v613, %v761
        %v824 = vadd.f32 %v614, %v766
        %v825 = vadd.f32 %v615, %v771
        %v826 = vadd.f32 %v616, %v776
        %v827 = vadd.f32 %v617, %v781
        %v828 = vadd.f32 %v618, %v786
        %v829 = vadd.f32 %v619, %v791
        %v830 = vadd.f32 %v620, %v796
        %v831 = vadd.f32 %v621, %v801
        %v832 = vadd.f32 %v622, %v806
        %v833 = vadd.f32 %v623, %v811
        %v834 = vadd.f32 %v624, %v816
        %835 = vst.msk [vmem:[#allocation4] sm:$0xff] %vm568, %v819
        %836 = vst.msk [vmem:[#allocation4 + $0x8] sm:$0xff] %vm568, %v820
        %837 = vst.msk [vmem:[#allocation4 + $0x10] sm:$0xff] %vm568, %v821
        %838 = vst.msk [vmem:[#allocation4 + $0x18] sm:$0xff] %vm568, %v822
        %839 = vst.msk [vmem:[#allocation4 + $0x20] sm:$0xff] %vm568, %v823
        %840 = vst.msk [vmem:[#allocation4 + $0x28] sm:$0xff] %vm568, %v824
        %841 = vst.msk [vmem:[#allocation4 + $0x30] sm:$0xff] %vm568, %v825
        %842 = vst.msk [vmem:[#allocation4 + $0x38] sm:$0xff] %vm568, %v826
        %843 = vst.msk [vmem:[#allocation4 + $0x40] sm:$0xff] %vm568, %v827
        %844 = vst.msk [vmem:[#allocation4 + $0x48] sm:$0xff] %vm568, %v828
        %845 = vst.msk [vmem:[#allocation4 + $0x50] sm:$0xff] %vm568, %v829
        %846 = vst.msk [vmem:[#allocation4 + $0x58] sm:$0xff] %vm568, %v830
        %847 = vst.msk [vmem:[#allocation4 + $0x60] sm:$0xff] %vm568, %v831
        %848 = vst.msk [vmem:[#allocation4 + $0x68] sm:$0xff] %vm568, %v832
        %849 = vst.msk [vmem:[#allocation4 + $0x70] sm:$0xff] %vm568, %v833
        %850 = vst.msk [vmem:[#allocation4 + $0x78] sm:$0xff] %vm568, %v834
        %vm859 = vcmask 1046528
        %v860 = vrot.slane %v585, 1
        %v861 = vrot.slane %v586, 1
        %v862 = vsel %vm859, %v860, %v861
        %v863 = vrot.slane %v587, 1
        %v864 = vsel %vm859, %v861, %v863
        %v865 = vrot.slane %v588, 1
        %v866 = vrot.slane %v589, 1
        %v867 = vsel %vm859, %v865, %v866
        %v868 = vrot.slane %v590, 1
        %v869 = vsel %vm859, %v866, %v868
        %v870 = vrot.slane %v591, 1
        %v871 = vrot.slane %v592, 1
        %v872 = vsel %vm859, %v870, %v871
        %v873 = vrot.slane %v593, 1
        %v874 = vsel %vm859, %v871, %v873
        %v875 = vrot.slane %v594, 1
        %v876 = vrot.slane %v595, 1
        %v877 = vsel %vm859, %v875, %v876
        %v878 = vrot.slane %v596, 1
        %v879 = vsel %vm859, %v876, %v878
        %v880 = vrot.slane %v597, 1
        %v881 = vrot.slane %v598, 1
        %v882 = vsel %vm859, %v880, %v881
        %v883 = vrot.slane %v599, 1
        %v884 = vsel %vm859, %v881, %v883
        %v885 = vrot.slane %v600, 1
        %v886 = vrot.slane %v601, 1
        %v887 = vsel %vm859, %v885, %v886
        %v888 = vrot.slane %v602, 1
        %v889 = vsel %vm859, %v886, %v888
        %v890 = vrot.slane %v603, 1
        %v891 = vrot.slane %v604, 1
        %v892 = vsel %vm859, %v890, %v891
        %v893 = vrot.slane %v605, 1
        %v894 = vsel %vm859, %v891, %v893
        %v895 = vrot.slane %v606, 1
        %v896 = vrot.slane %v607, 1
        %v897 = vsel %vm859, %v895, %v896
        %v898 = vrot.slane %v608, 1
        %v899 = vsel %vm859, %v896, %v898
        %v900 = vld [vmem:[#allocation4] sm:$0xff]
        %v901 = vld [vmem:[#allocation4 + $0x8] sm:$0xff]
        %v902 = vld [vmem:[#allocation4 + $0x10] sm:$0xff]
        %v903 = vld [vmem:[#allocation4 + $0x18] sm:$0xff]
        %v904 = vld [vmem:[#allocation4 + $0x20] sm:$0xff]
        %v905 = vld [vmem:[#allocation4 + $0x28] sm:$0xff]
        %v906 = vld [vmem:[#allocation4 + $0x30] sm:$0xff]
        %v907 = vld [vmem:[#allocation4 + $0x38] sm:$0xff]
        %v908 = vld [vmem:[#allocation4 + $0x40] sm:$0xff]
        %v909 = vld [vmem:[#allocation4 + $0x48] sm:$0xff]
        %v910 = vld [vmem:[#allocation4 + $0x50] sm:$0xff]
        %v911 = vld [vmem:[#allocation4 + $0x58] sm:$0xff]
        %v912 = vld [vmem:[#allocation4 + $0x60] sm:$0xff]
        %v913 = vld [vmem:[#allocation4 + $0x68] sm:$0xff]
        %v914 = vld [vmem:[#allocation4 + $0x70] sm:$0xff]
        %v915 = vld [vmem:[#allocation4 + $0x78] sm:$0xff]
        %s916 = scalar_lea.vmem [#allocation10], 8
        %v917 = vld [vmem:[%s916] sm:$0xff]
        %v918 = vsel %vm499, %v862, 0
        %v920 = vsel %vm499, %v864, 0
        %v922 = vsel %vm499, %v867, 0
        %v924 = vsel %vm499, %v869, 0
        %v926 = vsel %vm499, %v872, 0
        %v928 = vsel %vm499, %v874, 0
        %v930 = vsel %vm499, %v877, 0
        %v932 = vsel %vm499, %v879, 0
        %v934 = vsel %vm499, %v882, 0
        %v936 = vsel %vm499, %v884, 0
        %v938 = vsel %vm499, %v887, 0
        %v940 = vsel %vm499, %v889, 0
        %v942 = vsel %vm499, %v892, 0
        %v944 = vsel %vm499, %v894, 0
        %v946 = vsel %vm499, %v897, 0
        %v948 = vsel %vm499, %v899, 0
        %950 = vmatprep.subr.mxu0 0.0
        %951 = vmatpush1.msra.mxu0 %v917
        %952 = vmatprep.subr.mxu0 0.0
        %953 = vmatpush1.msra.mxu0 0.0
        %954 = vmatprep.subr.mxu0 0.0
        %955 = vmatpush1.msra.mxu0 0.0
        %956 = vmatprep.subr.mxu0 0.0
        %957 = vmatpush1.msra.mxu0 0.0
        %958 = vmatprep.subr.mxu0 0.0
        %959 = vmatpush1.msra.mxu0 0.0
        %960 = vmatprep.subr.mxu0 0.0
        %961 = vmatpush1.msra.mxu0 0.0
        %962 = vmatprep.subr.mxu0 0.0
        %963 = vmatpush1.msra.mxu0 0.0
        %964 = vmatprep.subr.mxu0 0.0
        %965 = vmatpush1.msra.mxu0 0.0
        %966 = vmatprep.subr.mxu0 0.0
        %967 = vmatpush1.msra.mxu0 0.0
        %968 = vmatprep.subr.mxu0 0.0
        %969 = vmatpush1.msra.mxu0 0.0
        %970 = vmatprep.subr.mxu0 0.0
        %971 = vmatpush1.msra.mxu0 0.0
        %972 = vmatprep.subr.mxu0 0.0
        %973 = vmatpush1.msra.mxu0 0.0
        %974 = vmatprep.subr.mxu0 0.0
        %975 = vmatpush1.msra.mxu0 0.0
        %976 = vmatprep.subr.mxu0 0.0
        %977 = vmatpush1.msra.mxu0 0.0
        %978 = vmatprep.subr.mxu0 0.0
        %979 = vmatpush1.msra.mxu0 0.0
        %980 = vmatprep.subr.mxu0 0.0
        %981 = vmatpush1.msra.mxu0 0.0
        %982 = vmatprep.subr.mxu0 0.0
        %983 = vmatpush1.msra.mxu0 0.0
        %984 = vmatprep.subr.mxu0 0.0
        %985 = vmatpush1.msra.mxu0 0.0
        %986 = vmatprep.subr.mxu0 0.0
        %987 = vmatpush1.msra.mxu0 0.0
        %988 = vmatprep.subr.mxu0 0.0
        %989 = vmatpush1.msra.mxu0 0.0
        %990 = vmatprep.subr.mxu0 0.0
        %991 = vmatpush1.msra.mxu0 0.0
        %992 = vmatprep.subr.mxu0 0.0
        %993 = vmatpush1.msra.mxu0 0.0
        %994 = vmatprep.subr.mxu0 0.0
        %995 = vmatpush1.msra.mxu0 0.0
        %996 = vmatprep.subr.mxu0 0.0
        %997 = vmatpush1.msra.mxu0 0.0
        %998 = vmatprep.subr.mxu0 0.0
        %999 = vmatpush1.msra.mxu0 0.0
        %1000 = vmatprep.subr.mxu0 0.0
        %1001 = vmatpush1.msra.mxu0 0.0
        %1002 = vmatprep.subr.mxu0 0.0
        %1003 = vmatpush1.msra.mxu0 0.0
        %1004 = vmatprep.subr.mxu0 0.0
        %1005 = vmatpush1.msra.mxu0 0.0
        %1006 = vmatprep.subr.mxu0 0.0
        %1007 = vmatpush1.msra.mxu0 0.0
        %1008 = vmatprep.subr.mxu0 0.0
        %1009 = vmatpush1.msra.mxu0 0.0
        %1010 = vmatprep.subr.mxu0 0.0
        %1011 = vmatpush1.msra.mxu0 0.0
        %1012 = vmatprep.subr.mxu0 0.0
        %1013 = vmatpush1.msra.mxu0 0.0
        %1014 = vmatprep.mubr.f32.mxu0 0.0
        %1015 = vmatmul.mubr.f32.gmra.mrb[0].mxu0 %v918
        %v1016 = vpop.f32.mrb[0].mxu0
        %v1017 = vadd.f32 0.0, %v1016
        %v1018 = vpop.f32.mrb[0].mxu0
        %1019 = vmatprep.mubr.f32.mxu0 0.0
        %1020 = vmatmul.mubr.f32.gmra.mrb[0].mxu0 %v920
        %v1021 = vpop.f32.mrb[0].mxu0
        %v1022 = vadd.f32 0.0, %v1021
        %v1023 = vpop.f32.mrb[0].mxu0
        %1024 = vmatprep.mubr.f32.mxu0 0.0
        %1025 = vmatmul.mubr.f32.gmra.mrb[0].mxu0 %v922
        %v1026 = vpop.f32.mrb[0].mxu0
        %v1027 = vadd.f32 0.0, %v1026
        %v1028 = vpop.f32.mrb[0].mxu0
        %1029 = vmatprep.mubr.f32.mxu0 0.0
        %1030 = vmatmul.mubr.f32.gmra.mrb[0].mxu0 %v924
        %v1031 = vpop.f32.mrb[0].mxu0
        %v1032 = vadd.f32 0.0, %v1031
        %v1033 = vpop.f32.mrb[0].mxu0
        %1034 = vmatprep.mubr.f32.mxu0 0.0
        %1035 = vmatmul.mubr.f32.gmra.mrb[0].mxu0 %v926
        %v1036 = vpop.f32.mrb[0].mxu0
        %v1037 = vadd.f32 0.0, %v1036
        %v1038 = vpop.f32.mrb[0].mxu0
        %1039 = vmatprep.mubr.f32.mxu0 0.0
        %1040 = vmatmul.mubr.f32.gmra.mrb[0].mxu0 %v928
        %v1041 = vpop.f32.mrb[0].mxu0
        %v1042 = vadd.f32 0.0, %v1041
        %v1043 = vpop.f32.mrb[0].mxu0
        %1044 = vmatprep.mubr.f32.mxu0 0.0
        %1045 = vmatmul.mubr.f32.gmra.mrb[0].mxu0 %v930
        %v1046 = vpop.f32.mrb[0].mxu0
        %v1047 = vadd.f32 0.0, %v1046
        %v1048 = vpop.f32.mrb[0].mxu0
        %1049 = vmatprep.mubr.f32.mxu0 0.0
        %1050 = vmatmul.mubr.f32.gmra.mrb[0].mxu0 %v932
        %v1051 = vpop.f32.mrb[0].mxu0
        %v1052 = vadd.f32 0.0, %v1051
        %v1053 = vpop.f32.mrb[0].mxu0
        %1054 = vmatprep.mubr.f32.mxu0 0.0
        %1055 = vmatmul.mubr.f32.gmra.mrb[0].mxu0 %v934
        %v1056 = vpop.f32.mrb[0].mxu0
        %v1057 = vadd.f32 0.0, %v1056
        %v1058 = vpop.f32.mrb[0].mxu0
        %1059 = vmatprep.mubr.f32.mxu0 0.0
        %1060 = vmatmul.mubr.f32.gmra.mrb[0].mxu0 %v936
        %v1061 = vpop.f32.mrb[0].mxu0
        %v1062 = vadd.f32 0.0, %v1061
        %v1063 = vpop.f32.mrb[0].mxu0
        %1064 = vmatprep.mubr.f32.mxu0 0.0
        %1065 = vmatmul.mubr.f32.gmra.mrb[0].mxu0 %v938
        %v1066 = vpop.f32.mrb[0].mxu0
        %v1067 = vadd.f32 0.0, %v1066
        %v1068 = vpop.f32.mrb[0].mxu0
        %1069 = vmatprep.mubr.f32.mxu0 0.0
        %1070 = vmatmul.mubr.f32.gmra.mrb[0].mxu0 %v940
        %v1071 = vpop.f32.mrb[0].mxu0
        %v1072 = vadd.f32 0.0, %v1071
        %v1073 = vpop.f32.mrb[0].mxu0
        %1074 = vmatprep.mubr.f32.mxu0 0.0
        %1075 = vmatmul.mubr.f32.gmra.mrb[0].mxu0 %v942
        %v1076 = vpop.f32.mrb[0].mxu0
        %v1077 = vadd.f32 0.0, %v1076
        %v1078 = vpop.f32.mrb[0].mxu0
        %1079 = vmatprep.mubr.f32.mxu0 0.0
        %1080 = vmatmul.mubr.f32.gmra.mrb[0].mxu0 %v944
        %v1081 = vpop.f32.mrb[0].mxu0
        %v1082 = vadd.f32 0.0, %v1081
        %v1083 = vpop.f32.mrb[0].mxu0
        %1084 = vmatprep.mubr.f32.mxu0 0.0
        %1085 = vmatmul.mubr.f32.gmra.mrb[0].mxu0 %v946
        %v1086 = vpop.f32.mrb[0].mxu0
        %v1087 = vadd.f32 0.0, %v1086
        %v1088 = vpop.f32.mrb[0].mxu0
        %1089 = vmatprep.mubr.f32.mxu0 0.0
        %1090 = vmatmul.mubr.f32.gmra.mrb[0].mxu0 %v948
        %v1091 = vpop.f32.mrb[0].mxu0
        %v1092 = vadd.f32 0.0, %v1091
        %v1093 = vpop.f32.mrb[0].mxu0
        %1094 = vdwg.mxu0
        %v1095 = vadd.f32 %v900, %v1017
        %v1096 = vadd.f32 %v901, %v1022
        %v1097 = vadd.f32 %v902, %v1027
        %v1098 = vadd.f32 %v903, %v1032
        %v1099 = vadd.f32 %v904, %v1037
        %v1100 = vadd.f32 %v905, %v1042
        %v1101 = vadd.f32 %v906, %v1047
        %v1102 = vadd.f32 %v907, %v1052
        %v1103 = vadd.f32 %v908, %v1057
        %v1104 = vadd.f32 %v909, %v1062
        %v1105 = vadd.f32 %v910, %v1067
        %v1106 = vadd.f32 %v911, %v1072
        %v1107 = vadd.f32 %v912, %v1077
        %v1108 = vadd.f32 %v913, %v1082
        %v1109 = vadd.f32 %v914, %v1087
        %v1110 = vadd.f32 %v915, %v1092
        %1111 = vst.msk [vmem:[#allocation4] sm:$0xff] %vm568, %v1095
        %1112 = vst.msk [vmem:[#allocation4 + $0x8] sm:$0xff] %vm568, %v1096
        %1113 = vst.msk [vmem:[#allocation4 + $0x10] sm:$0xff] %vm568, %v1097
        %1114 = vst.msk [vmem:[#allocation4 + $0x18] sm:$0xff] %vm568, %v1098
        %1115 = vst.msk [vmem:[#allocation4 + $0x20] sm:$0xff] %vm568, %v1099
        %1116 = vst.msk [vmem:[#allocation4 + $0x28] sm:$0xff] %vm568, %v1100
        %1117 = vst.msk [vmem:[#allocation4 + $0x30] sm:$0xff] %vm568, %v1101
        %1118 = vst.msk [vmem:[#allocation4 + $0x38] sm:$0xff] %vm568, %v1102
        %1119 = vst.msk [vmem:[#allocation4 + $0x40] sm:$0xff] %vm568, %v1103
        %1120 = vst.msk [vmem:[#allocation4 + $0x48] sm:$0xff] %vm568, %v1104
        %1121 = vst.msk [vmem:[#allocation4 + $0x50] sm:$0xff] %vm568, %v1105
        %1122 = vst.msk [vmem:[#allocation4 + $0x58] sm:$0xff] %vm568, %v1106
        %1123 = vst.msk [vmem:[#allocation4 + $0x60] sm:$0xff] %vm568, %v1107
        %1124 = vst.msk [vmem:[#allocation4 + $0x68] sm:$0xff] %vm568, %v1108
        %1125 = vst.msk [vmem:[#allocation4 + $0x70] sm:$0xff] %vm568, %v1109
        %1126 = vst.msk [vmem:[#allocation4 + $0x78] sm:$0xff] %vm568, %v1110
        %vm1127 = vcmask 1045504
        %v1128 = vrot.slane %v585, 2
        %v1129 = vrot.slane %v586, 2
        %v1130 = vsel %vm1127, %v1128, %v1129
        %v1131 = vrot.slane %v587, 2
        %v1132 = vsel %vm1127, %v1129, %v1131
        %v1133 = vrot.slane %v588, 2
        %v1134 = vrot.slane %v589, 2
        %v1135 = vsel %vm1127, %v1133, %v1134
        %v1136 = vrot.slane %v590, 2
        %v1137 = vsel %vm1127, %v1134, %v1136
        %v1138 = vrot.slane %v591, 2
        %v1139 = vrot.slane %v592, 2
        %v1140 = vsel %vm1127, %v1138, %v1139
        %v1141 = vrot.slane %v593, 2
        %v1142 = vsel %vm1127, %v1139, %v1141
        %v1143 = vrot.slane %v594, 2
        %v1144 = vrot.slane %v595, 2
        %v1145 = vsel %vm1127, %v1143, %v1144
        %v1146 = vrot.slane %v596, 2
        %v1147 = vsel %vm1127, %v1144, %v1146
        %v1148 = vrot.slane %v597, 2
        %v1149 = vrot.slane %v598, 2
        %v1150 = vsel %vm1127, %v1148, %v1149
        %v1151 = vrot.slane %v599, 2
        %v1152 = vsel %vm1127, %v1149, %v1151
        %v1153 = vrot.slane %v600, 2
        %v1154 = vrot.slane %v601, 2
        %v1155 = vsel %vm1127, %v1153, %v1154
        %v1156 = vrot.slane %v602, 2
        %v1157 = vsel %vm1127, %v1154, %v1156
        %v1158 = vrot.slane %v603, 2
        %v1159 = vrot.slane %v604, 2
        %v1160 = vsel %vm1127, %v1158, %v1159
        %v1161 = vrot.slane %v605, 2
        %v1162 = vsel %vm1127, %v1159, %v1161
        %v1163 = vrot.slane %v606, 2
        %v1164 = vrot.slane %v607, 2
        %v1165 = vsel %vm1127, %v1163, %v1164
        %v1166 = vrot.slane %v608, 2
        %v1167 = vsel %vm1127, %v1164, %v1166
        %v1168 = vld [vmem:[#allocation4] sm:$0xff]
        %v1169 = vld [vmem:[#allocation4 + $0x8] sm:$0xff]
        %v1170 = vld [vmem:[#allocation4 + $0x10] sm:$0xff]
        %v1171 = vld [vmem:[#allocation4 + $0x18] sm:$0xff]
        %v1172 = vld [vmem:[#allocation4 + $0x20] sm:$0xff]
        %v1173 = vld [vmem:[#allocation4 + $0x28] sm:$0xff]
        %v1174 = vld [vmem:[#allocation4 + $0x30] sm:$0xff]
        %v1175 = vld [vmem:[#allocation4 + $0x38] sm:$0xff]
        %v1176 = vld [vmem:[#allocation4 + $0x40] sm:$0xff]
        %v1177 = vld [vmem:[#allocation4 + $0x48] sm:$0xff]
        %v1178 = vld [vmem:[#allocation4 + $0x50] sm:$0xff]
        %v1179 = vld [vmem:[#allocation4 + $0x58] sm:$0xff]
        %v1180 = vld [vmem:[#allocation4 + $0x60] sm:$0xff]
        %v1181 = vld [vmem:[#allocation4 + $0x68] sm:$0xff]
        %v1182 = vld [vmem:[#allocation4 + $0x70] sm:$0xff]
        %v1183 = vld [vmem:[#allocation4 + $0x78] sm:$0xff]
        %s1184 = scalar_lea.vmem [#allocation10], 16
        %v1185 = vld [vmem:[%s1184] sm:$0xff]
        %v1186 = vsel %vm499, %v1130, 0
        %v1188 = vsel %vm499, %v1132, 0
        %v1190 = vsel %vm499, %v1135, 0
        %v1192 = vsel %vm499, %v1137, 0
        %v1194 = vsel %vm499, %v1140, 0
        %v1196 = vsel %vm499, %v1142, 0
        %v1198 = vsel %vm499, %v1145, 0
        %v1200 = vsel %vm499, %v1147, 0
        %v1202 = vsel %vm499, %v1150, 0
        %v1204 = vsel %vm499, %v1152, 0
        %v1206 = vsel %vm499, %v1155, 0
        %v1208 = vsel %vm499, %v1157, 0
        %v1210 = vsel %vm499, %v1160, 0
        %v1212 = vsel %vm499, %v1162, 0
        %v1214 = vsel %vm499, %v1165, 0
        %v1216 = vsel %vm499, %v1167, 0
        %1218 = vmatprep.subr.mxu0 0.0
        %1219 = vmatpush1.msra.mxu0 %v1185
        %1220 = vmatprep.subr.mxu0 0.0
        %1221 = vmatpush1.msra.mxu0 0.0
        %1222 = vmatprep.subr.mxu0 0.0
        %1223 = vmatpush1.msra.mxu0 0.0
        %1224 = vmatprep.subr.mxu0 0.0
        %1225 = vmatpush1.msra.mxu0 0.0
        %1226 = vmatprep.subr.mxu0 0.0
        %1227 = vmatpush1.msra.mxu0 0.0
        %1228 = vmatprep.subr.mxu0 0.0
        %1229 = vmatpush1.msra.mxu0 0.0
        %1230 = vmatprep.subr.mxu0 0.0
        %1231 = vmatpush1.msra.mxu0 0.0
        %1232 = vmatprep.subr.mxu0 0.0
        %1233 = vmatpush1.msra.mxu0 0.0
        %1234 = vmatprep.subr.mxu0 0.0
        %1235 = vmatpush1.msra.mxu0 0.0
        %1236 = vmatprep.subr.mxu0 0.0
        %1237 = vmatpush1.msra.mxu0 0.0
        %1238 = vmatprep.subr.mxu0 0.0
        %1239 = vmatpush1.msra.mxu0 0.0
        %1240 = vmatprep.subr.mxu0 0.0
        %1241 = vmatpush1.msra.mxu0 0.0
        %1242 = vmatprep.subr.mxu0 0.0
        %1243 = vmatpush1.msra.mxu0 0.0
        %1244 = vmatprep.subr.mxu0 0.0
        %1245 = vmatpush1.msra.mxu0 0.0
        %1246 = vmatprep.subr.mxu0 0.0
        %1247 = vmatpush1.msra.mxu0 0.0
        %1248 = vmatprep.subr.mxu0 0.0
        %1249 = vmatpush1.msra.mxu0 0.0
        %1250 = vmatprep.subr.mxu0 0.0
        %1251 = vmatpush1.msra.mxu0 0.0
        %1252 = vmatprep.subr.mxu0 0.0
        %1253 = vmatpush1.msra.mxu0 0.0
        %1254 = vmatprep.subr.mxu0 0.0
        %1255 = vmatpush1.msra.mxu0 0.0
        %1256 = vmatprep.subr.mxu0 0.0
        %1257 = vmatpush1.msra.mxu0 0.0
        %1258 = vmatprep.subr.mxu0 0.0
        %1259 = vmatpush1.msra.mxu0 0.0
        %1260 = vmatprep.subr.mxu0 0.0
        %1261 = vmatpush1.msra.mxu0 0.0
        %1262 = vmatprep.subr.mxu0 0.0
        %1263 = vmatpush1.msra.mxu0 0.0
        %1264 = vmatprep.subr.mxu0 0.0
        %1265 = vmatpush1.msra.mxu0 0.0
        %1266 = vmatprep.subr.mxu0 0.0
        %1267 = vmatpush1.msra.mxu0 0.0
        %1268 = vmatprep.subr.mxu0 0.0
        %1269 = vmatpush1.msra.mxu0 0.0
        %1270 = vmatprep.subr.mxu0 0.0
        %1271 = vmatpush1.msra.mxu0 0.0
        %1272 = vmatprep.subr.mxu0 0.0
        %1273 = vmatpush1.msra.mxu0 0.0
        %1274 = vmatprep.subr.mxu0 0.0
        %1275 = vmatpush1.msra.mxu0 0.0
        %1276 = vmatprep.subr.mxu0 0.0
        %1277 = vmatpush1.msra.mxu0 0.0
        %1278 = vmatprep.subr.mxu0 0.0
        %1279 = vmatpush1.msra.mxu0 0.0
        %1280 = vmatprep.subr.mxu0 0.0
        %1281 = vmatpush1.msra.mxu0 0.0
        %1282 = vmatprep.mubr.f32.mxu0 0.0
        %1283 = vmatmul.mubr.f32.gmra.mrb[0].mxu0 %v1186
        %v1284 = vpop.f32.mrb[0].mxu0
        %v1285 = vadd.f32 0.0, %v1284
        %v1286 = vpop.f32.mrb[0].mxu0
        %1287 = vmatprep.mubr.f32.mxu0 0.0
        %1288 = vmatmul.mubr.f32.gmra.mrb[0].mxu0 %v1188
        %v1289 = vpop.f32.mrb[0].mxu0
        %v1290 = vadd.f32 0.0, %v1289
        %v1291 = vpop.f32.mrb[0].mxu0
        %1292 = vmatprep.mubr.f32.mxu0 0.0
        %1293 = vmatmul.mubr.f32.gmra.mrb[0].mxu0 %v1190
        %v1294 = vpop.f32.mrb[0].mxu0
        %v1295 = vadd.f32 0.0, %v1294
        %v1296 = vpop.f32.mrb[0].mxu0
        %1297 = vmatprep.mubr.f32.mxu0 0.0
        %1298 = vmatmul.mubr.f32.gmra.mrb[0].mxu0 %v1192
        %v1299 = vpop.f32.mrb[0].mxu0
        %v1300 = vadd.f32 0.0, %v1299
        %v1301 = vpop.f32.mrb[0].mxu0
        %1302 = vmatprep.mubr.f32.mxu0 0.0
        %1303 = vmatmul.mubr.f32.gmra.mrb[0].mxu0 %v1194
        %v1304 = vpop.f32.mrb[0].mxu0
        %v1305 = vadd.f32 0.0, %v1304
        %v1306 = vpop.f32.mrb[0].mxu0
        %1307 = vmatprep.mubr.f32.mxu0 0.0
        %1308 = vmatmul.mubr.f32.gmra.mrb[0].mxu0 %v1196
        %v1309 = vpop.f32.mrb[0].mxu0
        %v1310 = vadd.f32 0.0, %v1309
        %v1311 = vpop.f32.mrb[0].mxu0
        %1312 = vmatprep.mubr.f32.mxu0 0.0
        %1313 = vmatmul.mubr.f32.gmra.mrb[0].mxu0 %v1198
        %v1314 = vpop.f32.mrb[0].mxu0
        %v1315 = vadd.f32 0.0, %v1314
        %v1316 = vpop.f32.mrb[0].mxu0
        %1317 = vmatprep.mubr.f32.mxu0 0.0
        %1318 = vmatmul.mubr.f32.gmra.mrb[0].mxu0 %v1200
        %v1319 = vpop.f32.mrb[0].mxu0
        %v1320 = vadd.f32 0.0, %v1319
        %v1321 = vpop.f32.mrb[0].mxu0
        %1322 = vmatprep.mubr.f32.mxu0 0.0
        %1323 = vmatmul.mubr.f32.gmra.mrb[0].mxu0 %v1202
        %v1324 = vpop.f32.mrb[0].mxu0
        %v1325 = vadd.f32 0.0, %v1324
        %v1326 = vpop.f32.mrb[0].mxu0
        %1327 = vmatprep.mubr.f32.mxu0 0.0
        %1328 = vmatmul.mubr.f32.gmra.mrb[0].mxu0 %v1204
        %v1329 = vpop.f32.mrb[0].mxu0
        %v1330 = vadd.f32 0.0, %v1329
        %v1331 = vpop.f32.mrb[0].mxu0
        %1332 = vmatprep.mubr.f32.mxu0 0.0
        %1333 = vmatmul.mubr.f32.gmra.mrb[0].mxu0 %v1206
        %v1334 = vpop.f32.mrb[0].mxu0
        %v1335 = vadd.f32 0.0, %v1334
        %v1336 = vpop.f32.mrb[0].mxu0
        %1337 = vmatprep.mubr.f32.mxu0 0.0
        %1338 = vmatmul.mubr.f32.gmra.mrb[0].mxu0 %v1208
        %v1339 = vpop.f32.mrb[0].mxu0
        %v1340 = vadd.f32 0.0, %v1339
        %v1341 = vpop.f32.mrb[0].mxu0
        %1342 = vmatprep.mubr.f32.mxu0 0.0
        %1343 = vmatmul.mubr.f32.gmra.mrb[0].mxu0 %v1210
        %v1344 = vpop.f32.mrb[0].mxu0
        %v1345 = vadd.f32 0.0, %v1344
        %v1346 = vpop.f32.mrb[0].mxu0
        %1347 = vmatprep.mubr.f32.mxu0 0.0
        %1348 = vmatmul.mubr.f32.gmra.mrb[0].mxu0 %v1212
        %v1349 = vpop.f32.mrb[0].mxu0
        %v1350 = vadd.f32 0.0, %v1349
        %v1351 = vpop.f32.mrb[0].mxu0
        %1352 = vmatprep.mubr.f32.mxu0 0.0
        %1353 = vmatmul.mubr.f32.gmra.mrb[0].mxu0 %v1214
        %v1354 = vpop.f32.mrb[0].mxu0
        %v1355 = vadd.f32 0.0, %v1354
        %v1356 = vpop.f32.mrb[0].mxu0
        %1357 = vmatprep.mubr.f32.mxu0 0.0
        %1358 = vmatmul.mubr.f32.gmra.mrb[0].mxu0 %v1216
        %v1359 = vpop.f32.mrb[0].mxu0
        %v1360 = vadd.f32 0.0, %v1359
        %v1361 = vpop.f32.mrb[0].mxu0
        %1362 = vdwg.mxu0
        %v1363 = vadd.f32 %v1168, %v1285
        %v1364 = vadd.f32 %v1169, %v1290
        %v1365 = vadd.f32 %v1170, %v1295
        %v1366 = vadd.f32 %v1171, %v1300
        %v1367 = vadd.f32 %v1172, %v1305
        %v1368 = vadd.f32 %v1173, %v1310
        %v1369 = vadd.f32 %v1174, %v1315
        %v1370 = vadd.f32 %v1175, %v1320
        %v1371 = vadd.f32 %v1176, %v1325
        %v1372 = vadd.f32 %v1177, %v1330
        %v1373 = vadd.f32 %v1178, %v1335
        %v1374 = vadd.f32 %v1179, %v1340
        %v1375 = vadd.f32 %v1180, %v1345
        %v1376 = vadd.f32 %v1181, %v1350
        %v1377 = vadd.f32 %v1182, %v1355
        %v1378 = vadd.f32 %v1183, %v1360
        %1379 = vst.msk [vmem:[#allocation4] sm:$0xff] %vm568, %v1363
        %1380 = vst.msk [vmem:[#allocation4 + $0x8] sm:$0xff] %vm568, %v1364
        %1381 = vst.msk [vmem:[#allocation4 + $0x10] sm:$0xff] %vm568, %v1365
        %1382 = vst.msk [vmem:[#allocation4 + $0x18] sm:$0xff] %vm568, %v1366
        %1383 = vst.msk [vmem:[#allocation4 + $0x20] sm:$0xff] %vm568, %v1367
        %1384 = vst.msk [vmem:[#allocation4 + $0x28] sm:$0xff] %vm568, %v1368
        %1385 = vst.msk [vmem:[#allocation4 + $0x30] sm:$0xff] %vm568, %v1369
        %1386 = vst.msk [vmem:[#allocation4 + $0x38] sm:$0xff] %vm568, %v1370
        %1387 = vst.msk [vmem:[#allocation4 + $0x40] sm:$0xff] %vm568, %v1371
        %1388 = vst.msk [vmem:[#allocation4 + $0x48] sm:$0xff] %vm568, %v1372
        %1389 = vst.msk [vmem:[#allocation4 + $0x50] sm:$0xff] %vm568, %v1373
        %1390 = vst.msk [vmem:[#allocation4 + $0x58] sm:$0xff] %vm568, %v1374
        %1391 = vst.msk [vmem:[#allocation4 + $0x60] sm:$0xff] %vm568, %v1375
        %1392 = vst.msk [vmem:[#allocation4 + $0x68] sm:$0xff] %vm568, %v1376
        %1393 = vst.msk [vmem:[#allocation4 + $0x70] sm:$0xff] %vm568, %v1377
        %1394 = vst.msk [vmem:[#allocation4 + $0x78] sm:$0xff] %vm568, %v1378
        %s1395 = scalar_lea.vmem [#allocation2], 24
        %v1396 = vld [vmem:[%s1395] sm:$0xff]
        %v1397 = vld [vmem:[%s1395 + $0x8] sm:$0xff]
        %v1398 = vld [vmem:[%s1395 + $0x10] sm:$0x3]
        %v1399 = vld [vmem:[%s1395 + $0x18] sm:$0xff]
        %v1400 = vld [vmem:[%s1395 + $0x20] sm:$0xff]
        %v1401 = vld [vmem:[%s1395 + $0x28] sm:$0x3]
        %v1402 = vld [vmem:[%s1395 + $0x30] sm:$0xff]
        %v1403 = vld [vmem:[%s1395 + $0x38] sm:$0xff]
        %v1404 = vld [vmem:[%s1395 + $0x40] sm:$0x3]
        %v1405 = vld [vmem:[%s1395 + $0x48] sm:$0xff]
        %v1406 = vld [vmem:[%s1395 + $0x50] sm:$0xff]
        %v1407 = vld [vmem:[%s1395 + $0x58] sm:$0x3]
        %v1408 = vld [vmem:[%s1395 + $0x60] sm:$0xff]
        %v1409 = vld [vmem:[%s1395 + $0x68] sm:$0xff]
        %v1410 = vld [vmem:[%s1395 + $0x70] sm:$0x3]
        %v1411 = vld [vmem:[%s1395 + $0x78] sm:$0xff]
        %v1412 = vld [vmem:[%s1395 + $0x80] sm:$0xff]
        %v1413 = vld [vmem:[%s1395 + $0x88] sm:$0x3]
        %v1414 = vld [vmem:[%s1395 + $0x90] sm:$0xff]
        %v1415 = vld [vmem:[%s1395 + $0x98] sm:$0xff]
        %v1416 = vld [vmem:[%s1395 + $0xa0] sm:$0x3]
        %v1417 = vld [vmem:[%s1395 + $0xa8] sm:$0xff]
        %v1418 = vld [vmem:[%s1395 + $0xb0] sm:$0xff]
        %v1419 = vld [vmem:[%s1395 + $0xb8] sm:$0x3]
        %v1420 = vld [vmem:[#allocation4] sm:$0xff]
        %v1421 = vld [vmem:[#allocation4 + $0x8] sm:$0xff]
        %v1422 = vld [vmem:[#allocation4 + $0x10] sm:$0xff]
        %v1423 = vld [vmem:[#allocation4 + $0x18] sm:$0xff]
        %v1424 = vld [vmem:[#allocation4 + $0x20] sm:$0xff]
        %v1425 = vld [vmem:[#allocation4 + $0x28] sm:$0xff]
        %v1426 = vld [vmem:[#allocation4 + $0x30] sm:$0xff]
        %v1427 = vld [vmem:[#allocation4 + $0x38] sm:$0xff]
        %v1428 = vld [vmem:[#allocation4 + $0x40] sm:$0xff]
        %v1429 = vld [vmem:[#allocation4 + $0x48] sm:$0xff]
        %v1430 = vld [vmem:[#allocation4 + $0x50] sm:$0xff]
        %v1431 = vld [vmem:[#allocation4 + $0x58] sm:$0xff]
        %v1432 = vld [vmem:[#allocation4 + $0x60] sm:$0xff]
        %v1433 = vld [vmem:[#allocation4 + $0x68] sm:$0xff]
        %v1434 = vld [vmem:[#allocation4 + $0x70] sm:$0xff]
        %v1435 = vld [vmem:[#allocation4 + $0x78] sm:$0xff]
        %s1436 = scalar_lea.vmem [#allocation10], 24
        %v1437 = vld [vmem:[%s1436] sm:$0xff]
        %v1439 = vsel %vm499, %v1396, 0
        %v1442 = vsel %vm499, %v1397, 0
        %v1445 = vsel %vm499, %v1399, 0
        %v1448 = vsel %vm499, %v1400, 0
        %v1451 = vsel %vm499, %v1402, 0
        %v1454 = vsel %vm499, %v1403, 0
        %v1457 = vsel %vm499, %v1405, 0
        %v1460 = vsel %vm499, %v1406, 0
        %v1463 = vsel %vm499, %v1408, 0
        %v1466 = vsel %vm499, %v1409, 0
        %v1469 = vsel %vm499, %v1411, 0
        %v1472 = vsel %vm499, %v1412, 0
        %v1475 = vsel %vm499, %v1414, 0
        %v1478 = vsel %vm499, %v1415, 0
        %v1481 = vsel %vm499, %v1417, 0
        %v1484 = vsel %vm499, %v1418, 0
        %1486 = vmatprep.subr.mxu0 0.0
        %1487 = vmatpush1.msra.mxu0 %v1437
        %1488 = vmatprep.subr.mxu0 0.0
        %1489 = vmatpush1.msra.mxu0 0.0
        %1490 = vmatprep.subr.mxu0 0.0
        %1491 = vmatpush1.msra.mxu0 0.0
        %1492 = vmatprep.subr.mxu0 0.0
        %1493 = vmatpush1.msra.mxu0 0.0
        %1494 = vmatprep.subr.mxu0 0.0
        %1495 = vmatpush1.msra.mxu0 0.0
        %1496 = vmatprep.subr.mxu0 0.0
        %1497 = vmatpush1.msra.mxu0 0.0
        %1498 = vmatprep.subr.mxu0 0.0
        %1499 = vmatpush1.msra.mxu0 0.0
        %1500 = vmatprep.subr.mxu0 0.0
        %1501 = vmatpush1.msra.mxu0 0.0
        %1502 = vmatprep.subr.mxu0 0.0
        %1503 = vmatpush1.msra.mxu0 0.0
        %1504 = vmatprep.subr.mxu0 0.0
        %1505 = vmatpush1.msra.mxu0 0.0
        %1506 = vmatprep.subr.mxu0 0.0
        %1507 = vmatpush1.msra.mxu0 0.0
        %1508 = vmatprep.subr.mxu0 0.0
        %1509 = vmatpush1.msra.mxu0 0.0
        %1510 = vmatprep.subr.mxu0 0.0
        %1511 = vmatpush1.msra.mxu0 0.0
        %1512 = vmatprep.subr.mxu0 0.0
        %1513 = vmatpush1.msra.mxu0 0.0
        %1514 = vmatprep.subr.mxu0 0.0
        %1515 = vmatpush1.msra.mxu0 0.0
        %1516 = vmatprep.subr.mxu0 0.0
        %1517 = vmatpush1.msra.mxu0 0.0
        %1518 = vmatprep.subr.mxu0 0.0
        %1519 = vmatpush1.msra.mxu0 0.0
        %1520 = vmatprep.subr.mxu0 0.0
        %1521 = vmatpush1.msra.mxu0 0.0
        %1522 = vmatprep.subr.mxu0 0.0
        %1523 = vmatpush1.msra.mxu0 0.0
        %1524 = vmatprep.subr.mxu0 0.0
        %1525 = vmatpush1.msra.mxu0 0.0
        %1526 = vmatprep.subr.mxu0 0.0
        %1527 = vmatpush1.msra.mxu0 0.0
        %1528 = vmatprep.subr.mxu0 0.0
        %1529 = vmatpush1.msra.mxu0 0.0
        %1530 = vmatprep.subr.mxu0 0.0
        %1531 = vmatpush1.msra.mxu0 0.0
        %1532 = vmatprep.subr.mxu0 0.0
        %1533 = vmatpush1.msra.mxu0 0.0
        %1534 = vmatprep.subr.mxu0 0.0
        %1535 = vmatpush1.msra.mxu0 0.0
        %1536 = vmatprep.subr.mxu0 0.0
        %1537 = vmatpush1.msra.mxu0 0.0
        %1538 = vmatprep.subr.mxu0 0.0
        %1539 = vmatpush1.msra.mxu0 0.0
        %1540 = vmatprep.subr.mxu0 0.0
        %1541 = vmatpush1.msra.mxu0 0.0
        %1542 = vmatprep.subr.mxu0 0.0
        %1543 = vmatpush1.msra.mxu0 0.0
        %1544 = vmatprep.subr.mxu0 0.0
        %1545 = vmatpush1.msra.mxu0 0.0
        %1546 = vmatprep.subr.mxu0 0.0
        %1547 = vmatpush1.msra.mxu0 0.0
        %1548 = vmatprep.subr.mxu0 0.0
        %1549 = vmatpush1.msra.mxu0 0.0
        %1550 = vmatprep.mubr.f32.mxu0 0.0
        %1551 = vmatmul.mubr.f32.gmra.mrb[0].mxu0 %v1439
        %v1552 = vpop.f32.mrb[0].mxu0
        %v1553 = vadd.f32 0.0, %v1552
        %v1554 = vpop.f32.mrb[0].mxu0
        %1555 = vmatprep.mubr.f32.mxu0 0.0
        %1556 = vmatmul.mubr.f32.gmra.mrb[0].mxu0 %v1442
        %v1557 = vpop.f32.mrb[0].mxu0
        %v1558 = vadd.f32 0.0, %v1557
        %v1559 = vpop.f32.mrb[0].mxu0
        %1560 = vmatprep.mubr.f32.mxu0 0.0
        %1561 = vmatmul.mubr.f32.gmra.mrb[0].mxu0 %v1445
        %v1562 = vpop.f32.mrb[0].mxu0
        %v1563 = vadd.f32 0.0, %v1562
        %v1564 = vpop.f32.mrb[0].mxu0
        %1565 = vmatprep.mubr.f32.mxu0 0.0
        %1566 = vmatmul.mubr.f32.gmra.mrb[0].mxu0 %v1448
        %v1567 = vpop.f32.mrb[0].mxu0
        %v1568 = vadd.f32 0.0, %v1567
        %v1569 = vpop.f32.mrb[0].mxu0
        %1570 = vmatprep.mubr.f32.mxu0 0.0
        %1571 = vmatmul.mubr.f32.gmra.mrb[0].mxu0 %v1451
        %v1572 = vpop.f32.mrb[0].mxu0
        %v1573 = vadd.f32 0.0, %v1572
        %v1574 = vpop.f32.mrb[0].mxu0
        %1575 = vmatprep.mubr.f32.mxu0 0.0
        %1576 = vmatmul.mubr.f32.gmra.mrb[0].mxu0 %v1454
        %v1577 = vpop.f32.mrb[0].mxu0
        %v1578 = vadd.f32 0.0, %v1577
        %v1579 = vpop.f32.mrb[0].mxu0
        %1580 = vmatprep.mubr.f32.mxu0 0.0
        %1581 = vmatmul.mubr.f32.gmra.mrb[0].mxu0 %v1457
        %v1582 = vpop.f32.mrb[0].mxu0
        %v1583 = vadd.f32 0.0, %v1582
        %v1584 = vpop.f32.mrb[0].mxu0
        %1585 = vmatprep.mubr.f32.mxu0 0.0
        %1586 = vmatmul.mubr.f32.gmra.mrb[0].mxu0 %v1460
        %v1587 = vpop.f32.mrb[0].mxu0
        %v1588 = vadd.f32 0.0, %v1587
        %v1589 = vpop.f32.mrb[0].mxu0
        %1590 = vmatprep.mubr.f32.mxu0 0.0
        %1591 = vmatmul.mubr.f32.gmra.mrb[0].mxu0 %v1463
        %v1592 = vpop.f32.mrb[0].mxu0
        %v1593 = vadd.f32 0.0, %v1592
        %v1594 = vpop.f32.mrb[0].mxu0
        %1595 = vmatprep.mubr.f32.mxu0 0.0
        %1596 = vmatmul.mubr.f32.gmra.mrb[0].mxu0 %v1466
        %v1597 = vpop.f32.mrb[0].mxu0
        %v1598 = vadd.f32 0.0, %v1597
        %v1599 = vpop.f32.mrb[0].mxu0
        %1600 = vmatprep.mubr.f32.mxu0 0.0
        %1601 = vmatmul.mubr.f32.gmra.mrb[0].mxu0 %v1469
        %v1602 = vpop.f32.mrb[0].mxu0
        %v1603 = vadd.f32 0.0, %v1602
        %v1604 = vpop.f32.mrb[0].mxu0
        %1605 = vmatprep.mubr.f32.mxu0 0.0
        %1606 = vmatmul.mubr.f32.gmra.mrb[0].mxu0 %v1472
        %v1607 = vpop.f32.mrb[0].mxu0
        %v1608 = vadd.f32 0.0, %v1607
        %v1609 = vpop.f32.mrb[0].mxu0
        %1610 = vmatprep.mubr.f32.mxu0 0.0
        %1611 = vmatmul.mubr.f32.gmra.mrb[0].mxu0 %v1475
        %v1612 = vpop.f32.mrb[0].mxu0
        %v1613 = vadd.f32 0.0, %v1612
        %v1614 = vpop.f32.mrb[0].mxu0
        %1615 = vmatprep.mubr.f32.mxu0 0.0
        %1616 = vmatmul.mubr.f32.gmra.mrb[0].mxu0 %v1478
        %v1617 = vpop.f32.mrb[0].mxu0
        %v1618 = vadd.f32 0.0, %v1617
        %v1619 = vpop.f32.mrb[0].mxu0
        %1620 = vmatprep.mubr.f32.mxu0 0.0
        %1621 = vmatmul.mubr.f32.gmra.mrb[0].mxu0 %v1481
        %v1622 = vpop.f32.mrb[0].mxu0
        %v1623 = vadd.f32 0.0, %v1622
        %v1624 = vpop.f32.mrb[0].mxu0
        %1625 = vmatprep.mubr.f32.mxu0 0.0
        %1626 = vmatmul.mubr.f32.gmra.mrb[0].mxu0 %v1484
        %v1627 = vpop.f32.mrb[0].mxu0
        %v1628 = vadd.f32 0.0, %v1627
        %v1629 = vpop.f32.mrb[0].mxu0
        %1630 = vdwg.mxu0
        %v1631 = vadd.f32 %v1420, %v1553
        %v1632 = vadd.f32 %v1421, %v1558
        %v1633 = vadd.f32 %v1422, %v1563
        %v1634 = vadd.f32 %v1423, %v1568
        %v1635 = vadd.f32 %v1424, %v1573
        %v1636 = vadd.f32 %v1425, %v1578
        %v1637 = vadd.f32 %v1426, %v1583
        %v1638 = vadd.f32 %v1427, %v1588
        %v1639 = vadd.f32 %v1428, %v1593
        %v1640 = vadd.f32 %v1429, %v1598
        %v1641 = vadd.f32 %v1430, %v1603
        %v1642 = vadd.f32 %v1431, %v1608
        %v1643 = vadd.f32 %v1432, %v1613
        %v1644 = vadd.f32 %v1433, %v1618
        %v1645 = vadd.f32 %v1434, %v1623
        %v1646 = vadd.f32 %v1435, %v1628
        %1647 = vst.msk [vmem:[#allocation4] sm:$0xff] %vm568, %v1631
        %1648 = vst.msk [vmem:[#allocation4 + $0x8] sm:$0xff] %vm568, %v1632
        %1649 = vst.msk [vmem:[#allocation4 + $0x10] sm:$0xff] %vm568, %v1633
        %1650 = vst.msk [vmem:[#allocation4 + $0x18] sm:$0xff] %vm568, %v1634
        %1651 = vst.msk [vmem:[#allocation4 + $0x20] sm:$0xff] %vm568, %v1635
        %1652 = vst.msk [vmem:[#allocation4 + $0x28] sm:$0xff] %vm568, %v1636
        %1653 = vst.msk [vmem:[#allocation4 + $0x30] sm:$0xff] %vm568, %v1637
        %1654 = vst.msk [vmem:[#allocation4 + $0x38] sm:$0xff] %vm568, %v1638
        %1655 = vst.msk [vmem:[#allocation4 + $0x40] sm:$0xff] %vm568, %v1639
        %1656 = vst.msk [vmem:[#allocation4 + $0x48] sm:$0xff] %vm568, %v1640
        %1657 = vst.msk [vmem:[#allocation4 + $0x50] sm:$0xff] %vm568, %v1641
        %1658 = vst.msk [vmem:[#allocation4 + $0x58] sm:$0xff] %vm568, %v1642
        %1659 = vst.msk [vmem:[#allocation4 + $0x60] sm:$0xff] %vm568, %v1643
        %1660 = vst.msk [vmem:[#allocation4 + $0x68] sm:$0xff] %vm568, %v1644
        %1661 = vst.msk [vmem:[#allocation4 + $0x70] sm:$0xff] %vm568, %v1645
        %1662 = vst.msk [vmem:[#allocation4 + $0x78] sm:$0xff] %vm568, %v1646
        %v1671 = vrot.slane %v1396, 1
        %v1672 = vrot.slane %v1397, 1
        %v1673 = vsel %vm859, %v1671, %v1672
        %v1674 = vrot.slane %v1398, 1
        %v1675 = vsel %vm859, %v1672, %v1674
        %v1676 = vrot.slane %v1399, 1
        %v1677 = vrot.slane %v1400, 1
        %v1678 = vsel %vm859, %v1676, %v1677
        %v1679 = vrot.slane %v1401, 1
        %v1680 = vsel %vm859, %v1677, %v1679
        %v1681 = vrot.slane %v1402, 1
        %v1682 = vrot.slane %v1403, 1
        %v1683 = vsel %vm859, %v1681, %v1682
        %v1684 = vrot.slane %v1404, 1
        %v1685 = vsel %vm859, %v1682, %v1684
        %v1686 = vrot.slane %v1405, 1
        %v1687 = vrot.slane %v1406, 1
        %v1688 = vsel %vm859, %v1686, %v1687
        %v1689 = vrot.slane %v1407, 1
        %v1690 = vsel %vm859, %v1687, %v1689
        %v1691 = vrot.slane %v1408, 1
        %v1692 = vrot.slane %v1409, 1
        %v1693 = vsel %vm859, %v1691, %v1692
        %v1694 = vrot.slane %v1410, 1
        %v1695 = vsel %vm859, %v1692, %v1694
        %v1696 = vrot.slane %v1411, 1
        %v1697 = vrot.slane %v1412, 1
        %v1698 = vsel %vm859, %v1696, %v1697
        %v1699 = vrot.slane %v1413, 1
        %v1700 = vsel %vm859, %v1697, %v1699
        %v1701 = vrot.slane %v1414, 1
        %v1702 = vrot.slane %v1415, 1
        %v1703 = vsel %vm859, %v1701, %v1702
        %v1704 = vrot.slane %v1416, 1
        %v1705 = vsel %vm859, %v1702, %v1704
        %v1706 = vrot.slane %v1417, 1
        %v1707 = vrot.slane %v1418, 1
        %v1708 = vsel %vm859, %v1706, %v1707
        %v1709 = vrot.slane %v1419, 1
        %v1710 = vsel %vm859, %v1707, %v1709
        %v1711 = vld [vmem:[#allocation4] sm:$0xff]
        %v1712 = vld [vmem:[#allocation4 + $0x8] sm:$0xff]
        %v1713 = vld [vmem:[#allocation4 + $0x10] sm:$0xff]
        %v1714 = vld [vmem:[#allocation4 + $0x18] sm:$0xff]
        %v1715 = vld [vmem:[#allocation4 + $0x20] sm:$0xff]
        %v1716 = vld [vmem:[#allocation4 + $0x28] sm:$0xff]
        %v1717 = vld [vmem:[#allocation4 + $0x30] sm:$0xff]
        %v1718 = vld [vmem:[#allocation4 + $0x38] sm:$0xff]
        %v1719 = vld [vmem:[#allocation4 + $0x40] sm:$0xff]
        %v1720 = vld [vmem:[#allocation4 + $0x48] sm:$0xff]
        %v1721 = vld [vmem:[#allocation4 + $0x50] sm:$0xff]
        %v1722 = vld [vmem:[#allocation4 + $0x58] sm:$0xff]
        %v1723 = vld [vmem:[#allocation4 + $0x60] sm:$0xff]
        %v1724 = vld [vmem:[#allocation4 + $0x68] sm:$0xff]
        %v1725 = vld [vmem:[#allocation4 + $0x70] sm:$0xff]
        %v1726 = vld [vmem:[#allocation4 + $0x78] sm:$0xff]
        %s1727 = scalar_lea.vmem [#allocation10], 32
        %v1728 = vld [vmem:[%s1727] sm:$0xff]
        %v1729 = vsel %vm499, %v1673, 0
        %v1731 = vsel %vm499, %v1675, 0
        %v1733 = vsel %vm499, %v1678, 0
        %v1735 = vsel %vm499, %v1680, 0
        %v1737 = vsel %vm499, %v1683, 0
        %v1739 = vsel %vm499, %v1685, 0
        %v1741 = vsel %vm499, %v1688, 0
        %v1743 = vsel %vm499, %v1690, 0
        %v1745 = vsel %vm499, %v1693, 0
        %v1747 = vsel %vm499, %v1695, 0
        %v1749 = vsel %vm499, %v1698, 0
        %v1751 = vsel %vm499, %v1700, 0
        %v1753 = vsel %vm499, %v1703, 0
        %v1755 = vsel %vm499, %v1705, 0
        %v1757 = vsel %vm499, %v1708, 0
        %v1759 = vsel %vm499, %v1710, 0
        %1761 = vmatprep.subr.mxu0 0.0
        %1762 = vmatpush1.msra.mxu0 %v1728
        %1763 = vmatprep.subr.mxu0 0.0
        %1764 = vmatpush1.msra.mxu0 0.0
        %1765 = vmatprep.subr.mxu0 0.0
        %1766 = vmatpush1.msra.mxu0 0.0
        %1767 = vmatprep.subr.mxu0 0.0
        %1768 = vmatpush1.msra.mxu0 0.0
        %1769 = vmatprep.subr.mxu0 0.0
        %1770 = vmatpush1.msra.mxu0 0.0
        %1771 = vmatprep.subr.mxu0 0.0
        %1772 = vmatpush1.msra.mxu0 0.0
        %1773 = vmatprep.subr.mxu0 0.0
        %1774 = vmatpush1.msra.mxu0 0.0
        %1775 = vmatprep.subr.mxu0 0.0
        %1776 = vmatpush1.msra.mxu0 0.0
        %1777 = vmatprep.subr.mxu0 0.0
        %1778 = vmatpush1.msra.mxu0 0.0
        %1779 = vmatprep.subr.mxu0 0.0
        %1780 = vmatpush1.msra.mxu0 0.0
        %1781 = vmatprep.subr.mxu0 0.0
        %1782 = vmatpush1.msra.mxu0 0.0
        %1783 = vmatprep.subr.mxu0 0.0
        %1784 = vmatpush1.msra.mxu0 0.0
        %1785 = vmatprep.subr.mxu0 0.0
        %1786 = vmatpush1.msra.mxu0 0.0
        %1787 = vmatprep.subr.mxu0 0.0
        %1788 = vmatpush1.msra.mxu0 0.0
        %1789 = vmatprep.subr.mxu0 0.0
        %1790 = vmatpush1.msra.mxu0 0.0
        %1791 = vmatprep.subr.mxu0 0.0
        %1792 = vmatpush1.msra.mxu0 0.0
        %1793 = vmatprep.subr.mxu0 0.0
        %1794 = vmatpush1.msra.mxu0 0.0
        %1795 = vmatprep.subr.mxu0 0.0
        %1796 = vmatpush1.msra.mxu0 0.0
        %1797 = vmatprep.subr.mxu0 0.0
        %1798 = vmatpush1.msra.mxu0 0.0
        %1799 = vmatprep.subr.mxu0 0.0
        %1800 = vmatpush1.msra.mxu0 0.0
        %1801 = vmatprep.subr.mxu0 0.0
        %1802 = vmatpush1.msra.mxu0 0.0
        %1803 = vmatprep.subr.mxu0 0.0
        %1804 = vmatpush1.msra.mxu0 0.0
        %1805 = vmatprep.subr.mxu0 0.0
        %1806 = vmatpush1.msra.mxu0 0.0
        %1807 = vmatprep.subr.mxu0 0.0
        %1808 = vmatpush1.msra.mxu0 0.0
        %1809 = vmatprep.subr.mxu0 0.0
        %1810 = vmatpush1.msra.mxu0 0.0
        %1811 = vmatprep.subr.mxu0 0.0
        %1812 = vmatpush1.msra.mxu0 0.0
        %1813 = vmatprep.subr.mxu0 0.0
        %1814 = vmatpush1.msra.mxu0 0.0
        %1815 = vmatprep.subr.mxu0 0.0
        %1816 = vmatpush1.msra.mxu0 0.0
        %1817 = vmatprep.subr.mxu0 0.0
        %1818 = vmatpush1.msra.mxu0 0.0
        %1819 = vmatprep.subr.mxu0 0.0
        %1820 = vmatpush1.msra.mxu0 0.0
        %1821 = vmatprep.subr.mxu0 0.0
        %1822 = vmatpush1.msra.mxu0 0.0
        %1823 = vmatprep.subr.mxu0 0.0
        %1824 = vmatpush1.msra.mxu0 0.0
        %1825 = vmatprep.mubr.f32.mxu0 0.0
        %1826 = vmatmul.mubr.f32.gmra.mrb[0].mxu0 %v1729
        %v1827 = vpop.f32.mrb[0].mxu0
        %v1828 = vadd.f32 0.0, %v1827
        %v1829 = vpop.f32.mrb[0].mxu0
        %1830 = vmatprep.mubr.f32.mxu0 0.0
        %1831 = vmatmul.mubr.f32.gmra.mrb[0].mxu0 %v1731
        %v1832 = vpop.f32.mrb[0].mxu0
        %v1833 = vadd.f32 0.0, %v1832
        %v1834 = vpop.f32.mrb[0].mxu0
        %1835 = vmatprep.mubr.f32.mxu0 0.0
        %1836 = vmatmul.mubr.f32.gmra.mrb[0].mxu0 %v1733
        %v1837 = vpop.f32.mrb[0].mxu0
        %v1838 = vadd.f32 0.0, %v1837
        %v1839 = vpop.f32.mrb[0].mxu0
        %1840 = vmatprep.mubr.f32.mxu0 0.0
        %1841 = vmatmul.mubr.f32.gmra.mrb[0].mxu0 %v1735
        %v1842 = vpop.f32.mrb[0].mxu0
        %v1843 = vadd.f32 0.0, %v1842
        %v1844 = vpop.f32.mrb[0].mxu0
        %1845 = vmatprep.mubr.f32.mxu0 0.0
        %1846 = vmatmul.mubr.f32.gmra.mrb[0].mxu0 %v1737
        %v1847 = vpop.f32.mrb[0].mxu0
        %v1848 = vadd.f32 0.0, %v1847
        %v1849 = vpop.f32.mrb[0].mxu0
        %1850 = vmatprep.mubr.f32.mxu0 0.0
        %1851 = vmatmul.mubr.f32.gmra.mrb[0].mxu0 %v1739
        %v1852 = vpop.f32.mrb[0].mxu0
        %v1853 = vadd.f32 0.0, %v1852
        %v1854 = vpop.f32.mrb[0].mxu0
        %1855 = vmatprep.mubr.f32.mxu0 0.0
        %1856 = vmatmul.mubr.f32.gmra.mrb[0].mxu0 %v1741
        %v1857 = vpop.f32.mrb[0].mxu0
        %v1858 = vadd.f32 0.0, %v1857
        %v1859 = vpop.f32.mrb[0].mxu0
        %1860 = vmatprep.mubr.f32.mxu0 0.0
        %1861 = vmatmul.mubr.f32.gmra.mrb[0].mxu0 %v1743
        %v1862 = vpop.f32.mrb[0].mxu0
        %v1863 = vadd.f32 0.0, %v1862
        %v1864 = vpop.f32.mrb[0].mxu0
        %1865 = vmatprep.mubr.f32.mxu0 0.0
        %1866 = vmatmul.mubr.f32.gmra.mrb[0].mxu0 %v1745
        %v1867 = vpop.f32.mrb[0].mxu0
        %v1868 = vadd.f32 0.0, %v1867
        %v1869 = vpop.f32.mrb[0].mxu0
        %1870 = vmatprep.mubr.f32.mxu0 0.0
        %1871 = vmatmul.mubr.f32.gmra.mrb[0].mxu0 %v1747
        %v1872 = vpop.f32.mrb[0].mxu0
        %v1873 = vadd.f32 0.0, %v1872
        %v1874 = vpop.f32.mrb[0].mxu0
        %1875 = vmatprep.mubr.f32.mxu0 0.0
        %1876 = vmatmul.mubr.f32.gmra.mrb[0].mxu0 %v1749
        %v1877 = vpop.f32.mrb[0].mxu0
        %v1878 = vadd.f32 0.0, %v1877
        %v1879 = vpop.f32.mrb[0].mxu0
        %1880 = vmatprep.mubr.f32.mxu0 0.0
        %1881 = vmatmul.mubr.f32.gmra.mrb[0].mxu0 %v1751
        %v1882 = vpop.f32.mrb[0].mxu0
        %v1883 = vadd.f32 0.0, %v1882
        %v1884 = vpop.f32.mrb[0].mxu0
        %1885 = vmatprep.mubr.f32.mxu0 0.0
        %1886 = vmatmul.mubr.f32.gmra.mrb[0].mxu0 %v1753
        %v1887 = vpop.f32.mrb[0].mxu0
        %v1888 = vadd.f32 0.0, %v1887
        %v1889 = vpop.f32.mrb[0].mxu0
        %1890 = vmatprep.mubr.f32.mxu0 0.0
        %1891 = vmatmul.mubr.f32.gmra.mrb[0].mxu0 %v1755
        %v1892 = vpop.f32.mrb[0].mxu0
        %v1893 = vadd.f32 0.0, %v1892
        %v1894 = vpop.f32.mrb[0].mxu0
        %1895 = vmatprep.mubr.f32.mxu0 0.0
        %1896 = vmatmul.mubr.f32.gmra.mrb[0].mxu0 %v1757
        %v1897 = vpop.f32.mrb[0].mxu0
        %v1898 = vadd.f32 0.0, %v1897
        %v1899 = vpop.f32.mrb[0].mxu0
        %1900 = vmatprep.mubr.f32.mxu0 0.0
        %1901 = vmatmul.mubr.f32.gmra.mrb[0].mxu0 %v1759
        %v1902 = vpop.f32.mrb[0].mxu0
        %v1903 = vadd.f32 0.0, %v1902
        %v1904 = vpop.f32.mrb[0].mxu0
        %1905 = vdwg.mxu0
        %v1906 = vadd.f32 %v1711, %v1828
        %v1907 = vadd.f32 %v1712, %v1833
        %v1908 = vadd.f32 %v1713, %v1838
        %v1909 = vadd.f32 %v1714, %v1843
        %v1910 = vadd.f32 %v1715, %v1848
        %v1911 = vadd.f32 %v1716, %v1853
        %v1912 = vadd.f32 %v1717, %v1858
        %v1913 = vadd.f32 %v1718, %v1863
        %v1914 = vadd.f32 %v1719, %v1868
        %v1915 = vadd.f32 %v1720, %v1873
        %v1916 = vadd.f32 %v1721, %v1878
        %v1917 = vadd.f32 %v1722, %v1883
        %v1918 = vadd.f32 %v1723, %v1888
        %v1919 = vadd.f32 %v1724, %v1893
        %v1920 = vadd.f32 %v1725, %v1898
        %v1921 = vadd.f32 %v1726, %v1903
        %1922 = vst.msk [vmem:[#allocation4] sm:$0xff] %vm568, %v1906
        %1923 = vst.msk [vmem:[#allocation4 + $0x8] sm:$0xff] %vm568, %v1907
        %1924 = vst.msk [vmem:[#allocation4 + $0x10] sm:$0xff] %vm568, %v1908
        %1925 = vst.msk [vmem:[#allocation4 + $0x18] sm:$0xff] %vm568, %v1909
        %1926 = vst.msk [vmem:[#allocation4 + $0x20] sm:$0xff] %vm568, %v1910
        %1927 = vst.msk [vmem:[#allocation4 + $0x28] sm:$0xff] %vm568, %v1911
        %1928 = vst.msk [vmem:[#allocation4 + $0x30] sm:$0xff] %vm568, %v1912
        %1929 = vst.msk [vmem:[#allocation4 + $0x38] sm:$0xff] %vm568, %v1913
        %1930 = vst.msk [vmem:[#allocation4 + $0x40] sm:$0xff] %vm568, %v1914
        %1931 = vst.msk [vmem:[#allocation4 + $0x48] sm:$0xff] %vm568, %v1915
        %1932 = vst.msk [vmem:[#allocation4 + $0x50] sm:$0xff] %vm568, %v1916
        %1933 = vst.msk [vmem:[#allocation4 + $0x58] sm:$0xff] %vm568, %v1917
        %1934 = vst.msk [vmem:[#allocation4 + $0x60] sm:$0xff] %vm568, %v1918
        %1935 = vst.msk [vmem:[#allocation4 + $0x68] sm:$0xff] %vm568, %v1919
        %1936 = vst.msk [vmem:[#allocation4 + $0x70] sm:$0xff] %vm568, %v1920
        %1937 = vst.msk [vmem:[#allocation4 + $0x78] sm:$0xff] %vm568, %v1921
        %v1938 = vrot.slane %v1396, 2
        %v1939 = vrot.slane %v1397, 2
        %v1940 = vsel %vm1127, %v1938, %v1939
        %v1941 = vrot.slane %v1398, 2
        %v1942 = vsel %vm1127, %v1939, %v1941
        %v1943 = vrot.slane %v1399, 2
        %v1944 = vrot.slane %v1400, 2
        %v1945 = vsel %vm1127, %v1943, %v1944
        %v1946 = vrot.slane %v1401, 2
        %v1947 = vsel %vm1127, %v1944, %v1946
        %v1948 = vrot.slane %v1402, 2
        %v1949 = vrot.slane %v1403, 2
        %v1950 = vsel %vm1127, %v1948, %v1949
        %v1951 = vrot.slane %v1404, 2
        %v1952 = vsel %vm1127, %v1949, %v1951
        %v1953 = vrot.slane %v1405, 2
        %v1954 = vrot.slane %v1406, 2
        %v1955 = vsel %vm1127, %v1953, %v1954
        %v1956 = vrot.slane %v1407, 2
        %v1957 = vsel %vm1127, %v1954, %v1956
        %v1958 = vrot.slane %v1408, 2
        %v1959 = vrot.slane %v1409, 2
        %v1960 = vsel %vm1127, %v1958, %v1959
        %v1961 = vrot.slane %v1410, 2
        %v1962 = vsel %vm1127, %v1959, %v1961
        %v1963 = vrot.slane %v1411, 2
        %v1964 = vrot.slane %v1412, 2
        %v1965 = vsel %vm1127, %v1963, %v1964
        %v1966 = vrot.slane %v1413, 2
        %v1967 = vsel %vm1127, %v1964, %v1966
        %v1968 = vrot.slane %v1414, 2
        %v1969 = vrot.slane %v1415, 2
        %v1970 = vsel %vm1127, %v1968, %v1969
        %v1971 = vrot.slane %v1416, 2
        %v1972 = vsel %vm1127, %v1969, %v1971
        %v1973 = vrot.slane %v1417, 2
        %v1974 = vrot.slane %v1418, 2
        %v1975 = vsel %vm1127, %v1973, %v1974
        %v1976 = vrot.slane %v1419, 2
        %v1977 = vsel %vm1127, %v1974, %v1976
        %v1978 = vld [vmem:[#allocation4] sm:$0xff]
        %v1979 = vld [vmem:[#allocation4 + $0x8] sm:$0xff]
        %v1980 = vld [vmem:[#allocation4 + $0x10] sm:$0xff]
        %v1981 = vld [vmem:[#allocation4 + $0x18] sm:$0xff]
        %v1982 = vld [vmem:[#allocation4 + $0x20] sm:$0xff]
        %v1983 = vld [vmem:[#allocation4 + $0x28] sm:$0xff]
        %v1984 = vld [vmem:[#allocation4 + $0x30] sm:$0xff]
        %v1985 = vld [vmem:[#allocation4 + $0x38] sm:$0xff]
        %v1986 = vld [vmem:[#allocation4 + $0x40] sm:$0xff]
        %v1987 = vld [vmem:[#allocation4 + $0x48] sm:$0xff]
        %v1988 = vld [vmem:[#allocation4 + $0x50] sm:$0xff]
        %v1989 = vld [vmem:[#allocation4 + $0x58] sm:$0xff]
        %v1990 = vld [vmem:[#allocation4 + $0x60] sm:$0xff]
        %v1991 = vld [vmem:[#allocation4 + $0x68] sm:$0xff]
        %v1992 = vld [vmem:[#allocation4 + $0x70] sm:$0xff]
        %v1993 = vld [vmem:[#allocation4 + $0x78] sm:$0xff]
        %s1994 = scalar_lea.vmem [#allocation10], 40
        %v1995 = vld [vmem:[%s1994] sm:$0xff]
        %v1996 = vsel %vm499, %v1940, 0
        %v1998 = vsel %vm499, %v1942, 0
        %v2000 = vsel %vm499, %v1945, 0
        %v2002 = vsel %vm499, %v1947, 0
        %v2004 = vsel %vm499, %v1950, 0
        %v2006 = vsel %vm499, %v1952, 0
        %v2008 = vsel %vm499, %v1955, 0
        %v2010 = vsel %vm499, %v1957, 0
        %v2012 = vsel %vm499, %v1960, 0
        %v2014 = vsel %vm499, %v1962, 0
        %v2016 = vsel %vm499, %v1965, 0
        %v2018 = vsel %vm499, %v1967, 0
        %v2020 = vsel %vm499, %v1970, 0
        %v2022 = vsel %vm499, %v1972, 0
        %v2024 = vsel %vm499, %v1975, 0
        %v2026 = vsel %vm499, %v1977, 0
        %2028 = vmatprep.subr.mxu0 0.0
        %2029 = vmatpush1.msra.mxu0 %v1995
        %2030 = vmatprep.subr.mxu0 0.0
        %2031 = vmatpush1.msra.mxu0 0.0
        %2032 = vmatprep.subr.mxu0 0.0
        %2033 = vmatpush1.msra.mxu0 0.0
        %2034 = vmatprep.subr.mxu0 0.0
        %2035 = vmatpush1.msra.mxu0 0.0
        %2036 = vmatprep.subr.mxu0 0.0
        %2037 = vmatpush1.msra.mxu0 0.0
        %2038 = vmatprep.subr.mxu0 0.0
        %2039 = vmatpush1.msra.mxu0 0.0
        %2040 = vmatprep.subr.mxu0 0.0
        %2041 = vmatpush1.msra.mxu0 0.0
        %2042 = vmatprep.subr.mxu0 0.0
        %2043 = vmatpush1.msra.mxu0 0.0
        %2044 = vmatprep.subr.mxu0 0.0
        %2045 = vmatpush1.msra.mxu0 0.0
        %2046 = vmatprep.subr.mxu0 0.0
        %2047 = vmatpush1.msra.mxu0 0.0
        %2048 = vmatprep.subr.mxu0 0.0
        %2049 = vmatpush1.msra.mxu0 0.0
        %2050 = vmatprep.subr.mxu0 0.0
        %2051 = vmatpush1.msra.mxu0 0.0
        %2052 = vmatprep.subr.mxu0 0.0
        %2053 = vmatpush1.msra.mxu0 0.0
        %2054 = vmatprep.subr.mxu0 0.0
        %2055 = vmatpush1.msra.mxu0 0.0
        %2056 = vmatprep.subr.mxu0 0.0
        %2057 = vmatpush1.msra.mxu0 0.0
        %2058 = vmatprep.subr.mxu0 0.0
        %2059 = vmatpush1.msra.mxu0 0.0
        %2060 = vmatprep.subr.mxu0 0.0
        %2061 = vmatpush1.msra.mxu0 0.0
        %2062 = vmatprep.subr.mxu0 0.0
        %2063 = vmatpush1.msra.mxu0 0.0
        %2064 = vmatprep.subr.mxu0 0.0
        %2065 = vmatpush1.msra.mxu0 0.0
        %2066 = vmatprep.subr.mxu0 0.0
        %2067 = vmatpush1.msra.mxu0 0.0
        %2068 = vmatprep.subr.mxu0 0.0
        %2069 = vmatpush1.msra.mxu0 0.0
        %2070 = vmatprep.subr.mxu0 0.0
        %2071 = vmatpush1.msra.mxu0 0.0
        %2072 = vmatprep.subr.mxu0 0.0
        %2073 = vmatpush1.msra.mxu0 0.0
        %2074 = vmatprep.subr.mxu0 0.0
        %2075 = vmatpush1.msra.mxu0 0.0
        %2076 = vmatprep.subr.mxu0 0.0
        %2077 = vmatpush1.msra.mxu0 0.0
        %2078 = vmatprep.subr.mxu0 0.0
        %2079 = vmatpush1.msra.mxu0 0.0
        %2080 = vmatprep.subr.mxu0 0.0
        %2081 = vmatpush1.msra.mxu0 0.0
        %2082 = vmatprep.subr.mxu0 0.0
        %2083 = vmatpush1.msra.mxu0 0.0
        %2084 = vmatprep.subr.mxu0 0.0
        %2085 = vmatpush1.msra.mxu0 0.0
        %2086 = vmatprep.subr.mxu0 0.0
        %2087 = vmatpush1.msra.mxu0 0.0
        %2088 = vmatprep.subr.mxu0 0.0
        %2089 = vmatpush1.msra.mxu0 0.0
        %2090 = vmatprep.subr.mxu0 0.0
        %2091 = vmatpush1.msra.mxu0 0.0
        %2092 = vmatprep.mubr.f32.mxu0 0.0
        %2093 = vmatmul.mubr.f32.gmra.mrb[0].mxu0 %v1996
        %v2094 = vpop.f32.mrb[0].mxu0
        %v2095 = vadd.f32 0.0, %v2094
        %v2096 = vpop.f32.mrb[0].mxu0
        %2097 = vmatprep.mubr.f32.mxu0 0.0
        %2098 = vmatmul.mubr.f32.gmra.mrb[0].mxu0 %v1998
        %v2099 = vpop.f32.mrb[0].mxu0
        %v2100 = vadd.f32 0.0, %v2099
        %v2101 = vpop.f32.mrb[0].mxu0
        %2102 = vmatprep.mubr.f32.mxu0 0.0
        %2103 = vmatmul.mubr.f32.gmra.mrb[0].mxu0 %v2000
        %v2104 = vpop.f32.mrb[0].mxu0
        %v2105 = vadd.f32 0.0, %v2104
        %v2106 = vpop.f32.mrb[0].mxu0
        %2107 = vmatprep.mubr.f32.mxu0 0.0
        %2108 = vmatmul.mubr.f32.gmra.mrb[0].mxu0 %v2002
        %v2109 = vpop.f32.mrb[0].mxu0
        %v2110 = vadd.f32 0.0, %v2109
        %v2111 = vpop.f32.mrb[0].mxu0
        %2112 = vmatprep.mubr.f32.mxu0 0.0
        %2113 = vmatmul.mubr.f32.gmra.mrb[0].mxu0 %v2004
        %v2114 = vpop.f32.mrb[0].mxu0
        %v2115 = vadd.f32 0.0, %v2114
        %v2116 = vpop.f32.mrb[0].mxu0
        %2117 = vmatprep.mubr.f32.mxu0 0.0
        %2118 = vmatmul.mubr.f32.gmra.mrb[0].mxu0 %v2006
        %v2119 = vpop.f32.mrb[0].mxu0
        %v2120 = vadd.f32 0.0, %v2119
        %v2121 = vpop.f32.mrb[0].mxu0
        %2122 = vmatprep.mubr.f32.mxu0 0.0
        %2123 = vmatmul.mubr.f32.gmra.mrb[0].mxu0 %v2008
        %v2124 = vpop.f32.mrb[0].mxu0
        %v2125 = vadd.f32 0.0, %v2124
        %v2126 = vpop.f32.mrb[0].mxu0
        %2127 = vmatprep.mubr.f32.mxu0 0.0
        %2128 = vmatmul.mubr.f32.gmra.mrb[0].mxu0 %v2010
        %v2129 = vpop.f32.mrb[0].mxu0
        %v2130 = vadd.f32 0.0, %v2129
        %v2131 = vpop.f32.mrb[0].mxu0
        %2132 = vmatprep.mubr.f32.mxu0 0.0
        %2133 = vmatmul.mubr.f32.gmra.mrb[0].mxu0 %v2012
        %v2134 = vpop.f32.mrb[0].mxu0
        %v2135 = vadd.f32 0.0, %v2134
        %v2136 = vpop.f32.mrb[0].mxu0
        %2137 = vmatprep.mubr.f32.mxu0 0.0
        %2138 = vmatmul.mubr.f32.gmra.mrb[0].mxu0 %v2014
        %v2139 = vpop.f32.mrb[0].mxu0
        %v2140 = vadd.f32 0.0, %v2139
        %v2141 = vpop.f32.mrb[0].mxu0
        %2142 = vmatprep.mubr.f32.mxu0 0.0
        %2143 = vmatmul.mubr.f32.gmra.mrb[0].mxu0 %v2016
        %v2144 = vpop.f32.mrb[0].mxu0
        %v2145 = vadd.f32 0.0, %v2144
        %v2146 = vpop.f32.mrb[0].mxu0
        %2147 = vmatprep.mubr.f32.mxu0 0.0
        %2148 = vmatmul.mubr.f32.gmra.mrb[0].mxu0 %v2018
        %v2149 = vpop.f32.mrb[0].mxu0
        %v2150 = vadd.f32 0.0, %v2149
        %v2151 = vpop.f32.mrb[0].mxu0
        %2152 = vmatprep.mubr.f32.mxu0 0.0
        %2153 = vmatmul.mubr.f32.gmra.mrb[0].mxu0 %v2020
        %v2154 = vpop.f32.mrb[0].mxu0
        %v2155 = vadd.f32 0.0, %v2154
        %v2156 = vpop.f32.mrb[0].mxu0
        %2157 = vmatprep.mubr.f32.mxu0 0.0
        %2158 = vmatmul.mubr.f32.gmra.mrb[0].mxu0 %v2022
        %v2159 = vpop.f32.mrb[0].mxu0
        %v2160 = vadd.f32 0.0, %v2159
        %v2161 = vpop.f32.mrb[0].mxu0
        %2162 = vmatprep.mubr.f32.mxu0 0.0
        %2163 = vmatmul.mubr.f32.gmra.mrb[0].mxu0 %v2024
        %v2164 = vpop.f32.mrb[0].mxu0
        %v2165 = vadd.f32 0.0, %v2164
        %v2166 = vpop.f32.mrb[0].mxu0
        %2167 = vmatprep.mubr.f32.mxu0 0.0
        %2168 = vmatmul.mubr.f32.gmra.mrb[0].mxu0 %v2026
        %v2169 = vpop.f32.mrb[0].mxu0
        %v2170 = vadd.f32 0.0, %v2169
        %v2171 = vpop.f32.mrb[0].mxu0
        %2172 = vdwg.mxu0
        %v2173 = vadd.f32 %v1978, %v2095
        %v2174 = vadd.f32 %v1979, %v2100
        %v2175 = vadd.f32 %v1980, %v2105
        %v2176 = vadd.f32 %v1981, %v2110
        %v2177 = vadd.f32 %v1982, %v2115
        %v2178 = vadd.f32 %v1983, %v2120
        %v2179 = vadd.f32 %v1984, %v2125
        %v2180 = vadd.f32 %v1985, %v2130
        %v2181 = vadd.f32 %v1986, %v2135
        %v2182 = vadd.f32 %v1987, %v2140
        %v2183 = vadd.f32 %v1988, %v2145
        %v2184 = vadd.f32 %v1989, %v2150
        %v2185 = vadd.f32 %v1990, %v2155
        %v2186 = vadd.f32 %v1991, %v2160
        %v2187 = vadd.f32 %v1992, %v2165
        %v2188 = vadd.f32 %v1993, %v2170
        %2189 = vst.msk [vmem:[#allocation4] sm:$0xff] %vm568, %v2173
        %2190 = vst.msk [vmem:[#allocation4 + $0x8] sm:$0xff] %vm568, %v2174
        %2191 = vst.msk [vmem:[#allocation4 + $0x10] sm:$0xff] %vm568, %v2175
        %2192 = vst.msk [vmem:[#allocation4 + $0x18] sm:$0xff] %vm568, %v2176
        %2193 = vst.msk [vmem:[#allocation4 + $0x20] sm:$0xff] %vm568, %v2177
        %2194 = vst.msk [vmem:[#allocation4 + $0x28] sm:$0xff] %vm568, %v2178
        %2195 = vst.msk [vmem:[#allocation4 + $0x30] sm:$0xff] %vm568, %v2179
        %2196 = vst.msk [vmem:[#allocation4 + $0x38] sm:$0xff] %vm568, %v2180
        %2197 = vst.msk [vmem:[#allocation4 + $0x40] sm:$0xff] %vm568, %v2181
        %2198 = vst.msk [vmem:[#allocation4 + $0x48] sm:$0xff] %vm568, %v2182
        %2199 = vst.msk [vmem:[#allocation4 + $0x50] sm:$0xff] %vm568, %v2183
        %2200 = vst.msk [vmem:[#allocation4 + $0x58] sm:$0xff] %vm568, %v2184
        %2201 = vst.msk [vmem:[#allocation4 + $0x60] sm:$0xff] %vm568, %v2185
        %2202 = vst.msk [vmem:[#allocation4 + $0x68] sm:$0xff] %vm568, %v2186
        %2203 = vst.msk [vmem:[#allocation4 + $0x70] sm:$0xff] %vm568, %v2187
        %2204 = vst.msk [vmem:[#allocation4 + $0x78] sm:$0xff] %vm568, %v2188
        %v2205 = vld [vmem:[%s520] sm:$0xff]
        %v2206 = vld [vmem:[%s520 + $0x8] sm:$0xff]
        %v2207 = vld [vmem:[%s520 + $0x10] sm:$0x3]
        %v2208 = vld [vmem:[%s520 + $0x18] sm:$0xff]
        %v2209 = vld [vmem:[%s520 + $0x20] sm:$0xff]
        %v2210 = vld [vmem:[%s520 + $0x28] sm:$0x3]
        %v2211 = vld [vmem:[%s520 + $0x30] sm:$0xff]
        %v2212 = vld [vmem:[%s520 + $0x38] sm:$0xff]
        %v2213 = vld [vmem:[%s520 + $0x40] sm:$0x3]
        %v2214 = vld [vmem:[%s520 + $0x48] sm:$0xff]
        %v2215 = vld [vmem:[%s520 + $0x50] sm:$0xff]
        %v2216 = vld [vmem:[%s520 + $0x58] sm:$0x3]
        %v2217 = vld [vmem:[%s520 + $0x60] sm:$0xff]
        %v2218 = vld [vmem:[%s520 + $0x68] sm:$0xff]
        %v2219 = vld [vmem:[%s520 + $0x70] sm:$0x3]
        %v2220 = vld [vmem:[%s520 + $0x78] sm:$0xff]
        %v2221 = vld [vmem:[%s520 + $0x80] sm:$0xff]
        %v2222 = vld [vmem:[%s520 + $0x88] sm:$0x3]
        %v2223 = vld [vmem:[%s520 + $0x90] sm:$0xff]
        %v2224 = vld [vmem:[%s520 + $0x98] sm:$0xff]
        %v2225 = vld [vmem:[%s520 + $0xa0] sm:$0x3]
        %v2226 = vld [vmem:[%s520 + $0xa8] sm:$0xff]
        %v2227 = vld [vmem:[%s520 + $0xb0] sm:$0xff]
        %v2228 = vld [vmem:[%s520 + $0xb8] sm:$0x3]
        %v2229 = vld [vmem:[#allocation4] sm:$0xff]
        %v2230 = vld [vmem:[#allocation4 + $0x8] sm:$0xff]
        %v2231 = vld [vmem:[#allocation4 + $0x10] sm:$0xff]
        %v2232 = vld [vmem:[#allocation4 + $0x18] sm:$0xff]
        %v2233 = vld [vmem:[#allocation4 + $0x20] sm:$0xff]
        %v2234 = vld [vmem:[#allocation4 + $0x28] sm:$0xff]
        %v2235 = vld [vmem:[#allocation4 + $0x30] sm:$0xff]
        %v2236 = vld [vmem:[#allocation4 + $0x38] sm:$0xff]
        %v2237 = vld [vmem:[#allocation4 + $0x40] sm:$0xff]
        %v2238 = vld [vmem:[#allocation4 + $0x48] sm:$0xff]
        %v2239 = vld [vmem:[#allocation4 + $0x50] sm:$0xff]
        %v2240 = vld [vmem:[#allocation4 + $0x58] sm:$0xff]
        %v2241 = vld [vmem:[#allocation4 + $0x60] sm:$0xff]
        %v2242 = vld [vmem:[#allocation4 + $0x68] sm:$0xff]
        %v2243 = vld [vmem:[#allocation4 + $0x70] sm:$0xff]
        %v2244 = vld [vmem:[#allocation4 + $0x78] sm:$0xff]
        %s2245 = scalar_lea.vmem [#allocation10], 48
        %v2246 = vld [vmem:[%s2245] sm:$0xff]
        %v2248 = vsel %vm499, %v2205, 0
        %v2251 = vsel %vm499, %v2206, 0
        %v2254 = vsel %vm499, %v2208, 0
        %v2257 = vsel %vm499, %v2209, 0
        %v2260 = vsel %vm499, %v2211, 0
        %v2263 = vsel %vm499, %v2212, 0
        %v2266 = vsel %vm499, %v2214, 0
        %v2269 = vsel %vm499, %v2215, 0
        %v2272 = vsel %vm499, %v2217, 0
        %v2275 = vsel %vm499, %v2218, 0
        %v2278 = vsel %vm499, %v2220, 0
        %v2281 = vsel %vm499, %v2221, 0
        %v2284 = vsel %vm499, %v2223, 0
        %v2287 = vsel %vm499, %v2224, 0
        %v2290 = vsel %vm499, %v2226, 0
        %v2293 = vsel %vm499, %v2227, 0
        %2295 = vmatprep.subr.mxu0 0.0
        %2296 = vmatpush1.msra.mxu0 %v2246
        %2297 = vmatprep.subr.mxu0 0.0
        %2298 = vmatpush1.msra.mxu0 0.0
        %2299 = vmatprep.subr.mxu0 0.0
        %2300 = vmatpush1.msra.mxu0 0.0
        %2301 = vmatprep.subr.mxu0 0.0
        %2302 = vmatpush1.msra.mxu0 0.0
        %2303 = vmatprep.subr.mxu0 0.0
        %2304 = vmatpush1.msra.mxu0 0.0
        %2305 = vmatprep.subr.mxu0 0.0
        %2306 = vmatpush1.msra.mxu0 0.0
        %2307 = vmatprep.subr.mxu0 0.0
        %2308 = vmatpush1.msra.mxu0 0.0
        %2309 = vmatprep.subr.mxu0 0.0
        %2310 = vmatpush1.msra.mxu0 0.0
        %2311 = vmatprep.subr.mxu0 0.0
        %2312 = vmatpush1.msra.mxu0 0.0
        %2313 = vmatprep.subr.mxu0 0.0
        %2314 = vmatpush1.msra.mxu0 0.0
        %2315 = vmatprep.subr.mxu0 0.0
        %2316 = vmatpush1.msra.mxu0 0.0
        %2317 = vmatprep.subr.mxu0 0.0
        %2318 = vmatpush1.msra.mxu0 0.0
        %2319 = vmatprep.subr.mxu0 0.0
        %2320 = vmatpush1.msra.mxu0 0.0
        %2321 = vmatprep.subr.mxu0 0.0
        %2322 = vmatpush1.msra.mxu0 0.0
        %2323 = vmatprep.subr.mxu0 0.0
        %2324 = vmatpush1.msra.mxu0 0.0
        %2325 = vmatprep.subr.mxu0 0.0
        %2326 = vmatpush1.msra.mxu0 0.0
        %2327 = vmatprep.subr.mxu0 0.0
        %2328 = vmatpush1.msra.mxu0 0.0
        %2329 = vmatprep.subr.mxu0 0.0
        %2330 = vmatpush1.msra.mxu0 0.0
        %2331 = vmatprep.subr.mxu0 0.0
        %2332 = vmatpush1.msra.mxu0 0.0
        %2333 = vmatprep.subr.mxu0 0.0
        %2334 = vmatpush1.msra.mxu0 0.0
        %2335 = vmatprep.subr.mxu0 0.0
        %2336 = vmatpush1.msra.mxu0 0.0
        %2337 = vmatprep.subr.mxu0 0.0
        %2338 = vmatpush1.msra.mxu0 0.0
        %2339 = vmatprep.subr.mxu0 0.0
        %2340 = vmatpush1.msra.mxu0 0.0
        %2341 = vmatprep.subr.mxu0 0.0
        %2342 = vmatpush1.msra.mxu0 0.0
        %2343 = vmatprep.subr.mxu0 0.0
        %2344 = vmatpush1.msra.mxu0 0.0
        %2345 = vmatprep.subr.mxu0 0.0
        %2346 = vmatpush1.msra.mxu0 0.0
        %2347 = vmatprep.subr.mxu0 0.0
        %2348 = vmatpush1.msra.mxu0 0.0
        %2349 = vmatprep.subr.mxu0 0.0
        %2350 = vmatpush1.msra.mxu0 0.0
        %2351 = vmatprep.subr.mxu0 0.0
        %2352 = vmatpush1.msra.mxu0 0.0
        %2353 = vmatprep.subr.mxu0 0.0
        %2354 = vmatpush1.msra.mxu0 0.0
        %2355 = vmatprep.subr.mxu0 0.0
        %2356 = vmatpush1.msra.mxu0 0.0
        %2357 = vmatprep.subr.mxu0 0.0
        %2358 = vmatpush1.msra.mxu0 0.0
        %2359 = vmatprep.mubr.f32.mxu0 0.0
        %2360 = vmatmul.mubr.f32.gmra.mrb[0].mxu0 %v2248
        %v2361 = vpop.f32.mrb[0].mxu0
        %v2362 = vadd.f32 0.0, %v2361
        %v2363 = vpop.f32.mrb[0].mxu0
        %2364 = vmatprep.mubr.f32.mxu0 0.0
        %2365 = vmatmul.mubr.f32.gmra.mrb[0].mxu0 %v2251
        %v2366 = vpop.f32.mrb[0].mxu0
        %v2367 = vadd.f32 0.0, %v2366
        %v2368 = vpop.f32.mrb[0].mxu0
        %2369 = vmatprep.mubr.f32.mxu0 0.0
        %2370 = vmatmul.mubr.f32.gmra.mrb[0].mxu0 %v2254
        %v2371 = vpop.f32.mrb[0].mxu0
        %v2372 = vadd.f32 0.0, %v2371
        %v2373 = vpop.f32.mrb[0].mxu0
        %2374 = vmatprep.mubr.f32.mxu0 0.0
        %2375 = vmatmul.mubr.f32.gmra.mrb[0].mxu0 %v2257
        %v2376 = vpop.f32.mrb[0].mxu0
        %v2377 = vadd.f32 0.0, %v2376
        %v2378 = vpop.f32.mrb[0].mxu0
        %2379 = vmatprep.mubr.f32.mxu0 0.0
        %2380 = vmatmul.mubr.f32.gmra.mrb[0].mxu0 %v2260
        %v2381 = vpop.f32.mrb[0].mxu0
        %v2382 = vadd.f32 0.0, %v2381
        %v2383 = vpop.f32.mrb[0].mxu0
        %2384 = vmatprep.mubr.f32.mxu0 0.0
        %2385 = vmatmul.mubr.f32.gmra.mrb[0].mxu0 %v2263
        %v2386 = vpop.f32.mrb[0].mxu0
        %v2387 = vadd.f32 0.0, %v2386
        %v2388 = vpop.f32.mrb[0].mxu0
        %2389 = vmatprep.mubr.f32.mxu0 0.0
        %2390 = vmatmul.mubr.f32.gmra.mrb[0].mxu0 %v2266
        %v2391 = vpop.f32.mrb[0].mxu0
        %v2392 = vadd.f32 0.0, %v2391
        %v2393 = vpop.f32.mrb[0].mxu0
        %2394 = vmatprep.mubr.f32.mxu0 0.0
        %2395 = vmatmul.mubr.f32.gmra.mrb[0].mxu0 %v2269
        %v2396 = vpop.f32.mrb[0].mxu0
        %v2397 = vadd.f32 0.0, %v2396
        %v2398 = vpop.f32.mrb[0].mxu0
        %2399 = vmatprep.mubr.f32.mxu0 0.0
        %2400 = vmatmul.mubr.f32.gmra.mrb[0].mxu0 %v2272
        %v2401 = vpop.f32.mrb[0].mxu0
        %v2402 = vadd.f32 0.0, %v2401
        %v2403 = vpop.f32.mrb[0].mxu0
        %2404 = vmatprep.mubr.f32.mxu0 0.0
        %2405 = vmatmul.mubr.f32.gmra.mrb[0].mxu0 %v2275
        %v2406 = vpop.f32.mrb[0].mxu0
        %v2407 = vadd.f32 0.0, %v2406
        %v2408 = vpop.f32.mrb[0].mxu0
        %2409 = vmatprep.mubr.f32.mxu0 0.0
        %2410 = vmatmul.mubr.f32.gmra.mrb[0].mxu0 %v2278
        %v2411 = vpop.f32.mrb[0].mxu0
        %v2412 = vadd.f32 0.0, %v2411
        %v2413 = vpop.f32.mrb[0].mxu0
        %2414 = vmatprep.mubr.f32.mxu0 0.0
        %2415 = vmatmul.mubr.f32.gmra.mrb[0].mxu0 %v2281
        %v2416 = vpop.f32.mrb[0].mxu0
        %v2417 = vadd.f32 0.0, %v2416
        %v2418 = vpop.f32.mrb[0].mxu0
        %2419 = vmatprep.mubr.f32.mxu0 0.0
        %2420 = vmatmul.mubr.f32.gmra.mrb[0].mxu0 %v2284
        %v2421 = vpop.f32.mrb[0].mxu0
        %v2422 = vadd.f32 0.0, %v2421
        %v2423 = vpop.f32.mrb[0].mxu0
        %2424 = vmatprep.mubr.f32.mxu0 0.0
        %2425 = vmatmul.mubr.f32.gmra.mrb[0].mxu0 %v2287
        %v2426 = vpop.f32.mrb[0].mxu0
        %v2427 = vadd.f32 0.0, %v2426
        %v2428 = vpop.f32.mrb[0].mxu0
        %2429 = vmatprep.mubr.f32.mxu0 0.0
        %2430 = vmatmul.mubr.f32.gmra.mrb[0].mxu0 %v2290
        %v2431 = vpop.f32.mrb[0].mxu0
        %v2432 = vadd.f32 0.0, %v2431
        %v2433 = vpop.f32.mrb[0].mxu0
        %2434 = vmatprep.mubr.f32.mxu0 0.0
        %2435 = vmatmul.mubr.f32.gmra.mrb[0].mxu0 %v2293
        %v2436 = vpop.f32.mrb[0].mxu0
        %v2437 = vadd.f32 0.0, %v2436
        %v2438 = vpop.f32.mrb[0].mxu0
        %2439 = vdwg.mxu0
        %v2440 = vadd.f32 %v2229, %v2362
        %v2441 = vadd.f32 %v2230, %v2367
        %v2442 = vadd.f32 %v2231, %v2372
        %v2443 = vadd.f32 %v2232, %v2377
        %v2444 = vadd.f32 %v2233, %v2382
        %v2445 = vadd.f32 %v2234, %v2387
        %v2446 = vadd.f32 %v2235, %v2392
        %v2447 = vadd.f32 %v2236, %v2397
        %v2448 = vadd.f32 %v2237, %v2402
        %v2449 = vadd.f32 %v2238, %v2407
        %v2450 = vadd.f32 %v2239, %v2412
        %v2451 = vadd.f32 %v2240, %v2417
        %v2452 = vadd.f32 %v2241, %v2422
        %v2453 = vadd.f32 %v2242, %v2427
        %v2454 = vadd.f32 %v2243, %v2432
        %v2455 = vadd.f32 %v2244, %v2437
        %2456 = vst.msk [vmem:[#allocation4] sm:$0xff] %vm568, %v2440
        %2457 = vst.msk [vmem:[#allocation4 + $0x8] sm:$0xff] %vm568, %v2441
        %2458 = vst.msk [vmem:[#allocation4 + $0x10] sm:$0xff] %vm568, %v2442
        %2459 = vst.msk [vmem:[#allocation4 + $0x18] sm:$0xff] %vm568, %v2443
        %2460 = vst.msk [vmem:[#allocation4 + $0x20] sm:$0xff] %vm568, %v2444
        %2461 = vst.msk [vmem:[#allocation4 + $0x28] sm:$0xff] %vm568, %v2445
        %2462 = vst.msk [vmem:[#allocation4 + $0x30] sm:$0xff] %vm568, %v2446
        %2463 = vst.msk [vmem:[#allocation4 + $0x38] sm:$0xff] %vm568, %v2447
        %2464 = vst.msk [vmem:[#allocation4 + $0x40] sm:$0xff] %vm568, %v2448
        %2465 = vst.msk [vmem:[#allocation4 + $0x48] sm:$0xff] %vm568, %v2449
        %2466 = vst.msk [vmem:[#allocation4 + $0x50] sm:$0xff] %vm568, %v2450
        %2467 = vst.msk [vmem:[#allocation4 + $0x58] sm:$0xff] %vm568, %v2451
        %2468 = vst.msk [vmem:[#allocation4 + $0x60] sm:$0xff] %vm568, %v2452
        %2469 = vst.msk [vmem:[#allocation4 + $0x68] sm:$0xff] %vm568, %v2453
        %2470 = vst.msk [vmem:[#allocation4 + $0x70] sm:$0xff] %vm568, %v2454
        %2471 = vst.msk [vmem:[#allocation4 + $0x78] sm:$0xff] %vm568, %v2455
        %v2480 = vrot.slane %v2205, 1
        %v2481 = vrot.slane %v2206, 1
        %v2482 = vsel %vm859, %v2480, %v2481
        %v2483 = vrot.slane %v2207, 1
        %v2484 = vsel %vm859, %v2481, %v2483
        %v2485 = vrot.slane %v2208, 1
        %v2486 = vrot.slane %v2209, 1
        %v2487 = vsel %vm859, %v2485, %v2486
        %v2488 = vrot.slane %v2210, 1
        %v2489 = vsel %vm859, %v2486, %v2488
        %v2490 = vrot.slane %v2211, 1
        %v2491 = vrot.slane %v2212, 1
        %v2492 = vsel %vm859, %v2490, %v2491
        %v2493 = vrot.slane %v2213, 1
        %v2494 = vsel %vm859, %v2491, %v2493
        %v2495 = vrot.slane %v2214, 1
        %v2496 = vrot.slane %v2215, 1
        %v2497 = vsel %vm859, %v2495, %v2496
        %v2498 = vrot.slane %v2216, 1
        %v2499 = vsel %vm859, %v2496, %v2498
        %v2500 = vrot.slane %v2217, 1
        %v2501 = vrot.slane %v2218, 1
        %v2502 = vsel %vm859, %v2500, %v2501
        %v2503 = vrot.slane %v2219, 1
        %v2504 = vsel %vm859, %v2501, %v2503
        %v2505 = vrot.slane %v2220, 1
        %v2506 = vrot.slane %v2221, 1
        %v2507 = vsel %vm859, %v2505, %v2506
        %v2508 = vrot.slane %v2222, 1
        %v2509 = vsel %vm859, %v2506, %v2508
        %v2510 = vrot.slane %v2223, 1
        %v2511 = vrot.slane %v2224, 1
        %v2512 = vsel %vm859, %v2510, %v2511
        %v2513 = vrot.slane %v2225, 1
        %v2514 = vsel %vm859, %v2511, %v2513
        %v2515 = vrot.slane %v2226, 1
        %v2516 = vrot.slane %v2227, 1
        %v2517 = vsel %vm859, %v2515, %v2516
        %v2518 = vrot.slane %v2228, 1
        %v2519 = vsel %vm859, %v2516, %v2518
        %v2520 = vld [vmem:[#allocation4] sm:$0xff]
        %v2521 = vld [vmem:[#allocation4 + $0x8] sm:$0xff]
        %v2522 = vld [vmem:[#allocation4 + $0x10] sm:$0xff]
        %v2523 = vld [vmem:[#allocation4 + $0x18] sm:$0xff]
        %v2524 = vld [vmem:[#allocation4 + $0x20] sm:$0xff]
        %v2525 = vld [vmem:[#allocation4 + $0x28] sm:$0xff]
        %v2526 = vld [vmem:[#allocation4 + $0x30] sm:$0xff]
        %v2527 = vld [vmem:[#allocation4 + $0x38] sm:$0xff]
        %v2528 = vld [vmem:[#allocation4 + $0x40] sm:$0xff]
        %v2529 = vld [vmem:[#allocation4 + $0x48] sm:$0xff]
        %v2530 = vld [vmem:[#allocation4 + $0x50] sm:$0xff]
        %v2531 = vld [vmem:[#allocation4 + $0x58] sm:$0xff]
        %v2532 = vld [vmem:[#allocation4 + $0x60] sm:$0xff]
        %v2533 = vld [vmem:[#allocation4 + $0x68] sm:$0xff]
        %v2534 = vld [vmem:[#allocation4 + $0x70] sm:$0xff]
        %v2535 = vld [vmem:[#allocation4 + $0x78] sm:$0xff]
        %s2536 = scalar_lea.vmem [#allocation10], 56
        %v2537 = vld [vmem:[%s2536] sm:$0xff]
        %v2538 = vsel %vm499, %v2482, 0
        %v2540 = vsel %vm499, %v2484, 0
        %v2542 = vsel %vm499, %v2487, 0
        %v2544 = vsel %vm499, %v2489, 0
        %v2546 = vsel %vm499, %v2492, 0
        %v2548 = vsel %vm499, %v2494, 0
        %v2550 = vsel %vm499, %v2497, 0
        %v2552 = vsel %vm499, %v2499, 0
        %v2554 = vsel %vm499, %v2502, 0
        %v2556 = vsel %vm499, %v2504, 0
        %v2558 = vsel %vm499, %v2507, 0
        %v2560 = vsel %vm499, %v2509, 0
        %v2562 = vsel %vm499, %v2512, 0
        %v2564 = vsel %vm499, %v2514, 0
        %v2566 = vsel %vm499, %v2517, 0
        %v2568 = vsel %vm499, %v2519, 0
        %2570 = vmatprep.subr.mxu0 0.0
        %2571 = vmatpush1.msra.mxu0 %v2537
        %2572 = vmatprep.subr.mxu0 0.0
        %2573 = vmatpush1.msra.mxu0 0.0
        %2574 = vmatprep.subr.mxu0 0.0
        %2575 = vmatpush1.msra.mxu0 0.0
        %2576 = vmatprep.subr.mxu0 0.0
        %2577 = vmatpush1.msra.mxu0 0.0
        %2578 = vmatprep.subr.mxu0 0.0
        %2579 = vmatpush1.msra.mxu0 0.0
        %2580 = vmatprep.subr.mxu0 0.0
        %2581 = vmatpush1.msra.mxu0 0.0
        %2582 = vmatprep.subr.mxu0 0.0
        %2583 = vmatpush1.msra.mxu0 0.0
        %2584 = vmatprep.subr.mxu0 0.0
        %2585 = vmatpush1.msra.mxu0 0.0
        %2586 = vmatprep.subr.mxu0 0.0
        %2587 = vmatpush1.msra.mxu0 0.0
        %2588 = vmatprep.subr.mxu0 0.0
        %2589 = vmatpush1.msra.mxu0 0.0
        %2590 = vmatprep.subr.mxu0 0.0
        %2591 = vmatpush1.msra.mxu0 0.0
        %2592 = vmatprep.subr.mxu0 0.0
        %2593 = vmatpush1.msra.mxu0 0.0
        %2594 = vmatprep.subr.mxu0 0.0
        %2595 = vmatpush1.msra.mxu0 0.0
        %2596 = vmatprep.subr.mxu0 0.0
        %2597 = vmatpush1.msra.mxu0 0.0
        %2598 = vmatprep.subr.mxu0 0.0
        %2599 = vmatpush1.msra.mxu0 0.0
        %2600 = vmatprep.subr.mxu0 0.0
        %2601 = vmatpush1.msra.mxu0 0.0
        %2602 = vmatprep.subr.mxu0 0.0
        %2603 = vmatpush1.msra.mxu0 0.0
        %2604 = vmatprep.subr.mxu0 0.0
        %2605 = vmatpush1.msra.mxu0 0.0
        %2606 = vmatprep.subr.mxu0 0.0
        %2607 = vmatpush1.msra.mxu0 0.0
        %2608 = vmatprep.subr.mxu0 0.0
        %2609 = vmatpush1.msra.mxu0 0.0
        %2610 = vmatprep.subr.mxu0 0.0
        %2611 = vmatpush1.msra.mxu0 0.0
        %2612 = vmatprep.subr.mxu0 0.0
        %2613 = vmatpush1.msra.mxu0 0.0
        %2614 = vmatprep.subr.mxu0 0.0
        %2615 = vmatpush1.msra.mxu0 0.0
        %2616 = vmatprep.subr.mxu0 0.0
        %2617 = vmatpush1.msra.mxu0 0.0
        %2618 = vmatprep.subr.mxu0 0.0
        %2619 = vmatpush1.msra.mxu0 0.0
        %2620 = vmatprep.subr.mxu0 0.0
        %2621 = vmatpush1.msra.mxu0 0.0
        %2622 = vmatprep.subr.mxu0 0.0
        %2623 = vmatpush1.msra.mxu0 0.0
        %2624 = vmatprep.subr.mxu0 0.0
        %2625 = vmatpush1.msra.mxu0 0.0
        %2626 = vmatprep.subr.mxu0 0.0
        %2627 = vmatpush1.msra.mxu0 0.0
        %2628 = vmatprep.subr.mxu0 0.0
        %2629 = vmatpush1.msra.mxu0 0.0
        %2630 = vmatprep.subr.mxu0 0.0
        %2631 = vmatpush1.msra.mxu0 0.0
        %2632 = vmatprep.subr.mxu0 0.0
        %2633 = vmatpush1.msra.mxu0 0.0
        %2634 = vmatprep.mubr.f32.mxu0 0.0
        %2635 = vmatmul.mubr.f32.gmra.mrb[0].mxu0 %v2538
        %v2636 = vpop.f32.mrb[0].mxu0
        %v2637 = vadd.f32 0.0, %v2636
        %v2638 = vpop.f32.mrb[0].mxu0
        %2639 = vmatprep.mubr.f32.mxu0 0.0
        %2640 = vmatmul.mubr.f32.gmra.mrb[0].mxu0 %v2540
        %v2641 = vpop.f32.mrb[0].mxu0
        %v2642 = vadd.f32 0.0, %v2641
        %v2643 = vpop.f32.mrb[0].mxu0
        %2644 = vmatprep.mubr.f32.mxu0 0.0
        %2645 = vmatmul.mubr.f32.gmra.mrb[0].mxu0 %v2542
        %v2646 = vpop.f32.mrb[0].mxu0
        %v2647 = vadd.f32 0.0, %v2646
        %v2648 = vpop.f32.mrb[0].mxu0
        %2649 = vmatprep.mubr.f32.mxu0 0.0
        %2650 = vmatmul.mubr.f32.gmra.mrb[0].mxu0 %v2544
        %v2651 = vpop.f32.mrb[0].mxu0
        %v2652 = vadd.f32 0.0, %v2651
        %v2653 = vpop.f32.mrb[0].mxu0
        %2654 = vmatprep.mubr.f32.mxu0 0.0
        %2655 = vmatmul.mubr.f32.gmra.mrb[0].mxu0 %v2546
        %v2656 = vpop.f32.mrb[0].mxu0
        %v2657 = vadd.f32 0.0, %v2656
        %v2658 = vpop.f32.mrb[0].mxu0
        %2659 = vmatprep.mubr.f32.mxu0 0.0
        %2660 = vmatmul.mubr.f32.gmra.mrb[0].mxu0 %v2548
        %v2661 = vpop.f32.mrb[0].mxu0
        %v2662 = vadd.f32 0.0, %v2661
        %v2663 = vpop.f32.mrb[0].mxu0
        %2664 = vmatprep.mubr.f32.mxu0 0.0
        %2665 = vmatmul.mubr.f32.gmra.mrb[0].mxu0 %v2550
        %v2666 = vpop.f32.mrb[0].mxu0
        %v2667 = vadd.f32 0.0, %v2666
        %v2668 = vpop.f32.mrb[0].mxu0
        %2669 = vmatprep.mubr.f32.mxu0 0.0
        %2670 = vmatmul.mubr.f32.gmra.mrb[0].mxu0 %v2552
        %v2671 = vpop.f32.mrb[0].mxu0
        %v2672 = vadd.f32 0.0, %v2671
        %v2673 = vpop.f32.mrb[0].mxu0
        %2674 = vmatprep.mubr.f32.mxu0 0.0
        %2675 = vmatmul.mubr.f32.gmra.mrb[0].mxu0 %v2554
        %v2676 = vpop.f32.mrb[0].mxu0
        %v2677 = vadd.f32 0.0, %v2676
        %v2678 = vpop.f32.mrb[0].mxu0
        %2679 = vmatprep.mubr.f32.mxu0 0.0
        %2680 = vmatmul.mubr.f32.gmra.mrb[0].mxu0 %v2556
        %v2681 = vpop.f32.mrb[0].mxu0
        %v2682 = vadd.f32 0.0, %v2681
        %v2683 = vpop.f32.mrb[0].mxu0
        %2684 = vmatprep.mubr.f32.mxu0 0.0
        %2685 = vmatmul.mubr.f32.gmra.mrb[0].mxu0 %v2558
        %v2686 = vpop.f32.mrb[0].mxu0
        %v2687 = vadd.f32 0.0, %v2686
        %v2688 = vpop.f32.mrb[0].mxu0
        %2689 = vmatprep.mubr.f32.mxu0 0.0
        %2690 = vmatmul.mubr.f32.gmra.mrb[0].mxu0 %v2560
        %v2691 = vpop.f32.mrb[0].mxu0
        %v2692 = vadd.f32 0.0, %v2691
        %v2693 = vpop.f32.mrb[0].mxu0
        %2694 = vmatprep.mubr.f32.mxu0 0.0
        %2695 = vmatmul.mubr.f32.gmra.mrb[0].mxu0 %v2562
        %v2696 = vpop.f32.mrb[0].mxu0
        %v2697 = vadd.f32 0.0, %v2696
        %v2698 = vpop.f32.mrb[0].mxu0
        %2699 = vmatprep.mubr.f32.mxu0 0.0
        %2700 = vmatmul.mubr.f32.gmra.mrb[0].mxu0 %v2564
        %v2701 = vpop.f32.mrb[0].mxu0
        %v2702 = vadd.f32 0.0, %v2701
        %v2703 = vpop.f32.mrb[0].mxu0
        %2704 = vmatprep.mubr.f32.mxu0 0.0
        %2705 = vmatmul.mubr.f32.gmra.mrb[0].mxu0 %v2566
        %v2706 = vpop.f32.mrb[0].mxu0
        %v2707 = vadd.f32 0.0, %v2706
        %v2708 = vpop.f32.mrb[0].mxu0
        %2709 = vmatprep.mubr.f32.mxu0 0.0
        %2710 = vmatmul.mubr.f32.gmra.mrb[0].mxu0 %v2568
        %v2711 = vpop.f32.mrb[0].mxu0
        %v2712 = vadd.f32 0.0, %v2711
        %v2713 = vpop.f32.mrb[0].mxu0
        %2714 = vdwg.mxu0
        %v2715 = vadd.f32 %v2520, %v2637
        %v2716 = vadd.f32 %v2521, %v2642
        %v2717 = vadd.f32 %v2522, %v2647
        %v2718 = vadd.f32 %v2523, %v2652
        %v2719 = vadd.f32 %v2524, %v2657
        %v2720 = vadd.f32 %v2525, %v2662
        %v2721 = vadd.f32 %v2526, %v2667
        %v2722 = vadd.f32 %v2527, %v2672
        %v2723 = vadd.f32 %v2528, %v2677
        %v2724 = vadd.f32 %v2529, %v2682
        %v2725 = vadd.f32 %v2530, %v2687
        %v2726 = vadd.f32 %v2531, %v2692
        %v2727 = vadd.f32 %v2532, %v2697
        %v2728 = vadd.f32 %v2533, %v2702
        %v2729 = vadd.f32 %v2534, %v2707
        %v2730 = vadd.f32 %v2535, %v2712
        %2731 = vst.msk [vmem:[#allocation4] sm:$0xff] %vm568, %v2715
        %2732 = vst.msk [vmem:[#allocation4 + $0x8] sm:$0xff] %vm568, %v2716
        %2733 = vst.msk [vmem:[#allocation4 + $0x10] sm:$0xff] %vm568, %v2717
        %2734 = vst.msk [vmem:[#allocation4 + $0x18] sm:$0xff] %vm568, %v2718
        %2735 = vst.msk [vmem:[#allocation4 + $0x20] sm:$0xff] %vm568, %v2719
        %2736 = vst.msk [vmem:[#allocation4 + $0x28] sm:$0xff] %vm568, %v2720
        %2737 = vst.msk [vmem:[#allocation4 + $0x30] sm:$0xff] %vm568, %v2721
        %2738 = vst.msk [vmem:[#allocation4 + $0x38] sm:$0xff] %vm568, %v2722
        %2739 = vst.msk [vmem:[#allocation4 + $0x40] sm:$0xff] %vm568, %v2723
        %2740 = vst.msk [vmem:[#allocation4 + $0x48] sm:$0xff] %vm568, %v2724
        %2741 = vst.msk [vmem:[#allocation4 + $0x50] sm:$0xff] %vm568, %v2725
        %2742 = vst.msk [vmem:[#allocation4 + $0x58] sm:$0xff] %vm568, %v2726
        %2743 = vst.msk [vmem:[#allocation4 + $0x60] sm:$0xff] %vm568, %v2727
        %2744 = vst.msk [vmem:[#allocation4 + $0x68] sm:$0xff] %vm568, %v2728
        %2745 = vst.msk [vmem:[#allocation4 + $0x70] sm:$0xff] %vm568, %v2729
        %2746 = vst.msk [vmem:[#allocation4 + $0x78] sm:$0xff] %vm568, %v2730
        %v2747 = vrot.slane %v2205, 2
        %v2748 = vrot.slane %v2206, 2
        %v2749 = vsel %vm1127, %v2747, %v2748
        %v2750 = vrot.slane %v2207, 2
        %v2751 = vsel %vm1127, %v2748, %v2750
        %v2752 = vrot.slane %v2208, 2
        %v2753 = vrot.slane %v2209, 2
        %v2754 = vsel %vm1127, %v2752, %v2753
        %v2755 = vrot.slane %v2210, 2
        %v2756 = vsel %vm1127, %v2753, %v2755
        %v2757 = vrot.slane %v2211, 2
        %v2758 = vrot.slane %v2212, 2
        %v2759 = vsel %vm1127, %v2757, %v2758
        %v2760 = vrot.slane %v2213, 2
        %v2761 = vsel %vm1127, %v2758, %v2760
        %v2762 = vrot.slane %v2214, 2
        %v2763 = vrot.slane %v2215, 2
        %v2764 = vsel %vm1127, %v2762, %v2763
        %v2765 = vrot.slane %v2216, 2
        %v2766 = vsel %vm1127, %v2763, %v2765
        %v2767 = vrot.slane %v2217, 2
        %v2768 = vrot.slane %v2218, 2
        %v2769 = vsel %vm1127, %v2767, %v2768
        %v2770 = vrot.slane %v2219, 2
        %v2771 = vsel %vm1127, %v2768, %v2770
        %v2772 = vrot.slane %v2220, 2
        %v2773 = vrot.slane %v2221, 2
        %v2774 = vsel %vm1127, %v2772, %v2773
        %v2775 = vrot.slane %v2222, 2
        %v2776 = vsel %vm1127, %v2773, %v2775
        %v2777 = vrot.slane %v2223, 2
        %v2778 = vrot.slane %v2224, 2
        %v2779 = vsel %vm1127, %v2777, %v2778
        %v2780 = vrot.slane %v2225, 2
        %v2781 = vsel %vm1127, %v2778, %v2780
        %v2782 = vrot.slane %v2226, 2
        %v2783 = vrot.slane %v2227, 2
        %v2784 = vsel %vm1127, %v2782, %v2783
        %v2785 = vrot.slane %v2228, 2
        %v2786 = vsel %vm1127, %v2783, %v2785
        %v2787 = vld [vmem:[#allocation4] sm:$0xff]
        %v2788 = vld [vmem:[#allocation4 + $0x8] sm:$0xff]
        %v2789 = vld [vmem:[#allocation4 + $0x10] sm:$0xff]
        %v2790 = vld [vmem:[#allocation4 + $0x18] sm:$0xff]
        %v2791 = vld [vmem:[#allocation4 + $0x20] sm:$0xff]
        %v2792 = vld [vmem:[#allocation4 + $0x28] sm:$0xff]
        %v2793 = vld [vmem:[#allocation4 + $0x30] sm:$0xff]
        %v2794 = vld [vmem:[#allocation4 + $0x38] sm:$0xff]
        %v2795 = vld [vmem:[#allocation4 + $0x40] sm:$0xff]
        %v2796 = vld [vmem:[#allocation4 + $0x48] sm:$0xff]
        %v2797 = vld [vmem:[#allocation4 + $0x50] sm:$0xff]
        %v2798 = vld [vmem:[#allocation4 + $0x58] sm:$0xff]
        %v2799 = vld [vmem:[#allocation4 + $0x60] sm:$0xff]
        %v2800 = vld [vmem:[#allocation4 + $0x68] sm:$0xff]
        %v2801 = vld [vmem:[#allocation4 + $0x70] sm:$0xff]
        %v2802 = vld [vmem:[#allocation4 + $0x78] sm:$0xff]
        %s2803 = scalar_lea.vmem [#allocation10], 64
        %v2804 = vld [vmem:[%s2803] sm:$0xff]
        %v2805 = vsel %vm499, %v2749, 0
        %v2807 = vsel %vm499, %v2751, 0
        %v2809 = vsel %vm499, %v2754, 0
        %v2811 = vsel %vm499, %v2756, 0
        %v2813 = vsel %vm499, %v2759, 0
        %v2815 = vsel %vm499, %v2761, 0
        %v2817 = vsel %vm499, %v2764, 0
        %v2819 = vsel %vm499, %v2766, 0
        %v2821 = vsel %vm499, %v2769, 0
        %v2823 = vsel %vm499, %v2771, 0
        %v2825 = vsel %vm499, %v2774, 0
        %v2827 = vsel %vm499, %v2776, 0
        %v2829 = vsel %vm499, %v2779, 0
        %v2831 = vsel %vm499, %v2781, 0
        %v2833 = vsel %vm499, %v2784, 0
        %v2835 = vsel %vm499, %v2786, 0
        %2837 = vmatprep.subr.mxu0 0.0
        %2838 = vmatpush1.msra.mxu0 %v2804
        %2839 = vmatprep.subr.mxu0 0.0
        %2840 = vmatpush1.msra.mxu0 0.0
        %2841 = vmatprep.subr.mxu0 0.0
        %2842 = vmatpush1.msra.mxu0 0.0
        %2843 = vmatprep.subr.mxu0 0.0
        %2844 = vmatpush1.msra.mxu0 0.0
        %2845 = vmatprep.subr.mxu0 0.0
        %2846 = vmatpush1.msra.mxu0 0.0
        %2847 = vmatprep.subr.mxu0 0.0
        %2848 = vmatpush1.msra.mxu0 0.0
        %2849 = vmatprep.subr.mxu0 0.0
        %2850 = vmatpush1.msra.mxu0 0.0
        %2851 = vmatprep.subr.mxu0 0.0
        %2852 = vmatpush1.msra.mxu0 0.0
        %2853 = vmatprep.subr.mxu0 0.0
        %2854 = vmatpush1.msra.mxu0 0.0
        %2855 = vmatprep.subr.mxu0 0.0
        %2856 = vmatpush1.msra.mxu0 0.0
        %2857 = vmatprep.subr.mxu0 0.0
        %2858 = vmatpush1.msra.mxu0 0.0
        %2859 = vmatprep.subr.mxu0 0.0
        %2860 = vmatpush1.msra.mxu0 0.0
        %2861 = vmatprep.subr.mxu0 0.0
        %2862 = vmatpush1.msra.mxu0 0.0
        %2863 = vmatprep.subr.mxu0 0.0
        %2864 = vmatpush1.msra.mxu0 0.0
        %2865 = vmatprep.subr.mxu0 0.0
        %2866 = vmatpush1.msra.mxu0 0.0
        %2867 = vmatprep.subr.mxu0 0.0
        %2868 = vmatpush1.msra.mxu0 0.0
        %2869 = vmatprep.subr.mxu0 0.0
        %2870 = vmatpush1.msra.mxu0 0.0
        %2871 = vmatprep.subr.mxu0 0.0
        %2872 = vmatpush1.msra.mxu0 0.0
        %2873 = vmatprep.subr.mxu0 0.0
        %2874 = vmatpush1.msra.mxu0 0.0
        %2875 = vmatprep.subr.mxu0 0.0
        %2876 = vmatpush1.msra.mxu0 0.0
        %2877 = vmatprep.subr.mxu0 0.0
        %2878 = vmatpush1.msra.mxu0 0.0
        %2879 = vmatprep.subr.mxu0 0.0
        %2880 = vmatpush1.msra.mxu0 0.0
        %2881 = vmatprep.subr.mxu0 0.0
        %2882 = vmatpush1.msra.mxu0 0.0
        %2883 = vmatprep.subr.mxu0 0.0
        %2884 = vmatpush1.msra.mxu0 0.0
        %2885 = vmatprep.subr.mxu0 0.0
        %2886 = vmatpush1.msra.mxu0 0.0
        %2887 = vmatprep.subr.mxu0 0.0
        %2888 = vmatpush1.msra.mxu0 0.0
        %2889 = vmatprep.subr.mxu0 0.0
        %2890 = vmatpush1.msra.mxu0 0.0
        %2891 = vmatprep.subr.mxu0 0.0
        %2892 = vmatpush1.msra.mxu0 0.0
        %2893 = vmatprep.subr.mxu0 0.0
        %2894 = vmatpush1.msra.mxu0 0.0
        %2895 = vmatprep.subr.mxu0 0.0
        %2896 = vmatpush1.msra.mxu0 0.0
        %2897 = vmatprep.subr.mxu0 0.0
        %2898 = vmatpush1.msra.mxu0 0.0
        %2899 = vmatprep.subr.mxu0 0.0
        %2900 = vmatpush1.msra.mxu0 0.0
        %2901 = vmatprep.mubr.f32.mxu0 0.0
        %2902 = vmatmul.mubr.f32.gmra.mrb[0].mxu0 %v2805
        %v2903 = vpop.f32.mrb[0].mxu0
        %v2904 = vadd.f32 0.0, %v2903
        %v2905 = vpop.f32.mrb[0].mxu0
        %2906 = vmatprep.mubr.f32.mxu0 0.0
        %2907 = vmatmul.mubr.f32.gmra.mrb[0].mxu0 %v2807
        %v2908 = vpop.f32.mrb[0].mxu0
        %v2909 = vadd.f32 0.0, %v2908
        %v2910 = vpop.f32.mrb[0].mxu0
        %2911 = vmatprep.mubr.f32.mxu0 0.0
        %2912 = vmatmul.mubr.f32.gmra.mrb[0].mxu0 %v2809
        %v2913 = vpop.f32.mrb[0].mxu0
        %v2914 = vadd.f32 0.0, %v2913
        %v2915 = vpop.f32.mrb[0].mxu0
        %2916 = vmatprep.mubr.f32.mxu0 0.0
        %2917 = vmatmul.mubr.f32.gmra.mrb[0].mxu0 %v2811
        %v2918 = vpop.f32.mrb[0].mxu0
        %v2919 = vadd.f32 0.0, %v2918
        %v2920 = vpop.f32.mrb[0].mxu0
        %2921 = vmatprep.mubr.f32.mxu0 0.0
        %2922 = vmatmul.mubr.f32.gmra.mrb[0].mxu0 %v2813
        %v2923 = vpop.f32.mrb[0].mxu0
        %v2924 = vadd.f32 0.0, %v2923
        %v2925 = vpop.f32.mrb[0].mxu0
        %2926 = vmatprep.mubr.f32.mxu0 0.0
        %2927 = vmatmul.mubr.f32.gmra.mrb[0].mxu0 %v2815
        %v2928 = vpop.f32.mrb[0].mxu0
        %v2929 = vadd.f32 0.0, %v2928
        %v2930 = vpop.f32.mrb[0].mxu0
        %2931 = vmatprep.mubr.f32.mxu0 0.0
        %2932 = vmatmul.mubr.f32.gmra.mrb[0].mxu0 %v2817
        %v2933 = vpop.f32.mrb[0].mxu0
        %v2934 = vadd.f32 0.0, %v2933
        %v2935 = vpop.f32.mrb[0].mxu0
        %2936 = vmatprep.mubr.f32.mxu0 0.0
        %2937 = vmatmul.mubr.f32.gmra.mrb[0].mxu0 %v2819
        %v2938 = vpop.f32.mrb[0].mxu0
        %v2939 = vadd.f32 0.0, %v2938
        %v2940 = vpop.f32.mrb[0].mxu0
        %2941 = vmatprep.mubr.f32.mxu0 0.0
        %2942 = vmatmul.mubr.f32.gmra.mrb[0].mxu0 %v2821
        %v2943 = vpop.f32.mrb[0].mxu0
        %v2944 = vadd.f32 0.0, %v2943
        %v2945 = vpop.f32.mrb[0].mxu0
        %2946 = vmatprep.mubr.f32.mxu0 0.0
        %2947 = vmatmul.mubr.f32.gmra.mrb[0].mxu0 %v2823
        %v2948 = vpop.f32.mrb[0].mxu0
        %v2949 = vadd.f32 0.0, %v2948
        %v2950 = vpop.f32.mrb[0].mxu0
        %2951 = vmatprep.mubr.f32.mxu0 0.0
        %2952 = vmatmul.mubr.f32.gmra.mrb[0].mxu0 %v2825
        %v2953 = vpop.f32.mrb[0].mxu0
        %v2954 = vadd.f32 0.0, %v2953
        %v2955 = vpop.f32.mrb[0].mxu0
        %2956 = vmatprep.mubr.f32.mxu0 0.0
        %2957 = vmatmul.mubr.f32.gmra.mrb[0].mxu0 %v2827
        %v2958 = vpop.f32.mrb[0].mxu0
        %v2959 = vadd.f32 0.0, %v2958
        %v2960 = vpop.f32.mrb[0].mxu0
        %2961 = vmatprep.mubr.f32.mxu0 0.0
        %2962 = vmatmul.mubr.f32.gmra.mrb[0].mxu0 %v2829
        %v2963 = vpop.f32.mrb[0].mxu0
        %v2964 = vadd.f32 0.0, %v2963
        %v2965 = vpop.f32.mrb[0].mxu0
        %2966 = vmatprep.mubr.f32.mxu0 0.0
        %2967 = vmatmul.mubr.f32.gmra.mrb[0].mxu0 %v2831
        %v2968 = vpop.f32.mrb[0].mxu0
        %v2969 = vadd.f32 0.0, %v2968
        %v2970 = vpop.f32.mrb[0].mxu0
        %2971 = vmatprep.mubr.f32.mxu0 0.0
        %2972 = vmatmul.mubr.f32.gmra.mrb[0].mxu0 %v2833
        %v2973 = vpop.f32.mrb[0].mxu0
        %v2974 = vadd.f32 0.0, %v2973
        %v2975 = vpop.f32.mrb[0].mxu0
        %2976 = vmatprep.mubr.f32.mxu0 0.0
        %2977 = vmatmul.mubr.f32.gmra.mrb[0].mxu0 %v2835
        %v2978 = vpop.f32.mrb[0].mxu0
        %v2979 = vadd.f32 0.0, %v2978
        %v2980 = vpop.f32.mrb[0].mxu0
        %2981 = vdwg.mxu0
        %v2982 = vadd.f32 %v2787, %v2904
        %v2983 = vadd.f32 %v2788, %v2909
        %v2984 = vadd.f32 %v2789, %v2914
        %v2985 = vadd.f32 %v2790, %v2919
        %v2986 = vadd.f32 %v2791, %v2924
        %v2987 = vadd.f32 %v2792, %v2929
        %v2988 = vadd.f32 %v2793, %v2934
        %v2989 = vadd.f32 %v2794, %v2939
        %v2990 = vadd.f32 %v2795, %v2944
        %v2991 = vadd.f32 %v2796, %v2949
        %v2992 = vadd.f32 %v2797, %v2954
        %v2993 = vadd.f32 %v2798, %v2959
        %v2994 = vadd.f32 %v2799, %v2964
        %v2995 = vadd.f32 %v2800, %v2969
        %v2996 = vadd.f32 %v2801, %v2974
        %v2997 = vadd.f32 %v2802, %v2979
        %2998 = vst.msk [vmem:[#allocation4] sm:$0xff] %vm568, %v2982
        %2999 = vst.msk [vmem:[#allocation4 + $0x8] sm:$0xff] %vm568, %v2983
        %3000 = vst.msk [vmem:[#allocation4 + $0x10] sm:$0xff] %vm568, %v2984
        %3001 = vst.msk [vmem:[#allocation4 + $0x18] sm:$0xff] %vm568, %v2985
        %3002 = vst.msk [vmem:[#allocation4 + $0x20] sm:$0xff] %vm568, %v2986
        %3003 = vst.msk [vmem:[#allocation4 + $0x28] sm:$0xff] %vm568, %v2987
        %3004 = vst.msk [vmem:[#allocation4 + $0x30] sm:$0xff] %vm568, %v2988
        %3005 = vst.msk [vmem:[#allocation4 + $0x38] sm:$0xff] %vm568, %v2989
        %3006 = vst.msk [vmem:[#allocation4 + $0x40] sm:$0xff] %vm568, %v2990
        %3007 = vst.msk [vmem:[#allocation4 + $0x48] sm:$0xff] %vm568, %v2991
        %3008 = vst.msk [vmem:[#allocation4 + $0x50] sm:$0xff] %vm568, %v2992
        %3009 = vst.msk [vmem:[#allocation4 + $0x58] sm:$0xff] %vm568, %v2993
        %3010 = vst.msk [vmem:[#allocation4 + $0x60] sm:$0xff] %vm568, %v2994
        %3011 = vst.msk [vmem:[#allocation4 + $0x68] sm:$0xff] %vm568, %v2995
        %3012 = vst.msk [vmem:[#allocation4 + $0x70] sm:$0xff] %vm568, %v2996
        %3013 = vst.msk [vmem:[#allocation4 + $0x78] sm:$0xff] %vm568, %v2997
        %v3014 = vld [vmem:[#allocation4] sm:$0xff]
        %v3015 = vld [vmem:[#allocation4 + $0x8] sm:$0xff]
        %v3016 = vld [vmem:[#allocation4 + $0x10] sm:$0xff]
        %v3017 = vld [vmem:[#allocation4 + $0x18] sm:$0xff]
        %v3018 = vld [vmem:[#allocation4 + $0x20] sm:$0xff]
        %v3019 = vld [vmem:[#allocation4 + $0x28] sm:$0xff]
        %v3020 = vld [vmem:[#allocation4 + $0x30] sm:$0xff]
        %v3021 = vld [vmem:[#allocation4 + $0x38] sm:$0xff]
        %v3022 = vld [vmem:[#allocation4 + $0x40] sm:$0xff]
        %v3023 = vld [vmem:[#allocation4 + $0x48] sm:$0xff]
        %v3024 = vld [vmem:[#allocation4 + $0x50] sm:$0xff]
        %v3025 = vld [vmem:[#allocation4 + $0x58] sm:$0xff]
        %v3026 = vld [vmem:[#allocation4 + $0x60] sm:$0xff]
        %v3027 = vld [vmem:[#allocation4 + $0x68] sm:$0xff]
        %v3028 = vld [vmem:[#allocation4 + $0x70] sm:$0xff]
        %v3029 = vld [vmem:[#allocation4 + $0x78] sm:$0xff]
        %v3030 = vld [vmem:[#allocation11] sm:$0x1]
        %v3032 = vlaneseq
        %v3033 = vshrl.u32 %v3032, 7
        %v3034 = vsub.s32 0, %v3033
        %v3035 = vrot.slane %v3030, %v3034
        %v3037 = vadd.f32 %v3014, %v3035
        %v3038 = vadd.f32 %v3015, %v3035
        %v3039 = vadd.f32 %v3016, %v3035
        %v3040 = vadd.f32 %v3017, %v3035
        %v3041 = vadd.f32 %v3018, %v3035
        %v3042 = vadd.f32 %v3019, %v3035
        %v3043 = vadd.f32 %v3020, %v3035
        %v3044 = vadd.f32 %v3021, %v3035
        %v3045 = vadd.f32 %v3022, %v3035
        %v3046 = vadd.f32 %v3023, %v3035
        %v3047 = vadd.f32 %v3024, %v3035
        %v3048 = vadd.f32 %v3025, %v3035
        %v3049 = vadd.f32 %v3026, %v3035
        %v3050 = vadd.f32 %v3027, %v3035
        %v3051 = vadd.f32 %v3028, %v3035
        %v3052 = vadd.f32 %v3029, %v3035
        %vm3053 = vcmp.ge.f32.partialorder %v3037, 0.0
        %vm3054 = vcmp.ge.f32.partialorder %v3038, 0.0
        %vm3055 = vcmp.ge.f32.partialorder %v3039, 0.0
        %vm3056 = vcmp.ge.f32.partialorder %v3040, 0.0
        %vm3057 = vcmp.ge.f32.partialorder %v3041, 0.0
        %vm3058 = vcmp.ge.f32.partialorder %v3042, 0.0
        %vm3059 = vcmp.ge.f32.partialorder %v3043, 0.0
        %vm3060 = vcmp.ge.f32.partialorder %v3044, 0.0
        %vm3061 = vcmp.ge.f32.partialorder %v3045, 0.0
        %vm3062 = vcmp.ge.f32.partialorder %v3046, 0.0
        %vm3063 = vcmp.ge.f32.partialorder %v3047, 0.0
        %vm3064 = vcmp.ge.f32.partialorder %v3048, 0.0
        %vm3065 = vcmp.ge.f32.partialorder %v3049, 0.0
        %vm3066 = vcmp.ge.f32.partialorder %v3050, 0.0
        %vm3067 = vcmp.ge.f32.partialorder %v3051, 0.0
        %vm3068 = vcmp.ge.f32.partialorder %v3052, 0.0
        %v3069 = vmul.f32 %v3037, 0.2
        %v3070 = vmul.f32 %v3038, 0.2
        %v3071 = vmul.f32 %v3039, 0.2
        %v3072 = vmul.f32 %v3040, 0.2
        %v3073 = vmul.f32 %v3041, 0.2
        %v3074 = vmul.f32 %v3042, 0.2
        %v3075 = vmul.f32 %v3043, 0.2
        %v3076 = vmul.f32 %v3044, 0.2
        %v3077 = vmul.f32 %v3045, 0.2
        %v3078 = vmul.f32 %v3046, 0.2
        %v3079 = vmul.f32 %v3047, 0.2
        %v3080 = vmul.f32 %v3048, 0.2
        %v3081 = vmul.f32 %v3049, 0.2
        %v3082 = vmul.f32 %v3050, 0.2
        %v3083 = vmul.f32 %v3051, 0.2
        %v3084 = vmul.f32 %v3052, 0.2
        %v3085 = vsel %vm3053, %v3037, %v3069
        %v3086 = vsel %vm3054, %v3038, %v3070
        %v3087 = vsel %vm3055, %v3039, %v3071
        %v3088 = vsel %vm3056, %v3040, %v3072
        %v3089 = vsel %vm3057, %v3041, %v3073
        %v3090 = vsel %vm3058, %v3042, %v3074
        %v3091 = vsel %vm3059, %v3043, %v3075
        %v3092 = vsel %vm3060, %v3044, %v3076
        %v3093 = vsel %vm3061, %v3045, %v3077
        %v3094 = vsel %vm3062, %v3046, %v3078
        %v3095 = vsel %vm3063, %v3047, %v3079
        %v3096 = vsel %vm3064, %v3048, %v3080
        %v3097 = vsel %vm3065, %v3049, %v3081
        %v3098 = vsel %vm3066, %v3050, %v3082
        %v3099 = vsel %vm3067, %v3051, %v3083
        %v3100 = vsel %vm3068, %v3052, %v3084
        %3101 = vst.msk [vmem:[#allocation3 + $0x1] sm:$0xff] %vm568, %v3085
        %3102 = vst.msk [vmem:[#allocation3 + $0x9] sm:$0xff] %vm568, %v3086
        %3103 = vst.msk [vmem:[#allocation3 + $0x19] sm:$0xff] %vm568, %v3087
        %3104 = vst.msk [vmem:[#allocation3 + $0x21] sm:$0xff] %vm568, %v3088
        %3105 = vst.msk [vmem:[#allocation3 + $0x31] sm:$0xff] %vm568, %v3089
        %3106 = vst.msk [vmem:[#allocation3 + $0x39] sm:$0xff] %vm568, %v3090
        %3107 = vst.msk [vmem:[#allocation3 + $0x49] sm:$0xff] %vm568, %v3091
        %3108 = vst.msk [vmem:[#allocation3 + $0x51] sm:$0xff] %vm568, %v3092
        %3109 = vst.msk [vmem:[#allocation3 + $0x61] sm:$0xff] %vm568, %v3093
        %3110 = vst.msk [vmem:[#allocation3 + $0x69] sm:$0xff] %vm568, %v3094
        %3111 = vst.msk [vmem:[#allocation3 + $0x79] sm:$0xff] %vm568, %v3095
        %3112 = vst.msk [vmem:[#allocation3 + $0x81] sm:$0xff] %vm568, %v3096
        %3113 = vst.msk [vmem:[#allocation3 + $0x91] sm:$0xff] %vm568, %v3097
        %3114 = vst.msk [vmem:[#allocation3 + $0x99] sm:$0xff] %vm568, %v3098
        %3115 = vst.msk [vmem:[#allocation3 + $0xa9] sm:$0xff] %vm568, %v3099
        %3116 = vst.msk [vmem:[#allocation3 + $0xb1] sm:$0xff] %vm568, %v3100
        %3117 = vst.msk [vmem:[#allocation4] sm:$0xff] %vm568, 0.0
        %3118 = vst.msk [vmem:[#allocation4 + $0x8] sm:$0xff] %vm568, 0.0
        %3119 = vst.msk [vmem:[#allocation4 + $0x10] sm:$0xff] %vm568, 0.0
        %3120 = vst.msk [vmem:[#allocation4 + $0x18] sm:$0xff] %vm568, 0.0
        %s3121 = scalar_lea.vmem [#allocation2], 192
        %v3122 = vld [vmem:[%s3121] sm:$0xff]
        %v3123 = vld [vmem:[%s3121 + $0x8] sm:$0xff]
        %v3124 = vld [vmem:[%s3121 + $0x10] sm:$0x3]
        %v3125 = vld [vmem:[%s3121 + $0x18] sm:$0xff]
        %v3126 = vld [vmem:[%s3121 + $0x20] sm:$0xff]
        %v3127 = vld [vmem:[%s3121 + $0x28] sm:$0x3]
        %v3128 = vld [vmem:[#allocation4] sm:$0xff]
        %v3129 = vld [vmem:[#allocation4 + $0x8] sm:$0xff]
        %v3130 = vld [vmem:[#allocation4 + $0x10] sm:$0xff]
        %v3131 = vld [vmem:[#allocation4 + $0x18] sm:$0xff]
        %v3132 = vld [vmem:[#allocation10] sm:$0xff]
        %v3134 = vsel %vm499, %v3122, 0
        %v3137 = vsel %vm499, %v3123, 0
        %v3140 = vsel %vm499, %v3125, 0
        %v3143 = vsel %vm499, %v3126, 0
        %3145 = vmatprep.subr.mxu0 0.0
        %3146 = vmatpush1.msra.mxu0 %v3132
        %3147 = vmatprep.subr.mxu0 0.0
        %3148 = vmatpush1.msra.mxu0 0.0
        %3149 = vmatprep.subr.mxu0 0.0
        %3150 = vmatpush1.msra.mxu0 0.0
        %3151 = vmatprep.subr.mxu0 0.0
        %3152 = vmatpush1.msra.mxu0 0.0
        %3153 = vmatprep.subr.mxu0 0.0
        %3154 = vmatpush1.msra.mxu0 0.0
        %3155 = vmatprep.subr.mxu0 0.0
        %3156 = vmatpush1.msra.mxu0 0.0
        %3157 = vmatprep.subr.mxu0 0.0
        %3158 = vmatpush1.msra.mxu0 0.0
        %3159 = vmatprep.subr.mxu0 0.0
        %3160 = vmatpush1.msra.mxu0 0.0
        %3161 = vmatprep.subr.mxu0 0.0
        %3162 = vmatpush1.msra.mxu0 0.0
        %3163 = vmatprep.subr.mxu0 0.0
        %3164 = vmatpush1.msra.mxu0 0.0
        %3165 = vmatprep.subr.mxu0 0.0
        %3166 = vmatpush1.msra.mxu0 0.0
        %3167 = vmatprep.subr.mxu0 0.0
        %3168 = vmatpush1.msra.mxu0 0.0
        %3169 = vmatprep.subr.mxu0 0.0
        %3170 = vmatpush1.msra.mxu0 0.0
        %3171 = vmatprep.subr.mxu0 0.0
        %3172 = vmatpush1.msra.mxu0 0.0
        %3173 = vmatprep.subr.mxu0 0.0
        %3174 = vmatpush1.msra.mxu0 0.0
        %3175 = vmatprep.subr.mxu0 0.0
        %3176 = vmatpush1.msra.mxu0 0.0
        %3177 = vmatprep.subr.mxu0 0.0
        %3178 = vmatpush1.msra.mxu0 0.0
        %3179 = vmatprep.subr.mxu0 0.0
        %3180 = vmatpush1.msra.mxu0 0.0
        %3181 = vmatprep.subr.mxu0 0.0
        %3182 = vmatpush1.msra.mxu0 0.0
        %3183 = vmatprep.subr.mxu0 0.0
        %3184 = vmatpush1.msra.mxu0 0.0
        %3185 = vmatprep.subr.mxu0 0.0
        %3186 = vmatpush1.msra.mxu0 0.0
        %3187 = vmatprep.subr.mxu0 0.0
        %3188 = vmatpush1.msra.mxu0 0.0
        %3189 = vmatprep.subr.mxu0 0.0
        %3190 = vmatpush1.msra.mxu0 0.0
        %3191 = vmatprep.subr.mxu0 0.0
        %3192 = vmatpush1.msra.mxu0 0.0
        %3193 = vmatprep.subr.mxu0 0.0
        %3194 = vmatpush1.msra.mxu0 0.0
        %3195 = vmatprep.subr.mxu0 0.0
        %3196 = vmatpush1.msra.mxu0 0.0
        %3197 = vmatprep.subr.mxu0 0.0
        %3198 = vmatpush1.msra.mxu0 0.0
        %3199 = vmatprep.subr.mxu0 0.0
        %3200 = vmatpush1.msra.mxu0 0.0
        %3201 = vmatprep.subr.mxu0 0.0
        %3202 = vmatpush1.msra.mxu0 0.0
        %3203 = vmatprep.subr.mxu0 0.0
        %3204 = vmatpush1.msra.mxu0 0.0
        %3205 = vmatprep.subr.mxu0 0.0
        %3206 = vmatpush1.msra.mxu0 0.0
        %3207 = vmatprep.subr.mxu0 0.0
        %3208 = vmatpush1.msra.mxu0 0.0
        %3209 = vmatprep.mubr.f32.mxu0 0.0
        %3210 = vmatmul.mubr.f32.gmra.mrb[0].mxu0 %v3134
        %v3211 = vpop.f32.mrb[0].mxu0
        %v3212 = vadd.f32 0.0, %v3211
        %v3213 = vpop.f32.mrb[0].mxu0
        %3214 = vmatprep.mubr.f32.mxu0 0.0
        %3215 = vmatmul.mubr.f32.gmra.mrb[0].mxu0 %v3137
        %v3216 = vpop.f32.mrb[0].mxu0
        %v3217 = vadd.f32 0.0, %v3216
        %v3218 = vpop.f32.mrb[0].mxu0
        %3219 = vmatprep.mubr.f32.mxu0 0.0
        %3220 = vmatmul.mubr.f32.gmra.mrb[0].mxu0 %v3140
        %v3221 = vpop.f32.mrb[0].mxu0
        %v3222 = vadd.f32 0.0, %v3221
        %v3223 = vpop.f32.mrb[0].mxu0
        %3224 = vmatprep.mubr.f32.mxu0 0.0
        %3225 = vmatmul.mubr.f32.gmra.mrb[0].mxu0 %v3143
        %v3226 = vpop.f32.mrb[0].mxu0
        %v3227 = vadd.f32 0.0, %v3226
        %v3228 = vpop.f32.mrb[0].mxu0
        %3229 = vdwg.mxu0
        %v3230 = vadd.f32 %v3128, %v3212
        %v3231 = vadd.f32 %v3129, %v3217
        %v3232 = vadd.f32 %v3130, %v3222
        %v3233 = vadd.f32 %v3131, %v3227
        %3234 = vst.msk [vmem:[#allocation4] sm:$0xff] %vm568, %v3230
        %3235 = vst.msk [vmem:[#allocation4 + $0x8] sm:$0xff] %vm568, %v3231
        %3236 = vst.msk [vmem:[#allocation4 + $0x10] sm:$0xff] %vm568, %v3232
        %3237 = vst.msk [vmem:[#allocation4 + $0x18] sm:$0xff] %vm568, %v3233
        %v3240 = vrot.slane %v3122, 1
        %v3241 = vrot.slane %v3123, 1
        %v3242 = vsel %vm859, %v3240, %v3241
        %v3243 = vrot.slane %v3124, 1
        %v3244 = vsel %vm859, %v3241, %v3243
        %v3245 = vrot.slane %v3125, 1
        %v3246 = vrot.slane %v3126, 1
        %v3247 = vsel %vm859, %v3245, %v3246
        %v3248 = vrot.slane %v3127, 1
        %v3249 = vsel %vm859, %v3246, %v3248
        %v3250 = vld [vmem:[#allocation4] sm:$0xff]
        %v3251 = vld [vmem:[#allocation4 + $0x8] sm:$0xff]
        %v3252 = vld [vmem:[#allocation4 + $0x10] sm:$0xff]
        %v3253 = vld [vmem:[#allocation4 + $0x18] sm:$0xff]
        %v3254 = vld [vmem:[%s916] sm:$0xff]
        %v3255 = vsel %vm499, %v3242, 0
        %v3257 = vsel %vm499, %v3244, 0
        %v3259 = vsel %vm499, %v3247, 0
        %v3261 = vsel %vm499, %v3249, 0
        %3263 = vmatprep.subr.mxu0 0.0
        %3264 = vmatpush1.msra.mxu0 %v3254
        %3265 = vmatprep.subr.mxu0 0.0
        %3266 = vmatpush1.msra.mxu0 0.0
        %3267 = vmatprep.subr.mxu0 0.0
        %3268 = vmatpush1.msra.mxu0 0.0
        %3269 = vmatprep.subr.mxu0 0.0
        %3270 = vmatpush1.msra.mxu0 0.0
        %3271 = vmatprep.subr.mxu0 0.0
        %3272 = vmatpush1.msra.mxu0 0.0
        %3273 = vmatprep.subr.mxu0 0.0
        %3274 = vmatpush1.msra.mxu0 0.0
        %3275 = vmatprep.subr.mxu0 0.0
        %3276 = vmatpush1.msra.mxu0 0.0
        %3277 = vmatprep.subr.mxu0 0.0
        %3278 = vmatpush1.msra.mxu0 0.0
        %3279 = vmatprep.subr.mxu0 0.0
        %3280 = vmatpush1.msra.mxu0 0.0
        %3281 = vmatprep.subr.mxu0 0.0
        %3282 = vmatpush1.msra.mxu0 0.0
        %3283 = vmatprep.subr.mxu0 0.0
        %3284 = vmatpush1.msra.mxu0 0.0
        %3285 = vmatprep.subr.mxu0 0.0
        %3286 = vmatpush1.msra.mxu0 0.0
        %3287 = vmatprep.subr.mxu0 0.0
        %3288 = vmatpush1.msra.mxu0 0.0
        %3289 = vmatprep.subr.mxu0 0.0
        %3290 = vmatpush1.msra.mxu0 0.0
        %3291 = vmatprep.subr.mxu0 0.0
        %3292 = vmatpush1.msra.mxu0 0.0
        %3293 = vmatprep.subr.mxu0 0.0
        %3294 = vmatpush1.msra.mxu0 0.0
        %3295 = vmatprep.subr.mxu0 0.0
        %3296 = vmatpush1.msra.mxu0 0.0
        %3297 = vmatprep.subr.mxu0 0.0
        %3298 = vmatpush1.msra.mxu0 0.0
        %3299 = vmatprep.subr.mxu0 0.0
        %3300 = vmatpush1.msra.mxu0 0.0
        %3301 = vmatprep.subr.mxu0 0.0
        %3302 = vmatpush1.msra.mxu0 0.0
        %3303 = vmatprep.subr.mxu0 0.0
        %3304 = vmatpush1.msra.mxu0 0.0
        %3305 = vmatprep.subr.mxu0 0.0
        %3306 = vmatpush1.msra.mxu0 0.0
        %3307 = vmatprep.subr.mxu0 0.0
        %3308 = vmatpush1.msra.mxu0 0.0
        %3309 = vmatprep.subr.mxu0 0.0
        %3310 = vmatpush1.msra.mxu0 0.0
        %3311 = vmatprep.subr.mxu0 0.0
        %3312 = vmatpush1.msra.mxu0 0.0
        %3313 = vmatprep.subr.mxu0 0.0
        %3314 = vmatpush1.msra.mxu0 0.0
        %3315 = vmatprep.subr.mxu0 0.0
        %3316 = vmatpush1.msra.mxu0 0.0
        %3317 = vmatprep.subr.mxu0 0.0
        %3318 = vmatpush1.msra.mxu0 0.0
        %3319 = vmatprep.subr.mxu0 0.0
        %3320 = vmatpush1.msra.mxu0 0.0
        %3321 = vmatprep.subr.mxu0 0.0
        %3322 = vmatpush1.msra.mxu0 0.0
        %3323 = vmatprep.subr.mxu0 0.0
        %3324 = vmatpush1.msra.mxu0 0.0
        %3325 = vmatprep.subr.mxu0 0.0
        %3326 = vmatpush1.msra.mxu0 0.0
        %3327 = vmatprep.mubr.f32.mxu0 0.0
        %3328 = vmatmul.mubr.f32.gmra.mrb[0].mxu0 %v3255
        %v3329 = vpop.f32.mrb[0].mxu0
        %v3330 = vadd.f32 0.0, %v3329
        %v3331 = vpop.f32.mrb[0].mxu0
        %3332 = vmatprep.mubr.f32.mxu0 0.0
        %3333 = vmatmul.mubr.f32.gmra.mrb[0].mxu0 %v3257
        %v3334 = vpop.f32.mrb[0].mxu0
        %v3335 = vadd.f32 0.0, %v3334
        %v3336 = vpop.f32.mrb[0].mxu0
        %3337 = vmatprep.mubr.f32.mxu0 0.0
        %3338 = vmatmul.mubr.f32.gmra.mrb[0].mxu0 %v3259
        %v3339 = vpop.f32.mrb[0].mxu0
        %v3340 = vadd.f32 0.0, %v3339
        %v3341 = vpop.f32.mrb[0].mxu0
        %3342 = vmatprep.mubr.f32.mxu0 0.0
        %3343 = vmatmul.mubr.f32.gmra.mrb[0].mxu0 %v3261
        %v3344 = vpop.f32.mrb[0].mxu0
        %v3345 = vadd.f32 0.0, %v3344
        %v3346 = vpop.f32.mrb[0].mxu0
        %3347 = vdwg.mxu0
        %v3348 = vadd.f32 %v3250, %v3330
        %v3349 = vadd.f32 %v3251, %v3335
        %v3350 = vadd.f32 %v3252, %v3340
        %v3351 = vadd.f32 %v3253, %v3345
        %3352 = vst.msk [vmem:[#allocation4] sm:$0xff] %vm568, %v3348
        %3353 = vst.msk [vmem:[#allocation4 + $0x8] sm:$0xff] %vm568, %v3349
        %3354 = vst.msk [vmem:[#allocation4 + $0x10] sm:$0xff] %vm568, %v3350
        %3355 = vst.msk [vmem:[#allocation4 + $0x18] sm:$0xff] %vm568, %v3351
        %v3356 = vrot.slane %v3122, 2
        %v3357 = vrot.slane %v3123, 2
        %v3358 = vsel %vm1127, %v3356, %v3357
        %v3359 = vrot.slane %v3124, 2
        %v3360 = vsel %vm1127, %v3357, %v3359
        %v3361 = vrot.slane %v3125, 2
        %v3362 = vrot.slane %v3126, 2
        %v3363 = vsel %vm1127, %v3361, %v3362
        %v3364 = vrot.slane %v3127, 2
        %v3365 = vsel %vm1127, %v3362, %v3364
        %v3366 = vld [vmem:[#allocation4] sm:$0xff]
        %v3367 = vld [vmem:[#allocation4 + $0x8] sm:$0xff]
        %v3368 = vld [vmem:[#allocation4 + $0x10] sm:$0xff]
        %v3369 = vld [vmem:[#allocation4 + $0x18] sm:$0xff]
        %v3370 = vld [vmem:[%s1184] sm:$0xff]
        %v3371 = vsel %vm499, %v3358, 0
        %v3373 = vsel %vm499, %v3360, 0
        %v3375 = vsel %vm499, %v3363, 0
        %v3377 = vsel %vm499, %v3365, 0
        %3379 = vmatprep.subr.mxu0 0.0
        %3380 = vmatpush1.msra.mxu0 %v3370
        %3381 = vmatprep.subr.mxu0 0.0
        %3382 = vmatpush1.msra.mxu0 0.0
        %3383 = vmatprep.subr.mxu0 0.0
        %3384 = vmatpush1.msra.mxu0 0.0
        %3385 = vmatprep.subr.mxu0 0.0
        %3386 = vmatpush1.msra.mxu0 0.0
        %3387 = vmatprep.subr.mxu0 0.0
        %3388 = vmatpush1.msra.mxu0 0.0
        %3389 = vmatprep.subr.mxu0 0.0
        %3390 = vmatpush1.msra.mxu0 0.0
        %3391 = vmatprep.subr.mxu0 0.0
        %3392 = vmatpush1.msra.mxu0 0.0
        %3393 = vmatprep.subr.mxu0 0.0
        %3394 = vmatpush1.msra.mxu0 0.0
        %3395 = vmatprep.subr.mxu0 0.0
        %3396 = vmatpush1.msra.mxu0 0.0
        %3397 = vmatprep.subr.mxu0 0.0
        %3398 = vmatpush1.msra.mxu0 0.0
        %3399 = vmatprep.subr.mxu0 0.0
        %3400 = vmatpush1.msra.mxu0 0.0
        %3401 = vmatprep.subr.mxu0 0.0
        %3402 = vmatpush1.msra.mxu0 0.0
        %3403 = vmatprep.subr.mxu0 0.0
        %3404 = vmatpush1.msra.mxu0 0.0
        %3405 = vmatprep.subr.mxu0 0.0
        %3406 = vmatpush1.msra.mxu0 0.0
        %3407 = vmatprep.subr.mxu0 0.0
        %3408 = vmatpush1.msra.mxu0 0.0
        %3409 = vmatprep.subr.mxu0 0.0
        %3410 = vmatpush1.msra.mxu0 0.0
        %3411 = vmatprep.subr.mxu0 0.0
        %3412 = vmatpush1.msra.mxu0 0.0
        %3413 = vmatprep.subr.mxu0 0.0
        %3414 = vmatpush1.msra.mxu0 0.0
        %3415 = vmatprep.subr.mxu0 0.0
        %3416 = vmatpush1.msra.mxu0 0.0
        %3417 = vmatprep.subr.mxu0 0.0
        %3418 = vmatpush1.msra.mxu0 0.0
        %3419 = vmatprep.subr.mxu0 0.0
        %3420 = vmatpush1.msra.mxu0 0.0
        %3421 = vmatprep.subr.mxu0 0.0
        %3422 = vmatpush1.msra.mxu0 0.0
        %3423 = vmatprep.subr.mxu0 0.0
        %3424 = vmatpush1.msra.mxu0 0.0
        %3425 = vmatprep.subr.mxu0 0.0
        %3426 = vmatpush1.msra.mxu0 0.0
        %3427 = vmatprep.subr.mxu0 0.0
        %3428 = vmatpush1.msra.mxu0 0.0
        %3429 = vmatprep.subr.mxu0 0.0
        %3430 = vmatpush1.msra.mxu0 0.0
        %3431 = vmatprep.subr.mxu0 0.0
        %3432 = vmatpush1.msra.mxu0 0.0
        %3433 = vmatprep.subr.mxu0 0.0
        %3434 = vmatpush1.msra.mxu0 0.0
        %3435 = vmatprep.subr.mxu0 0.0
        %3436 = vmatpush1.msra.mxu0 0.0
        %3437 = vmatprep.subr.mxu0 0.0
        %3438 = vmatpush1.msra.mxu0 0.0
        %3439 = vmatprep.subr.mxu0 0.0
        %3440 = vmatpush1.msra.mxu0 0.0
        %3441 = vmatprep.subr.mxu0 0.0
        %3442 = vmatpush1.msra.mxu0 0.0
        %3443 = vmatprep.mubr.f32.mxu0 0.0
        %3444 = vmatmul.mubr.f32.gmra.mrb[0].mxu0 %v3371
        %v3445 = vpop.f32.mrb[0].mxu0
        %v3446 = vadd.f32 0.0, %v3445
        %v3447 = vpop.f32.mrb[0].mxu0
        %3448 = vmatprep.mubr.f32.mxu0 0.0
        %3449 = vmatmul.mubr.f32.gmra.mrb[0].mxu0 %v3373
        %v3450 = vpop.f32.mrb[0].mxu0
        %v3451 = vadd.f32 0.0, %v3450
        %v3452 = vpop.f32.mrb[0].mxu0
        %3453 = vmatprep.mubr.f32.mxu0 0.0
        %3454 = vmatmul.mubr.f32.gmra.mrb[0].mxu0 %v3375
        %v3455 = vpop.f32.mrb[0].mxu0
        %v3456 = vadd.f32 0.0, %v3455
        %v3457 = vpop.f32.mrb[0].mxu0
        %3458 = vmatprep.mubr.f32.mxu0 0.0
        %3459 = vmatmul.mubr.f32.gmra.mrb[0].mxu0 %v3377
        %v3460 = vpop.f32.mrb[0].mxu0
        %v3461 = vadd.f32 0.0, %v3460
        %v3462 = vpop.f32.mrb[0].mxu0
        %3463 = vdwg.mxu0
        %v3464 = vadd.f32 %v3366, %v3446
        %v3465 = vadd.f32 %v3367, %v3451
        %v3466 = vadd.f32 %v3368, %v3456
        %v3467 = vadd.f32 %v3369, %v3461
        %3468 = vst.msk [vmem:[#allocation4] sm:$0xff] %vm568, %v3464
        %3469 = vst.msk [vmem:[#allocation4 + $0x8] sm:$0xff] %vm568, %v3465
        %3470 = vst.msk [vmem:[#allocation4 + $0x10] sm:$0xff] %vm568, %v3466
        %3471 = vst.msk [vmem:[#allocation4 + $0x18] sm:$0xff] %vm568, %v3467
        %s3472 = scalar_lea.vmem [#allocation2], 216
        %v3473 = vld [vmem:[%s3472] sm:$0xff]
        %v3474 = vld [vmem:[%s3472 + $0x8] sm:$0xff]
        %v3475 = vld [vmem:[%s3472 + $0x10] sm:$0x3]
        %v3476 = vld [vmem:[%s3472 + $0x18] sm:$0xff]
        %v3477 = vld [vmem:[%s3472 + $0x20] sm:$0xff]
        %v3478 = vld [vmem:[%s3472 + $0x28] sm:$0x3]
        %v3479 = vld [vmem:[#allocation4] sm:$0xff]
        %v3480 = vld [vmem:[#allocation4 + $0x8] sm:$0xff]
        %v3481 = vld [vmem:[#allocation4 + $0x10] sm:$0xff]
        %v3482 = vld [vmem:[#allocation4 + $0x18] sm:$0xff]
        %v3483 = vld [vmem:[%s1436] sm:$0xff]
        %v3485 = vsel %vm499, %v3473, 0
        %v3488 = vsel %vm499, %v3474, 0
        %v3491 = vsel %vm499, %v3476, 0
        %v3494 = vsel %vm499, %v3477, 0
        %3496 = vmatprep.subr.mxu0 0.0
        %3497 = vmatpush1.msra.mxu0 %v3483
        %3498 = vmatprep.subr.mxu0 0.0
        %3499 = vmatpush1.msra.mxu0 0.0
        %3500 = vmatprep.subr.mxu0 0.0
        %3501 = vmatpush1.msra.mxu0 0.0
        %3502 = vmatprep.subr.mxu0 0.0
        %3503 = vmatpush1.msra.mxu0 0.0
        %3504 = vmatprep.subr.mxu0 0.0
        %3505 = vmatpush1.msra.mxu0 0.0
        %3506 = vmatprep.subr.mxu0 0.0
        %3507 = vmatpush1.msra.mxu0 0.0
        %3508 = vmatprep.subr.mxu0 0.0
        %3509 = vmatpush1.msra.mxu0 0.0
        %3510 = vmatprep.subr.mxu0 0.0
        %3511 = vmatpush1.msra.mxu0 0.0
        %3512 = vmatprep.subr.mxu0 0.0
        %3513 = vmatpush1.msra.mxu0 0.0
        %3514 = vmatprep.subr.mxu0 0.0
        %3515 = vmatpush1.msra.mxu0 0.0
        %3516 = vmatprep.subr.mxu0 0.0
        %3517 = vmatpush1.msra.mxu0 0.0
        %3518 = vmatprep.subr.mxu0 0.0
        %3519 = vmatpush1.msra.mxu0 0.0
        %3520 = vmatprep.subr.mxu0 0.0
        %3521 = vmatpush1.msra.mxu0 0.0
        %3522 = vmatprep.subr.mxu0 0.0
        %3523 = vmatpush1.msra.mxu0 0.0
        %3524 = vmatprep.subr.mxu0 0.0
        %3525 = vmatpush1.msra.mxu0 0.0
        %3526 = vmatprep.subr.mxu0 0.0
        %3527 = vmatpush1.msra.mxu0 0.0
        %3528 = vmatprep.subr.mxu0 0.0
        %3529 = vmatpush1.msra.mxu0 0.0
        %3530 = vmatprep.subr.mxu0 0.0
        %3531 = vmatpush1.msra.mxu0 0.0
        %3532 = vmatprep.subr.mxu0 0.0
        %3533 = vmatpush1.msra.mxu0 0.0
        %3534 = vmatprep.subr.mxu0 0.0
        %3535 = vmatpush1.msra.mxu0 0.0
        %3536 = vmatprep.subr.mxu0 0.0
        %3537 = vmatpush1.msra.mxu0 0.0
        %3538 = vmatprep.subr.mxu0 0.0
        %3539 = vmatpush1.msra.mxu0 0.0
        %3540 = vmatprep.subr.mxu0 0.0
        %3541 = vmatpush1.msra.mxu0 0.0
        %3542 = vmatprep.subr.mxu0 0.0
        %3543 = vmatpush1.msra.mxu0 0.0
        %3544 = vmatprep.subr.mxu0 0.0
        %3545 = vmatpush1.msra.mxu0 0.0
        %3546 = vmatprep.subr.mxu0 0.0
        %3547 = vmatpush1.msra.mxu0 0.0
        %3548 = vmatprep.subr.mxu0 0.0
        %3549 = vmatpush1.msra.mxu0 0.0
        %3550 = vmatprep.subr.mxu0 0.0
        %3551 = vmatpush1.msra.mxu0 0.0
        %3552 = vmatprep.subr.mxu0 0.0
        %3553 = vmatpush1.msra.mxu0 0.0
        %3554 = vmatprep.subr.mxu0 0.0
        %3555 = vmatpush1.msra.mxu0 0.0
        %3556 = vmatprep.subr.mxu0 0.0
        %3557 = vmatpush1.msra.mxu0 0.0
        %3558 = vmatprep.subr.mxu0 0.0
        %3559 = vmatpush1.msra.mxu0 0.0
        %3560 = vmatprep.mubr.f32.mxu0 0.0
        %3561 = vmatmul.mubr.f32.gmra.mrb[0].mxu0 %v3485
        %v3562 = vpop.f32.mrb[0].mxu0
        %v3563 = vadd.f32 0.0, %v3562
        %v3564 = vpop.f32.mrb[0].mxu0
        %3565 = vmatprep.mubr.f32.mxu0 0.0
        %3566 = vmatmul.mubr.f32.gmra.mrb[0].mxu0 %v3488
        %v3567 = vpop.f32.mrb[0].mxu0
        %v3568 = vadd.f32 0.0, %v3567
        %v3569 = vpop.f32.mrb[0].mxu0
        %3570 = vmatprep.mubr.f32.mxu0 0.0
        %3571 = vmatmul.mubr.f32.gmra.mrb[0].mxu0 %v3491
        %v3572 = vpop.f32.mrb[0].mxu0
        %v3573 = vadd.f32 0.0, %v3572
        %v3574 = vpop.f32.mrb[0].mxu0
        %3575 = vmatprep.mubr.f32.mxu0 0.0
        %3576 = vmatmul.mubr.f32.gmra.mrb[0].mxu0 %v3494
        %v3577 = vpop.f32.mrb[0].mxu0
        %v3578 = vadd.f32 0.0, %v3577
        %v3579 = vpop.f32.mrb[0].mxu0
        %3580 = vdwg.mxu0
        %v3581 = vadd.f32 %v3479, %v3563
        %v3582 = vadd.f32 %v3480, %v3568
        %v3583 = vadd.f32 %v3481, %v3573
        %v3584 = vadd.f32 %v3482, %v3578
        %3585 = vst.msk [vmem:[#allocation4] sm:$0xff] %vm568, %v3581
        %3586 = vst.msk [vmem:[#allocation4 + $0x8] sm:$0xff] %vm568, %v3582
        %3587 = vst.msk [vmem:[#allocation4 + $0x10] sm:$0xff] %vm568, %v3583
        %3588 = vst.msk [vmem:[#allocation4 + $0x18] sm:$0xff] %vm568, %v3584
        %v3591 = vrot.slane %v3473, 1
        %v3592 = vrot.slane %v3474, 1
        %v3593 = vsel %vm859, %v3591, %v3592
        %v3594 = vrot.slane %v3475, 1
        %v3595 = vsel %vm859, %v3592, %v3594
        %v3596 = vrot.slane %v3476, 1
        %v3597 = vrot.slane %v3477, 1
        %v3598 = vsel %vm859, %v3596, %v3597
        %v3599 = vrot.slane %v3478, 1
        %v3600 = vsel %vm859, %v3597, %v3599
        %v3601 = vld [vmem:[#allocation4] sm:$0xff]
        %v3602 = vld [vmem:[#allocation4 + $0x8] sm:$0xff]
        %v3603 = vld [vmem:[#allocation4 + $0x10] sm:$0xff]
        %v3604 = vld [vmem:[#allocation4 + $0x18] sm:$0xff]
        %v3605 = vld [vmem:[%s1727] sm:$0xff]
        %v3606 = vsel %vm499, %v3593, 0
        %v3608 = vsel %vm499, %v3595, 0
        %v3610 = vsel %vm499, %v3598, 0
        %v3612 = vsel %vm499, %v3600, 0
        %3614 = vmatprep.subr.mxu0 0.0
        %3615 = vmatpush1.msra.mxu0 %v3605
        %3616 = vmatprep.subr.mxu0 0.0
        %3617 = vmatpush1.msra.mxu0 0.0
        %3618 = vmatprep.subr.mxu0 0.0
        %3619 = vmatpush1.msra.mxu0 0.0
        %3620 = vmatprep.subr.mxu0 0.0
        %3621 = vmatpush1.msra.mxu0 0.0
        %3622 = vmatprep.subr.mxu0 0.0
        %3623 = vmatpush1.msra.mxu0 0.0
        %3624 = vmatprep.subr.mxu0 0.0
        %3625 = vmatpush1.msra.mxu0 0.0
        %3626 = vmatprep.subr.mxu0 0.0
        %3627 = vmatpush1.msra.mxu0 0.0
        %3628 = vmatprep.subr.mxu0 0.0
        %3629 = vmatpush1.msra.mxu0 0.0
        %3630 = vmatprep.subr.mxu0 0.0
        %3631 = vmatpush1.msra.mxu0 0.0
        %3632 = vmatprep.subr.mxu0 0.0
        %3633 = vmatpush1.msra.mxu0 0.0
        %3634 = vmatprep.subr.mxu0 0.0
        %3635 = vmatpush1.msra.mxu0 0.0
        %3636 = vmatprep.subr.mxu0 0.0
        %3637 = vmatpush1.msra.mxu0 0.0
        %3638 = vmatprep.subr.mxu0 0.0
        %3639 = vmatpush1.msra.mxu0 0.0
        %3640 = vmatprep.subr.mxu0 0.0
        %3641 = vmatpush1.msra.mxu0 0.0
        %3642 = vmatprep.subr.mxu0 0.0
        %3643 = vmatpush1.msra.mxu0 0.0
        %3644 = vmatprep.subr.mxu0 0.0
        %3645 = vmatpush1.msra.mxu0 0.0
        %3646 = vmatprep.subr.mxu0 0.0
        %3647 = vmatpush1.msra.mxu0 0.0
        %3648 = vmatprep.subr.mxu0 0.0
        %3649 = vmatpush1.msra.mxu0 0.0
        %3650 = vmatprep.subr.mxu0 0.0
        %3651 = vmatpush1.msra.mxu0 0.0
        %3652 = vmatprep.subr.mxu0 0.0
        %3653 = vmatpush1.msra.mxu0 0.0
        %3654 = vmatprep.subr.mxu0 0.0
        %3655 = vmatpush1.msra.mxu0 0.0
        %3656 = vmatprep.subr.mxu0 0.0
        %3657 = vmatpush1.msra.mxu0 0.0
        %3658 = vmatprep.subr.mxu0 0.0
        %3659 = vmatpush1.msra.mxu0 0.0
        %3660 = vmatprep.subr.mxu0 0.0
        %3661 = vmatpush1.msra.mxu0 0.0
        %3662 = vmatprep.subr.mxu0 0.0
        %3663 = vmatpush1.msra.mxu0 0.0
        %3664 = vmatprep.subr.mxu0 0.0
        %3665 = vmatpush1.msra.mxu0 0.0
        %3666 = vmatprep.subr.mxu0 0.0
        %3667 = vmatpush1.msra.mxu0 0.0
        %3668 = vmatprep.subr.mxu0 0.0
        %3669 = vmatpush1.msra.mxu0 0.0
        %3670 = vmatprep.subr.mxu0 0.0
        %3671 = vmatpush1.msra.mxu0 0.0
        %3672 = vmatprep.subr.mxu0 0.0
        %3673 = vmatpush1.msra.mxu0 0.0
        %3674 = vmatprep.subr.mxu0 0.0
        %3675 = vmatpush1.msra.mxu0 0.0
        %3676 = vmatprep.subr.mxu0 0.0
        %3677 = vmatpush1.msra.mxu0 0.0
        %3678 = vmatprep.mubr.f32.mxu0 0.0
        %3679 = vmatmul.mubr.f32.gmra.mrb[0].mxu0 %v3606
        %v3680 = vpop.f32.mrb[0].mxu0
        %v3681 = vadd.f32 0.0, %v3680
        %v3682 = vpop.f32.mrb[0].mxu0
        %3683 = vmatprep.mubr.f32.mxu0 0.0
        %3684 = vmatmul.mubr.f32.gmra.mrb[0].mxu0 %v3608
        %v3685 = vpop.f32.mrb[0].mxu0
        %v3686 = vadd.f32 0.0, %v3685
        %v3687 = vpop.f32.mrb[0].mxu0
        %3688 = vmatprep.mubr.f32.mxu0 0.0
        %3689 = vmatmul.mubr.f32.gmra.mrb[0].mxu0 %v3610
        %v3690 = vpop.f32.mrb[0].mxu0
        %v3691 = vadd.f32 0.0, %v3690
        %v3692 = vpop.f32.mrb[0].mxu0
        %3693 = vmatprep.mubr.f32.mxu0 0.0
        %3694 = vmatmul.mubr.f32.gmra.mrb[0].mxu0 %v3612
        %v3695 = vpop.f32.mrb[0].mxu0
        %v3696 = vadd.f32 0.0, %v3695
        %v3697 = vpop.f32.mrb[0].mxu0
        %3698 = vdwg.mxu0
        %v3699 = vadd.f32 %v3601, %v3681
        %v3700 = vadd.f32 %v3602, %v3686
        %v3701 = vadd.f32 %v3603, %v3691
        %v3702 = vadd.f32 %v3604, %v3696
        %3703 = vst.msk [vmem:[#allocation4] sm:$0xff] %vm568, %v3699
        %3704 = vst.msk [vmem:[#allocation4 + $0x8] sm:$0xff] %vm568, %v3700
        %3705 = vst.msk [vmem:[#allocation4 + $0x10] sm:$0xff] %vm568, %v3701
        %3706 = vst.msk [vmem:[#allocation4 + $0x18] sm:$0xff] %vm568, %v3702
        %v3707 = vrot.slane %v3473, 2
        %v3708 = vrot.slane %v3474, 2
        %v3709 = vsel %vm1127, %v3707, %v3708
        %v3710 = vrot.slane %v3475, 2
        %v3711 = vsel %vm1127, %v3708, %v3710
        %v3712 = vrot.slane %v3476, 2
        %v3713 = vrot.slane %v3477, 2
        %v3714 = vsel %vm1127, %v3712, %v3713
        %v3715 = vrot.slane %v3478, 2
        %v3716 = vsel %vm1127, %v3713, %v3715
        %v3717 = vld [vmem:[#allocation4] sm:$0xff]
        %v3718 = vld [vmem:[#allocation4 + $0x8] sm:$0xff]
        %v3719 = vld [vmem:[#allocation4 + $0x10] sm:$0xff]
        %v3720 = vld [vmem:[#allocation4 + $0x18] sm:$0xff]
        %v3721 = vld [vmem:[%s1994] sm:$0xff]
        %v3722 = vsel %vm499, %v3709, 0
        %v3724 = vsel %vm499, %v3711, 0
        %v3726 = vsel %vm499, %v3714, 0
        %v3728 = vsel %vm499, %v3716, 0
        %3730 = vmatprep.subr.mxu0 0.0
        %3731 = vmatpush1.msra.mxu0 %v3721
        %3732 = vmatprep.subr.mxu0 0.0
        %3733 = vmatpush1.msra.mxu0 0.0
        %3734 = vmatprep.subr.mxu0 0.0
        %3735 = vmatpush1.msra.mxu0 0.0
        %3736 = vmatprep.subr.mxu0 0.0
        %3737 = vmatpush1.msra.mxu0 0.0
        %3738 = vmatprep.subr.mxu0 0.0
        %3739 = vmatpush1.msra.mxu0 0.0
        %3740 = vmatprep.subr.mxu0 0.0
        %3741 = vmatpush1.msra.mxu0 0.0
        %3742 = vmatprep.subr.mxu0 0.0
        %3743 = vmatpush1.msra.mxu0 0.0
        %3744 = vmatprep.subr.mxu0 0.0
        %3745 = vmatpush1.msra.mxu0 0.0
        %3746 = vmatprep.subr.mxu0 0.0
        %3747 = vmatpush1.msra.mxu0 0.0
        %3748 = vmatprep.subr.mxu0 0.0
        %3749 = vmatpush1.msra.mxu0 0.0
        %3750 = vmatprep.subr.mxu0 0.0
        %3751 = vmatpush1.msra.mxu0 0.0
        %3752 = vmatprep.subr.mxu0 0.0
        %3753 = vmatpush1.msra.mxu0 0.0
        %3754 = vmatprep.subr.mxu0 0.0
        %3755 = vmatpush1.msra.mxu0 0.0
        %3756 = vmatprep.subr.mxu0 0.0
        %3757 = vmatpush1.msra.mxu0 0.0
        %3758 = vmatprep.subr.mxu0 0.0
        %3759 = vmatpush1.msra.mxu0 0.0
        %3760 = vmatprep.subr.mxu0 0.0
        %3761 = vmatpush1.msra.mxu0 0.0
        %3762 = vmatprep.subr.mxu0 0.0
        %3763 = vmatpush1.msra.mxu0 0.0
        %3764 = vmatprep.subr.mxu0 0.0
        %3765 = vmatpush1.msra.mxu0 0.0
        %3766 = vmatprep.subr.mxu0 0.0
        %3767 = vmatpush1.msra.mxu0 0.0
        %3768 = vmatprep.subr.mxu0 0.0
        %3769 = vmatpush1.msra.mxu0 0.0
        %3770 = vmatprep.subr.mxu0 0.0
        %3771 = vmatpush1.msra.mxu0 0.0
        %3772 = vmatprep.subr.mxu0 0.0
        %3773 = vmatpush1.msra.mxu0 0.0
        %3774 = vmatprep.subr.mxu0 0.0
        %3775 = vmatpush1.msra.mxu0 0.0
        %3776 = vmatprep.subr.mxu0 0.0
        %3777 = vmatpush1.msra.mxu0 0.0
        %3778 = vmatprep.subr.mxu0 0.0
        %3779 = vmatpush1.msra.mxu0 0.0
        %3780 = vmatprep.subr.mxu0 0.0
        %3781 = vmatpush1.msra.mxu0 0.0
        %3782 = vmatprep.subr.mxu0 0.0
        %3783 = vmatpush1.msra.mxu0 0.0
        %3784 = vmatprep.subr.mxu0 0.0
        %3785 = vmatpush1.msra.mxu0 0.0
        %3786 = vmatprep.subr.mxu0 0.0
        %3787 = vmatpush1.msra.mxu0 0.0
        %3788 = vmatprep.subr.mxu0 0.0
        %3789 = vmatpush1.msra.mxu0 0.0
        %3790 = vmatprep.subr.mxu0 0.0
        %3791 = vmatpush1.msra.mxu0 0.0
        %3792 = vmatprep.subr.mxu0 0.0
        %3793 = vmatpush1.msra.mxu0 0.0
        %3794 = vmatprep.mubr.f32.mxu0 0.0
        %3795 = vmatmul.mubr.f32.gmra.mrb[0].mxu0 %v3722
        %v3796 = vpop.f32.mrb[0].mxu0
        %v3797 = vadd.f32 0.0, %v3796
        %v3798 = vpop.f32.mrb[0].mxu0
        %3799 = vmatprep.mubr.f32.mxu0 0.0
        %3800 = vmatmul.mubr.f32.gmra.mrb[0].mxu0 %v3724
        %v3801 = vpop.f32.mrb[0].mxu0
        %v3802 = vadd.f32 0.0, %v3801
        %v3803 = vpop.f32.mrb[0].mxu0
        %3804 = vmatprep.mubr.f32.mxu0 0.0
        %3805 = vmatmul.mubr.f32.gmra.mrb[0].mxu0 %v3726
        %v3806 = vpop.f32.mrb[0].mxu0
        %v3807 = vadd.f32 0.0, %v3806
        %v3808 = vpop.f32.mrb[0].mxu0
        %3809 = vmatprep.mubr.f32.mxu0 0.0
        %3810 = vmatmul.mubr.f32.gmra.mrb[0].mxu0 %v3728
        %v3811 = vpop.f32.mrb[0].mxu0
        %v3812 = vadd.f32 0.0, %v3811
        %v3813 = vpop.f32.mrb[0].mxu0
        %3814 = vdwg.mxu0
        %v3815 = vadd.f32 %v3717, %v3797
        %v3816 = vadd.f32 %v3718, %v3802
        %v3817 = vadd.f32 %v3719, %v3807
        %v3818 = vadd.f32 %v3720, %v3812
        %3819 = vst.msk [vmem:[#allocation4] sm:$0xff] %vm568, %v3815
        %3820 = vst.msk [vmem:[#allocation4 + $0x8] sm:$0xff] %vm568, %v3816
        %3821 = vst.msk [vmem:[#allocation4 + $0x10] sm:$0xff] %vm568, %v3817
        %3822 = vst.msk [vmem:[#allocation4 + $0x18] sm:$0xff] %vm568, %v3818
        %v3823 = vld [vmem:[%s542] sm:$0xff]
        %v3824 = vld [vmem:[%s542 + $0x8] sm:$0xff]
        %v3825 = vld [vmem:[%s542 + $0x10] sm:$0x3]
        %v3826 = vld [vmem:[%s542 + $0x18] sm:$0xff]
        %v3827 = vld [vmem:[%s542 + $0x20] sm:$0xff]
        %v3828 = vld [vmem:[%s542 + $0x28] sm:$0x3]
        %v3829 = vld [vmem:[#allocation4] sm:$0xff]
        %v3830 = vld [vmem:[#allocation4 + $0x8] sm:$0xff]
        %v3831 = vld [vmem:[#allocation4 + $0x10] sm:$0xff]
        %v3832 = vld [vmem:[#allocation4 + $0x18] sm:$0xff]
        %v3833 = vld [vmem:[%s2245] sm:$0xff]
        %v3835 = vsel %vm499, %v3823, 0
        %v3838 = vsel %vm499, %v3824, 0
        %v3841 = vsel %vm499, %v3826, 0
        %v3844 = vsel %vm499, %v3827, 0
        %3846 = vmatprep.subr.mxu0 0.0
        %3847 = vmatpush1.msra.mxu0 %v3833
        %3848 = vmatprep.subr.mxu0 0.0
        %3849 = vmatpush1.msra.mxu0 0.0
        %3850 = vmatprep.subr.mxu0 0.0
        %3851 = vmatpush1.msra.mxu0 0.0
        %3852 = vmatprep.subr.mxu0 0.0
        %3853 = vmatpush1.msra.mxu0 0.0
        %3854 = vmatprep.subr.mxu0 0.0
        %3855 = vmatpush1.msra.mxu0 0.0
        %3856 = vmatprep.subr.mxu0 0.0
        %3857 = vmatpush1.msra.mxu0 0.0
        %3858 = vmatprep.subr.mxu0 0.0
        %3859 = vmatpush1.msra.mxu0 0.0
        %3860 = vmatprep.subr.mxu0 0.0
        %3861 = vmatpush1.msra.mxu0 0.0
        %3862 = vmatprep.subr.mxu0 0.0
        %3863 = vmatpush1.msra.mxu0 0.0
        %3864 = vmatprep.subr.mxu0 0.0
        %3865 = vmatpush1.msra.mxu0 0.0
        %3866 = vmatprep.subr.mxu0 0.0
        %3867 = vmatpush1.msra.mxu0 0.0
        %3868 = vmatprep.subr.mxu0 0.0
        %3869 = vmatpush1.msra.mxu0 0.0
        %3870 = vmatprep.subr.mxu0 0.0
        %3871 = vmatpush1.msra.mxu0 0.0
        %3872 = vmatprep.subr.mxu0 0.0
        %3873 = vmatpush1.msra.mxu0 0.0
        %3874 = vmatprep.subr.mxu0 0.0
        %3875 = vmatpush1.msra.mxu0 0.0
        %3876 = vmatprep.subr.mxu0 0.0
        %3877 = vmatpush1.msra.mxu0 0.0
        %3878 = vmatprep.subr.mxu0 0.0
        %3879 = vmatpush1.msra.mxu0 0.0
        %3880 = vmatprep.subr.mxu0 0.0
        %3881 = vmatpush1.msra.mxu0 0.0
        %3882 = vmatprep.subr.mxu0 0.0
        %3883 = vmatpush1.msra.mxu0 0.0
        %3884 = vmatprep.subr.mxu0 0.0
        %3885 = vmatpush1.msra.mxu0 0.0
        %3886 = vmatprep.subr.mxu0 0.0
        %3887 = vmatpush1.msra.mxu0 0.0
        %3888 = vmatprep.subr.mxu0 0.0
        %3889 = vmatpush1.msra.mxu0 0.0
        %3890 = vmatprep.subr.mxu0 0.0
        %3891 = vmatpush1.msra.mxu0 0.0
        %3892 = vmatprep.subr.mxu0 0.0
        %3893 = vmatpush1.msra.mxu0 0.0
        %3894 = vmatprep.subr.mxu0 0.0
        %3895 = vmatpush1.msra.mxu0 0.0
        %3896 = vmatprep.subr.mxu0 0.0
        %3897 = vmatpush1.msra.mxu0 0.0
        %3898 = vmatprep.subr.mxu0 0.0
        %3899 = vmatpush1.msra.mxu0 0.0
        %3900 = vmatprep.subr.mxu0 0.0
        %3901 = vmatpush1.msra.mxu0 0.0
        %3902 = vmatprep.subr.mxu0 0.0
        %3903 = vmatpush1.msra.mxu0 0.0
        %3904 = vmatprep.subr.mxu0 0.0
        %3905 = vmatpush1.msra.mxu0 0.0
        %3906 = vmatprep.subr.mxu0 0.0
        %3907 = vmatpush1.msra.mxu0 0.0
        %3908 = vmatprep.subr.mxu0 0.0
        %3909 = vmatpush1.msra.mxu0 0.0
        %3910 = vmatprep.mubr.f32.mxu0 0.0
        %3911 = vmatmul.mubr.f32.gmra.mrb[0].mxu0 %v3835
        %v3912 = vpop.f32.mrb[0].mxu0
        %v3913 = vadd.f32 0.0, %v3912
        %v3914 = vpop.f32.mrb[0].mxu0
        %3915 = vmatprep.mubr.f32.mxu0 0.0
        %3916 = vmatmul.mubr.f32.gmra.mrb[0].mxu0 %v3838
        %v3917 = vpop.f32.mrb[0].mxu0
        %v3918 = vadd.f32 0.0, %v3917
        %v3919 = vpop.f32.mrb[0].mxu0
        %3920 = vmatprep.mubr.f32.mxu0 0.0
        %3921 = vmatmul.mubr.f32.gmra.mrb[0].mxu0 %v3841
        %v3922 = vpop.f32.mrb[0].mxu0
        %v3923 = vadd.f32 0.0, %v3922
        %v3924 = vpop.f32.mrb[0].mxu0
        %3925 = vmatprep.mubr.f32.mxu0 0.0
        %3926 = vmatmul.mubr.f32.gmra.mrb[0].mxu0 %v3844
        %v3927 = vpop.f32.mrb[0].mxu0
        %v3928 = vadd.f32 0.0, %v3927
        %v3929 = vpop.f32.mrb[0].mxu0
        %3930 = vdwg.mxu0
        %v3931 = vadd.f32 %v3829, %v3913
        %v3932 = vadd.f32 %v3830, %v3918
        %v3933 = vadd.f32 %v3831, %v3923
        %v3934 = vadd.f32 %v3832, %v3928
        %3935 = vst.msk [vmem:[#allocation4] sm:$0xff] %vm568, %v3931
        %3936 = vst.msk [vmem:[#allocation4 + $0x8] sm:$0xff] %vm568, %v3932
        %3937 = vst.msk [vmem:[#allocation4 + $0x10] sm:$0xff] %vm568, %v3933
        %3938 = vst.msk [vmem:[#allocation4 + $0x18] sm:$0xff] %vm568, %v3934
        %v3941 = vrot.slane %v3823, 1
        %v3942 = vrot.slane %v3824, 1
        %v3943 = vsel %vm859, %v3941, %v3942
        %v3944 = vrot.slane %v3825, 1
        %v3945 = vsel %vm859, %v3942, %v3944
        %v3946 = vrot.slane %v3826, 1
        %v3947 = vrot.slane %v3827, 1
        %v3948 = vsel %vm859, %v3946, %v3947
        %v3949 = vrot.slane %v3828, 1
        %v3950 = vsel %vm859, %v3947, %v3949
        %v3951 = vld [vmem:[#allocation4] sm:$0xff]
        %v3952 = vld [vmem:[#allocation4 + $0x8] sm:$0xff]
        %v3953 = vld [vmem:[#allocation4 + $0x10] sm:$0xff]
        %v3954 = vld [vmem:[#allocation4 + $0x18] sm:$0xff]
        %v3955 = vld [vmem:[%s2536] sm:$0xff]
        %v3956 = vsel %vm499, %v3943, 0
        %v3958 = vsel %vm499, %v3945, 0
        %v3960 = vsel %vm499, %v3948, 0
        %v3962 = vsel %vm499, %v3950, 0
        %3964 = vmatprep.subr.mxu0 0.0
        %3965 = vmatpush1.msra.mxu0 %v3955
        %3966 = vmatprep.subr.mxu0 0.0
        %3967 = vmatpush1.msra.mxu0 0.0
        %3968 = vmatprep.subr.mxu0 0.0
        %3969 = vmatpush1.msra.mxu0 0.0
        %3970 = vmatprep.subr.mxu0 0.0
        %3971 = vmatpush1.msra.mxu0 0.0
        %3972 = vmatprep.subr.mxu0 0.0
        %3973 = vmatpush1.msra.mxu0 0.0
        %3974 = vmatprep.subr.mxu0 0.0
        %3975 = vmatpush1.msra.mxu0 0.0
        %3976 = vmatprep.subr.mxu0 0.0
        %3977 = vmatpush1.msra.mxu0 0.0
        %3978 = vmatprep.subr.mxu0 0.0
        %3979 = vmatpush1.msra.mxu0 0.0
        %3980 = vmatprep.subr.mxu0 0.0
        %3981 = vmatpush1.msra.mxu0 0.0
        %3982 = vmatprep.subr.mxu0 0.0
        %3983 = vmatpush1.msra.mxu0 0.0
        %3984 = vmatprep.subr.mxu0 0.0
        %3985 = vmatpush1.msra.mxu0 0.0
        %3986 = vmatprep.subr.mxu0 0.0
        %3987 = vmatpush1.msra.mxu0 0.0
        %3988 = vmatprep.subr.mxu0 0.0
        %3989 = vmatpush1.msra.mxu0 0.0
        %3990 = vmatprep.subr.mxu0 0.0
        %3991 = vmatpush1.msra.mxu0 0.0
        %3992 = vmatprep.subr.mxu0 0.0
        %3993 = vmatpush1.msra.mxu0 0.0
        %3994 = vmatprep.subr.mxu0 0.0
        %3995 = vmatpush1.msra.mxu0 0.0
        %3996 = vmatprep.subr.mxu0 0.0
        %3997 = vmatpush1.msra.mxu0 0.0
        %3998 = vmatprep.subr.mxu0 0.0
        %3999 = vmatpush1.msra.mxu0 0.0
        %4000 = vmatprep.subr.mxu0 0.0
        %4001 = vmatpush1.msra.mxu0 0.0
        %4002 = vmatprep.subr.mxu0 0.0
        %4003 = vmatpush1.msra.mxu0 0.0
        %4004 = vmatprep.subr.mxu0 0.0
        %4005 = vmatpush1.msra.mxu0 0.0
        %4006 = vmatprep.subr.mxu0 0.0
        %4007 = vmatpush1.msra.mxu0 0.0
        %4008 = vmatprep.subr.mxu0 0.0
        %4009 = vmatpush1.msra.mxu0 0.0
        %4010 = vmatprep.subr.mxu0 0.0
        %4011 = vmatpush1.msra.mxu0 0.0
        %4012 = vmatprep.subr.mxu0 0.0
        %4013 = vmatpush1.msra.mxu0 0.0
        %4014 = vmatprep.subr.mxu0 0.0
        %4015 = vmatpush1.msra.mxu0 0.0
        %4016 = vmatprep.subr.mxu0 0.0
        %4017 = vmatpush1.msra.mxu0 0.0
        %4018 = vmatprep.subr.mxu0 0.0
        %4019 = vmatpush1.msra.mxu0 0.0
        %4020 = vmatprep.subr.mxu0 0.0
        %4021 = vmatpush1.msra.mxu0 0.0
        %4022 = vmatprep.subr.mxu0 0.0
        %4023 = vmatpush1.msra.mxu0 0.0
        %4024 = vmatprep.subr.mxu0 0.0
        %4025 = vmatpush1.msra.mxu0 0.0
        %4026 = vmatprep.subr.mxu0 0.0
        %4027 = vmatpush1.msra.mxu0 0.0
        %4028 = vmatprep.mubr.f32.mxu0 0.0
        %4029 = vmatmul.mubr.f32.gmra.mrb[0].mxu0 %v3956
        %v4030 = vpop.f32.mrb[0].mxu0
        %v4031 = vadd.f32 0.0, %v4030
        %v4032 = vpop.f32.mrb[0].mxu0
        %4033 = vmatprep.mubr.f32.mxu0 0.0
        %4034 = vmatmul.mubr.f32.gmra.mrb[0].mxu0 %v3958
        %v4035 = vpop.f32.mrb[0].mxu0
        %v4036 = vadd.f32 0.0, %v4035
        %v4037 = vpop.f32.mrb[0].mxu0
        %4038 = vmatprep.mubr.f32.mxu0 0.0
        %4039 = vmatmul.mubr.f32.gmra.mrb[0].mxu0 %v3960
        %v4040 = vpop.f32.mrb[0].mxu0
        %v4041 = vadd.f32 0.0, %v4040
        %v4042 = vpop.f32.mrb[0].mxu0
        %4043 = vmatprep.mubr.f32.mxu0 0.0
        %4044 = vmatmul.mubr.f32.gmra.mrb[0].mxu0 %v3962
        %v4045 = vpop.f32.mrb[0].mxu0
        %v4046 = vadd.f32 0.0, %v4045
        %v4047 = vpop.f32.mrb[0].mxu0
        %4048 = vdwg.mxu0
        %v4049 = vadd.f32 %v3951, %v4031
        %v4050 = vadd.f32 %v3952, %v4036
        %v4051 = vadd.f32 %v3953, %v4041
        %v4052 = vadd.f32 %v3954, %v4046
        %4053 = vst.msk [vmem:[#allocation4] sm:$0xff] %vm568, %v4049
        %4054 = vst.msk [vmem:[#allocation4 + $0x8] sm:$0xff] %vm568, %v4050
        %4055 = vst.msk [vmem:[#allocation4 + $0x10] sm:$0xff] %vm568, %v4051
        %4056 = vst.msk [vmem:[#allocation4 + $0x18] sm:$0xff] %vm568, %v4052
        %v4057 = vrot.slane %v3823, 2
        %v4058 = vrot.slane %v3824, 2
        %v4059 = vsel %vm1127, %v4057, %v4058
        %v4060 = vrot.slane %v3825, 2
        %v4061 = vsel %vm1127, %v4058, %v4060
        %v4062 = vrot.slane %v3826, 2
        %v4063 = vrot.slane %v3827, 2
        %v4064 = vsel %vm1127, %v4062, %v4063
        %v4065 = vrot.slane %v3828, 2
        %v4066 = vsel %vm1127, %v4063, %v4065
        %v4067 = vld [vmem:[#allocation4] sm:$0xff]
        %v4068 = vld [vmem:[#allocation4 + $0x8] sm:$0xff]
        %v4069 = vld [vmem:[#allocation4 + $0x10] sm:$0xff]
        %v4070 = vld [vmem:[#allocation4 + $0x18] sm:$0xff]
        %v4071 = vld [vmem:[%s2803] sm:$0xff]
        %v4072 = vsel %vm499, %v4059, 0
        %v4074 = vsel %vm499, %v4061, 0
        %v4076 = vsel %vm499, %v4064, 0
        %v4078 = vsel %vm499, %v4066, 0
        %4080 = vmatprep.subr.mxu0 0.0
        %4081 = vmatpush1.msra.mxu0 %v4071
        %4082 = vmatprep.subr.mxu0 0.0
        %4083 = vmatpush1.msra.mxu0 0.0
        %4084 = vmatprep.subr.mxu0 0.0
        %4085 = vmatpush1.msra.mxu0 0.0
        %4086 = vmatprep.subr.mxu0 0.0
        %4087 = vmatpush1.msra.mxu0 0.0
        %4088 = vmatprep.subr.mxu0 0.0
        %4089 = vmatpush1.msra.mxu0 0.0
        %4090 = vmatprep.subr.mxu0 0.0
        %4091 = vmatpush1.msra.mxu0 0.0
        %4092 = vmatprep.subr.mxu0 0.0
        %4093 = vmatpush1.msra.mxu0 0.0
        %4094 = vmatprep.subr.mxu0 0.0
        %4095 = vmatpush1.msra.mxu0 0.0
        %4096 = vmatprep.subr.mxu0 0.0
        %4097 = vmatpush1.msra.mxu0 0.0
        %4098 = vmatprep.subr.mxu0 0.0
        %4099 = vmatpush1.msra.mxu0 0.0
        %4100 = vmatprep.subr.mxu0 0.0
        %4101 = vmatpush1.msra.mxu0 0.0
        %4102 = vmatprep.subr.mxu0 0.0
        %4103 = vmatpush1.msra.mxu0 0.0
        %4104 = vmatprep.subr.mxu0 0.0
        %4105 = vmatpush1.msra.mxu0 0.0
        %4106 = vmatprep.subr.mxu0 0.0
        %4107 = vmatpush1.msra.mxu0 0.0
        %4108 = vmatprep.subr.mxu0 0.0
        %4109 = vmatpush1.msra.mxu0 0.0
        %4110 = vmatprep.subr.mxu0 0.0
        %4111 = vmatpush1.msra.mxu0 0.0
        %4112 = vmatprep.subr.mxu0 0.0
        %4113 = vmatpush1.msra.mxu0 0.0
        %4114 = vmatprep.subr.mxu0 0.0
        %4115 = vmatpush1.msra.mxu0 0.0
        %4116 = vmatprep.subr.mxu0 0.0
        %4117 = vmatpush1.msra.mxu0 0.0
        %4118 = vmatprep.subr.mxu0 0.0
        %4119 = vmatpush1.msra.mxu0 0.0
        %4120 = vmatprep.subr.mxu0 0.0
        %4121 = vmatpush1.msra.mxu0 0.0
        %4122 = vmatprep.subr.mxu0 0.0
        %4123 = vmatpush1.msra.mxu0 0.0
        %4124 = vmatprep.subr.mxu0 0.0
        %4125 = vmatpush1.msra.mxu0 0.0
        %4126 = vmatprep.subr.mxu0 0.0
        %4127 = vmatpush1.msra.mxu0 0.0
        %4128 = vmatprep.subr.mxu0 0.0
        %4129 = vmatpush1.msra.mxu0 0.0
        %4130 = vmatprep.subr.mxu0 0.0
        %4131 = vmatpush1.msra.mxu0 0.0
        %4132 = vmatprep.subr.mxu0 0.0
        %4133 = vmatpush1.msra.mxu0 0.0
        %4134 = vmatprep.subr.mxu0 0.0
        %4135 = vmatpush1.msra.mxu0 0.0
        %4136 = vmatprep.subr.mxu0 0.0
        %4137 = vmatpush1.msra.mxu0 0.0
        %4138 = vmatprep.subr.mxu0 0.0
        %4139 = vmatpush1.msra.mxu0 0.0
        %4140 = vmatprep.subr.mxu0 0.0
        %4141 = vmatpush1.msra.mxu0 0.0
        %4142 = vmatprep.subr.mxu0 0.0
        %4143 = vmatpush1.msra.mxu0 0.0
        %4144 = vmatprep.mubr.f32.mxu0 0.0
        %4145 = vmatmul.mubr.f32.gmra.mrb[0].mxu0 %v4072
        %v4146 = vpop.f32.mrb[0].mxu0
        %v4147 = vadd.f32 0.0, %v4146
        %v4148 = vpop.f32.mrb[0].mxu0
        %4149 = vmatprep.mubr.f32.mxu0 0.0
        %4150 = vmatmul.mubr.f32.gmra.mrb[0].mxu0 %v4074
        %v4151 = vpop.f32.mrb[0].mxu0
        %v4152 = vadd.f32 0.0, %v4151
        %v4153 = vpop.f32.mrb[0].mxu0
        %4154 = vmatprep.mubr.f32.mxu0 0.0
        %4155 = vmatmul.mubr.f32.gmra.mrb[0].mxu0 %v4076
        %v4156 = vpop.f32.mrb[0].mxu0
        %v4157 = vadd.f32 0.0, %v4156
        %v4158 = vpop.f32.mrb[0].mxu0
        %4159 = vmatprep.mubr.f32.mxu0 0.0
        %4160 = vmatmul.mubr.f32.gmra.mrb[0].mxu0 %v4078
        %v4161 = vpop.f32.mrb[0].mxu0
        %v4162 = vadd.f32 0.0, %v4161
        %v4163 = vpop.f32.mrb[0].mxu0
        %4164 = vdwg.mxu0
        %v4165 = vadd.f32 %v4067, %v4147
        %v4166 = vadd.f32 %v4068, %v4152
        %v4167 = vadd.f32 %v4069, %v4157
        %v4168 = vadd.f32 %v4070, %v4162
        %4169 = vst.msk [vmem:[#allocation4] sm:$0xff] %vm568, %v4165
        %4170 = vst.msk [vmem:[#allocation4 + $0x8] sm:$0xff] %vm568, %v4166
        %4171 = vst.msk [vmem:[#allocation4 + $0x10] sm:$0xff] %vm568, %v4167
        %4172 = vst.msk [vmem:[#allocation4 + $0x18] sm:$0xff] %vm568, %v4168
        %v4173 = vld [vmem:[#allocation4] sm:$0xff]
        %v4174 = vld [vmem:[#allocation4 + $0x8] sm:$0xff]
        %v4175 = vld [vmem:[#allocation4 + $0x10] sm:$0xff]
        %v4176 = vld [vmem:[#allocation4 + $0x18] sm:$0xff]
        %v4177 = vld [vmem:[#allocation11] sm:$0x1]
        %v4179 = vlaneseq
        %v4180 = vshrl.u32 %v4179, 7
        %v4181 = vsub.s32 0, %v4180
        %v4182 = vrot.slane %v4177, %v4181
        %v4184 = vadd.f32 %v4173, %v4182
        %v4185 = vadd.f32 %v4174, %v4182
        %v4186 = vadd.f32 %v4175, %v4182
        %v4187 = vadd.f32 %v4176, %v4182
        %vm4188 = vcmp.ge.f32.partialorder %v4184, 0.0
        %vm4189 = vcmp.ge.f32.partialorder %v4185, 0.0
        %vm4190 = vcmp.ge.f32.partialorder %v4186, 0.0
        %vm4191 = vcmp.ge.f32.partialorder %v4187, 0.0
        %v4192 = vmul.f32 %v4184, 0.2
        %v4193 = vmul.f32 %v4185, 0.2
        %v4194 = vmul.f32 %v4186, 0.2
        %v4195 = vmul.f32 %v4187, 0.2
        %v4196 = vsel %vm4188, %v4184, %v4192
        %v4197 = vsel %vm4189, %v4185, %v4193
        %v4198 = vsel %vm4190, %v4186, %v4194
        %v4199 = vsel %vm4191, %v4187, %v4195
        %s4200 = scalar_lea.vmem [#allocation3], 192
        %4201 = vst.msk [vmem:[%s4200 + $0x1] sm:$0xff] %vm568, %v4196
        %4202 = vst.msk [vmem:[%s4200 + $0x9] sm:$0xff] %vm568, %v4197
        %4203 = vst.msk [vmem:[%s4200 + $0x19] sm:$0xff] %vm568, %v4198
        %4204 = vst.msk [vmem:[%s4200 + $0x21] sm:$0xff] %vm568, %v4199
        %p4205 = scmp.eq.s32.totalorder %s36, 0
        // Predicated region
        $region85: #{tpu_custom_call.1} parent=51 // pred_check
          %p4206 = pneg %p4205
        $region86: #{tpu_custom_call.1} parent=51 // pred_check_branch
          %4208 = sbr.rel (%p4206) target = $region88
        $region87: #{tpu_custom_call.1} parent=51 // pred_region
          %4209 = vst.msk [vmem:[#allocation3] sm:$0xff] %vm568, 0.0
          %4210 = vst.msk [vmem:[#allocation3 + $0x8] sm:$0xff] %vm568, 0.0
          %vm4211 = vcmask 123904
          %4212 = vst.msk [vmem:[#allocation3 + $0x10] sm:$0x3] %vm4211, 0.0
        $region88: #{tpu_custom_call.1} parent=51 // pred_fallthru
          _
        %p4213 = scmp.eq.s32.totalorder %s36, 1
        // Predicated region
        $region89: #{tpu_custom_call.1} parent=51 // pred_check
          %p4214 = pneg %p4213
        $region90: #{tpu_custom_call.1} parent=51 // pred_check_branch
          %4216 = sbr.rel (%p4214) target = $region92
        $region91: #{tpu_custom_call.1} parent=51 // pred_region
          %s4217 = scalar_lea.vmem [#allocation3], 216
          %4218 = vst.msk [vmem:[%s4217] sm:$0xff] %vm568, 0.0
          %4219 = vst.msk [vmem:[%s4217 + $0x8] sm:$0xff] %vm568, 0.0
          %vm4220 = vcmask 123904
          %4221 = vst.msk [vmem:[%s4217 + $0x10] sm:$0x3] %vm4220, 0.0
        $region92: #{tpu_custom_call.1} parent=51 // pred_fallthru
          _
        %4222 = vst.msk [vmem:[#allocation4] sm:$0xff] %vm568, 0.0
        %4223 = vst.msk [vmem:[#allocation4 + $0x8] sm:$0xff] %vm568, 0.0
        %4224 = vst.msk [vmem:[#allocation4 + $0x10] sm:$0xff] %vm568, 0.0
        %4225 = vst.msk [vmem:[#allocation4 + $0x18] sm:$0xff] %vm568, 0.0
        %4226 = vst.msk [vmem:[#allocation4 + $0x20] sm:$0xff] %vm568, 0.0
        %4227 = vst.msk [vmem:[#allocation4 + $0x28] sm:$0xff] %vm568, 0.0
        %4228 = vst.msk [vmem:[#allocation4 + $0x30] sm:$0xff] %vm568, 0.0
        %4229 = vst.msk [vmem:[#allocation4 + $0x38] sm:$0xff] %vm568, 0.0
        %4230 = vst.msk [vmem:[#allocation4 + $0x40] sm:$0xff] %vm568, 0.0
        %4231 = vst.msk [vmem:[#allocation4 + $0x48] sm:$0xff] %vm568, 0.0
        %4232 = vst.msk [vmem:[#allocation4 + $0x50] sm:$0xff] %vm568, 0.0
        %4233 = vst.msk [vmem:[#allocation4 + $0x58] sm:$0xff] %vm568, 0.0
        %4234 = vst.msk [vmem:[#allocation4 + $0x60] sm:$0xff] %vm568, 0.0
        %4235 = vst.msk [vmem:[#allocation4 + $0x68] sm:$0xff] %vm568, 0.0
        %4236 = vst.msk [vmem:[#allocation4 + $0x70] sm:$0xff] %vm568, 0.0
        %4237 = vst.msk [vmem:[#allocation4 + $0x78] sm:$0xff] %vm568, 0.0
        %v4238 = vld [vmem:[#allocation3] sm:$0xff]
        %v4239 = vld [vmem:[#allocation3 + $0x8] sm:$0xff]
        %v4240 = vld [vmem:[#allocation3 + $0x10] sm:$0x3]
        %v4241 = vld [vmem:[#allocation3 + $0x18] sm:$0xff]
        %v4242 = vld [vmem:[#allocation3 + $0x20] sm:$0xff]
        %v4243 = vld [vmem:[#allocation3 + $0x28] sm:$0x3]
        %v4244 = vld [vmem:[#allocation3 + $0x30] sm:$0xff]
        %v4245 = vld [vmem:[#allocation3 + $0x38] sm:$0xff]
        %v4246 = vld [vmem:[#allocation3 + $0x40] sm:$0x3]
        %v4247 = vld [vmem:[#allocation3 + $0x48] sm:$0xff]
        %v4248 = vld [vmem:[#allocation3 + $0x50] sm:$0xff]
        %v4249 = vld [vmem:[#allocation3 + $0x58] sm:$0x3]
        %v4250 = vld [vmem:[#allocation3 + $0x60] sm:$0xff]
        %v4251 = vld [vmem:[#allocation3 + $0x68] sm:$0xff]
        %v4252 = vld [vmem:[#allocation3 + $0x70] sm:$0x3]
        %v4253 = vld [vmem:[#allocation3 + $0x78] sm:$0xff]
        %v4254 = vld [vmem:[#allocation3 + $0x80] sm:$0xff]
        %v4255 = vld [vmem:[#allocation3 + $0x88] sm:$0x3]
        %v4256 = vld [vmem:[#allocation3 + $0x90] sm:$0xff]
        %v4257 = vld [vmem:[#allocation3 + $0x98] sm:$0xff]
        %v4258 = vld [vmem:[#allocation3 + $0xa0] sm:$0x3]
        %v4259 = vld [vmem:[#allocation3 + $0xa8] sm:$0xff]
        %v4260 = vld [vmem:[#allocation3 + $0xb0] sm:$0xff]
        %v4261 = vld [vmem:[#allocation3 + $0xb8] sm:$0x3]
        %v4262 = vld [vmem:[#allocation4] sm:$0xff]
        %v4263 = vld [vmem:[#allocation4 + $0x8] sm:$0xff]
        %v4264 = vld [vmem:[#allocation4 + $0x10] sm:$0xff]
        %v4265 = vld [vmem:[#allocation4 + $0x18] sm:$0xff]
        %v4266 = vld [vmem:[#allocation4 + $0x20] sm:$0xff]
        %v4267 = vld [vmem:[#allocation4 + $0x28] sm:$0xff]
        %v4268 = vld [vmem:[#allocation4 + $0x30] sm:$0xff]
        %v4269 = vld [vmem:[#allocation4 + $0x38] sm:$0xff]
        %v4270 = vld [vmem:[#allocation4 + $0x40] sm:$0xff]
        %v4271 = vld [vmem:[#allocation4 + $0x48] sm:$0xff]
        %v4272 = vld [vmem:[#allocation4 + $0x50] sm:$0xff]
        %v4273 = vld [vmem:[#allocation4 + $0x58] sm:$0xff]
        %v4274 = vld [vmem:[#allocation4 + $0x60] sm:$0xff]
        %v4275 = vld [vmem:[#allocation4 + $0x68] sm:$0xff]
        %v4276 = vld [vmem:[#allocation4 + $0x70] sm:$0xff]
        %v4277 = vld [vmem:[#allocation4 + $0x78] sm:$0xff]
        %v4278 = vld [vmem:[#allocation13] sm:$0xff]
        %v4279 = vld [vmem:[#allocation13 + $0x8] sm:$0xff]
        %v4281 = vsel %vm568, %v4238, 0
        %v4284 = vsel %vm568, %v4239, 0
        %v4287 = vsel %vm568, %v4241, 0
        %v4290 = vsel %vm568, %v4242, 0
        %v4293 = vsel %vm568, %v4244, 0
        %v4296 = vsel %vm568, %v4245, 0
        %v4299 = vsel %vm568, %v4247, 0
        %v4302 = vsel %vm568, %v4248, 0
        %v4305 = vsel %vm568, %v4250, 0
        %v4308 = vsel %vm568, %v4251, 0
        %v4311 = vsel %vm568, %v4253, 0
        %v4314 = vsel %vm568, %v4254, 0
        %v4317 = vsel %vm568, %v4256, 0
        %v4320 = vsel %vm568, %v4257, 0
        %v4323 = vsel %vm568, %v4259, 0
        %v4326 = vsel %vm568, %v4260, 0
        %4328 = vmatprep.subr.mxu0 0.0
        %4329 = vmatpush1.msra.mxu0 %v4278
        %4330 = vmatprep.subr.mxu0 0.0
        %4331 = vmatpush1.msra.mxu0 %v4279
        %4332 = vmatprep.subr.mxu0 0.0
        %4333 = vmatpush1.msra.mxu0 0.0
        %4334 = vmatprep.subr.mxu0 0.0
        %4335 = vmatpush1.msra.mxu0 0.0
        %4336 = vmatprep.subr.mxu0 0.0
        %4337 = vmatpush1.msra.mxu0 0.0
        %4338 = vmatprep.subr.mxu0 0.0
        %4339 = vmatpush1.msra.mxu0 0.0
        %4340 = vmatprep.subr.mxu0 0.0
        %4341 = vmatpush1.msra.mxu0 0.0
        %4342 = vmatprep.subr.mxu0 0.0
        %4343 = vmatpush1.msra.mxu0 0.0
        %4344 = vmatprep.subr.mxu0 0.0
        %4345 = vmatpush1.msra.mxu0 0.0
        %4346 = vmatprep.subr.mxu0 0.0
        %4347 = vmatpush1.msra.mxu0 0.0
        %4348 = vmatprep.subr.mxu0 0.0
        %4349 = vmatpush1.msra.mxu0 0.0
        %4350 = vmatprep.subr.mxu0 0.0
        %4351 = vmatpush1.msra.mxu0 0.0
        %4352 = vmatprep.subr.mxu0 0.0
        %4353 = vmatpush1.msra.mxu0 0.0
        %4354 = vmatprep.subr.mxu0 0.0
        %4355 = vmatpush1.msra.mxu0 0.0
        %4356 = vmatprep.subr.mxu0 0.0
        %4357 = vmatpush1.msra.mxu0 0.0
        %4358 = vmatprep.subr.mxu0 0.0
        %4359 = vmatpush1.msra.mxu0 0.0
        %4360 = vmatprep.subr.mxu0 0.0
        %4361 = vmatpush1.msra.mxu0 0.0
        %4362 = vmatprep.subr.mxu0 0.0
        %4363 = vmatpush1.msra.mxu0 0.0
        %4364 = vmatprep.subr.mxu0 0.0
        %4365 = vmatpush1.msra.mxu0 0.0
        %4366 = vmatprep.subr.mxu0 0.0
        %4367 = vmatpush1.msra.mxu0 0.0
        %4368 = vmatprep.subr.mxu0 0.0
        %4369 = vmatpush1.msra.mxu0 0.0
        %4370 = vmatprep.subr.mxu0 0.0
        %4371 = vmatpush1.msra.mxu0 0.0
        %4372 = vmatprep.subr.mxu0 0.0
        %4373 = vmatpush1.msra.mxu0 0.0
        %4374 = vmatprep.subr.mxu0 0.0
        %4375 = vmatpush1.msra.mxu0 0.0
        %4376 = vmatprep.subr.mxu0 0.0
        %4377 = vmatpush1.msra.mxu0 0.0
        %4378 = vmatprep.subr.mxu0 0.0
        %4379 = vmatpush1.msra.mxu0 0.0
        %4380 = vmatprep.subr.mxu0 0.0
        %4381 = vmatpush1.msra.mxu0 0.0
        %4382 = vmatprep.subr.mxu0 0.0
        %4383 = vmatpush1.msra.mxu0 0.0
        %4384 = vmatprep.subr.mxu0 0.0
        %4385 = vmatpush1.msra.mxu0 0.0
        %4386 = vmatprep.subr.mxu0 0.0
        %4387 = vmatpush1.msra.mxu0 0.0
        %4388 = vmatprep.subr.mxu0 0.0
        %4389 = vmatpush1.msra.mxu0 0.0
        %4390 = vmatprep.subr.mxu0 0.0
        %4391 = vmatpush1.msra.mxu0 0.0
        %4392 = vmatprep.mubr.f32.mxu0 0.0
        %4393 = vmatmul.mubr.f32.gmra.mrb[0].mxu0 %v4281
        %v4394 = vpop.f32.mrb[0].mxu0
        %v4395 = vadd.f32 0.0, %v4394
        %v4396 = vpop.f32.mrb[0].mxu0
        %4397 = vmatprep.mubr.f32.mxu0 0.0
        %4398 = vmatmul.mubr.f32.gmra.mrb[0].mxu0 %v4284
        %v4399 = vpop.f32.mrb[0].mxu0
        %v4400 = vadd.f32 0.0, %v4399
        %v4401 = vpop.f32.mrb[0].mxu0
        %4402 = vmatprep.mubr.f32.mxu0 0.0
        %4403 = vmatmul.mubr.f32.gmra.mrb[0].mxu0 %v4287
        %v4404 = vpop.f32.mrb[0].mxu0
        %v4405 = vadd.f32 0.0, %v4404
        %v4406 = vpop.f32.mrb[0].mxu0
        %4407 = vmatprep.mubr.f32.mxu0 0.0
        %4408 = vmatmul.mubr.f32.gmra.mrb[0].mxu0 %v4290
        %v4409 = vpop.f32.mrb[0].mxu0
        %v4410 = vadd.f32 0.0, %v4409
        %v4411 = vpop.f32.mrb[0].mxu0
        %4412 = vmatprep.mubr.f32.mxu0 0.0
        %4413 = vmatmul.mubr.f32.gmra.mrb[0].mxu0 %v4293
        %v4414 = vpop.f32.mrb[0].mxu0
        %v4415 = vadd.f32 0.0, %v4414
        %v4416 = vpop.f32.mrb[0].mxu0
        %4417 = vmatprep.mubr.f32.mxu0 0.0
        %4418 = vmatmul.mubr.f32.gmra.mrb[0].mxu0 %v4296
        %v4419 = vpop.f32.mrb[0].mxu0
        %v4420 = vadd.f32 0.0, %v4419
        %v4421 = vpop.f32.mrb[0].mxu0
        %4422 = vmatprep.mubr.f32.mxu0 0.0
        %4423 = vmatmul.mubr.f32.gmra.mrb[0].mxu0 %v4299
        %v4424 = vpop.f32.mrb[0].mxu0
        %v4425 = vadd.f32 0.0, %v4424
        %v4426 = vpop.f32.mrb[0].mxu0
        %4427 = vmatprep.mubr.f32.mxu0 0.0
        %4428 = vmatmul.mubr.f32.gmra.mrb[0].mxu0 %v4302
        %v4429 = vpop.f32.mrb[0].mxu0
        %v4430 = vadd.f32 0.0, %v4429
        %v4431 = vpop.f32.mrb[0].mxu0
        %4432 = vmatprep.mubr.f32.mxu0 0.0
        %4433 = vmatmul.mubr.f32.gmra.mrb[0].mxu0 %v4305
        %v4434 = vpop.f32.mrb[0].mxu0
        %v4435 = vadd.f32 0.0, %v4434
        %v4436 = vpop.f32.mrb[0].mxu0
        %4437 = vmatprep.mubr.f32.mxu0 0.0
        %4438 = vmatmul.mubr.f32.gmra.mrb[0].mxu0 %v4308
        %v4439 = vpop.f32.mrb[0].mxu0
        %v4440 = vadd.f32 0.0, %v4439
        %v4441 = vpop.f32.mrb[0].mxu0
        %4442 = vmatprep.mubr.f32.mxu0 0.0
        %4443 = vmatmul.mubr.f32.gmra.mrb[0].mxu0 %v4311
        %v4444 = vpop.f32.mrb[0].mxu0
        %v4445 = vadd.f32 0.0, %v4444
        %v4446 = vpop.f32.mrb[0].mxu0
        %4447 = vmatprep.mubr.f32.mxu0 0.0
        %4448 = vmatmul.mubr.f32.gmra.mrb[0].mxu0 %v4314
        %v4449 = vpop.f32.mrb[0].mxu0
        %v4450 = vadd.f32 0.0, %v4449
        %v4451 = vpop.f32.mrb[0].mxu0
        %4452 = vmatprep.mubr.f32.mxu0 0.0
        %4453 = vmatmul.mubr.f32.gmra.mrb[0].mxu0 %v4317
        %v4454 = vpop.f32.mrb[0].mxu0
        %v4455 = vadd.f32 0.0, %v4454
        %v4456 = vpop.f32.mrb[0].mxu0
        %4457 = vmatprep.mubr.f32.mxu0 0.0
        %4458 = vmatmul.mubr.f32.gmra.mrb[0].mxu0 %v4320
        %v4459 = vpop.f32.mrb[0].mxu0
        %v4460 = vadd.f32 0.0, %v4459
        %v4461 = vpop.f32.mrb[0].mxu0
        %4462 = vmatprep.mubr.f32.mxu0 0.0
        %4463 = vmatmul.mubr.f32.gmra.mrb[0].mxu0 %v4323
        %v4464 = vpop.f32.mrb[0].mxu0
        %v4465 = vadd.f32 0.0, %v4464
        %v4466 = vpop.f32.mrb[0].mxu0
        %4467 = vmatprep.mubr.f32.mxu0 0.0
        %4468 = vmatmul.mubr.f32.gmra.mrb[0].mxu0 %v4326
        %v4469 = vpop.f32.mrb[0].mxu0
        %v4470 = vadd.f32 0.0, %v4469
        %v4471 = vpop.f32.mrb[0].mxu0
        %4472 = vdwg.mxu0
        %v4473 = vadd.f32 %v4262, %v4395
        %v4474 = vadd.f32 %v4263, %v4400
        %v4475 = vadd.f32 %v4264, %v4405
        %v4476 = vadd.f32 %v4265, %v4410
        %v4477 = vadd.f32 %v4266, %v4415
        %v4478 = vadd.f32 %v4267, %v4420
        %v4479 = vadd.f32 %v4268, %v4425
        %v4480 = vadd.f32 %v4269, %v4430
        %v4481 = vadd.f32 %v4270, %v4435
        %v4482 = vadd.f32 %v4271, %v4440
        %v4483 = vadd.f32 %v4272, %v4445
        %v4484 = vadd.f32 %v4273, %v4450
        %v4485 = vadd.f32 %v4274, %v4455
        %v4486 = vadd.f32 %v4275, %v4460
        %v4487 = vadd.f32 %v4276, %v4465
        %v4488 = vadd.f32 %v4277, %v4470
        %4489 = vst.msk [vmem:[#allocation4] sm:$0xff] %vm568, %v4473
        %4490 = vst.msk [vmem:[#allocation4 + $0x8] sm:$0xff] %vm568, %v4474
        %4491 = vst.msk [vmem:[#allocation4 + $0x10] sm:$0xff] %vm568, %v4475
        %4492 = vst.msk [vmem:[#allocation4 + $0x18] sm:$0xff] %vm568, %v4476
        %4493 = vst.msk [vmem:[#allocation4 + $0x20] sm:$0xff] %vm568, %v4477
        %4494 = vst.msk [vmem:[#allocation4 + $0x28] sm:$0xff] %vm568, %v4478
        %4495 = vst.msk [vmem:[#allocation4 + $0x30] sm:$0xff] %vm568, %v4479
        %4496 = vst.msk [vmem:[#allocation4 + $0x38] sm:$0xff] %vm568, %v4480
        %4497 = vst.msk [vmem:[#allocation4 + $0x40] sm:$0xff] %vm568, %v4481
        %4498 = vst.msk [vmem:[#allocation4 + $0x48] sm:$0xff] %vm568, %v4482
        %4499 = vst.msk [vmem:[#allocation4 + $0x50] sm:$0xff] %vm568, %v4483
        %4500 = vst.msk [vmem:[#allocation4 + $0x58] sm:$0xff] %vm568, %v4484
        %4501 = vst.msk [vmem:[#allocation4 + $0x60] sm:$0xff] %vm568, %v4485
        %4502 = vst.msk [vmem:[#allocation4 + $0x68] sm:$0xff] %vm568, %v4486
        %4503 = vst.msk [vmem:[#allocation4 + $0x70] sm:$0xff] %vm568, %v4487
        %4504 = vst.msk [vmem:[#allocation4 + $0x78] sm:$0xff] %vm568, %v4488
        %v4513 = vrot.slane %v4238, 1
        %v4514 = vrot.slane %v4239, 1
        %v4515 = vsel %vm859, %v4513, %v4514
        %v4516 = vrot.slane %v4240, 1
        %v4517 = vsel %vm859, %v4514, %v4516
        %v4518 = vrot.slane %v4241, 1
        %v4519 = vrot.slane %v4242, 1
        %v4520 = vsel %vm859, %v4518, %v4519
        %v4521 = vrot.slane %v4243, 1
        %v4522 = vsel %vm859, %v4519, %v4521
        %v4523 = vrot.slane %v4244, 1
        %v4524 = vrot.slane %v4245, 1
        %v4525 = vsel %vm859, %v4523, %v4524
        %v4526 = vrot.slane %v4246, 1
        %v4527 = vsel %vm859, %v4524, %v4526
        %v4528 = vrot.slane %v4247, 1
        %v4529 = vrot.slane %v4248, 1
        %v4530 = vsel %vm859, %v4528, %v4529
        %v4531 = vrot.slane %v4249, 1
        %v4532 = vsel %vm859, %v4529, %v4531
        %v4533 = vrot.slane %v4250, 1
        %v4534 = vrot.slane %v4251, 1
        %v4535 = vsel %vm859, %v4533, %v4534
        %v4536 = vrot.slane %v4252, 1
        %v4537 = vsel %vm859, %v4534, %v4536
        %v4538 = vrot.slane %v4253, 1
        %v4539 = vrot.slane %v4254, 1
        %v4540 = vsel %vm859, %v4538, %v4539
        %v4541 = vrot.slane %v4255, 1
        %v4542 = vsel %vm859, %v4539, %v4541
        %v4543 = vrot.slane %v4256, 1
        %v4544 = vrot.slane %v4257, 1
        %v4545 = vsel %vm859, %v4543, %v4544
        %v4546 = vrot.slane %v4258, 1
        %v4547 = vsel %vm859, %v4544, %v4546
        %v4548 = vrot.slane %v4259, 1
        %v4549 = vrot.slane %v4260, 1
        %v4550 = vsel %vm859, %v4548, %v4549
        %v4551 = vrot.slane %v4261, 1
        %v4552 = vsel %vm859, %v4549, %v4551
        %v4553 = vld [vmem:[#allocation4] sm:$0xff]
        %v4554 = vld [vmem:[#allocation4 + $0x8] sm:$0xff]
        %v4555 = vld [vmem:[#allocation4 + $0x10] sm:$0xff]
        %v4556 = vld [vmem:[#allocation4 + $0x18] sm:$0xff]
        %v4557 = vld [vmem:[#allocation4 + $0x20] sm:$0xff]
        %v4558 = vld [vmem:[#allocation4 + $0x28] sm:$0xff]
        %v4559 = vld [vmem:[#allocation4 + $0x30] sm:$0xff]
        %v4560 = vld [vmem:[#allocation4 + $0x38] sm:$0xff]
        %v4561 = vld [vmem:[#allocation4 + $0x40] sm:$0xff]
        %v4562 = vld [vmem:[#allocation4 + $0x48] sm:$0xff]
        %v4563 = vld [vmem:[#allocation4 + $0x50] sm:$0xff]
        %v4564 = vld [vmem:[#allocation4 + $0x58] sm:$0xff]
        %v4565 = vld [vmem:[#allocation4 + $0x60] sm:$0xff]
        %v4566 = vld [vmem:[#allocation4 + $0x68] sm:$0xff]
        %v4567 = vld [vmem:[#allocation4 + $0x70] sm:$0xff]
        %v4568 = vld [vmem:[#allocation4 + $0x78] sm:$0xff]
        %s4569 = scalar_lea.vmem [#allocation13], 16
        %v4570 = vld [vmem:[%s4569] sm:$0xff]
        %v4571 = vld [vmem:[%s4569 + $0x8] sm:$0xff]
        %v4572 = vsel %vm568, %v4515, 0
        %v4574 = vsel %vm568, %v4517, 0
        %v4576 = vsel %vm568, %v4520, 0
        %v4578 = vsel %vm568, %v4522, 0
        %v4580 = vsel %vm568, %v4525, 0
        %v4582 = vsel %vm568, %v4527, 0
        %v4584 = vsel %vm568, %v4530, 0
        %v4586 = vsel %vm568, %v4532, 0
        %v4588 = vsel %vm568, %v4535, 0
        %v4590 = vsel %vm568, %v4537, 0
        %v4592 = vsel %vm568, %v4540, 0
        %v4594 = vsel %vm568, %v4542, 0
        %v4596 = vsel %vm568, %v4545, 0
        %v4598 = vsel %vm568, %v4547, 0
        %v4600 = vsel %vm568, %v4550, 0
        %v4602 = vsel %vm568, %v4552, 0
        %4604 = vmatprep.subr.mxu0 0.0
        %4605 = vmatpush1.msra.mxu0 %v4570
        %4606 = vmatprep.subr.mxu0 0.0
        %4607 = vmatpush1.msra.mxu0 %v4571
        %4608 = vmatprep.subr.mxu0 0.0
        %4609 = vmatpush1.msra.mxu0 0.0
        %4610 = vmatprep.subr.mxu0 0.0
        %4611 = vmatpush1.msra.mxu0 0.0
        %4612 = vmatprep.subr.mxu0 0.0
        %4613 = vmatpush1.msra.mxu0 0.0
        %4614 = vmatprep.subr.mxu0 0.0
        %4615 = vmatpush1.msra.mxu0 0.0
        %4616 = vmatprep.subr.mxu0 0.0
        %4617 = vmatpush1.msra.mxu0 0.0
        %4618 = vmatprep.subr.mxu0 0.0
        %4619 = vmatpush1.msra.mxu0 0.0
        %4620 = vmatprep.subr.mxu0 0.0
        %4621 = vmatpush1.msra.mxu0 0.0
        %4622 = vmatprep.subr.mxu0 0.0
        %4623 = vmatpush1.msra.mxu0 0.0
        %4624 = vmatprep.subr.mxu0 0.0
        %4625 = vmatpush1.msra.mxu0 0.0
        %4626 = vmatprep.subr.mxu0 0.0
        %4627 = vmatpush1.msra.mxu0 0.0
        %4628 = vmatprep.subr.mxu0 0.0
        %4629 = vmatpush1.msra.mxu0 0.0
        %4630 = vmatprep.subr.mxu0 0.0
        %4631 = vmatpush1.msra.mxu0 0.0
        %4632 = vmatprep.subr.mxu0 0.0
        %4633 = vmatpush1.msra.mxu0 0.0
        %4634 = vmatprep.subr.mxu0 0.0
        %4635 = vmatpush1.msra.mxu0 0.0
        %4636 = vmatprep.subr.mxu0 0.0
        %4637 = vmatpush1.msra.mxu0 0.0
        %4638 = vmatprep.subr.mxu0 0.0
        %4639 = vmatpush1.msra.mxu0 0.0
        %4640 = vmatprep.subr.mxu0 0.0
        %4641 = vmatpush1.msra.mxu0 0.0
        %4642 = vmatprep.subr.mxu0 0.0
        %4643 = vmatpush1.msra.mxu0 0.0
        %4644 = vmatprep.subr.mxu0 0.0
        %4645 = vmatpush1.msra.mxu0 0.0
        %4646 = vmatprep.subr.mxu0 0.0
        %4647 = vmatpush1.msra.mxu0 0.0
        %4648 = vmatprep.subr.mxu0 0.0
        %4649 = vmatpush1.msra.mxu0 0.0
        %4650 = vmatprep.subr.mxu0 0.0
        %4651 = vmatpush1.msra.mxu0 0.0
        %4652 = vmatprep.subr.mxu0 0.0
        %4653 = vmatpush1.msra.mxu0 0.0
        %4654 = vmatprep.subr.mxu0 0.0
        %4655 = vmatpush1.msra.mxu0 0.0
        %4656 = vmatprep.subr.mxu0 0.0
        %4657 = vmatpush1.msra.mxu0 0.0
        %4658 = vmatprep.subr.mxu0 0.0
        %4659 = vmatpush1.msra.mxu0 0.0
        %4660 = vmatprep.subr.mxu0 0.0
        %4661 = vmatpush1.msra.mxu0 0.0
        %4662 = vmatprep.subr.mxu0 0.0
        %4663 = vmatpush1.msra.mxu0 0.0
        %4664 = vmatprep.subr.mxu0 0.0
        %4665 = vmatpush1.msra.mxu0 0.0
        %4666 = vmatprep.subr.mxu0 0.0
        %4667 = vmatpush1.msra.mxu0 0.0
        %4668 = vmatprep.mubr.f32.mxu0 0.0
        %4669 = vmatmul.mubr.f32.gmra.mrb[0].mxu0 %v4572
        %v4670 = vpop.f32.mrb[0].mxu0
        %v4671 = vadd.f32 0.0, %v4670
        %v4672 = vpop.f32.mrb[0].mxu0
        %4673 = vmatprep.mubr.f32.mxu0 0.0
        %4674 = vmatmul.mubr.f32.gmra.mrb[0].mxu0 %v4574
        %v4675 = vpop.f32.mrb[0].mxu0
        %v4676 = vadd.f32 0.0, %v4675
        %v4677 = vpop.f32.mrb[0].mxu0
        %4678 = vmatprep.mubr.f32.mxu0 0.0
        %4679 = vmatmul.mubr.f32.gmra.mrb[0].mxu0 %v4576
        %v4680 = vpop.f32.mrb[0].mxu0
        %v4681 = vadd.f32 0.0, %v4680
        %v4682 = vpop.f32.mrb[0].mxu0
        %4683 = vmatprep.mubr.f32.mxu0 0.0
        %4684 = vmatmul.mubr.f32.gmra.mrb[0].mxu0 %v4578
        %v4685 = vpop.f32.mrb[0].mxu0
        %v4686 = vadd.f32 0.0, %v4685
        %v4687 = vpop.f32.mrb[0].mxu0
        %4688 = vmatprep.mubr.f32.mxu0 0.0
        %4689 = vmatmul.mubr.f32.gmra.mrb[0].mxu0 %v4580
        %v4690 = vpop.f32.mrb[0].mxu0
        %v4691 = vadd.f32 0.0, %v4690
        %v4692 = vpop.f32.mrb[0].mxu0
        %4693 = vmatprep.mubr.f32.mxu0 0.0
        %4694 = vmatmul.mubr.f32.gmra.mrb[0].mxu0 %v4582
        %v4695 = vpop.f32.mrb[0].mxu0
        %v4696 = vadd.f32 0.0, %v4695
        %v4697 = vpop.f32.mrb[0].mxu0
        %4698 = vmatprep.mubr.f32.mxu0 0.0
        %4699 = vmatmul.mubr.f32.gmra.mrb[0].mxu0 %v4584
        %v4700 = vpop.f32.mrb[0].mxu0
        %v4701 = vadd.f32 0.0, %v4700
        %v4702 = vpop.f32.mrb[0].mxu0
        %4703 = vmatprep.mubr.f32.mxu0 0.0
        %4704 = vmatmul.mubr.f32.gmra.mrb[0].mxu0 %v4586
        %v4705 = vpop.f32.mrb[0].mxu0
        %v4706 = vadd.f32 0.0, %v4705
        %v4707 = vpop.f32.mrb[0].mxu0
        %4708 = vmatprep.mubr.f32.mxu0 0.0
        %4709 = vmatmul.mubr.f32.gmra.mrb[0].mxu0 %v4588
        %v4710 = vpop.f32.mrb[0].mxu0
        %v4711 = vadd.f32 0.0, %v4710
        %v4712 = vpop.f32.mrb[0].mxu0
        %4713 = vmatprep.mubr.f32.mxu0 0.0
        %4714 = vmatmul.mubr.f32.gmra.mrb[0].mxu0 %v4590
        %v4715 = vpop.f32.mrb[0].mxu0
        %v4716 = vadd.f32 0.0, %v4715
        %v4717 = vpop.f32.mrb[0].mxu0
        %4718 = vmatprep.mubr.f32.mxu0 0.0
        %4719 = vmatmul.mubr.f32.gmra.mrb[0].mxu0 %v4592
        %v4720 = vpop.f32.mrb[0].mxu0
        %v4721 = vadd.f32 0.0, %v4720
        %v4722 = vpop.f32.mrb[0].mxu0
        %4723 = vmatprep.mubr.f32.mxu0 0.0
        %4724 = vmatmul.mubr.f32.gmra.mrb[0].mxu0 %v4594
        %v4725 = vpop.f32.mrb[0].mxu0
        %v4726 = vadd.f32 0.0, %v4725
        %v4727 = vpop.f32.mrb[0].mxu0
        %4728 = vmatprep.mubr.f32.mxu0 0.0
        %4729 = vmatmul.mubr.f32.gmra.mrb[0].mxu0 %v4596
        %v4730 = vpop.f32.mrb[0].mxu0
        %v4731 = vadd.f32 0.0, %v4730
        %v4732 = vpop.f32.mrb[0].mxu0
        %4733 = vmatprep.mubr.f32.mxu0 0.0
        %4734 = vmatmul.mubr.f32.gmra.mrb[0].mxu0 %v4598
        %v4735 = vpop.f32.mrb[0].mxu0
        %v4736 = vadd.f32 0.0, %v4735
        %v4737 = vpop.f32.mrb[0].mxu0
        %4738 = vmatprep.mubr.f32.mxu0 0.0
        %4739 = vmatmul.mubr.f32.gmra.mrb[0].mxu0 %v4600
        %v4740 = vpop.f32.mrb[0].mxu0
        %v4741 = vadd.f32 0.0, %v4740
        %v4742 = vpop.f32.mrb[0].mxu0
        %4743 = vmatprep.mubr.f32.mxu0 0.0
        %4744 = vmatmul.mubr.f32.gmra.mrb[0].mxu0 %v4602
        %v4745 = vpop.f32.mrb[0].mxu0
        %v4746 = vadd.f32 0.0, %v4745
        %v4747 = vpop.f32.mrb[0].mxu0
        %4748 = vdwg.mxu0
        %v4749 = vadd.f32 %v4553, %v4671
        %v4750 = vadd.f32 %v4554, %v4676
        %v4751 = vadd.f32 %v4555, %v4681
        %v4752 = vadd.f32 %v4556, %v4686
        %v4753 = vadd.f32 %v4557, %v4691
        %v4754 = vadd.f32 %v4558, %v4696
        %v4755 = vadd.f32 %v4559, %v4701
        %v4756 = vadd.f32 %v4560, %v4706
        %v4757 = vadd.f32 %v4561, %v4711
        %v4758 = vadd.f32 %v4562, %v4716
        %v4759 = vadd.f32 %v4563, %v4721
        %v4760 = vadd.f32 %v4564, %v4726
        %v4761 = vadd.f32 %v4565, %v4731
        %v4762 = vadd.f32 %v4566, %v4736
        %v4763 = vadd.f32 %v4567, %v4741
        %v4764 = vadd.f32 %v4568, %v4746
        %4765 = vst.msk [vmem:[#allocation4] sm:$0xff] %vm568, %v4749
        %4766 = vst.msk [vmem:[#allocation4 + $0x8] sm:$0xff] %vm568, %v4750
        %4767 = vst.msk [vmem:[#allocation4 + $0x10] sm:$0xff] %vm568, %v4751
        %4768 = vst.msk [vmem:[#allocation4 + $0x18] sm:$0xff] %vm568, %v4752
        %4769 = vst.msk [vmem:[#allocation4 + $0x20] sm:$0xff] %vm568, %v4753
        %4770 = vst.msk [vmem:[#allocation4 + $0x28] sm:$0xff] %vm568, %v4754
        %4771 = vst.msk [vmem:[#allocation4 + $0x30] sm:$0xff] %vm568, %v4755
        %4772 = vst.msk [vmem:[#allocation4 + $0x38] sm:$0xff] %vm568, %v4756
        %4773 = vst.msk [vmem:[#allocation4 + $0x40] sm:$0xff] %vm568, %v4757
        %4774 = vst.msk [vmem:[#allocation4 + $0x48] sm:$0xff] %vm568, %v4758
        %4775 = vst.msk [vmem:[#allocation4 + $0x50] sm:$0xff] %vm568, %v4759
        %4776 = vst.msk [vmem:[#allocation4 + $0x58] sm:$0xff] %vm568, %v4760
        %4777 = vst.msk [vmem:[#allocation4 + $0x60] sm:$0xff] %vm568, %v4761
        %4778 = vst.msk [vmem:[#allocation4 + $0x68] sm:$0xff] %vm568, %v4762
        %4779 = vst.msk [vmem:[#allocation4 + $0x70] sm:$0xff] %vm568, %v4763
        %4780 = vst.msk [vmem:[#allocation4 + $0x78] sm:$0xff] %vm568, %v4764
        %v4781 = vrot.slane %v4238, 2
        %v4782 = vrot.slane %v4239, 2
        %v4783 = vsel %vm1127, %v4781, %v4782
        %v4784 = vrot.slane %v4240, 2
        %v4785 = vsel %vm1127, %v4782, %v4784
        %v4786 = vrot.slane %v4241, 2
        %v4787 = vrot.slane %v4242, 2
        %v4788 = vsel %vm1127, %v4786, %v4787
        %v4789 = vrot.slane %v4243, 2
        %v4790 = vsel %vm1127, %v4787, %v4789
        %v4791 = vrot.slane %v4244, 2
        %v4792 = vrot.slane %v4245, 2
        %v4793 = vsel %vm1127, %v4791, %v4792
        %v4794 = vrot.slane %v4246, 2
        %v4795 = vsel %vm1127, %v4792, %v4794
        %v4796 = vrot.slane %v4247, 2
        %v4797 = vrot.slane %v4248, 2
        %v4798 = vsel %vm1127, %v4796, %v4797
        %v4799 = vrot.slane %v4249, 2
        %v4800 = vsel %vm1127, %v4797, %v4799
        %v4801 = vrot.slane %v4250, 2
        %v4802 = vrot.slane %v4251, 2
        %v4803 = vsel %vm1127, %v4801, %v4802
        %v4804 = vrot.slane %v4252, 2
        %v4805 = vsel %vm1127, %v4802, %v4804
        %v4806 = vrot.slane %v4253, 2
        %v4807 = vrot.slane %v4254, 2
        %v4808 = vsel %vm1127, %v4806, %v4807
        %v4809 = vrot.slane %v4255, 2
        %v4810 = vsel %vm1127, %v4807, %v4809
        %v4811 = vrot.slane %v4256, 2
        %v4812 = vrot.slane %v4257, 2
        %v4813 = vsel %vm1127, %v4811, %v4812
        %v4814 = vrot.slane %v4258, 2
        %v4815 = vsel %vm1127, %v4812, %v4814
        %v4816 = vrot.slane %v4259, 2
        %v4817 = vrot.slane %v4260, 2
        %v4818 = vsel %vm1127, %v4816, %v4817
        %v4819 = vrot.slane %v4261, 2
        %v4820 = vsel %vm1127, %v4817, %v4819
        %v4821 = vld [vmem:[#allocation4] sm:$0xff]
        %v4822 = vld [vmem:[#allocation4 + $0x8] sm:$0xff]
        %v4823 = vld [vmem:[#allocation4 + $0x10] sm:$0xff]
        %v4824 = vld [vmem:[#allocation4 + $0x18] sm:$0xff]
        %v4825 = vld [vmem:[#allocation4 + $0x20] sm:$0xff]
        %v4826 = vld [vmem:[#allocation4 + $0x28] sm:$0xff]
        %v4827 = vld [vmem:[#allocation4 + $0x30] sm:$0xff]
        %v4828 = vld [vmem:[#allocation4 + $0x38] sm:$0xff]
        %v4829 = vld [vmem:[#allocation4 + $0x40] sm:$0xff]
        %v4830 = vld [vmem:[#allocation4 + $0x48] sm:$0xff]
        %v4831 = vld [vmem:[#allocation4 + $0x50] sm:$0xff]
        %v4832 = vld [vmem:[#allocation4 + $0x58] sm:$0xff]
        %v4833 = vld [vmem:[#allocation4 + $0x60] sm:$0xff]
        %v4834 = vld [vmem:[#allocation4 + $0x68] sm:$0xff]
        %v4835 = vld [vmem:[#allocation4 + $0x70] sm:$0xff]
        %v4836 = vld [vmem:[#allocation4 + $0x78] sm:$0xff]
        %s4837 = scalar_lea.vmem [#allocation13], 32
        %v4838 = vld [vmem:[%s4837] sm:$0xff]
        %v4839 = vld [vmem:[%s4837 + $0x8] sm:$0xff]
        %v4840 = vsel %vm568, %v4783, 0
        %v4842 = vsel %vm568, %v4785, 0
        %v4844 = vsel %vm568, %v4788, 0
        %v4846 = vsel %vm568, %v4790, 0
        %v4848 = vsel %vm568, %v4793, 0
        %v4850 = vsel %vm568, %v4795, 0
        %v4852 = vsel %vm568, %v4798, 0
        %v4854 = vsel %vm568, %v4800, 0
        %v4856 = vsel %vm568, %v4803, 0
        %v4858 = vsel %vm568, %v4805, 0
        %v4860 = vsel %vm568, %v4808, 0
        %v4862 = vsel %vm568, %v4810, 0
        %v4864 = vsel %vm568, %v4813, 0
        %v4866 = vsel %vm568, %v4815, 0
        %v4868 = vsel %vm568, %v4818, 0
        %v4870 = vsel %vm568, %v4820, 0
        %4872 = vmatprep.subr.mxu0 0.0
        %4873 = vmatpush1.msra.mxu0 %v4838
        %4874 = vmatprep.subr.mxu0 0.0
        %4875 = vmatpush1.msra.mxu0 %v4839
        %4876 = vmatprep.subr.mxu0 0.0
        %4877 = vmatpush1.msra.mxu0 0.0
        %4878 = vmatprep.subr.mxu0 0.0
        %4879 = vmatpush1.msra.mxu0 0.0
        %4880 = vmatprep.subr.mxu0 0.0
        %4881 = vmatpush1.msra.mxu0 0.0
        %4882 = vmatprep.subr.mxu0 0.0
        %4883 = vmatpush1.msra.mxu0 0.0
        %4884 = vmatprep.subr.mxu0 0.0
        %4885 = vmatpush1.msra.mxu0 0.0
        %4886 = vmatprep.subr.mxu0 0.0
        %4887 = vmatpush1.msra.mxu0 0.0
        %4888 = vmatprep.subr.mxu0 0.0
        %4889 = vmatpush1.msra.mxu0 0.0
        %4890 = vmatprep.subr.mxu0 0.0
        %4891 = vmatpush1.msra.mxu0 0.0
        %4892 = vmatprep.subr.mxu0 0.0
        %4893 = vmatpush1.msra.mxu0 0.0
        %4894 = vmatprep.subr.mxu0 0.0
        %4895 = vmatpush1.msra.mxu0 0.0
        %4896 = vmatprep.subr.mxu0 0.0
        %4897 = vmatpush1.msra.mxu0 0.0
        %4898 = vmatprep.subr.mxu0 0.0
        %4899 = vmatpush1.msra.mxu0 0.0
        %4900 = vmatprep.subr.mxu0 0.0
        %4901 = vmatpush1.msra.mxu0 0.0
        %4902 = vmatprep.subr.mxu0 0.0
        %4903 = vmatpush1.msra.mxu0 0.0
        %4904 = vmatprep.subr.mxu0 0.0
        %4905 = vmatpush1.msra.mxu0 0.0
        %4906 = vmatprep.subr.mxu0 0.0
        %4907 = vmatpush1.msra.mxu0 0.0
        %4908 = vmatprep.subr.mxu0 0.0
        %4909 = vmatpush1.msra.mxu0 0.0
        %4910 = vmatprep.subr.mxu0 0.0
        %4911 = vmatpush1.msra.mxu0 0.0
        %4912 = vmatprep.subr.mxu0 0.0
        %4913 = vmatpush1.msra.mxu0 0.0
        %4914 = vmatprep.subr.mxu0 0.0
        %4915 = vmatpush1.msra.mxu0 0.0
        %4916 = vmatprep.subr.mxu0 0.0
        %4917 = vmatpush1.msra.mxu0 0.0
        %4918 = vmatprep.subr.mxu0 0.0
        %4919 = vmatpush1.msra.mxu0 0.0
        %4920 = vmatprep.subr.mxu0 0.0
        %4921 = vmatpush1.msra.mxu0 0.0
        %4922 = vmatprep.subr.mxu0 0.0
        %4923 = vmatpush1.msra.mxu0 0.0
        %4924 = vmatprep.subr.mxu0 0.0
        %4925 = vmatpush1.msra.mxu0 0.0
        %4926 = vmatprep.subr.mxu0 0.0
        %4927 = vmatpush1.msra.mxu0 0.0
        %4928 = vmatprep.subr.mxu0 0.0
        %4929 = vmatpush1.msra.mxu0 0.0
        %4930 = vmatprep.subr.mxu0 0.0
        %4931 = vmatpush1.msra.mxu0 0.0
        %4932 = vmatprep.subr.mxu0 0.0
        %4933 = vmatpush1.msra.mxu0 0.0
        %4934 = vmatprep.subr.mxu0 0.0
        %4935 = vmatpush1.msra.mxu0 0.0
        %4936 = vmatprep.mubr.f32.mxu0 0.0
        %4937 = vmatmul.mubr.f32.gmra.mrb[0].mxu0 %v4840
        %v4938 = vpop.f32.mrb[0].mxu0
        %v4939 = vadd.f32 0.0, %v4938
        %v4940 = vpop.f32.mrb[0].mxu0
        %4941 = vmatprep.mubr.f32.mxu0 0.0
        %4942 = vmatmul.mubr.f32.gmra.mrb[0].mxu0 %v4842
        %v4943 = vpop.f32.mrb[0].mxu0
        %v4944 = vadd.f32 0.0, %v4943
        %v4945 = vpop.f32.mrb[0].mxu0
        %4946 = vmatprep.mubr.f32.mxu0 0.0
        %4947 = vmatmul.mubr.f32.gmra.mrb[0].mxu0 %v4844
        %v4948 = vpop.f32.mrb[0].mxu0
        %v4949 = vadd.f32 0.0, %v4948
        %v4950 = vpop.f32.mrb[0].mxu0
        %4951 = vmatprep.mubr.f32.mxu0 0.0
        %4952 = vmatmul.mubr.f32.gmra.mrb[0].mxu0 %v4846
        %v4953 = vpop.f32.mrb[0].mxu0
        %v4954 = vadd.f32 0.0, %v4953
        %v4955 = vpop.f32.mrb[0].mxu0
        %4956 = vmatprep.mubr.f32.mxu0 0.0
        %4957 = vmatmul.mubr.f32.gmra.mrb[0].mxu0 %v4848
        %v4958 = vpop.f32.mrb[0].mxu0
        %v4959 = vadd.f32 0.0, %v4958
        %v4960 = vpop.f32.mrb[0].mxu0
        %4961 = vmatprep.mubr.f32.mxu0 0.0
        %4962 = vmatmul.mubr.f32.gmra.mrb[0].mxu0 %v4850
        %v4963 = vpop.f32.mrb[0].mxu0
        %v4964 = vadd.f32 0.0, %v4963
        %v4965 = vpop.f32.mrb[0].mxu0
        %4966 = vmatprep.mubr.f32.mxu0 0.0
        %4967 = vmatmul.mubr.f32.gmra.mrb[0].mxu0 %v4852
        %v4968 = vpop.f32.mrb[0].mxu0
        %v4969 = vadd.f32 0.0, %v4968
        %v4970 = vpop.f32.mrb[0].mxu0
        %4971 = vmatprep.mubr.f32.mxu0 0.0
        %4972 = vmatmul.mubr.f32.gmra.mrb[0].mxu0 %v4854
        %v4973 = vpop.f32.mrb[0].mxu0
        %v4974 = vadd.f32 0.0, %v4973
        %v4975 = vpop.f32.mrb[0].mxu0
        %4976 = vmatprep.mubr.f32.mxu0 0.0
        %4977 = vmatmul.mubr.f32.gmra.mrb[0].mxu0 %v4856
        %v4978 = vpop.f32.mrb[0].mxu0
        %v4979 = vadd.f32 0.0, %v4978
        %v4980 = vpop.f32.mrb[0].mxu0
        %4981 = vmatprep.mubr.f32.mxu0 0.0
        %4982 = vmatmul.mubr.f32.gmra.mrb[0].mxu0 %v4858
        %v4983 = vpop.f32.mrb[0].mxu0
        %v4984 = vadd.f32 0.0, %v4983
        %v4985 = vpop.f32.mrb[0].mxu0
        %4986 = vmatprep.mubr.f32.mxu0 0.0
        %4987 = vmatmul.mubr.f32.gmra.mrb[0].mxu0 %v4860
        %v4988 = vpop.f32.mrb[0].mxu0
        %v4989 = vadd.f32 0.0, %v4988
        %v4990 = vpop.f32.mrb[0].mxu0
        %4991 = vmatprep.mubr.f32.mxu0 0.0
        %4992 = vmatmul.mubr.f32.gmra.mrb[0].mxu0 %v4862
        %v4993 = vpop.f32.mrb[0].mxu0
        %v4994 = vadd.f32 0.0, %v4993
        %v4995 = vpop.f32.mrb[0].mxu0
        %4996 = vmatprep.mubr.f32.mxu0 0.0
        %4997 = vmatmul.mubr.f32.gmra.mrb[0].mxu0 %v4864
        %v4998 = vpop.f32.mrb[0].mxu0
        %v4999 = vadd.f32 0.0, %v4998
        %v5000 = vpop.f32.mrb[0].mxu0
        %5001 = vmatprep.mubr.f32.mxu0 0.0
        %5002 = vmatmul.mubr.f32.gmra.mrb[0].mxu0 %v4866
        %v5003 = vpop.f32.mrb[0].mxu0
        %v5004 = vadd.f32 0.0, %v5003
        %v5005 = vpop.f32.mrb[0].mxu0
        %5006 = vmatprep.mubr.f32.mxu0 0.0
        %5007 = vmatmul.mubr.f32.gmra.mrb[0].mxu0 %v4868
        %v5008 = vpop.f32.mrb[0].mxu0
        %v5009 = vadd.f32 0.0, %v5008
        %v5010 = vpop.f32.mrb[0].mxu0
        %5011 = vmatprep.mubr.f32.mxu0 0.0
        %5012 = vmatmul.mubr.f32.gmra.mrb[0].mxu0 %v4870
        %v5013 = vpop.f32.mrb[0].mxu0
        %v5014 = vadd.f32 0.0, %v5013
        %v5015 = vpop.f32.mrb[0].mxu0
        %5016 = vdwg.mxu0
        %v5017 = vadd.f32 %v4821, %v4939
        %v5018 = vadd.f32 %v4822, %v4944
        %v5019 = vadd.f32 %v4823, %v4949
        %v5020 = vadd.f32 %v4824, %v4954
        %v5021 = vadd.f32 %v4825, %v4959
        %v5022 = vadd.f32 %v4826, %v4964
        %v5023 = vadd.f32 %v4827, %v4969
        %v5024 = vadd.f32 %v4828, %v4974
        %v5025 = vadd.f32 %v4829, %v4979
        %v5026 = vadd.f32 %v4830, %v4984
        %v5027 = vadd.f32 %v4831, %v4989
        %v5028 = vadd.f32 %v4832, %v4994
        %v5029 = vadd.f32 %v4833, %v4999
        %v5030 = vadd.f32 %v4834, %v5004
        %v5031 = vadd.f32 %v4835, %v5009
        %v5032 = vadd.f32 %v4836, %v5014
        %5033 = vst.msk [vmem:[#allocation4] sm:$0xff] %vm568, %v5017
        %5034 = vst.msk [vmem:[#allocation4 + $0x8] sm:$0xff] %vm568, %v5018
        %5035 = vst.msk [vmem:[#allocation4 + $0x10] sm:$0xff] %vm568, %v5019
        %5036 = vst.msk [vmem:[#allocation4 + $0x18] sm:$0xff] %vm568, %v5020
        %5037 = vst.msk [vmem:[#allocation4 + $0x20] sm:$0xff] %vm568, %v5021
        %5038 = vst.msk [vmem:[#allocation4 + $0x28] sm:$0xff] %vm568, %v5022
        %5039 = vst.msk [vmem:[#allocation4 + $0x30] sm:$0xff] %vm568, %v5023
        %5040 = vst.msk [vmem:[#allocation4 + $0x38] sm:$0xff] %vm568, %v5024
        %5041 = vst.msk [vmem:[#allocation4 + $0x40] sm:$0xff] %vm568, %v5025
        %5042 = vst.msk [vmem:[#allocation4 + $0x48] sm:$0xff] %vm568, %v5026
        %5043 = vst.msk [vmem:[#allocation4 + $0x50] sm:$0xff] %vm568, %v5027
        %5044 = vst.msk [vmem:[#allocation4 + $0x58] sm:$0xff] %vm568, %v5028
        %5045 = vst.msk [vmem:[#allocation4 + $0x60] sm:$0xff] %vm568, %v5029
        %5046 = vst.msk [vmem:[#allocation4 + $0x68] sm:$0xff] %vm568, %v5030
        %5047 = vst.msk [vmem:[#allocation4 + $0x70] sm:$0xff] %vm568, %v5031
        %5048 = vst.msk [vmem:[#allocation4 + $0x78] sm:$0xff] %vm568, %v5032
        %s5049 = scalar_lea.vmem [#allocation3], 24
        %v5050 = vld [vmem:[%s5049] sm:$0xff]
        %v5051 = vld [vmem:[%s5049 + $0x8] sm:$0xff]
        %v5052 = vld [vmem:[%s5049 + $0x10] sm:$0x3]
        %v5053 = vld [vmem:[%s5049 + $0x18] sm:$0xff]
        %v5054 = vld [vmem:[%s5049 + $0x20] sm:$0xff]
        %v5055 = vld [vmem:[%s5049 + $0x28] sm:$0x3]
        %v5056 = vld [vmem:[%s5049 + $0x30] sm:$0xff]
        %v5057 = vld [vmem:[%s5049 + $0x38] sm:$0xff]
        %v5058 = vld [vmem:[%s5049 + $0x40] sm:$0x3]
        %v5059 = vld [vmem:[%s5049 + $0x48] sm:$0xff]
        %v5060 = vld [vmem:[%s5049 + $0x50] sm:$0xff]
        %v5061 = vld [vmem:[%s5049 + $0x58] sm:$0x3]
        %v5062 = vld [vmem:[%s5049 + $0x60] sm:$0xff]
        %v5063 = vld [vmem:[%s5049 + $0x68] sm:$0xff]
        %v5064 = vld [vmem:[%s5049 + $0x70] sm:$0x3]
        %v5065 = vld [vmem:[%s5049 + $0x78] sm:$0xff]
        %v5066 = vld [vmem:[%s5049 + $0x80] sm:$0xff]
        %v5067 = vld [vmem:[%s5049 + $0x88] sm:$0x3]
        %v5068 = vld [vmem:[%s5049 + $0x90] sm:$0xff]
        %v5069 = vld [vmem:[%s5049 + $0x98] sm:$0xff]
        %v5070 = vld [vmem:[%s5049 + $0xa0] sm:$0x3]
        %v5071 = vld [vmem:[%s5049 + $0xa8] sm:$0xff]
        %v5072 = vld [vmem:[%s5049 + $0xb0] sm:$0xff]
        %v5073 = vld [vmem:[%s5049 + $0xb8] sm:$0x3]
        %v5074 = vld [vmem:[#allocation4] sm:$0xff]
        %v5075 = vld [vmem:[#allocation4 + $0x8] sm:$0xff]
        %v5076 = vld [vmem:[#allocation4 + $0x10] sm:$0xff]
        %v5077 = vld [vmem:[#allocation4 + $0x18] sm:$0xff]
        %v5078 = vld [vmem:[#allocation4 + $0x20] sm:$0xff]
        %v5079 = vld [vmem:[#allocation4 + $0x28] sm:$0xff]
        %v5080 = vld [vmem:[#allocation4 + $0x30] sm:$0xff]
        %v5081 = vld [vmem:[#allocation4 + $0x38] sm:$0xff]
        %v5082 = vld [vmem:[#allocation4 + $0x40] sm:$0xff]
        %v5083 = vld [vmem:[#allocation4 + $0x48] sm:$0xff]
        %v5084 = vld [vmem:[#allocation4 + $0x50] sm:$0xff]
        %v5085 = vld [vmem:[#allocation4 + $0x58] sm:$0xff]
        %v5086 = vld [vmem:[#allocation4 + $0x60] sm:$0xff]
        %v5087 = vld [vmem:[#allocation4 + $0x68] sm:$0xff]
        %v5088 = vld [vmem:[#allocation4 + $0x70] sm:$0xff]
        %v5089 = vld [vmem:[#allocation4 + $0x78] sm:$0xff]
        %s5090 = scalar_lea.vmem [#allocation13], 48
        %v5091 = vld [vmem:[%s5090] sm:$0xff]
        %v5092 = vld [vmem:[%s5090 + $0x8] sm:$0xff]
        %v5094 = vsel %vm568, %v5050, 0
        %v5097 = vsel %vm568, %v5051, 0
        %v5100 = vsel %vm568, %v5053, 0
        %v5103 = vsel %vm568, %v5054, 0
        %v5106 = vsel %vm568, %v5056, 0
        %v5109 = vsel %vm568, %v5057, 0
        %v5112 = vsel %vm568, %v5059, 0
        %v5115 = vsel %vm568, %v5060, 0
        %v5118 = vsel %vm568, %v5062, 0
        %v5121 = vsel %vm568, %v5063, 0
        %v5124 = vsel %vm568, %v5065, 0
        %v5127 = vsel %vm568, %v5066, 0
        %v5130 = vsel %vm568, %v5068, 0
        %v5133 = vsel %vm568, %v5069, 0
        %v5136 = vsel %vm568, %v5071, 0
        %v5139 = vsel %vm568, %v5072, 0
        %5141 = vmatprep.subr.mxu0 0.0
        %5142 = vmatpush1.msra.mxu0 %v5091
        %5143 = vmatprep.subr.mxu0 0.0
        %5144 = vmatpush1.msra.mxu0 %v5092
        %5145 = vmatprep.subr.mxu0 0.0
        %5146 = vmatpush1.msra.mxu0 0.0
        %5147 = vmatprep.subr.mxu0 0.0
        %5148 = vmatpush1.msra.mxu0 0.0
        %5149 = vmatprep.subr.mxu0 0.0
        %5150 = vmatpush1.msra.mxu0 0.0
        %5151 = vmatprep.subr.mxu0 0.0
        %5152 = vmatpush1.msra.mxu0 0.0
        %5153 = vmatprep.subr.mxu0 0.0
        %5154 = vmatpush1.msra.mxu0 0.0
        %5155 = vmatprep.subr.mxu0 0.0
        %5156 = vmatpush1.msra.mxu0 0.0
        %5157 = vmatprep.subr.mxu0 0.0
        %5158 = vmatpush1.msra.mxu0 0.0
        %5159 = vmatprep.subr.mxu0 0.0
        %5160 = vmatpush1.msra.mxu0 0.0
        %5161 = vmatprep.subr.mxu0 0.0
        %5162 = vmatpush1.msra.mxu0 0.0
        %5163 = vmatprep.subr.mxu0 0.0
        %5164 = vmatpush1.msra.mxu0 0.0
        %5165 = vmatprep.subr.mxu0 0.0
        %5166 = vmatpush1.msra.mxu0 0.0
        %5167 = vmatprep.subr.mxu0 0.0
        %5168 = vmatpush1.msra.mxu0 0.0
        %5169 = vmatprep.subr.mxu0 0.0
        %5170 = vmatpush1.msra.mxu0 0.0
        %5171 = vmatprep.subr.mxu0 0.0
        %5172 = vmatpush1.msra.mxu0 0.0
        %5173 = vmatprep.subr.mxu0 0.0
        %5174 = vmatpush1.msra.mxu0 0.0
        %5175 = vmatprep.subr.mxu0 0.0
        %5176 = vmatpush1.msra.mxu0 0.0
        %5177 = vmatprep.subr.mxu0 0.0
        %5178 = vmatpush1.msra.mxu0 0.0
        %5179 = vmatprep.subr.mxu0 0.0
        %5180 = vmatpush1.msra.mxu0 0.0
        %5181 = vmatprep.subr.mxu0 0.0
        %5182 = vmatpush1.msra.mxu0 0.0
        %5183 = vmatprep.subr.mxu0 0.0
        %5184 = vmatpush1.msra.mxu0 0.0
        %5185 = vmatprep.subr.mxu0 0.0
        %5186 = vmatpush1.msra.mxu0 0.0
        %5187 = vmatprep.subr.mxu0 0.0
        %5188 = vmatpush1.msra.mxu0 0.0
        %5189 = vmatprep.subr.mxu0 0.0
        %5190 = vmatpush1.msra.mxu0 0.0
        %5191 = vmatprep.subr.mxu0 0.0
        %5192 = vmatpush1.msra.mxu0 0.0
        %5193 = vmatprep.subr.mxu0 0.0
        %5194 = vmatpush1.msra.mxu0 0.0
        %5195 = vmatprep.subr.mxu0 0.0
        %5196 = vmatpush1.msra.mxu0 0.0
        %5197 = vmatprep.subr.mxu0 0.0
        %5198 = vmatpush1.msra.mxu0 0.0
        %5199 = vmatprep.subr.mxu0 0.0
        %5200 = vmatpush1.msra.mxu0 0.0
        %5201 = vmatprep.subr.mxu0 0.0
        %5202 = vmatpush1.msra.mxu0 0.0
        %5203 = vmatprep.subr.mxu0 0.0
        %5204 = vmatpush1.msra.mxu0 0.0
        %5205 = vmatprep.mubr.f32.mxu0 0.0
        %5206 = vmatmul.mubr.f32.gmra.mrb[0].mxu0 %v5094
        %v5207 = vpop.f32.mrb[0].mxu0
        %v5208 = vadd.f32 0.0, %v5207
        %v5209 = vpop.f32.mrb[0].mxu0
        %5210 = vmatprep.mubr.f32.mxu0 0.0
        %5211 = vmatmul.mubr.f32.gmra.mrb[0].mxu0 %v5097
        %v5212 = vpop.f32.mrb[0].mxu0
        %v5213 = vadd.f32 0.0, %v5212
        %v5214 = vpop.f32.mrb[0].mxu0
        %5215 = vmatprep.mubr.f32.mxu0 0.0
        %5216 = vmatmul.mubr.f32.gmra.mrb[0].mxu0 %v5100
        %v5217 = vpop.f32.mrb[0].mxu0
        %v5218 = vadd.f32 0.0, %v5217
        %v5219 = vpop.f32.mrb[0].mxu0
        %5220 = vmatprep.mubr.f32.mxu0 0.0
        %5221 = vmatmul.mubr.f32.gmra.mrb[0].mxu0 %v5103
        %v5222 = vpop.f32.mrb[0].mxu0
        %v5223 = vadd.f32 0.0, %v5222
        %v5224 = vpop.f32.mrb[0].mxu0
        %5225 = vmatprep.mubr.f32.mxu0 0.0
        %5226 = vmatmul.mubr.f32.gmra.mrb[0].mxu0 %v5106
        %v5227 = vpop.f32.mrb[0].mxu0
        %v5228 = vadd.f32 0.0, %v5227
        %v5229 = vpop.f32.mrb[0].mxu0
        %5230 = vmatprep.mubr.f32.mxu0 0.0
        %5231 = vmatmul.mubr.f32.gmra.mrb[0].mxu0 %v5109
        %v5232 = vpop.f32.mrb[0].mxu0
        %v5233 = vadd.f32 0.0, %v5232
        %v5234 = vpop.f32.mrb[0].mxu0
        %5235 = vmatprep.mubr.f32.mxu0 0.0
        %5236 = vmatmul.mubr.f32.gmra.mrb[0].mxu0 %v5112
        %v5237 = vpop.f32.mrb[0].mxu0
        %v5238 = vadd.f32 0.0, %v5237
        %v5239 = vpop.f32.mrb[0].mxu0
        %5240 = vmatprep.mubr.f32.mxu0 0.0
        %5241 = vmatmul.mubr.f32.gmra.mrb[0].mxu0 %v5115
        %v5242 = vpop.f32.mrb[0].mxu0
        %v5243 = vadd.f32 0.0, %v5242
        %v5244 = vpop.f32.mrb[0].mxu0
        %5245 = vmatprep.mubr.f32.mxu0 0.0
        %5246 = vmatmul.mubr.f32.gmra.mrb[0].mxu0 %v5118
        %v5247 = vpop.f32.mrb[0].mxu0
        %v5248 = vadd.f32 0.0, %v5247
        %v5249 = vpop.f32.mrb[0].mxu0
        %5250 = vmatprep.mubr.f32.mxu0 0.0
        %5251 = vmatmul.mubr.f32.gmra.mrb[0].mxu0 %v5121
        %v5252 = vpop.f32.mrb[0].mxu0
        %v5253 = vadd.f32 0.0, %v5252
        %v5254 = vpop.f32.mrb[0].mxu0
        %5255 = vmatprep.mubr.f32.mxu0 0.0
        %5256 = vmatmul.mubr.f32.gmra.mrb[0].mxu0 %v5124
        %v5257 = vpop.f32.mrb[0].mxu0
        %v5258 = vadd.f32 0.0, %v5257
        %v5259 = vpop.f32.mrb[0].mxu0
        %5260 = vmatprep.mubr.f32.mxu0 0.0
        %5261 = vmatmul.mubr.f32.gmra.mrb[0].mxu0 %v5127
        %v5262 = vpop.f32.mrb[0].mxu0
        %v5263 = vadd.f32 0.0, %v5262
        %v5264 = vpop.f32.mrb[0].mxu0
        %5265 = vmatprep.mubr.f32.mxu0 0.0
        %5266 = vmatmul.mubr.f32.gmra.mrb[0].mxu0 %v5130
        %v5267 = vpop.f32.mrb[0].mxu0
        %v5268 = vadd.f32 0.0, %v5267
        %v5269 = vpop.f32.mrb[0].mxu0
        %5270 = vmatprep.mubr.f32.mxu0 0.0
        %5271 = vmatmul.mubr.f32.gmra.mrb[0].mxu0 %v5133
        %v5272 = vpop.f32.mrb[0].mxu0
        %v5273 = vadd.f32 0.0, %v5272
        %v5274 = vpop.f32.mrb[0].mxu0
        %5275 = vmatprep.mubr.f32.mxu0 0.0
        %5276 = vmatmul.mubr.f32.gmra.mrb[0].mxu0 %v5136
        %v5277 = vpop.f32.mrb[0].mxu0
        %v5278 = vadd.f32 0.0, %v5277
        %v5279 = vpop.f32.mrb[0].mxu0
        %5280 = vmatprep.mubr.f32.mxu0 0.0
        %5281 = vmatmul.mubr.f32.gmra.mrb[0].mxu0 %v5139
        %v5282 = vpop.f32.mrb[0].mxu0
        %v5283 = vadd.f32 0.0, %v5282
        %v5284 = vpop.f32.mrb[0].mxu0
        %5285 = vdwg.mxu0
        %v5286 = vadd.f32 %v5074, %v5208
        %v5287 = vadd.f32 %v5075, %v5213
        %v5288 = vadd.f32 %v5076, %v5218
        %v5289 = vadd.f32 %v5077, %v5223
        %v5290 = vadd.f32 %v5078, %v5228
        %v5291 = vadd.f32 %v5079, %v5233
        %v5292 = vadd.f32 %v5080, %v5238
        %v5293 = vadd.f32 %v5081, %v5243
        %v5294 = vadd.f32 %v5082, %v5248
        %v5295 = vadd.f32 %v5083, %v5253
        %v5296 = vadd.f32 %v5084, %v5258
        %v5297 = vadd.f32 %v5085, %v5263
        %v5298 = vadd.f32 %v5086, %v5268
        %v5299 = vadd.f32 %v5087, %v5273
        %v5300 = vadd.f32 %v5088, %v5278
        %v5301 = vadd.f32 %v5089, %v5283
        %5302 = vst.msk [vmem:[#allocation4] sm:$0xff] %vm568, %v5286
        %5303 = vst.msk [vmem:[#allocation4 + $0x8] sm:$0xff] %vm568, %v5287
        %5304 = vst.msk [vmem:[#allocation4 + $0x10] sm:$0xff] %vm568, %v5288
        %5305 = vst.msk [vmem:[#allocation4 + $0x18] sm:$0xff] %vm568, %v5289
        %5306 = vst.msk [vmem:[#allocation4 + $0x20] sm:$0xff] %vm568, %v5290
        %5307 = vst.msk [vmem:[#allocation4 + $0x28] sm:$0xff] %vm568, %v5291
        %5308 = vst.msk [vmem:[#allocation4 + $0x30] sm:$0xff] %vm568, %v5292
        %5309 = vst.msk [vmem:[#allocation4 + $0x38] sm:$0xff] %vm568, %v5293
        %5310 = vst.msk [vmem:[#allocation4 + $0x40] sm:$0xff] %vm568, %v5294
        %5311 = vst.msk [vmem:[#allocation4 + $0x48] sm:$0xff] %vm568, %v5295
        %5312 = vst.msk [vmem:[#allocation4 + $0x50] sm:$0xff] %vm568, %v5296
        %5313 = vst.msk [vmem:[#allocation4 + $0x58] sm:$0xff] %vm568, %v5297
        %5314 = vst.msk [vmem:[#allocation4 + $0x60] sm:$0xff] %vm568, %v5298
        %5315 = vst.msk [vmem:[#allocation4 + $0x68] sm:$0xff] %vm568, %v5299
        %5316 = vst.msk [vmem:[#allocation4 + $0x70] sm:$0xff] %vm568, %v5300
        %5317 = vst.msk [vmem:[#allocation4 + $0x78] sm:$0xff] %vm568, %v5301
        %v5326 = vrot.slane %v5050, 1
        %v5327 = vrot.slane %v5051, 1
        %v5328 = vsel %vm859, %v5326, %v5327
        %v5329 = vrot.slane %v5052, 1
        %v5330 = vsel %vm859, %v5327, %v5329
        %v5331 = vrot.slane %v5053, 1
        %v5332 = vrot.slane %v5054, 1
        %v5333 = vsel %vm859, %v5331, %v5332
        %v5334 = vrot.slane %v5055, 1
        %v5335 = vsel %vm859, %v5332, %v5334
        %v5336 = vrot.slane %v5056, 1
        %v5337 = vrot.slane %v5057, 1
        %v5338 = vsel %vm859, %v5336, %v5337
        %v5339 = vrot.slane %v5058, 1
        %v5340 = vsel %vm859, %v5337, %v5339
        %v5341 = vrot.slane %v5059, 1
        %v5342 = vrot.slane %v5060, 1
        %v5343 = vsel %vm859, %v5341, %v5342
        %v5344 = vrot.slane %v5061, 1
        %v5345 = vsel %vm859, %v5342, %v5344
        %v5346 = vrot.slane %v5062, 1
        %v5347 = vrot.slane %v5063, 1
        %v5348 = vsel %vm859, %v5346, %v5347
        %v5349 = vrot.slane %v5064, 1
        %v5350 = vsel %vm859, %v5347, %v5349
        %v5351 = vrot.slane %v5065, 1
        %v5352 = vrot.slane %v5066, 1
        %v5353 = vsel %vm859, %v5351, %v5352
        %v5354 = vrot.slane %v5067, 1
        %v5355 = vsel %vm859, %v5352, %v5354
        %v5356 = vrot.slane %v5068, 1
        %v5357 = vrot.slane %v5069, 1
        %v5358 = vsel %vm859, %v5356, %v5357
        %v5359 = vrot.slane %v5070, 1
        %v5360 = vsel %vm859, %v5357, %v5359
        %v5361 = vrot.slane %v5071, 1
        %v5362 = vrot.slane %v5072, 1
        %v5363 = vsel %vm859, %v5361, %v5362
        %v5364 = vrot.slane %v5073, 1
        %v5365 = vsel %vm859, %v5362, %v5364
        %v5366 = vld [vmem:[#allocation4] sm:$0xff]
        %v5367 = vld [vmem:[#allocation4 + $0x8] sm:$0xff]
        %v5368 = vld [vmem:[#allocation4 + $0x10] sm:$0xff]
        %v5369 = vld [vmem:[#allocation4 + $0x18] sm:$0xff]
        %v5370 = vld [vmem:[#allocation4 + $0x20] sm:$0xff]
        %v5371 = vld [vmem:[#allocation4 + $0x28] sm:$0xff]
        %v5372 = vld [vmem:[#allocation4 + $0x30] sm:$0xff]
        %v5373 = vld [vmem:[#allocation4 + $0x38] sm:$0xff]
        %v5374 = vld [vmem:[#allocation4 + $0x40] sm:$0xff]
        %v5375 = vld [vmem:[#allocation4 + $0x48] sm:$0xff]
        %v5376 = vld [vmem:[#allocation4 + $0x50] sm:$0xff]
        %v5377 = vld [vmem:[#allocation4 + $0x58] sm:$0xff]
        %v5378 = vld [vmem:[#allocation4 + $0x60] sm:$0xff]
        %v5379 = vld [vmem:[#allocation4 + $0x68] sm:$0xff]
        %v5380 = vld [vmem:[#allocation4 + $0x70] sm:$0xff]
        %v5381 = vld [vmem:[#allocation4 + $0x78] sm:$0xff]
        %s5382 = scalar_lea.vmem [#allocation13], 64
        %v5383 = vld [vmem:[%s5382] sm:$0xff]
        %v5384 = vld [vmem:[%s5382 + $0x8] sm:$0xff]
        %v5385 = vsel %vm568, %v5328, 0
        %v5387 = vsel %vm568, %v5330, 0
        %v5389 = vsel %vm568, %v5333, 0
        %v5391 = vsel %vm568, %v5335, 0
        %v5393 = vsel %vm568, %v5338, 0
        %v5395 = vsel %vm568, %v5340, 0
        %v5397 = vsel %vm568, %v5343, 0
        %v5399 = vsel %vm568, %v5345, 0
        %v5401 = vsel %vm568, %v5348, 0
        %v5403 = vsel %vm568, %v5350, 0
        %v5405 = vsel %vm568, %v5353, 0
        %v5407 = vsel %vm568, %v5355, 0
        %v5409 = vsel %vm568, %v5358, 0
        %v5411 = vsel %vm568, %v5360, 0
        %v5413 = vsel %vm568, %v5363, 0
        %v5415 = vsel %vm568, %v5365, 0
        %5417 = vmatprep.subr.mxu0 0.0
        %5418 = vmatpush1.msra.mxu0 %v5383
        %5419 = vmatprep.subr.mxu0 0.0
        %5420 = vmatpush1.msra.mxu0 %v5384
        %5421 = vmatprep.subr.mxu0 0.0
        %5422 = vmatpush1.msra.mxu0 0.0
        %5423 = vmatprep.subr.mxu0 0.0
        %5424 = vmatpush1.msra.mxu0 0.0
        %5425 = vmatprep.subr.mxu0 0.0
        %5426 = vmatpush1.msra.mxu0 0.0
        %5427 = vmatprep.subr.mxu0 0.0
        %5428 = vmatpush1.msra.mxu0 0.0
        %5429 = vmatprep.subr.mxu0 0.0
        %5430 = vmatpush1.msra.mxu0 0.0
        %5431 = vmatprep.subr.mxu0 0.0
        %5432 = vmatpush1.msra.mxu0 0.0
        %5433 = vmatprep.subr.mxu0 0.0
        %5434 = vmatpush1.msra.mxu0 0.0
        %5435 = vmatprep.subr.mxu0 0.0
        %5436 = vmatpush1.msra.mxu0 0.0
        %5437 = vmatprep.subr.mxu0 0.0
        %5438 = vmatpush1.msra.mxu0 0.0
        %5439 = vmatprep.subr.mxu0 0.0
        %5440 = vmatpush1.msra.mxu0 0.0
        %5441 = vmatprep.subr.mxu0 0.0
        %5442 = vmatpush1.msra.mxu0 0.0
        %5443 = vmatprep.subr.mxu0 0.0
        %5444 = vmatpush1.msra.mxu0 0.0
        %5445 = vmatprep.subr.mxu0 0.0
        %5446 = vmatpush1.msra.mxu0 0.0
        %5447 = vmatprep.subr.mxu0 0.0
        %5448 = vmatpush1.msra.mxu0 0.0
        %5449 = vmatprep.subr.mxu0 0.0
        %5450 = vmatpush1.msra.mxu0 0.0
        %5451 = vmatprep.subr.mxu0 0.0
        %5452 = vmatpush1.msra.mxu0 0.0
        %5453 = vmatprep.subr.mxu0 0.0
        %5454 = vmatpush1.msra.mxu0 0.0
        %5455 = vmatprep.subr.mxu0 0.0
        %5456 = vmatpush1.msra.mxu0 0.0
        %5457 = vmatprep.subr.mxu0 0.0
        %5458 = vmatpush1.msra.mxu0 0.0
        %5459 = vmatprep.subr.mxu0 0.0
        %5460 = vmatpush1.msra.mxu0 0.0
        %5461 = vmatprep.subr.mxu0 0.0
        %5462 = vmatpush1.msra.mxu0 0.0
        %5463 = vmatprep.subr.mxu0 0.0
        %5464 = vmatpush1.msra.mxu0 0.0
        %5465 = vmatprep.subr.mxu0 0.0
        %5466 = vmatpush1.msra.mxu0 0.0
        %5467 = vmatprep.subr.mxu0 0.0
        %5468 = vmatpush1.msra.mxu0 0.0
        %5469 = vmatprep.subr.mxu0 0.0
        %5470 = vmatpush1.msra.mxu0 0.0
        %5471 = vmatprep.subr.mxu0 0.0
        %5472 = vmatpush1.msra.mxu0 0.0
        %5473 = vmatprep.subr.mxu0 0.0
        %5474 = vmatpush1.msra.mxu0 0.0
        %5475 = vmatprep.subr.mxu0 0.0
        %5476 = vmatpush1.msra.mxu0 0.0
        %5477 = vmatprep.subr.mxu0 0.0
        %5478 = vmatpush1.msra.mxu0 0.0
        %5479 = vmatprep.subr.mxu0 0.0
        %5480 = vmatpush1.msra.mxu0 0.0
        %5481 = vmatprep.mubr.f32.mxu0 0.0
        %5482 = vmatmul.mubr.f32.gmra.mrb[0].mxu0 %v5385
        %v5483 = vpop.f32.mrb[0].mxu0
        %v5484 = vadd.f32 0.0, %v5483
        %v5485 = vpop.f32.mrb[0].mxu0
        %5486 = vmatprep.mubr.f32.mxu0 0.0
        %5487 = vmatmul.mubr.f32.gmra.mrb[0].mxu0 %v5387
        %v5488 = vpop.f32.mrb[0].mxu0
        %v5489 = vadd.f32 0.0, %v5488
        %v5490 = vpop.f32.mrb[0].mxu0
        %5491 = vmatprep.mubr.f32.mxu0 0.0
        %5492 = vmatmul.mubr.f32.gmra.mrb[0].mxu0 %v5389
        %v5493 = vpop.f32.mrb[0].mxu0
        %v5494 = vadd.f32 0.0, %v5493
        %v5495 = vpop.f32.mrb[0].mxu0
        %5496 = vmatprep.mubr.f32.mxu0 0.0
        %5497 = vmatmul.mubr.f32.gmra.mrb[0].mxu0 %v5391
        %v5498 = vpop.f32.mrb[0].mxu0
        %v5499 = vadd.f32 0.0, %v5498
        %v5500 = vpop.f32.mrb[0].mxu0
        %5501 = vmatprep.mubr.f32.mxu0 0.0
        %5502 = vmatmul.mubr.f32.gmra.mrb[0].mxu0 %v5393
        %v5503 = vpop.f32.mrb[0].mxu0
        %v5504 = vadd.f32 0.0, %v5503
        %v5505 = vpop.f32.mrb[0].mxu0
        %5506 = vmatprep.mubr.f32.mxu0 0.0
        %5507 = vmatmul.mubr.f32.gmra.mrb[0].mxu0 %v5395
        %v5508 = vpop.f32.mrb[0].mxu0
        %v5509 = vadd.f32 0.0, %v5508
        %v5510 = vpop.f32.mrb[0].mxu0
        %5511 = vmatprep.mubr.f32.mxu0 0.0
        %5512 = vmatmul.mubr.f32.gmra.mrb[0].mxu0 %v5397
        %v5513 = vpop.f32.mrb[0].mxu0
        %v5514 = vadd.f32 0.0, %v5513
        %v5515 = vpop.f32.mrb[0].mxu0
        %5516 = vmatprep.mubr.f32.mxu0 0.0
        %5517 = vmatmul.mubr.f32.gmra.mrb[0].mxu0 %v5399
        %v5518 = vpop.f32.mrb[0].mxu0
        %v5519 = vadd.f32 0.0, %v5518
        %v5520 = vpop.f32.mrb[0].mxu0
        %5521 = vmatprep.mubr.f32.mxu0 0.0
        %5522 = vmatmul.mubr.f32.gmra.mrb[0].mxu0 %v5401
        %v5523 = vpop.f32.mrb[0].mxu0
        %v5524 = vadd.f32 0.0, %v5523
        %v5525 = vpop.f32.mrb[0].mxu0
        %5526 = vmatprep.mubr.f32.mxu0 0.0
        %5527 = vmatmul.mubr.f32.gmra.mrb[0].mxu0 %v5403
        %v5528 = vpop.f32.mrb[0].mxu0
        %v5529 = vadd.f32 0.0, %v5528
        %v5530 = vpop.f32.mrb[0].mxu0
        %5531 = vmatprep.mubr.f32.mxu0 0.0
        %5532 = vmatmul.mubr.f32.gmra.mrb[0].mxu0 %v5405
        %v5533 = vpop.f32.mrb[0].mxu0
        %v5534 = vadd.f32 0.0, %v5533
        %v5535 = vpop.f32.mrb[0].mxu0
        %5536 = vmatprep.mubr.f32.mxu0 0.0
        %5537 = vmatmul.mubr.f32.gmra.mrb[0].mxu0 %v5407
        %v5538 = vpop.f32.mrb[0].mxu0
        %v5539 = vadd.f32 0.0, %v5538
        %v5540 = vpop.f32.mrb[0].mxu0
        %5541 = vmatprep.mubr.f32.mxu0 0.0
        %5542 = vmatmul.mubr.f32.gmra.mrb[0].mxu0 %v5409
        %v5543 = vpop.f32.mrb[0].mxu0
        %v5544 = vadd.f32 0.0, %v5543
        %v5545 = vpop.f32.mrb[0].mxu0
        %5546 = vmatprep.mubr.f32.mxu0 0.0
        %5547 = vmatmul.mubr.f32.gmra.mrb[0].mxu0 %v5411
        %v5548 = vpop.f32.mrb[0].mxu0
        %v5549 = vadd.f32 0.0, %v5548
        %v5550 = vpop.f32.mrb[0].mxu0
        %5551 = vmatprep.mubr.f32.mxu0 0.0
        %5552 = vmatmul.mubr.f32.gmra.mrb[0].mxu0 %v5413
        %v5553 = vpop.f32.mrb[0].mxu0
        %v5554 = vadd.f32 0.0, %v5553
        %v5555 = vpop.f32.mrb[0].mxu0
        %5556 = vmatprep.mubr.f32.mxu0 0.0
        %5557 = vmatmul.mubr.f32.gmra.mrb[0].mxu0 %v5415
        %v5558 = vpop.f32.mrb[0].mxu0
        %v5559 = vadd.f32 0.0, %v5558
        %v5560 = vpop.f32.mrb[0].mxu0
        %5561 = vdwg.mxu0
        %v5562 = vadd.f32 %v5366, %v5484
        %v5563 = vadd.f32 %v5367, %v5489
        %v5564 = vadd.f32 %v5368, %v5494
        %v5565 = vadd.f32 %v5369, %v5499
        %v5566 = vadd.f32 %v5370, %v5504
        %v5567 = vadd.f32 %v5371, %v5509
        %v5568 = vadd.f32 %v5372, %v5514
        %v5569 = vadd.f32 %v5373, %v5519
        %v5570 = vadd.f32 %v5374, %v5524
        %v5571 = vadd.f32 %v5375, %v5529
        %v5572 = vadd.f32 %v5376, %v5534
        %v5573 = vadd.f32 %v5377, %v5539
        %v5574 = vadd.f32 %v5378, %v5544
        %v5575 = vadd.f32 %v5379, %v5549
        %v5576 = vadd.f32 %v5380, %v5554
        %v5577 = vadd.f32 %v5381, %v5559
        %5578 = vst.msk [vmem:[#allocation4] sm:$0xff] %vm568, %v5562
        %5579 = vst.msk [vmem:[#allocation4 + $0x8] sm:$0xff] %vm568, %v5563
        %5580 = vst.msk [vmem:[#allocation4 + $0x10] sm:$0xff] %vm568, %v5564
        %5581 = vst.msk [vmem:[#allocation4 + $0x18] sm:$0xff] %vm568, %v5565
        %5582 = vst.msk [vmem:[#allocation4 + $0x20] sm:$0xff] %vm568, %v5566
        %5583 = vst.msk [vmem:[#allocation4 + $0x28] sm:$0xff] %vm568, %v5567
        %5584 = vst.msk [vmem:[#allocation4 + $0x30] sm:$0xff] %vm568, %v5568
        %5585 = vst.msk [vmem:[#allocation4 + $0x38] sm:$0xff] %vm568, %v5569
        %5586 = vst.msk [vmem:[#allocation4 + $0x40] sm:$0xff] %vm568, %v5570
        %5587 = vst.msk [vmem:[#allocation4 + $0x48] sm:$0xff] %vm568, %v5571
        %5588 = vst.msk [vmem:[#allocation4 + $0x50] sm:$0xff] %vm568, %v5572
        %5589 = vst.msk [vmem:[#allocation4 + $0x58] sm:$0xff] %vm568, %v5573
        %5590 = vst.msk [vmem:[#allocation4 + $0x60] sm:$0xff] %vm568, %v5574
        %5591 = vst.msk [vmem:[#allocation4 + $0x68] sm:$0xff] %vm568, %v5575
        %5592 = vst.msk [vmem:[#allocation4 + $0x70] sm:$0xff] %vm568, %v5576
        %5593 = vst.msk [vmem:[#allocation4 + $0x78] sm:$0xff] %vm568, %v5577
        %v5594 = vrot.slane %v5050, 2
        %v5595 = vrot.slane %v5051, 2
        %v5596 = vsel %vm1127, %v5594, %v5595
        %v5597 = vrot.slane %v5052, 2
        %v5598 = vsel %vm1127, %v5595, %v5597
        %v5599 = vrot.slane %v5053, 2
        %v5600 = vrot.slane %v5054, 2
        %v5601 = vsel %vm1127, %v5599, %v5600
        %v5602 = vrot.slane %v5055, 2
        %v5603 = vsel %vm1127, %v5600, %v5602
        %v5604 = vrot.slane %v5056, 2
        %v5605 = vrot.slane %v5057, 2
        %v5606 = vsel %vm1127, %v5604, %v5605
        %v5607 = vrot.slane %v5058, 2
        %v5608 = vsel %vm1127, %v5605, %v5607
        %v5609 = vrot.slane %v5059, 2
        %v5610 = vrot.slane %v5060, 2
        %v5611 = vsel %vm1127, %v5609, %v5610
        %v5612 = vrot.slane %v5061, 2
        %v5613 = vsel %vm1127, %v5610, %v5612
        %v5614 = vrot.slane %v5062, 2
        %v5615 = vrot.slane %v5063, 2
        %v5616 = vsel %vm1127, %v5614, %v5615
        %v5617 = vrot.slane %v5064, 2
        %v5618 = vsel %vm1127, %v5615, %v5617
        %v5619 = vrot.slane %v5065, 2
        %v5620 = vrot.slane %v5066, 2
        %v5621 = vsel %vm1127, %v5619, %v5620
        %v5622 = vrot.slane %v5067, 2
        %v5623 = vsel %vm1127, %v5620, %v5622
        %v5624 = vrot.slane %v5068, 2
        %v5625 = vrot.slane %v5069, 2
        %v5626 = vsel %vm1127, %v5624, %v5625
        %v5627 = vrot.slane %v5070, 2
        %v5628 = vsel %vm1127, %v5625, %v5627
        %v5629 = vrot.slane %v5071, 2
        %v5630 = vrot.slane %v5072, 2
        %v5631 = vsel %vm1127, %v5629, %v5630
        %v5632 = vrot.slane %v5073, 2
        %v5633 = vsel %vm1127, %v5630, %v5632
        %v5634 = vld [vmem:[#allocation4] sm:$0xff]
        %v5635 = vld [vmem:[#allocation4 + $0x8] sm:$0xff]
        %v5636 = vld [vmem:[#allocation4 + $0x10] sm:$0xff]
        %v5637 = vld [vmem:[#allocation4 + $0x18] sm:$0xff]
        %v5638 = vld [vmem:[#allocation4 + $0x20] sm:$0xff]
        %v5639 = vld [vmem:[#allocation4 + $0x28] sm:$0xff]
        %v5640 = vld [vmem:[#allocation4 + $0x30] sm:$0xff]
        %v5641 = vld [vmem:[#allocation4 + $0x38] sm:$0xff]
        %v5642 = vld [vmem:[#allocation4 + $0x40] sm:$0xff]
        %v5643 = vld [vmem:[#allocation4 + $0x48] sm:$0xff]
        %v5644 = vld [vmem:[#allocation4 + $0x50] sm:$0xff]
        %v5645 = vld [vmem:[#allocation4 + $0x58] sm:$0xff]
        %v5646 = vld [vmem:[#allocation4 + $0x60] sm:$0xff]
        %v5647 = vld [vmem:[#allocation4 + $0x68] sm:$0xff]
        %v5648 = vld [vmem:[#allocation4 + $0x70] sm:$0xff]
        %v5649 = vld [vmem:[#allocation4 + $0x78] sm:$0xff]
        %s5650 = scalar_lea.vmem [#allocation13], 80
        %v5651 = vld [vmem:[%s5650] sm:$0xff]
        %v5652 = vld [vmem:[%s5650 + $0x8] sm:$0xff]
        %v5653 = vsel %vm568, %v5596, 0
        %v5655 = vsel %vm568, %v5598, 0
        %v5657 = vsel %vm568, %v5601, 0
        %v5659 = vsel %vm568, %v5603, 0
        %v5661 = vsel %vm568, %v5606, 0
        %v5663 = vsel %vm568, %v5608, 0
        %v5665 = vsel %vm568, %v5611, 0
        %v5667 = vsel %vm568, %v5613, 0
        %v5669 = vsel %vm568, %v5616, 0
        %v5671 = vsel %vm568, %v5618, 0
        %v5673 = vsel %vm568, %v5621, 0
        %v5675 = vsel %vm568, %v5623, 0
        %v5677 = vsel %vm568, %v5626, 0
        %v5679 = vsel %vm568, %v5628, 0
        %v5681 = vsel %vm568, %v5631, 0
        %v5683 = vsel %vm568, %v5633, 0
        %5685 = vmatprep.subr.mxu0 0.0
        %5686 = vmatpush1.msra.mxu0 %v5651
        %5687 = vmatprep.subr.mxu0 0.0
        %5688 = vmatpush1.msra.mxu0 %v5652
        %5689 = vmatprep.subr.mxu0 0.0
        %5690 = vmatpush1.msra.mxu0 0.0
        %5691 = vmatprep.subr.mxu0 0.0
        %5692 = vmatpush1.msra.mxu0 0.0
        %5693 = vmatprep.subr.mxu0 0.0
        %5694 = vmatpush1.msra.mxu0 0.0
        %5695 = vmatprep.subr.mxu0 0.0
        %5696 = vmatpush1.msra.mxu0 0.0
        %5697 = vmatprep.subr.mxu0 0.0
        %5698 = vmatpush1.msra.mxu0 0.0
        %5699 = vmatprep.subr.mxu0 0.0
        %5700 = vmatpush1.msra.mxu0 0.0
        %5701 = vmatprep.subr.mxu0 0.0
        %5702 = vmatpush1.msra.mxu0 0.0
        %5703 = vmatprep.subr.mxu0 0.0
        %5704 = vmatpush1.msra.mxu0 0.0
        %5705 = vmatprep.subr.mxu0 0.0
        %5706 = vmatpush1.msra.mxu0 0.0
        %5707 = vmatprep.subr.mxu0 0.0
        %5708 = vmatpush1.msra.mxu0 0.0
        %5709 = vmatprep.subr.mxu0 0.0
        %5710 = vmatpush1.msra.mxu0 0.0
        %5711 = vmatprep.subr.mxu0 0.0
        %5712 = vmatpush1.msra.mxu0 0.0
        %5713 = vmatprep.subr.mxu0 0.0
        %5714 = vmatpush1.msra.mxu0 0.0
        %5715 = vmatprep.subr.mxu0 0.0
        %5716 = vmatpush1.msra.mxu0 0.0
        %5717 = vmatprep.subr.mxu0 0.0
        %5718 = vmatpush1.msra.mxu0 0.0
        %5719 = vmatprep.subr.mxu0 0.0
        %5720 = vmatpush1.msra.mxu0 0.0
        %5721 = vmatprep.subr.mxu0 0.0
        %5722 = vmatpush1.msra.mxu0 0.0
        %5723 = vmatprep.subr.mxu0 0.0
        %5724 = vmatpush1.msra.mxu0 0.0
        %5725 = vmatprep.subr.mxu0 0.0
        %5726 = vmatpush1.msra.mxu0 0.0
        %5727 = vmatprep.subr.mxu0 0.0
        %5728 = vmatpush1.msra.mxu0 0.0
        %5729 = vmatprep.subr.mxu0 0.0
        %5730 = vmatpush1.msra.mxu0 0.0
        %5731 = vmatprep.subr.mxu0 0.0
        %5732 = vmatpush1.msra.mxu0 0.0
        %5733 = vmatprep.subr.mxu0 0.0
        %5734 = vmatpush1.msra.mxu0 0.0
        %5735 = vmatprep.subr.mxu0 0.0
        %5736 = vmatpush1.msra.mxu0 0.0
        %5737 = vmatprep.subr.mxu0 0.0
        %5738 = vmatpush1.msra.mxu0 0.0
        %5739 = vmatprep.subr.mxu0 0.0
        %5740 = vmatpush1.msra.mxu0 0.0
        %5741 = vmatprep.subr.mxu0 0.0
        %5742 = vmatpush1.msra.mxu0 0.0
        %5743 = vmatprep.subr.mxu0 0.0
        %5744 = vmatpush1.msra.mxu0 0.0
        %5745 = vmatprep.subr.mxu0 0.0
        %5746 = vmatpush1.msra.mxu0 0.0
        %5747 = vmatprep.subr.mxu0 0.0
        %5748 = vmatpush1.msra.mxu0 0.0
        %5749 = vmatprep.mubr.f32.mxu0 0.0
        %5750 = vmatmul.mubr.f32.gmra.mrb[0].mxu0 %v5653
        %v5751 = vpop.f32.mrb[0].mxu0
        %v5752 = vadd.f32 0.0, %v5751
        %v5753 = vpop.f32.mrb[0].mxu0
        %5754 = vmatprep.mubr.f32.mxu0 0.0
        %5755 = vmatmul.mubr.f32.gmra.mrb[0].mxu0 %v5655
        %v5756 = vpop.f32.mrb[0].mxu0
        %v5757 = vadd.f32 0.0, %v5756
        %v5758 = vpop.f32.mrb[0].mxu0
        %5759 = vmatprep.mubr.f32.mxu0 0.0
        %5760 = vmatmul.mubr.f32.gmra.mrb[0].mxu0 %v5657
        %v5761 = vpop.f32.mrb[0].mxu0
        %v5762 = vadd.f32 0.0, %v5761
        %v5763 = vpop.f32.mrb[0].mxu0
        %5764 = vmatprep.mubr.f32.mxu0 0.0
        %5765 = vmatmul.mubr.f32.gmra.mrb[0].mxu0 %v5659
        %v5766 = vpop.f32.mrb[0].mxu0
        %v5767 = vadd.f32 0.0, %v5766
        %v5768 = vpop.f32.mrb[0].mxu0
        %5769 = vmatprep.mubr.f32.mxu0 0.0
        %5770 = vmatmul.mubr.f32.gmra.mrb[0].mxu0 %v5661
        %v5771 = vpop.f32.mrb[0].mxu0
        %v5772 = vadd.f32 0.0, %v5771
        %v5773 = vpop.f32.mrb[0].mxu0
        %5774 = vmatprep.mubr.f32.mxu0 0.0
        %5775 = vmatmul.mubr.f32.gmra.mrb[0].mxu0 %v5663
        %v5776 = vpop.f32.mrb[0].mxu0
        %v5777 = vadd.f32 0.0, %v5776
        %v5778 = vpop.f32.mrb[0].mxu0
        %5779 = vmatprep.mubr.f32.mxu0 0.0
        %5780 = vmatmul.mubr.f32.gmra.mrb[0].mxu0 %v5665
        %v5781 = vpop.f32.mrb[0].mxu0
        %v5782 = vadd.f32 0.0, %v5781
        %v5783 = vpop.f32.mrb[0].mxu0
        %5784 = vmatprep.mubr.f32.mxu0 0.0
        %5785 = vmatmul.mubr.f32.gmra.mrb[0].mxu0 %v5667
        %v5786 = vpop.f32.mrb[0].mxu0
        %v5787 = vadd.f32 0.0, %v5786
        %v5788 = vpop.f32.mrb[0].mxu0
        %5789 = vmatprep.mubr.f32.mxu0 0.0
        %5790 = vmatmul.mubr.f32.gmra.mrb[0].mxu0 %v5669
        %v5791 = vpop.f32.mrb[0].mxu0
        %v5792 = vadd.f32 0.0, %v5791
        %v5793 = vpop.f32.mrb[0].mxu0
        %5794 = vmatprep.mubr.f32.mxu0 0.0
        %5795 = vmatmul.mubr.f32.gmra.mrb[0].mxu0 %v5671
        %v5796 = vpop.f32.mrb[0].mxu0
        %v5797 = vadd.f32 0.0, %v5796
        %v5798 = vpop.f32.mrb[0].mxu0
        %5799 = vmatprep.mubr.f32.mxu0 0.0
        %5800 = vmatmul.mubr.f32.gmra.mrb[0].mxu0 %v5673
        %v5801 = vpop.f32.mrb[0].mxu0
        %v5802 = vadd.f32 0.0, %v5801
        %v5803 = vpop.f32.mrb[0].mxu0
        %5804 = vmatprep.mubr.f32.mxu0 0.0
        %5805 = vmatmul.mubr.f32.gmra.mrb[0].mxu0 %v5675
        %v5806 = vpop.f32.mrb[0].mxu0
        %v5807 = vadd.f32 0.0, %v5806
        %v5808 = vpop.f32.mrb[0].mxu0
        %5809 = vmatprep.mubr.f32.mxu0 0.0
        %5810 = vmatmul.mubr.f32.gmra.mrb[0].mxu0 %v5677
        %v5811 = vpop.f32.mrb[0].mxu0
        %v5812 = vadd.f32 0.0, %v5811
        %v5813 = vpop.f32.mrb[0].mxu0
        %5814 = vmatprep.mubr.f32.mxu0 0.0
        %5815 = vmatmul.mubr.f32.gmra.mrb[0].mxu0 %v5679
        %v5816 = vpop.f32.mrb[0].mxu0
        %v5817 = vadd.f32 0.0, %v5816
        %v5818 = vpop.f32.mrb[0].mxu0
        %5819 = vmatprep.mubr.f32.mxu0 0.0
        %5820 = vmatmul.mubr.f32.gmra.mrb[0].mxu0 %v5681
        %v5821 = vpop.f32.mrb[0].mxu0
        %v5822 = vadd.f32 0.0, %v5821
        %v5823 = vpop.f32.mrb[0].mxu0
        %5824 = vmatprep.mubr.f32.mxu0 0.0
        %5825 = vmatmul.mubr.f32.gmra.mrb[0].mxu0 %v5683
        %v5826 = vpop.f32.mrb[0].mxu0
        %v5827 = vadd.f32 0.0, %v5826
        %v5828 = vpop.f32.mrb[0].mxu0
        %5829 = vdwg.mxu0
        %v5830 = vadd.f32 %v5634, %v5752
        %v5831 = vadd.f32 %v5635, %v5757
        %v5832 = vadd.f32 %v5636, %v5762
        %v5833 = vadd.f32 %v5637, %v5767
        %v5834 = vadd.f32 %v5638, %v5772
        %v5835 = vadd.f32 %v5639, %v5777
        %v5836 = vadd.f32 %v5640, %v5782
        %v5837 = vadd.f32 %v5641, %v5787
        %v5838 = vadd.f32 %v5642, %v5792
        %v5839 = vadd.f32 %v5643, %v5797
        %v5840 = vadd.f32 %v5644, %v5802
        %v5841 = vadd.f32 %v5645, %v5807
        %v5842 = vadd.f32 %v5646, %v5812
        %v5843 = vadd.f32 %v5647, %v5817
        %v5844 = vadd.f32 %v5648, %v5822
        %v5845 = vadd.f32 %v5649, %v5827
        %5846 = vst.msk [vmem:[#allocation4] sm:$0xff] %vm568, %v5830
        %5847 = vst.msk [vmem:[#allocation4 + $0x8] sm:$0xff] %vm568, %v5831
        %5848 = vst.msk [vmem:[#allocation4 + $0x10] sm:$0xff] %vm568, %v5832
        %5849 = vst.msk [vmem:[#allocation4 + $0x18] sm:$0xff] %vm568, %v5833
        %5850 = vst.msk [vmem:[#allocation4 + $0x20] sm:$0xff] %vm568, %v5834
        %5851 = vst.msk [vmem:[#allocation4 + $0x28] sm:$0xff] %vm568, %v5835
        %5852 = vst.msk [vmem:[#allocation4 + $0x30] sm:$0xff] %vm568, %v5836
        %5853 = vst.msk [vmem:[#allocation4 + $0x38] sm:$0xff] %vm568, %v5837
        %5854 = vst.msk [vmem:[#allocation4 + $0x40] sm:$0xff] %vm568, %v5838
        %5855 = vst.msk [vmem:[#allocation4 + $0x48] sm:$0xff] %vm568, %v5839
        %5856 = vst.msk [vmem:[#allocation4 + $0x50] sm:$0xff] %vm568, %v5840
        %5857 = vst.msk [vmem:[#allocation4 + $0x58] sm:$0xff] %vm568, %v5841
        %5858 = vst.msk [vmem:[#allocation4 + $0x60] sm:$0xff] %vm568, %v5842
        %5859 = vst.msk [vmem:[#allocation4 + $0x68] sm:$0xff] %vm568, %v5843
        %5860 = vst.msk [vmem:[#allocation4 + $0x70] sm:$0xff] %vm568, %v5844
        %5861 = vst.msk [vmem:[#allocation4 + $0x78] sm:$0xff] %vm568, %v5845
        %s5862 = scalar_lea.vmem [#allocation3], 48
        %v5863 = vld [vmem:[%s5862] sm:$0xff]
        %v5864 = vld [vmem:[%s5862 + $0x8] sm:$0xff]
        %v5865 = vld [vmem:[%s5862 + $0x10] sm:$0x3]
        %v5866 = vld [vmem:[%s5862 + $0x18] sm:$0xff]
        %v5867 = vld [vmem:[%s5862 + $0x20] sm:$0xff]
        %v5868 = vld [vmem:[%s5862 + $0x28] sm:$0x3]
        %v5869 = vld [vmem:[%s5862 + $0x30] sm:$0xff]
        %v5870 = vld [vmem:[%s5862 + $0x38] sm:$0xff]
        %v5871 = vld [vmem:[%s5862 + $0x40] sm:$0x3]
        %v5872 = vld [vmem:[%s5862 + $0x48] sm:$0xff]
        %v5873 = vld [vmem:[%s5862 + $0x50] sm:$0xff]
        %v5874 = vld [vmem:[%s5862 + $0x58] sm:$0x3]
        %v5875 = vld [vmem:[%s5862 + $0x60] sm:$0xff]
        %v5876 = vld [vmem:[%s5862 + $0x68] sm:$0xff]
        %v5877 = vld [vmem:[%s5862 + $0x70] sm:$0x3]
        %v5878 = vld [vmem:[%s5862 + $0x78] sm:$0xff]
        %v5879 = vld [vmem:[%s5862 + $0x80] sm:$0xff]
        %v5880 = vld [vmem:[%s5862 + $0x88] sm:$0x3]
        %v5881 = vld [vmem:[%s5862 + $0x90] sm:$0xff]
        %v5882 = vld [vmem:[%s5862 + $0x98] sm:$0xff]
        %v5883 = vld [vmem:[%s5862 + $0xa0] sm:$0x3]
        %v5884 = vld [vmem:[%s5862 + $0xa8] sm:$0xff]
        %v5885 = vld [vmem:[%s5862 + $0xb0] sm:$0xff]
        %v5886 = vld [vmem:[%s5862 + $0xb8] sm:$0x3]
        %v5887 = vld [vmem:[#allocation4] sm:$0xff]
        %v5888 = vld [vmem:[#allocation4 + $0x8] sm:$0xff]
        %v5889 = vld [vmem:[#allocation4 + $0x10] sm:$0xff]
        %v5890 = vld [vmem:[#allocation4 + $0x18] sm:$0xff]
        %v5891 = vld [vmem:[#allocation4 + $0x20] sm:$0xff]
        %v5892 = vld [vmem:[#allocation4 + $0x28] sm:$0xff]
        %v5893 = vld [vmem:[#allocation4 + $0x30] sm:$0xff]
        %v5894 = vld [vmem:[#allocation4 + $0x38] sm:$0xff]
        %v5895 = vld [vmem:[#allocation4 + $0x40] sm:$0xff]
        %v5896 = vld [vmem:[#allocation4 + $0x48] sm:$0xff]
        %v5897 = vld [vmem:[#allocation4 + $0x50] sm:$0xff]
        %v5898 = vld [vmem:[#allocation4 + $0x58] sm:$0xff]
        %v5899 = vld [vmem:[#allocation4 + $0x60] sm:$0xff]
        %v5900 = vld [vmem:[#allocation4 + $0x68] sm:$0xff]
        %v5901 = vld [vmem:[#allocation4 + $0x70] sm:$0xff]
        %v5902 = vld [vmem:[#allocation4 + $0x78] sm:$0xff]
        %s5903 = scalar_lea.vmem [#allocation13], 96
        %v5904 = vld [vmem:[%s5903] sm:$0xff]
        %v5905 = vld [vmem:[%s5903 + $0x8] sm:$0xff]
        %v5907 = vsel %vm568, %v5863, 0
        %v5910 = vsel %vm568, %v5864, 0
        %v5913 = vsel %vm568, %v5866, 0
        %v5916 = vsel %vm568, %v5867, 0
        %v5919 = vsel %vm568, %v5869, 0
        %v5922 = vsel %vm568, %v5870, 0
        %v5925 = vsel %vm568, %v5872, 0
        %v5928 = vsel %vm568, %v5873, 0
        %v5931 = vsel %vm568, %v5875, 0
        %v5934 = vsel %vm568, %v5876, 0
        %v5937 = vsel %vm568, %v5878, 0
        %v5940 = vsel %vm568, %v5879, 0
        %v5943 = vsel %vm568, %v5881, 0
        %v5946 = vsel %vm568, %v5882, 0
        %v5949 = vsel %vm568, %v5884, 0
        %v5952 = vsel %vm568, %v5885, 0
        %5954 = vmatprep.subr.mxu0 0.0
        %5955 = vmatpush1.msra.mxu0 %v5904
        %5956 = vmatprep.subr.mxu0 0.0
        %5957 = vmatpush1.msra.mxu0 %v5905
        %5958 = vmatprep.subr.mxu0 0.0
        %5959 = vmatpush1.msra.mxu0 0.0
        %5960 = vmatprep.subr.mxu0 0.0
        %5961 = vmatpush1.msra.mxu0 0.0
        %5962 = vmatprep.subr.mxu0 0.0
        %5963 = vmatpush1.msra.mxu0 0.0
        %5964 = vmatprep.subr.mxu0 0.0
        %5965 = vmatpush1.msra.mxu0 0.0
        %5966 = vmatprep.subr.mxu0 0.0
        %5967 = vmatpush1.msra.mxu0 0.0
        %5968 = vmatprep.subr.mxu0 0.0
        %5969 = vmatpush1.msra.mxu0 0.0
        %5970 = vmatprep.subr.mxu0 0.0
        %5971 = vmatpush1.msra.mxu0 0.0
        %5972 = vmatprep.subr.mxu0 0.0
        %5973 = vmatpush1.msra.mxu0 0.0
        %5974 = vmatprep.subr.mxu0 0.0
        %5975 = vmatpush1.msra.mxu0 0.0
        %5976 = vmatprep.subr.mxu0 0.0
        %5977 = vmatpush1.msra.mxu0 0.0
        %5978 = vmatprep.subr.mxu0 0.0
        %5979 = vmatpush1.msra.mxu0 0.0
        %5980 = vmatprep.subr.mxu0 0.0
        %5981 = vmatpush1.msra.mxu0 0.0
        %5982 = vmatprep.subr.mxu0 0.0
        %5983 = vmatpush1.msra.mxu0 0.0
        %5984 = vmatprep.subr.mxu0 0.0
        %5985 = vmatpush1.msra.mxu0 0.0
        %5986 = vmatprep.subr.mxu0 0.0
        %5987 = vmatpush1.msra.mxu0 0.0
        %5988 = vmatprep.subr.mxu0 0.0
        %5989 = vmatpush1.msra.mxu0 0.0
        %5990 = vmatprep.subr.mxu0 0.0
        %5991 = vmatpush1.msra.mxu0 0.0
        %5992 = vmatprep.subr.mxu0 0.0
        %5993 = vmatpush1.msra.mxu0 0.0
        %5994 = vmatprep.subr.mxu0 0.0
        %5995 = vmatpush1.msra.mxu0 0.0
        %5996 = vmatprep.subr.mxu0 0.0
        %5997 = vmatpush1.msra.mxu0 0.0
        %5998 = vmatprep.subr.mxu0 0.0
        %5999 = vmatpush1.msra.mxu0 0.0
        %6000 = vmatprep.subr.mxu0 0.0
        %6001 = vmatpush1.msra.mxu0 0.0
        %6002 = vmatprep.subr.mxu0 0.0
        %6003 = vmatpush1.msra.mxu0 0.0
        %6004 = vmatprep.subr.mxu0 0.0
        %6005 = vmatpush1.msra.mxu0 0.0
        %6006 = vmatprep.subr.mxu0 0.0
        %6007 = vmatpush1.msra.mxu0 0.0
        %6008 = vmatprep.subr.mxu0 0.0
        %6009 = vmatpush1.msra.mxu0 0.0
        %6010 = vmatprep.subr.mxu0 0.0
        %6011 = vmatpush1.msra.mxu0 0.0
        %6012 = vmatprep.subr.mxu0 0.0
        %6013 = vmatpush1.msra.mxu0 0.0
        %6014 = vmatprep.subr.mxu0 0.0
        %6015 = vmatpush1.msra.mxu0 0.0
        %6016 = vmatprep.subr.mxu0 0.0
        %6017 = vmatpush1.msra.mxu0 0.0
        %6018 = vmatprep.mubr.f32.mxu0 0.0
        %6019 = vmatmul.mubr.f32.gmra.mrb[0].mxu0 %v5907
        %v6020 = vpop.f32.mrb[0].mxu0
        %v6021 = vadd.f32 0.0, %v6020
        %v6022 = vpop.f32.mrb[0].mxu0
        %6023 = vmatprep.mubr.f32.mxu0 0.0
        %6024 = vmatmul.mubr.f32.gmra.mrb[0].mxu0 %v5910
        %v6025 = vpop.f32.mrb[0].mxu0
        %v6026 = vadd.f32 0.0, %v6025
        %v6027 = vpop.f32.mrb[0].mxu0
        %6028 = vmatprep.mubr.f32.mxu0 0.0
        %6029 = vmatmul.mubr.f32.gmra.mrb[0].mxu0 %v5913
        %v6030 = vpop.f32.mrb[0].mxu0
        %v6031 = vadd.f32 0.0, %v6030
        %v6032 = vpop.f32.mrb[0].mxu0
        %6033 = vmatprep.mubr.f32.mxu0 0.0
        %6034 = vmatmul.mubr.f32.gmra.mrb[0].mxu0 %v5916
        %v6035 = vpop.f32.mrb[0].mxu0
        %v6036 = vadd.f32 0.0, %v6035
        %v6037 = vpop.f32.mrb[0].mxu0
        %6038 = vmatprep.mubr.f32.mxu0 0.0
        %6039 = vmatmul.mubr.f32.gmra.mrb[0].mxu0 %v5919
        %v6040 = vpop.f32.mrb[0].mxu0
        %v6041 = vadd.f32 0.0, %v6040
        %v6042 = vpop.f32.mrb[0].mxu0
        %6043 = vmatprep.mubr.f32.mxu0 0.0
        %6044 = vmatmul.mubr.f32.gmra.mrb[0].mxu0 %v5922
        %v6045 = vpop.f32.mrb[0].mxu0
        %v6046 = vadd.f32 0.0, %v6045
        %v6047 = vpop.f32.mrb[0].mxu0
        %6048 = vmatprep.mubr.f32.mxu0 0.0
        %6049 = vmatmul.mubr.f32.gmra.mrb[0].mxu0 %v5925
        %v6050 = vpop.f32.mrb[0].mxu0
        %v6051 = vadd.f32 0.0, %v6050
        %v6052 = vpop.f32.mrb[0].mxu0
        %6053 = vmatprep.mubr.f32.mxu0 0.0
        %6054 = vmatmul.mubr.f32.gmra.mrb[0].mxu0 %v5928
        %v6055 = vpop.f32.mrb[0].mxu0
        %v6056 = vadd.f32 0.0, %v6055
        %v6057 = vpop.f32.mrb[0].mxu0
        %6058 = vmatprep.mubr.f32.mxu0 0.0
        %6059 = vmatmul.mubr.f32.gmra.mrb[0].mxu0 %v5931
        %v6060 = vpop.f32.mrb[0].mxu0
        %v6061 = vadd.f32 0.0, %v6060
        %v6062 = vpop.f32.mrb[0].mxu0
        %6063 = vmatprep.mubr.f32.mxu0 0.0
        %6064 = vmatmul.mubr.f32.gmra.mrb[0].mxu0 %v5934
        %v6065 = vpop.f32.mrb[0].mxu0
        %v6066 = vadd.f32 0.0, %v6065
        %v6067 = vpop.f32.mrb[0].mxu0
        %6068 = vmatprep.mubr.f32.mxu0 0.0
        %6069 = vmatmul.mubr.f32.gmra.mrb[0].mxu0 %v5937
        %v6070 = vpop.f32.mrb[0].mxu0
        %v6071 = vadd.f32 0.0, %v6070
        %v6072 = vpop.f32.mrb[0].mxu0
        %6073 = vmatprep.mubr.f32.mxu0 0.0
        %6074 = vmatmul.mubr.f32.gmra.mrb[0].mxu0 %v5940
        %v6075 = vpop.f32.mrb[0].mxu0
        %v6076 = vadd.f32 0.0, %v6075
        %v6077 = vpop.f32.mrb[0].mxu0
        %6078 = vmatprep.mubr.f32.mxu0 0.0
        %6079 = vmatmul.mubr.f32.gmra.mrb[0].mxu0 %v5943
        %v6080 = vpop.f32.mrb[0].mxu0
        %v6081 = vadd.f32 0.0, %v6080
        %v6082 = vpop.f32.mrb[0].mxu0
        %6083 = vmatprep.mubr.f32.mxu0 0.0
        %6084 = vmatmul.mubr.f32.gmra.mrb[0].mxu0 %v5946
        %v6085 = vpop.f32.mrb[0].mxu0
        %v6086 = vadd.f32 0.0, %v6085
        %v6087 = vpop.f32.mrb[0].mxu0
        %6088 = vmatprep.mubr.f32.mxu0 0.0
        %6089 = vmatmul.mubr.f32.gmra.mrb[0].mxu0 %v5949
        %v6090 = vpop.f32.mrb[0].mxu0
        %v6091 = vadd.f32 0.0, %v6090
        %v6092 = vpop.f32.mrb[0].mxu0
        %6093 = vmatprep.mubr.f32.mxu0 0.0
        %6094 = vmatmul.mubr.f32.gmra.mrb[0].mxu0 %v5952
        %v6095 = vpop.f32.mrb[0].mxu0
        %v6096 = vadd.f32 0.0, %v6095
        %v6097 = vpop.f32.mrb[0].mxu0
        %6098 = vdwg.mxu0
        %v6099 = vadd.f32 %v5887, %v6021
        %v6100 = vadd.f32 %v5888, %v6026
        %v6101 = vadd.f32 %v5889, %v6031
        %v6102 = vadd.f32 %v5890, %v6036
        %v6103 = vadd.f32 %v5891, %v6041
        %v6104 = vadd.f32 %v5892, %v6046
        %v6105 = vadd.f32 %v5893, %v6051
        %v6106 = vadd.f32 %v5894, %v6056
        %v6107 = vadd.f32 %v5895, %v6061
        %v6108 = vadd.f32 %v5896, %v6066
        %v6109 = vadd.f32 %v5897, %v6071
        %v6110 = vadd.f32 %v5898, %v6076
        %v6111 = vadd.f32 %v5899, %v6081
        %v6112 = vadd.f32 %v5900, %v6086
        %v6113 = vadd.f32 %v5901, %v6091
        %v6114 = vadd.f32 %v5902, %v6096
        %6115 = vst.msk [vmem:[#allocation4] sm:$0xff] %vm568, %v6099
        %6116 = vst.msk [vmem:[#allocation4 + $0x8] sm:$0xff] %vm568, %v6100
        %6117 = vst.msk [vmem:[#allocation4 + $0x10] sm:$0xff] %vm568, %v6101
        %6118 = vst.msk [vmem:[#allocation4 + $0x18] sm:$0xff] %vm568, %v6102
        %6119 = vst.msk [vmem:[#allocation4 + $0x20] sm:$0xff] %vm568, %v6103
        %6120 = vst.msk [vmem:[#allocation4 + $0x28] sm:$0xff] %vm568, %v6104
        %6121 = vst.msk [vmem:[#allocation4 + $0x30] sm:$0xff] %vm568, %v6105
        %6122 = vst.msk [vmem:[#allocation4 + $0x38] sm:$0xff] %vm568, %v6106
        %6123 = vst.msk [vmem:[#allocation4 + $0x40] sm:$0xff] %vm568, %v6107
        %6124 = vst.msk [vmem:[#allocation4 + $0x48] sm:$0xff] %vm568, %v6108
        %6125 = vst.msk [vmem:[#allocation4 + $0x50] sm:$0xff] %vm568, %v6109
        %6126 = vst.msk [vmem:[#allocation4 + $0x58] sm:$0xff] %vm568, %v6110
        %6127 = vst.msk [vmem:[#allocation4 + $0x60] sm:$0xff] %vm568, %v6111
        %6128 = vst.msk [vmem:[#allocation4 + $0x68] sm:$0xff] %vm568, %v6112
        %6129 = vst.msk [vmem:[#allocation4 + $0x70] sm:$0xff] %vm568, %v6113
        %6130 = vst.msk [vmem:[#allocation4 + $0x78] sm:$0xff] %vm568, %v6114
        %v6139 = vrot.slane %v5863, 1
        %v6140 = vrot.slane %v5864, 1
        %v6141 = vsel %vm859, %v6139, %v6140
        %v6142 = vrot.slane %v5865, 1
        %v6143 = vsel %vm859, %v6140, %v6142
        %v6144 = vrot.slane %v5866, 1
        %v6145 = vrot.slane %v5867, 1
        %v6146 = vsel %vm859, %v6144, %v6145
        %v6147 = vrot.slane %v5868, 1
        %v6148 = vsel %vm859, %v6145, %v6147
        %v6149 = vrot.slane %v5869, 1
        %v6150 = vrot.slane %v5870, 1
        %v6151 = vsel %vm859, %v6149, %v6150
        %v6152 = vrot.slane %v5871, 1
        %v6153 = vsel %vm859, %v6150, %v6152
        %v6154 = vrot.slane %v5872, 1
        %v6155 = vrot.slane %v5873, 1
        %v6156 = vsel %vm859, %v6154, %v6155
        %v6157 = vrot.slane %v5874, 1
        %v6158 = vsel %vm859, %v6155, %v6157
        %v6159 = vrot.slane %v5875, 1
        %v6160 = vrot.slane %v5876, 1
        %v6161 = vsel %vm859, %v6159, %v6160
        %v6162 = vrot.slane %v5877, 1
        %v6163 = vsel %vm859, %v6160, %v6162
        %v6164 = vrot.slane %v5878, 1
        %v6165 = vrot.slane %v5879, 1
        %v6166 = vsel %vm859, %v6164, %v6165
        %v6167 = vrot.slane %v5880, 1
        %v6168 = vsel %vm859, %v6165, %v6167
        %v6169 = vrot.slane %v5881, 1
        %v6170 = vrot.slane %v5882, 1
        %v6171 = vsel %vm859, %v6169, %v6170
        %v6172 = vrot.slane %v5883, 1
        %v6173 = vsel %vm859, %v6170, %v6172
        %v6174 = vrot.slane %v5884, 1
        %v6175 = vrot.slane %v5885, 1
        %v6176 = vsel %vm859, %v6174, %v6175
        %v6177 = vrot.slane %v5886, 1
        %v6178 = vsel %vm859, %v6175, %v6177
        %v6179 = vld [vmem:[#allocation4] sm:$0xff]
        %v6180 = vld [vmem:[#allocation4 + $0x8] sm:$0xff]
        %v6181 = vld [vmem:[#allocation4 + $0x10] sm:$0xff]
        %v6182 = vld [vmem:[#allocation4 + $0x18] sm:$0xff]
        %v6183 = vld [vmem:[#allocation4 + $0x20] sm:$0xff]
        %v6184 = vld [vmem:[#allocation4 + $0x28] sm:$0xff]
        %v6185 = vld [vmem:[#allocation4 + $0x30] sm:$0xff]
        %v6186 = vld [vmem:[#allocation4 + $0x38] sm:$0xff]
        %v6187 = vld [vmem:[#allocation4 + $0x40] sm:$0xff]
        %v6188 = vld [vmem:[#allocation4 + $0x48] sm:$0xff]
        %v6189 = vld [vmem:[#allocation4 + $0x50] sm:$0xff]
        %v6190 = vld [vmem:[#allocation4 + $0x58] sm:$0xff]
        %v6191 = vld [vmem:[#allocation4 + $0x60] sm:$0xff]
        %v6192 = vld [vmem:[#allocation4 + $0x68] sm:$0xff]
        %v6193 = vld [vmem:[#allocation4 + $0x70] sm:$0xff]
        %v6194 = vld [vmem:[#allocation4 + $0x78] sm:$0xff]
        %s6195 = scalar_lea.vmem [#allocation13], 112
        %v6196 = vld [vmem:[%s6195] sm:$0xff]
        %v6197 = vld [vmem:[%s6195 + $0x8] sm:$0xff]
        %v6198 = vsel %vm568, %v6141, 0
        %v6200 = vsel %vm568, %v6143, 0
        %v6202 = vsel %vm568, %v6146, 0
        %v6204 = vsel %vm568, %v6148, 0
        %v6206 = vsel %vm568, %v6151, 0
        %v6208 = vsel %vm568, %v6153, 0
        %v6210 = vsel %vm568, %v6156, 0
        %v6212 = vsel %vm568, %v6158, 0
        %v6214 = vsel %vm568, %v6161, 0
        %v6216 = vsel %vm568, %v6163, 0
        %v6218 = vsel %vm568, %v6166, 0
        %v6220 = vsel %vm568, %v6168, 0
        %v6222 = vsel %vm568, %v6171, 0
        %v6224 = vsel %vm568, %v6173, 0
        %v6226 = vsel %vm568, %v6176, 0
        %v6228 = vsel %vm568, %v6178, 0
        %6230 = vmatprep.subr.mxu0 0.0
        %6231 = vmatpush1.msra.mxu0 %v6196
        %6232 = vmatprep.subr.mxu0 0.0
        %6233 = vmatpush1.msra.mxu0 %v6197
        %6234 = vmatprep.subr.mxu0 0.0
        %6235 = vmatpush1.msra.mxu0 0.0
        %6236 = vmatprep.subr.mxu0 0.0
        %6237 = vmatpush1.msra.mxu0 0.0
        %6238 = vmatprep.subr.mxu0 0.0
        %6239 = vmatpush1.msra.mxu0 0.0
        %6240 = vmatprep.subr.mxu0 0.0
        %6241 = vmatpush1.msra.mxu0 0.0
        %6242 = vmatprep.subr.mxu0 0.0
        %6243 = vmatpush1.msra.mxu0 0.0
        %6244 = vmatprep.subr.mxu0 0.0
        %6245 = vmatpush1.msra.mxu0 0.0
        %6246 = vmatprep.subr.mxu0 0.0
        %6247 = vmatpush1.msra.mxu0 0.0
        %6248 = vmatprep.subr.mxu0 0.0
        %6249 = vmatpush1.msra.mxu0 0.0
        %6250 = vmatprep.subr.mxu0 0.0
        %6251 = vmatpush1.msra.mxu0 0.0
        %6252 = vmatprep.subr.mxu0 0.0
        %6253 = vmatpush1.msra.mxu0 0.0
        %6254 = vmatprep.subr.mxu0 0.0
        %6255 = vmatpush1.msra.mxu0 0.0
        %6256 = vmatprep.subr.mxu0 0.0
        %6257 = vmatpush1.msra.mxu0 0.0
        %6258 = vmatprep.subr.mxu0 0.0
        %6259 = vmatpush1.msra.mxu0 0.0
        %6260 = vmatprep.subr.mxu0 0.0
        %6261 = vmatpush1.msra.mxu0 0.0
        %6262 = vmatprep.subr.mxu0 0.0
        %6263 = vmatpush1.msra.mxu0 0.0
        %6264 = vmatprep.subr.mxu0 0.0
        %6265 = vmatpush1.msra.mxu0 0.0
        %6266 = vmatprep.subr.mxu0 0.0
        %6267 = vmatpush1.msra.mxu0 0.0
        %6268 = vmatprep.subr.mxu0 0.0
        %6269 = vmatpush1.msra.mxu0 0.0
        %6270 = vmatprep.subr.mxu0 0.0
        %6271 = vmatpush1.msra.mxu0 0.0
        %6272 = vmatprep.subr.mxu0 0.0
        %6273 = vmatpush1.msra.mxu0 0.0
        %6274 = vmatprep.subr.mxu0 0.0
        %6275 = vmatpush1.msra.mxu0 0.0
        %6276 = vmatprep.subr.mxu0 0.0
        %6277 = vmatpush1.msra.mxu0 0.0
        %6278 = vmatprep.subr.mxu0 0.0
        %6279 = vmatpush1.msra.mxu0 0.0
        %6280 = vmatprep.subr.mxu0 0.0
        %6281 = vmatpush1.msra.mxu0 0.0
        %6282 = vmatprep.subr.mxu0 0.0
        %6283 = vmatpush1.msra.mxu0 0.0
        %6284 = vmatprep.subr.mxu0 0.0
        %6285 = vmatpush1.msra.mxu0 0.0
        %6286 = vmatprep.subr.mxu0 0.0
        %6287 = vmatpush1.msra.mxu0 0.0
        %6288 = vmatprep.subr.mxu0 0.0
        %6289 = vmatpush1.msra.mxu0 0.0
        %6290 = vmatprep.subr.mxu0 0.0
        %6291 = vmatpush1.msra.mxu0 0.0
        %6292 = vmatprep.subr.mxu0 0.0
        %6293 = vmatpush1.msra.mxu0 0.0
        %6294 = vmatprep.mubr.f32.mxu0 0.0
        %6295 = vmatmul.mubr.f32.gmra.mrb[0].mxu0 %v6198
        %v6296 = vpop.f32.mrb[0].mxu0
        %v6297 = vadd.f32 0.0, %v6296
        %v6298 = vpop.f32.mrb[0].mxu0
        %6299 = vmatprep.mubr.f32.mxu0 0.0
        %6300 = vmatmul.mubr.f32.gmra.mrb[0].mxu0 %v6200
        %v6301 = vpop.f32.mrb[0].mxu0
        %v6302 = vadd.f32 0.0, %v6301
        %v6303 = vpop.f32.mrb[0].mxu0
        %6304 = vmatprep.mubr.f32.mxu0 0.0
        %6305 = vmatmul.mubr.f32.gmra.mrb[0].mxu0 %v6202
        %v6306 = vpop.f32.mrb[0].mxu0
        %v6307 = vadd.f32 0.0, %v6306
        %v6308 = vpop.f32.mrb[0].mxu0
        %6309 = vmatprep.mubr.f32.mxu0 0.0
        %6310 = vmatmul.mubr.f32.gmra.mrb[0].mxu0 %v6204
        %v6311 = vpop.f32.mrb[0].mxu0
        %v6312 = vadd.f32 0.0, %v6311
        %v6313 = vpop.f32.mrb[0].mxu0
        %6314 = vmatprep.mubr.f32.mxu0 0.0
        %6315 = vmatmul.mubr.f32.gmra.mrb[0].mxu0 %v6206
        %v6316 = vpop.f32.mrb[0].mxu0
        %v6317 = vadd.f32 0.0, %v6316
        %v6318 = vpop.f32.mrb[0].mxu0
        %6319 = vmatprep.mubr.f32.mxu0 0.0
        %6320 = vmatmul.mubr.f32.gmra.mrb[0].mxu0 %v6208
        %v6321 = vpop.f32.mrb[0].mxu0
        %v6322 = vadd.f32 0.0, %v6321
        %v6323 = vpop.f32.mrb[0].mxu0
        %6324 = vmatprep.mubr.f32.mxu0 0.0
        %6325 = vmatmul.mubr.f32.gmra.mrb[0].mxu0 %v6210
        %v6326 = vpop.f32.mrb[0].mxu0
        %v6327 = vadd.f32 0.0, %v6326
        %v6328 = vpop.f32.mrb[0].mxu0
        %6329 = vmatprep.mubr.f32.mxu0 0.0
        %6330 = vmatmul.mubr.f32.gmra.mrb[0].mxu0 %v6212
        %v6331 = vpop.f32.mrb[0].mxu0
        %v6332 = vadd.f32 0.0, %v6331
        %v6333 = vpop.f32.mrb[0].mxu0
        %6334 = vmatprep.mubr.f32.mxu0 0.0
        %6335 = vmatmul.mubr.f32.gmra.mrb[0].mxu0 %v6214
        %v6336 = vpop.f32.mrb[0].mxu0
        %v6337 = vadd.f32 0.0, %v6336
        %v6338 = vpop.f32.mrb[0].mxu0
        %6339 = vmatprep.mubr.f32.mxu0 0.0
        %6340 = vmatmul.mubr.f32.gmra.mrb[0].mxu0 %v6216
        %v6341 = vpop.f32.mrb[0].mxu0
        %v6342 = vadd.f32 0.0, %v6341
        %v6343 = vpop.f32.mrb[0].mxu0
        %6344 = vmatprep.mubr.f32.mxu0 0.0
        %6345 = vmatmul.mubr.f32.gmra.mrb[0].mxu0 %v6218
        %v6346 = vpop.f32.mrb[0].mxu0
        %v6347 = vadd.f32 0.0, %v6346
        %v6348 = vpop.f32.mrb[0].mxu0
        %6349 = vmatprep.mubr.f32.mxu0 0.0
        %6350 = vmatmul.mubr.f32.gmra.mrb[0].mxu0 %v6220
        %v6351 = vpop.f32.mrb[0].mxu0
        %v6352 = vadd.f32 0.0, %v6351
        %v6353 = vpop.f32.mrb[0].mxu0
        %6354 = vmatprep.mubr.f32.mxu0 0.0
        %6355 = vmatmul.mubr.f32.gmra.mrb[0].mxu0 %v6222
        %v6356 = vpop.f32.mrb[0].mxu0
        %v6357 = vadd.f32 0.0, %v6356
        %v6358 = vpop.f32.mrb[0].mxu0
        %6359 = vmatprep.mubr.f32.mxu0 0.0
        %6360 = vmatmul.mubr.f32.gmra.mrb[0].mxu0 %v6224
        %v6361 = vpop.f32.mrb[0].mxu0
        %v6362 = vadd.f32 0.0, %v6361
        %v6363 = vpop.f32.mrb[0].mxu0
        %6364 = vmatprep.mubr.f32.mxu0 0.0
        %6365 = vmatmul.mubr.f32.gmra.mrb[0].mxu0 %v6226
        %v6366 = vpop.f32.mrb[0].mxu0
        %v6367 = vadd.f32 0.0, %v6366
        %v6368 = vpop.f32.mrb[0].mxu0
        %6369 = vmatprep.mubr.f32.mxu0 0.0
        %6370 = vmatmul.mubr.f32.gmra.mrb[0].mxu0 %v6228
        %v6371 = vpop.f32.mrb[0].mxu0
        %v6372 = vadd.f32 0.0, %v6371
        %v6373 = vpop.f32.mrb[0].mxu0
        %6374 = vdwg.mxu0
        %v6375 = vadd.f32 %v6179, %v6297
        %v6376 = vadd.f32 %v6180, %v6302
        %v6377 = vadd.f32 %v6181, %v6307
        %v6378 = vadd.f32 %v6182, %v6312
        %v6379 = vadd.f32 %v6183, %v6317
        %v6380 = vadd.f32 %v6184, %v6322
        %v6381 = vadd.f32 %v6185, %v6327
        %v6382 = vadd.f32 %v6186, %v6332
        %v6383 = vadd.f32 %v6187, %v6337
        %v6384 = vadd.f32 %v6188, %v6342
        %v6385 = vadd.f32 %v6189, %v6347
        %v6386 = vadd.f32 %v6190, %v6352
        %v6387 = vadd.f32 %v6191, %v6357
        %v6388 = vadd.f32 %v6192, %v6362
        %v6389 = vadd.f32 %v6193, %v6367
        %v6390 = vadd.f32 %v6194, %v6372
        %6391 = vst.msk [vmem:[#allocation4] sm:$0xff] %vm568, %v6375
        %6392 = vst.msk [vmem:[#allocation4 + $0x8] sm:$0xff] %vm568, %v6376
        %6393 = vst.msk [vmem:[#allocation4 + $0x10] sm:$0xff] %vm568, %v6377
        %6394 = vst.msk [vmem:[#allocation4 + $0x18] sm:$0xff] %vm568, %v6378
        %6395 = vst.msk [vmem:[#allocation4 + $0x20] sm:$0xff] %vm568, %v6379
        %6396 = vst.msk [vmem:[#allocation4 + $0x28] sm:$0xff] %vm568, %v6380
        %6397 = vst.msk [vmem:[#allocation4 + $0x30] sm:$0xff] %vm568, %v6381
        %6398 = vst.msk [vmem:[#allocation4 + $0x38] sm:$0xff] %vm568, %v6382
        %6399 = vst.msk [vmem:[#allocation4 + $0x40] sm:$0xff] %vm568, %v6383
        %6400 = vst.msk [vmem:[#allocation4 + $0x48] sm:$0xff] %vm568, %v6384
        %6401 = vst.msk [vmem:[#allocation4 + $0x50] sm:$0xff] %vm568, %v6385
        %6402 = vst.msk [vmem:[#allocation4 + $0x58] sm:$0xff] %vm568, %v6386
        %6403 = vst.msk [vmem:[#allocation4 + $0x60] sm:$0xff] %vm568, %v6387
        %6404 = vst.msk [vmem:[#allocation4 + $0x68] sm:$0xff] %vm568, %v6388
        %6405 = vst.msk [vmem:[#allocation4 + $0x70] sm:$0xff] %vm568, %v6389
        %6406 = vst.msk [vmem:[#allocation4 + $0x78] sm:$0xff] %vm568, %v6390
        %v6407 = vrot.slane %v5863, 2
        %v6408 = vrot.slane %v5864, 2
        %v6409 = vsel %vm1127, %v6407, %v6408
        %v6410 = vrot.slane %v5865, 2
        %v6411 = vsel %vm1127, %v6408, %v6410
        %v6412 = vrot.slane %v5866, 2
        %v6413 = vrot.slane %v5867, 2
        %v6414 = vsel %vm1127, %v6412, %v6413
        %v6415 = vrot.slane %v5868, 2
        %v6416 = vsel %vm1127, %v6413, %v6415
        %v6417 = vrot.slane %v5869, 2
        %v6418 = vrot.slane %v5870, 2
        %v6419 = vsel %vm1127, %v6417, %v6418
        %v6420 = vrot.slane %v5871, 2
        %v6421 = vsel %vm1127, %v6418, %v6420
        %v6422 = vrot.slane %v5872, 2
        %v6423 = vrot.slane %v5873, 2
        %v6424 = vsel %vm1127, %v6422, %v6423
        %v6425 = vrot.slane %v5874, 2
        %v6426 = vsel %vm1127, %v6423, %v6425
        %v6427 = vrot.slane %v5875, 2
        %v6428 = vrot.slane %v5876, 2
        %v6429 = vsel %vm1127, %v6427, %v6428
        %v6430 = vrot.slane %v5877, 2
        %v6431 = vsel %vm1127, %v6428, %v6430
        %v6432 = vrot.slane %v5878, 2
        %v6433 = vrot.slane %v5879, 2
        %v6434 = vsel %vm1127, %v6432, %v6433
        %v6435 = vrot.slane %v5880, 2
        %v6436 = vsel %vm1127, %v6433, %v6435
        %v6437 = vrot.slane %v5881, 2
        %v6438 = vrot.slane %v5882, 2
        %v6439 = vsel %vm1127, %v6437, %v6438
        %v6440 = vrot.slane %v5883, 2
        %v6441 = vsel %vm1127, %v6438, %v6440
        %v6442 = vrot.slane %v5884, 2
        %v6443 = vrot.slane %v5885, 2
        %v6444 = vsel %vm1127, %v6442, %v6443
        %v6445 = vrot.slane %v5886, 2
        %v6446 = vsel %vm1127, %v6443, %v6445
        %v6447 = vld [vmem:[#allocation4] sm:$0xff]
        %v6448 = vld [vmem:[#allocation4 + $0x8] sm:$0xff]
        %v6449 = vld [vmem:[#allocation4 + $0x10] sm:$0xff]
        %v6450 = vld [vmem:[#allocation4 + $0x18] sm:$0xff]
        %v6451 = vld [vmem:[#allocation4 + $0x20] sm:$0xff]
        %v6452 = vld [vmem:[#allocation4 + $0x28] sm:$0xff]
        %v6453 = vld [vmem:[#allocation4 + $0x30] sm:$0xff]
        %v6454 = vld [vmem:[#allocation4 + $0x38] sm:$0xff]
        %v6455 = vld [vmem:[#allocation4 + $0x40] sm:$0xff]
        %v6456 = vld [vmem:[#allocation4 + $0x48] sm:$0xff]
        %v6457 = vld [vmem:[#allocation4 + $0x50] sm:$0xff]
        %v6458 = vld [vmem:[#allocation4 + $0x58] sm:$0xff]
        %v6459 = vld [vmem:[#allocation4 + $0x60] sm:$0xff]
        %v6460 = vld [vmem:[#allocation4 + $0x68] sm:$0xff]
        %v6461 = vld [vmem:[#allocation4 + $0x70] sm:$0xff]
        %v6462 = vld [vmem:[#allocation4 + $0x78] sm:$0xff]
        %s6463 = scalar_lea.vmem [#allocation13], 128
        %v6464 = vld [vmem:[%s6463] sm:$0xff]
        %v6465 = vld [vmem:[%s6463 + $0x8] sm:$0xff]
        %v6466 = vsel %vm568, %v6409, 0
        %v6468 = vsel %vm568, %v6411, 0
        %v6470 = vsel %vm568, %v6414, 0
        %v6472 = vsel %vm568, %v6416, 0
        %v6474 = vsel %vm568, %v6419, 0
        %v6476 = vsel %vm568, %v6421, 0
        %v6478 = vsel %vm568, %v6424, 0
        %v6480 = vsel %vm568, %v6426, 0
        %v6482 = vsel %vm568, %v6429, 0
        %v6484 = vsel %vm568, %v6431, 0
        %v6486 = vsel %vm568, %v6434, 0
        %v6488 = vsel %vm568, %v6436, 0
        %v6490 = vsel %vm568, %v6439, 0
        %v6492 = vsel %vm568, %v6441, 0
        %v6494 = vsel %vm568, %v6444, 0
        %v6496 = vsel %vm568, %v6446, 0
        %6498 = vmatprep.subr.mxu0 0.0
        %6499 = vmatpush1.msra.mxu0 %v6464
        %6500 = vmatprep.subr.mxu0 0.0
        %6501 = vmatpush1.msra.mxu0 %v6465
        %6502 = vmatprep.subr.mxu0 0.0
        %6503 = vmatpush1.msra.mxu0 0.0
        %6504 = vmatprep.subr.mxu0 0.0
        %6505 = vmatpush1.msra.mxu0 0.0
        %6506 = vmatprep.subr.mxu0 0.0
        %6507 = vmatpush1.msra.mxu0 0.0
        %6508 = vmatprep.subr.mxu0 0.0
        %6509 = vmatpush1.msra.mxu0 0.0
        %6510 = vmatprep.subr.mxu0 0.0
        %6511 = vmatpush1.msra.mxu0 0.0
        %6512 = vmatprep.subr.mxu0 0.0
        %6513 = vmatpush1.msra.mxu0 0.0
        %6514 = vmatprep.subr.mxu0 0.0
        %6515 = vmatpush1.msra.mxu0 0.0
        %6516 = vmatprep.subr.mxu0 0.0
        %6517 = vmatpush1.msra.mxu0 0.0
        %6518 = vmatprep.subr.mxu0 0.0
        %6519 = vmatpush1.msra.mxu0 0.0
        %6520 = vmatprep.subr.mxu0 0.0
        %6521 = vmatpush1.msra.mxu0 0.0
        %6522 = vmatprep.subr.mxu0 0.0
        %6523 = vmatpush1.msra.mxu0 0.0
        %6524 = vmatprep.subr.mxu0 0.0
        %6525 = vmatpush1.msra.mxu0 0.0
        %6526 = vmatprep.subr.mxu0 0.0
        %6527 = vmatpush1.msra.mxu0 0.0
        %6528 = vmatprep.subr.mxu0 0.0
        %6529 = vmatpush1.msra.mxu0 0.0
        %6530 = vmatprep.subr.mxu0 0.0
        %6531 = vmatpush1.msra.mxu0 0.0
        %6532 = vmatprep.subr.mxu0 0.0
        %6533 = vmatpush1.msra.mxu0 0.0
        %6534 = vmatprep.subr.mxu0 0.0
        %6535 = vmatpush1.msra.mxu0 0.0
        %6536 = vmatprep.subr.mxu0 0.0
        %6537 = vmatpush1.msra.mxu0 0.0
        %6538 = vmatprep.subr.mxu0 0.0
        %6539 = vmatpush1.msra.mxu0 0.0
        %6540 = vmatprep.subr.mxu0 0.0
        %6541 = vmatpush1.msra.mxu0 0.0
        %6542 = vmatprep.subr.mxu0 0.0
        %6543 = vmatpush1.msra.mxu0 0.0
        %6544 = vmatprep.subr.mxu0 0.0
        %6545 = vmatpush1.msra.mxu0 0.0
        %6546 = vmatprep.subr.mxu0 0.0
        %6547 = vmatpush1.msra.mxu0 0.0
        %6548 = vmatprep.subr.mxu0 0.0
        %6549 = vmatpush1.msra.mxu0 0.0
        %6550 = vmatprep.subr.mxu0 0.0
        %6551 = vmatpush1.msra.mxu0 0.0
        %6552 = vmatprep.subr.mxu0 0.0
        %6553 = vmatpush1.msra.mxu0 0.0
        %6554 = vmatprep.subr.mxu0 0.0
        %6555 = vmatpush1.msra.mxu0 0.0
        %6556 = vmatprep.subr.mxu0 0.0
        %6557 = vmatpush1.msra.mxu0 0.0
        %6558 = vmatprep.subr.mxu0 0.0
        %6559 = vmatpush1.msra.mxu0 0.0
        %6560 = vmatprep.subr.mxu0 0.0
        %6561 = vmatpush1.msra.mxu0 0.0
        %6562 = vmatprep.mubr.f32.mxu0 0.0
        %6563 = vmatmul.mubr.f32.gmra.mrb[0].mxu0 %v6466
        %v6564 = vpop.f32.mrb[0].mxu0
        %v6565 = vadd.f32 0.0, %v6564
        %v6566 = vpop.f32.mrb[0].mxu0
        %6567 = vmatprep.mubr.f32.mxu0 0.0
        %6568 = vmatmul.mubr.f32.gmra.mrb[0].mxu0 %v6468
        %v6569 = vpop.f32.mrb[0].mxu0
        %v6570 = vadd.f32 0.0, %v6569
        %v6571 = vpop.f32.mrb[0].mxu0
        %6572 = vmatprep.mubr.f32.mxu0 0.0
        %6573 = vmatmul.mubr.f32.gmra.mrb[0].mxu0 %v6470
        %v6574 = vpop.f32.mrb[0].mxu0
        %v6575 = vadd.f32 0.0, %v6574
        %v6576 = vpop.f32.mrb[0].mxu0
        %6577 = vmatprep.mubr.f32.mxu0 0.0
        %6578 = vmatmul.mubr.f32.gmra.mrb[0].mxu0 %v6472
        %v6579 = vpop.f32.mrb[0].mxu0
        %v6580 = vadd.f32 0.0, %v6579
        %v6581 = vpop.f32.mrb[0].mxu0
        %6582 = vmatprep.mubr.f32.mxu0 0.0
        %6583 = vmatmul.mubr.f32.gmra.mrb[0].mxu0 %v6474
        %v6584 = vpop.f32.mrb[0].mxu0
        %v6585 = vadd.f32 0.0, %v6584
        %v6586 = vpop.f32.mrb[0].mxu0
        %6587 = vmatprep.mubr.f32.mxu0 0.0
        %6588 = vmatmul.mubr.f32.gmra.mrb[0].mxu0 %v6476
        %v6589 = vpop.f32.mrb[0].mxu0
        %v6590 = vadd.f32 0.0, %v6589
        %v6591 = vpop.f32.mrb[0].mxu0
        %6592 = vmatprep.mubr.f32.mxu0 0.0
        %6593 = vmatmul.mubr.f32.gmra.mrb[0].mxu0 %v6478
        %v6594 = vpop.f32.mrb[0].mxu0
        %v6595 = vadd.f32 0.0, %v6594
        %v6596 = vpop.f32.mrb[0].mxu0
        %6597 = vmatprep.mubr.f32.mxu0 0.0
        %6598 = vmatmul.mubr.f32.gmra.mrb[0].mxu0 %v6480
        %v6599 = vpop.f32.mrb[0].mxu0
        %v6600 = vadd.f32 0.0, %v6599
        %v6601 = vpop.f32.mrb[0].mxu0
        %6602 = vmatprep.mubr.f32.mxu0 0.0
        %6603 = vmatmul.mubr.f32.gmra.mrb[0].mxu0 %v6482
        %v6604 = vpop.f32.mrb[0].mxu0
        %v6605 = vadd.f32 0.0, %v6604
        %v6606 = vpop.f32.mrb[0].mxu0
        %6607 = vmatprep.mubr.f32.mxu0 0.0
        %6608 = vmatmul.mubr.f32.gmra.mrb[0].mxu0 %v6484
        %v6609 = vpop.f32.mrb[0].mxu0
        %v6610 = vadd.f32 0.0, %v6609
        %v6611 = vpop.f32.mrb[0].mxu0
        %6612 = vmatprep.mubr.f32.mxu0 0.0
        %6613 = vmatmul.mubr.f32.gmra.mrb[0].mxu0 %v6486
        %v6614 = vpop.f32.mrb[0].mxu0
        %v6615 = vadd.f32 0.0, %v6614
        %v6616 = vpop.f32.mrb[0].mxu0
        %6617 = vmatprep.mubr.f32.mxu0 0.0
        %6618 = vmatmul.mubr.f32.gmra.mrb[0].mxu0 %v6488
        %v6619 = vpop.f32.mrb[0].mxu0
        %v6620 = vadd.f32 0.0, %v6619
        %v6621 = vpop.f32.mrb[0].mxu0
        %6622 = vmatprep.mubr.f32.mxu0 0.0
        %6623 = vmatmul.mubr.f32.gmra.mrb[0].mxu0 %v6490
        %v6624 = vpop.f32.mrb[0].mxu0
        %v6625 = vadd.f32 0.0, %v6624
        %v6626 = vpop.f32.mrb[0].mxu0
        %6627 = vmatprep.mubr.f32.mxu0 0.0
        %6628 = vmatmul.mubr.f32.gmra.mrb[0].mxu0 %v6492
        %v6629 = vpop.f32.mrb[0].mxu0
        %v6630 = vadd.f32 0.0, %v6629
        %v6631 = vpop.f32.mrb[0].mxu0
        %6632 = vmatprep.mubr.f32.mxu0 0.0
        %6633 = vmatmul.mubr.f32.gmra.mrb[0].mxu0 %v6494
        %v6634 = vpop.f32.mrb[0].mxu0
        %v6635 = vadd.f32 0.0, %v6634
        %v6636 = vpop.f32.mrb[0].mxu0
        %6637 = vmatprep.mubr.f32.mxu0 0.0
        %6638 = vmatmul.mubr.f32.gmra.mrb[0].mxu0 %v6496
        %v6639 = vpop.f32.mrb[0].mxu0
        %v6640 = vadd.f32 0.0, %v6639
        %v6641 = vpop.f32.mrb[0].mxu0
        %6642 = vdwg.mxu0
        %v6643 = vadd.f32 %v6447, %v6565
        %v6644 = vadd.f32 %v6448, %v6570
        %v6645 = vadd.f32 %v6449, %v6575
        %v6646 = vadd.f32 %v6450, %v6580
        %v6647 = vadd.f32 %v6451, %v6585
        %v6648 = vadd.f32 %v6452, %v6590
        %v6649 = vadd.f32 %v6453, %v6595
        %v6650 = vadd.f32 %v6454, %v6600
        %v6651 = vadd.f32 %v6455, %v6605
        %v6652 = vadd.f32 %v6456, %v6610
        %v6653 = vadd.f32 %v6457, %v6615
        %v6654 = vadd.f32 %v6458, %v6620
        %v6655 = vadd.f32 %v6459, %v6625
        %v6656 = vadd.f32 %v6460, %v6630
        %v6657 = vadd.f32 %v6461, %v6635
        %v6658 = vadd.f32 %v6462, %v6640
        %6659 = vst.msk [vmem:[#allocation4] sm:$0xff] %vm568, %v6643
        %6660 = vst.msk [vmem:[#allocation4 + $0x8] sm:$0xff] %vm568, %v6644
        %6661 = vst.msk [vmem:[#allocation4 + $0x10] sm:$0xff] %vm568, %v6645
        %6662 = vst.msk [vmem:[#allocation4 + $0x18] sm:$0xff] %vm568, %v6646
        %6663 = vst.msk [vmem:[#allocation4 + $0x20] sm:$0xff] %vm568, %v6647
        %6664 = vst.msk [vmem:[#allocation4 + $0x28] sm:$0xff] %vm568, %v6648
        %6665 = vst.msk [vmem:[#allocation4 + $0x30] sm:$0xff] %vm568, %v6649
        %6666 = vst.msk [vmem:[#allocation4 + $0x38] sm:$0xff] %vm568, %v6650
        %6667 = vst.msk [vmem:[#allocation4 + $0x40] sm:$0xff] %vm568, %v6651
        %6668 = vst.msk [vmem:[#allocation4 + $0x48] sm:$0xff] %vm568, %v6652
        %6669 = vst.msk [vmem:[#allocation4 + $0x50] sm:$0xff] %vm568, %v6653
        %6670 = vst.msk [vmem:[#allocation4 + $0x58] sm:$0xff] %vm568, %v6654
        %6671 = vst.msk [vmem:[#allocation4 + $0x60] sm:$0xff] %vm568, %v6655
        %6672 = vst.msk [vmem:[#allocation4 + $0x68] sm:$0xff] %vm568, %v6656
        %6673 = vst.msk [vmem:[#allocation4 + $0x70] sm:$0xff] %vm568, %v6657
        %6674 = vst.msk [vmem:[#allocation4 + $0x78] sm:$0xff] %vm568, %v6658
        %v6675 = vld [vmem:[#allocation4] sm:$0xff]
        %v6676 = vld [vmem:[#allocation4 + $0x8] sm:$0xff]
        %v6677 = vld [vmem:[#allocation4 + $0x10] sm:$0xff]
        %v6678 = vld [vmem:[#allocation4 + $0x18] sm:$0xff]
        %v6679 = vld [vmem:[#allocation4 + $0x20] sm:$0xff]
        %v6680 = vld [vmem:[#allocation4 + $0x28] sm:$0xff]
        %v6681 = vld [vmem:[#allocation4 + $0x30] sm:$0xff]
        %v6682 = vld [vmem:[#allocation4 + $0x38] sm:$0xff]
        %v6683 = vld [vmem:[#allocation4 + $0x40] sm:$0xff]
        %v6684 = vld [vmem:[#allocation4 + $0x48] sm:$0xff]
        %v6685 = vld [vmem:[#allocation4 + $0x50] sm:$0xff]
        %v6686 = vld [vmem:[#allocation4 + $0x58] sm:$0xff]
        %v6687 = vld [vmem:[#allocation4 + $0x60] sm:$0xff]
        %v6688 = vld [vmem:[#allocation4 + $0x68] sm:$0xff]
        %v6689 = vld [vmem:[#allocation4 + $0x70] sm:$0xff]
        %v6690 = vld [vmem:[#allocation4 + $0x78] sm:$0xff]
        %v6691 = vld [vmem:[#allocation14] sm:$0x1]
        %v6693 = vlaneseq
        %v6694 = vshrl.u32 %v6693, 7
        %v6695 = vsub.s32 0, %v6694
        %v6696 = vrot.slane %v6691, %v6695
        %v6698 = vadd.f32 %v6675, %v6696
        %v6699 = vadd.f32 %v6676, %v6696
        %v6700 = vadd.f32 %v6677, %v6696
        %v6701 = vadd.f32 %v6678, %v6696
        %v6702 = vadd.f32 %v6679, %v6696
        %v6703 = vadd.f32 %v6680, %v6696
        %v6704 = vadd.f32 %v6681, %v6696
        %v6705 = vadd.f32 %v6682, %v6696
        %v6706 = vadd.f32 %v6683, %v6696
        %v6707 = vadd.f32 %v6684, %v6696
        %v6708 = vadd.f32 %v6685, %v6696
        %v6709 = vadd.f32 %v6686, %v6696
        %v6710 = vadd.f32 %v6687, %v6696
        %v6711 = vadd.f32 %v6688, %v6696
        %v6712 = vadd.f32 %v6689, %v6696
        %v6713 = vadd.f32 %v6690, %v6696
        %vm6714 = vcmp.ge.f32.partialorder %v6698, 0.0
        %vm6715 = vcmp.ge.f32.partialorder %v6699, 0.0
        %vm6716 = vcmp.ge.f32.partialorder %v6700, 0.0
        %vm6717 = vcmp.ge.f32.partialorder %v6701, 0.0
        %vm6718 = vcmp.ge.f32.partialorder %v6702, 0.0
        %vm6719 = vcmp.ge.f32.partialorder %v6703, 0.0
        %vm6720 = vcmp.ge.f32.partialorder %v6704, 0.0
        %vm6721 = vcmp.ge.f32.partialorder %v6705, 0.0
        %vm6722 = vcmp.ge.f32.partialorder %v6706, 0.0
        %vm6723 = vcmp.ge.f32.partialorder %v6707, 0.0
        %vm6724 = vcmp.ge.f32.partialorder %v6708, 0.0
        %vm6725 = vcmp.ge.f32.partialorder %v6709, 0.0
        %vm6726 = vcmp.ge.f32.partialorder %v6710, 0.0
        %vm6727 = vcmp.ge.f32.partialorder %v6711, 0.0
        %vm6728 = vcmp.ge.f32.partialorder %v6712, 0.0
        %vm6729 = vcmp.ge.f32.partialorder %v6713, 0.0
        %v6730 = vmul.f32 %v6698, 0.2
        %v6731 = vmul.f32 %v6699, 0.2
        %v6732 = vmul.f32 %v6700, 0.2
        %v6733 = vmul.f32 %v6701, 0.2
        %v6734 = vmul.f32 %v6702, 0.2
        %v6735 = vmul.f32 %v6703, 0.2
        %v6736 = vmul.f32 %v6704, 0.2
        %v6737 = vmul.f32 %v6705, 0.2
        %v6738 = vmul.f32 %v6706, 0.2
        %v6739 = vmul.f32 %v6707, 0.2
        %v6740 = vmul.f32 %v6708, 0.2
        %v6741 = vmul.f32 %v6709, 0.2
        %v6742 = vmul.f32 %v6710, 0.2
        %v6743 = vmul.f32 %v6711, 0.2
        %v6744 = vmul.f32 %v6712, 0.2
        %v6745 = vmul.f32 %v6713, 0.2
        %v6746 = vsel %vm6714, %v6698, %v6730
        %v6747 = vsel %vm6715, %v6699, %v6731
        %v6748 = vsel %vm6716, %v6700, %v6732
        %v6749 = vsel %vm6717, %v6701, %v6733
        %v6750 = vsel %vm6718, %v6702, %v6734
        %v6751 = vsel %vm6719, %v6703, %v6735
        %v6752 = vsel %vm6720, %v6704, %v6736
        %v6753 = vsel %vm6721, %v6705, %v6737
        %v6754 = vsel %vm6722, %v6706, %v6738
        %v6755 = vsel %vm6723, %v6707, %v6739
        %v6756 = vsel %vm6724, %v6708, %v6740
        %v6757 = vsel %vm6725, %v6709, %v6741
        %v6758 = vsel %vm6726, %v6710, %v6742
        %v6759 = vsel %vm6727, %v6711, %v6743
        %v6760 = vsel %vm6728, %v6712, %v6744
        %v6761 = vsel %vm6729, %v6713, %v6745
        %v6762 = vld [vmem:[%s520 + $0x1] sm:$0xff]
        %v6763 = vld [vmem:[%s520 + $0x9] sm:$0xff]
        %v6764 = vld [vmem:[%s520 + $0x19] sm:$0xff]
        %v6765 = vld [vmem:[%s520 + $0x21] sm:$0xff]
        %v6766 = vld [vmem:[%s520 + $0x31] sm:$0xff]
        %v6767 = vld [vmem:[%s520 + $0x39] sm:$0xff]
        %v6768 = vld [vmem:[%s520 + $0x49] sm:$0xff]
        %v6769 = vld [vmem:[%s520 + $0x51] sm:$0xff]
        %v6770 = vld [vmem:[%s520 + $0x61] sm:$0xff]
        %v6771 = vld [vmem:[%s520 + $0x69] sm:$0xff]
        %v6772 = vld [vmem:[%s520 + $0x79] sm:$0xff]
        %v6773 = vld [vmem:[%s520 + $0x81] sm:$0xff]
        %v6774 = vld [vmem:[%s520 + $0x91] sm:$0xff]
        %v6775 = vld [vmem:[%s520 + $0x99] sm:$0xff]
        %v6776 = vld [vmem:[%s520 + $0xa9] sm:$0xff]
        %v6777 = vld [vmem:[%s520 + $0xb1] sm:$0xff]
        %v6778 = vld [vmem:[#allocation16] sm:$0xff]
        %v6779 = vld [vmem:[#allocation17] sm:$0x1]
        %v6781 = vlaneseq
        %v6782 = vshrl.u32 %v6781, 7
        %v6783 = vsub.s32 0, %v6782
        %v6784 = vrot.slane %v6779, %v6783
        %v6787 = vsel %vm499, %v6762, 0
        %v6790 = vsel %vm499, %v6763, 0
        %v6793 = vsel %vm499, %v6764, 0
        %v6796 = vsel %vm499, %v6765, 0
        %v6799 = vsel %vm499, %v6766, 0
        %v6802 = vsel %vm499, %v6767, 0
        %v6805 = vsel %vm499, %v6768, 0
        %v6808 = vsel %vm499, %v6769, 0
        %v6811 = vsel %vm499, %v6770, 0
        %v6814 = vsel %vm499, %v6771, 0
        %v6817 = vsel %vm499, %v6772, 0
        %v6820 = vsel %vm499, %v6773, 0
        %v6823 = vsel %vm499, %v6774, 0
        %v6826 = vsel %vm499, %v6775, 0
        %v6829 = vsel %vm499, %v6776, 0
        %v6832 = vsel %vm499, %v6777, 0
        %6834 = vmatprep.subr.mxu0 0.0
        %6835 = vmatpush1.msra.mxu0 %v6778
        %6836 = vmatprep.subr.mxu0 0.0
        %6837 = vmatpush1.msra.mxu0 0.0
        %6838 = vmatprep.subr.mxu0 0.0
        %6839 = vmatpush1.msra.mxu0 0.0
        %6840 = vmatprep.subr.mxu0 0.0
        %6841 = vmatpush1.msra.mxu0 0.0
        %6842 = vmatprep.subr.mxu0 0.0
        %6843 = vmatpush1.msra.mxu0 0.0
        %6844 = vmatprep.subr.mxu0 0.0
        %6845 = vmatpush1.msra.mxu0 0.0
        %6846 = vmatprep.subr.mxu0 0.0
        %6847 = vmatpush1.msra.mxu0 0.0
        %6848 = vmatprep.subr.mxu0 0.0
        %6849 = vmatpush1.msra.mxu0 0.0
        %6850 = vmatprep.subr.mxu0 0.0
        %6851 = vmatpush1.msra.mxu0 0.0
        %6852 = vmatprep.subr.mxu0 0.0
        %6853 = vmatpush1.msra.mxu0 0.0
        %6854 = vmatprep.subr.mxu0 0.0
        %6855 = vmatpush1.msra.mxu0 0.0
        %6856 = vmatprep.subr.mxu0 0.0
        %6857 = vmatpush1.msra.mxu0 0.0
        %6858 = vmatprep.subr.mxu0 0.0
        %6859 = vmatpush1.msra.mxu0 0.0
        %6860 = vmatprep.subr.mxu0 0.0
        %6861 = vmatpush1.msra.mxu0 0.0
        %6862 = vmatprep.subr.mxu0 0.0
        %6863 = vmatpush1.msra.mxu0 0.0
        %6864 = vmatprep.subr.mxu0 0.0
        %6865 = vmatpush1.msra.mxu0 0.0
        %6866 = vmatprep.subr.mxu0 0.0
        %6867 = vmatpush1.msra.mxu0 0.0
        %6868 = vmatprep.subr.mxu0 0.0
        %6869 = vmatpush1.msra.mxu0 0.0
        %6870 = vmatprep.subr.mxu0 0.0
        %6871 = vmatpush1.msra.mxu0 0.0
        %6872 = vmatprep.subr.mxu0 0.0
        %6873 = vmatpush1.msra.mxu0 0.0
        %6874 = vmatprep.subr.mxu0 0.0
        %6875 = vmatpush1.msra.mxu0 0.0
        %6876 = vmatprep.subr.mxu0 0.0
        %6877 = vmatpush1.msra.mxu0 0.0
        %6878 = vmatprep.subr.mxu0 0.0
        %6879 = vmatpush1.msra.mxu0 0.0
        %6880 = vmatprep.subr.mxu0 0.0
        %6881 = vmatpush1.msra.mxu0 0.0
        %6882 = vmatprep.subr.mxu0 0.0
        %6883 = vmatpush1.msra.mxu0 0.0
        %6884 = vmatprep.subr.mxu0 0.0
        %6885 = vmatpush1.msra.mxu0 0.0
        %6886 = vmatprep.subr.mxu0 0.0
        %6887 = vmatpush1.msra.mxu0 0.0
        %6888 = vmatprep.subr.mxu0 0.0
        %6889 = vmatpush1.msra.mxu0 0.0
        %6890 = vmatprep.subr.mxu0 0.0
        %6891 = vmatpush1.msra.mxu0 0.0
        %6892 = vmatprep.subr.mxu0 0.0
        %6893 = vmatpush1.msra.mxu0 0.0
        %6894 = vmatprep.subr.mxu0 0.0
        %6895 = vmatpush1.msra.mxu0 0.0
        %6896 = vmatprep.subr.mxu0 0.0
        %6897 = vmatpush1.msra.mxu0 0.0
        %6898 = vmatprep.mubr.f32.mxu0 0.0
        %6899 = vmatmul.mubr.f32.gmra.mrb[0].mxu0 %v6787
        %v6900 = vpop.f32.mrb[0].mxu0
        %v6901 = vadd.f32 %v6784, %v6900
        %v6902 = vpop.f32.mrb[0].mxu0
        %6903 = vmatprep.mubr.f32.mxu0 0.0
        %6904 = vmatmul.mubr.f32.gmra.mrb[0].mxu0 %v6790
        %v6905 = vpop.f32.mrb[0].mxu0
        %v6906 = vadd.f32 %v6784, %v6905
        %v6907 = vpop.f32.mrb[0].mxu0
        %6908 = vmatprep.mubr.f32.mxu0 0.0
        %6909 = vmatmul.mubr.f32.gmra.mrb[0].mxu0 %v6793
        %v6910 = vpop.f32.mrb[0].mxu0
        %v6911 = vadd.f32 %v6784, %v6910
        %v6912 = vpop.f32.mrb[0].mxu0
        %6913 = vmatprep.mubr.f32.mxu0 0.0
        %6914 = vmatmul.mubr.f32.gmra.mrb[0].mxu0 %v6796
        %v6915 = vpop.f32.mrb[0].mxu0
        %v6916 = vadd.f32 %v6784, %v6915
        %v6917 = vpop.f32.mrb[0].mxu0
        %6918 = vmatprep.mubr.f32.mxu0 0.0
        %6919 = vmatmul.mubr.f32.gmra.mrb[0].mxu0 %v6799
        %v6920 = vpop.f32.mrb[0].mxu0
        %v6921 = vadd.f32 %v6784, %v6920
        %v6922 = vpop.f32.mrb[0].mxu0
        %6923 = vmatprep.mubr.f32.mxu0 0.0
        %6924 = vmatmul.mubr.f32.gmra.mrb[0].mxu0 %v6802
        %v6925 = vpop.f32.mrb[0].mxu0
        %v6926 = vadd.f32 %v6784, %v6925
        %v6927 = vpop.f32.mrb[0].mxu0
        %6928 = vmatprep.mubr.f32.mxu0 0.0
        %6929 = vmatmul.mubr.f32.gmra.mrb[0].mxu0 %v6805
        %v6930 = vpop.f32.mrb[0].mxu0
        %v6931 = vadd.f32 %v6784, %v6930
        %v6932 = vpop.f32.mrb[0].mxu0
        %6933 = vmatprep.mubr.f32.mxu0 0.0
        %6934 = vmatmul.mubr.f32.gmra.mrb[0].mxu0 %v6808
        %v6935 = vpop.f32.mrb[0].mxu0
        %v6936 = vadd.f32 %v6784, %v6935
        %v6937 = vpop.f32.mrb[0].mxu0
        %6938 = vmatprep.mubr.f32.mxu0 0.0
        %6939 = vmatmul.mubr.f32.gmra.mrb[0].mxu0 %v6811
        %v6940 = vpop.f32.mrb[0].mxu0
        %v6941 = vadd.f32 %v6784, %v6940
        %v6942 = vpop.f32.mrb[0].mxu0
        %6943 = vmatprep.mubr.f32.mxu0 0.0
        %6944 = vmatmul.mubr.f32.gmra.mrb[0].mxu0 %v6814
        %v6945 = vpop.f32.mrb[0].mxu0
        %v6946 = vadd.f32 %v6784, %v6945
        %v6947 = vpop.f32.mrb[0].mxu0
        %6948 = vmatprep.mubr.f32.mxu0 0.0
        %6949 = vmatmul.mubr.f32.gmra.mrb[0].mxu0 %v6817
        %v6950 = vpop.f32.mrb[0].mxu0
        %v6951 = vadd.f32 %v6784, %v6950
        %v6952 = vpop.f32.mrb[0].mxu0
        %6953 = vmatprep.mubr.f32.mxu0 0.0
        %6954 = vmatmul.mubr.f32.gmra.mrb[0].mxu0 %v6820
        %v6955 = vpop.f32.mrb[0].mxu0
        %v6956 = vadd.f32 %v6784, %v6955
        %v6957 = vpop.f32.mrb[0].mxu0
        %6958 = vmatprep.mubr.f32.mxu0 0.0
        %6959 = vmatmul.mubr.f32.gmra.mrb[0].mxu0 %v6823
        %v6960 = vpop.f32.mrb[0].mxu0
        %v6961 = vadd.f32 %v6784, %v6960
        %v6962 = vpop.f32.mrb[0].mxu0
        %6963 = vmatprep.mubr.f32.mxu0 0.0
        %6964 = vmatmul.mubr.f32.gmra.mrb[0].mxu0 %v6826
        %v6965 = vpop.f32.mrb[0].mxu0
        %v6966 = vadd.f32 %v6784, %v6965
        %v6967 = vpop.f32.mrb[0].mxu0
        %6968 = vmatprep.mubr.f32.mxu0 0.0
        %6969 = vmatmul.mubr.f32.gmra.mrb[0].mxu0 %v6829
        %v6970 = vpop.f32.mrb[0].mxu0
        %v6971 = vadd.f32 %v6784, %v6970
        %v6972 = vpop.f32.mrb[0].mxu0
        %6973 = vmatprep.mubr.f32.mxu0 0.0
        %6974 = vmatmul.mubr.f32.gmra.mrb[0].mxu0 %v6832
        %v6975 = vpop.f32.mrb[0].mxu0
        %v6976 = vadd.f32 %v6784, %v6975
        %v6977 = vpop.f32.mrb[0].mxu0
        %6978 = vdwg.mxu0
        %v6979 = vadd.f32 %v6746, %v6901
        %v6980 = vadd.f32 %v6747, %v6906
        %v6981 = vadd.f32 %v6748, %v6911
        %v6982 = vadd.f32 %v6749, %v6916
        %v6983 = vadd.f32 %v6750, %v6921
        %v6984 = vadd.f32 %v6751, %v6926
        %v6985 = vadd.f32 %v6752, %v6931
        %v6986 = vadd.f32 %v6753, %v6936
        %v6987 = vadd.f32 %v6754, %v6941
        %v6988 = vadd.f32 %v6755, %v6946
        %v6989 = vadd.f32 %v6756, %v6951
        %v6990 = vadd.f32 %v6757, %v6956
        %v6991 = vadd.f32 %v6758, %v6961
        %v6992 = vadd.f32 %v6759, %v6966
        %v6993 = vadd.f32 %v6760, %v6971
        %v6994 = vadd.f32 %v6761, %v6976
        %6995 = vst.msk [vmem:[%s466] sm:$0xff] %vm568, %v6979
        %6996 = vst.msk [vmem:[%s466 + $0x8] sm:$0xff] %vm568, %v6980
        %6997 = vst.msk [vmem:[%s466 + $0x10] sm:$0xff] %vm568, %v6981
        %6998 = vst.msk [vmem:[%s466 + $0x18] sm:$0xff] %vm568, %v6982
        %6999 = vst.msk [vmem:[%s466 + $0x20] sm:$0xff] %vm568, %v6983
        %7000 = vst.msk [vmem:[%s466 + $0x28] sm:$0xff] %vm568, %v6984
        %7001 = vst.msk [vmem:[%s466 + $0x30] sm:$0xff] %vm568, %v6985
        %7002 = vst.msk [vmem:[%s466 + $0x38] sm:$0xff] %vm568, %v6986
        %7003 = vst.msk [vmem:[%s466 + $0x40] sm:$0xff] %vm568, %v6987
        %7004 = vst.msk [vmem:[%s466 + $0x48] sm:$0xff] %vm568, %v6988
        %7005 = vst.msk [vmem:[%s466 + $0x50] sm:$0xff] %vm568, %v6989
        %7006 = vst.msk [vmem:[%s466 + $0x58] sm:$0xff] %vm568, %v6990
        %7007 = vst.msk [vmem:[%s466 + $0x60] sm:$0xff] %vm568, %v6991
        %7008 = vst.msk [vmem:[%s466 + $0x68] sm:$0xff] %vm568, %v6992
        %7009 = vst.msk [vmem:[%s466 + $0x70] sm:$0xff] %vm568, %v6993
        %7010 = vst.msk [vmem:[%s466 + $0x78] sm:$0xff] %vm568, %v6994
        %s7011 = sand.u32 %s235, 1
        %s7012 = scalar_lea.sflag [#allocation7], %s7011
        %s7013 = sand.u32 %s235, 1
        %s7014 = smul.addr %s7013, 128
        %s7015 = scalar_lea.vmem [#allocation19], %s7014
        // Predicated region
        $region93: #{tpu_custom_call.1} parent=51 // pred_check
          %p7016 = pneg %p245
        $region94: #{tpu_custom_call.1} parent=51 // pred_check_branch
          %7018 = sbr.rel (%p7016) target = $region96
        $region95: #{tpu_custom_call.1} parent=51 // pred_region
          %s7019 = smul.u32 8, %s36
          %s7021 = ssub.s32 2048, 2048
          %7022 = vsyncadd %s7012, %s7021
          %s7023 = smul.addr %s7019, 2
          %s7024 = smul.addr %s35, 32
          %s7025 = sadd.s32 %s7023, %s7024
          %s7026 = smul.addr %s7025, 128
          %s7027 = scalar_lea.hbm %s8, %s7026
          %s7028 = sshll.u32 %s7015, 4
          %s7029 = int_to_ptr.vmem [resolvable:$true] %s7028
          %7034 = dma.vmem_to_hbm [thread:$0]  %s7029, 2048, %s7027, %s7012, 128, 128, 8
        $region96: #{tpu_custom_call.1} parent=51 // pred_fallthru
          _
      $region52: #{tpu_custom_call.1} parent=5 // pred_fallthru
        _
      %p7035 = scmp.le.s32.totalorder 2, %s26
      // Predicated region
      $region97: #{tpu_custom_call.1} parent=5 // pred_check
        %p7036 = pneg %p7035
      $region98: #{tpu_custom_call.1} parent=5 // pred_check_branch
        %7038 = sbr.rel (%p7036) target = $region100
      $region99: #{tpu_custom_call.1} parent=5 // pred_region
        %s7039 = ssub.s32 %s26, 2
        // Predicated region
        $region101: #{tpu_custom_call.1} parent=99 // pred_check
          %p7040 = pneg %p251
        $region102: #{tpu_custom_call.1} parent=99 // pred_check_branch
          %7042 = sbr.rel (%p7040) target = $region104
        $region103: #{tpu_custom_call.1} parent=99 // pred_region
          %s7043 = sand.u32 %s236, 1
          %s7044 = scalar_lea.sflag [#allocation7], %s7043
          %s7045 = sand.u32 %s236, 1
          %s7046 = smul.addr %s7045, 128
          %s7047 = scalar_lea.vmem [#allocation19], %s7046
          %7048 = dma.done %s7044, 2048
        $region104: #{tpu_custom_call.1} parent=99 // pred_fallthru
          _
      $region100: #{tpu_custom_call.1} parent=5 // pred_fallthru
        _
    $region6: #{tpu_custom_call.1} parent=1 // loop_footer
      %s30 = sadd.s32 1, %s26
    $region7: #{tpu_custom_call.1} parent=1 // loop_footer_branch
      %25 = sbr.rel target = $region3
    $region8: #{tpu_custom_call.1} parent=1 // loop_exit
      _
    %7049 = vsyncpa [#allocation6], 1
    %s7050 = scalar_lea.sflag [#allocation6], 1
    %7051 = vsyncpa %s7050, 1
    %7052 = vsyncpa [#allocation9], 1
    %s7053 = scalar_lea.sflag [#allocation9], 1
    %7054 = vsyncpa %s7053, 1
    %7055 = vsyncpa [#allocation12], 1
    %7056 = vsyncpa [#allocation15], 1
    %7057 = vsyncpa [#allocation18], 1
    %7058 = vsyncpa [#allocation7], 1
    %s7059 = scalar_lea.sflag [#allocation7], 1
    %7060 = vsyncpa %s7059, 1

</llo_original>
